<compile_context>
chip_gen: v6e
topology: v6e:2x2x1
jax: 0.10.0
libtpu: 0.0.40
codegen_flags: <defaults>
</compile_context>

<pallas_src>
import functools

import jax
import jax.numpy as jnp
from jax import lax
from jax.experimental import pallas as pl
from jax.experimental.pallas import tpu as pltpu


# bf16 MXU operands (f32 accumulation everywhere). Set to jnp.float32 for
# exact-f32 math.
MXU_DTYPE = jnp.bfloat16

_VMEM = pl.BlockSpec(memory_space=pltpu.MemorySpace.VMEM)


# ----------------------------------------------------------------------------
# Pallas kernels
# ----------------------------------------------------------------------------
def _bilstm_layer_kernel(x_ref, wih_ref, whh_ref, b_ref,
                         y_ref, hT_ref, cT_ref,
                         gxf_scr, gxb_scr, h_scr, c_scr):
    """One fused bidirectional LSTM layer (input projection + recurrence).

    x_ref  : [T*B, Din]  layer input (f32), flattened over (time, batch)
    wih_ref: [Din, 8H]   input->gate weights, [forward 4H | backward 4H] (bf16)
    whh_ref: [H, 8H]     hidden->gate weights, [forward 4H | backward 4H] (bf16)
    b_ref  : [1, 8H]     combined bias (b_ih + b_hh) per direction (f32)
    y_ref  : [T, B, 2H]  outputs; forward half lanes [0,H), backward [H,2H)
    hT_ref : [B, 2H]     final hidden states (forward | backward)
    cT_ref : [B, 2H]     final cell states   (forward | backward)
    gx*_scr: [T, B, 4H]  f32 scratch holding the hoisted input projection
    h_scr  : [2B, H]     f32 hidden state; rows [0,B) forward, [B,2B) backward
    c_scr  : [2B, H]     f32 cell state
    Gate order matches PyTorch: i, f, g, o.
    """
    T, B, H2 = y_ref.shape
    H = H2 // 2

    # ---- Stage 1 (fused in-kernel): hoisted input projection for BOTH
    # directions as one wide MXU matmul; result stays in f32 VMEM scratch.
    x = x_ref[...].astype(wih_ref.dtype)
    gboth = jnp.dot(x, wih_ref[...],
                    preferred_element_type=jnp.float32) + b_ref[...]   # [T*B, 8H]
    for t in range(T):                 # static unroll, outside the recurrence
        rows = gboth[t * B:(t + 1) * B, :]                             # [B, 8H]
        gxf_scr[t] = rows[:, :4 * H]
        gxb_scr[t] = rows[:, 4 * H:]

    # ---- Stage 2: sequential recurrence. Forward and backward directions are
    # processed in the SAME step (independent work -> one fused MXU matmul and
    # full(er) vregs in the elementwise gate math).
    h_scr[...] = jnp.zeros_like(h_scr)
    c_scr[...] = jnp.zeros_like(c_scr)
    whh = whh_ref[...]   # NOTE: W_hh is still re-fed to the MXU each step;
                         # weight-stationary (matmul_push_rhs) is a follow-up.

    def step(i, carry):
        tf = i                          # forward time index
        tb = T - 1 - i                  # backward time index
        h_prev = h_scr[...]             # [2B, H]
        c_prev = c_scr[...]

        hw = jnp.dot(h_prev.astype(whh.dtype), whh,
                     preferred_element_type=jnp.float32)               # [2B, 8H]
        g_f = gxf_scr[tf] + hw[:B, :4 * H]                             # [B, 4H]
        g_b = gxb_scr[tb] + hw[B:, 4 * H:]                             # [B, 4H]
        gates = jnp.concatenate([g_f, g_b], axis=0)                    # [2B, 4H]

        i_g = jax.nn.sigmoid(gates[:, 0 * H:1 * H])
        f_g = jax.nn.sigmoid(gates[:, 1 * H:2 * H])
        g_g = jnp.tanh(gates[:, 2 * H:3 * H])
        o_g = jax.nn.sigmoid(gates[:, 3 * H:4 * H])

        c_new = f_g * c_prev + i_g * g_g
        h_new = o_g * jnp.tanh(c_new)

        c_scr[...] = c_new
        h_scr[...] = h_new
        y_ref[tf, :, 0:H] = h_new[:B].astype(y_ref.dtype)       # forward half
        y_ref[tb, :, H:2 * H] = h_new[B:].astype(y_ref.dtype)   # backward half
        return carry

    lax.fori_loop(0, T, step, 0, unroll=min(T, 8))

    h_fin = h_scr[...]
    c_fin = c_scr[...]
    hT_ref[...] = jnp.concatenate([h_fin[:B], h_fin[B:]], axis=1)
    cT_ref[...] = jnp.concatenate([c_fin[:B], c_fin[B:]], axis=1)


def _fc_tanh_kernel(x_ref, w_ref, b_ref, o_ref):
    """o = tanh(x @ w + b);  x:[N, 2H], w:[2H, D] (bf16), b:[1, D], o:[N, D]."""
    x = x_ref[...].astype(w_ref.dtype)
    o_ref[...] = jnp.tanh(
        jnp.dot(x, w_ref[...], preferred_element_type=jnp.float32) + b_ref[...]
    )


# ----------------------------------------------------------------------------
# Pallas wrappers
# ----------------------------------------------------------------------------
def bilstm_layer(x, wih_cat, whh_cat, b_cat, hidden_dim):
    """One bidirectional LSTM layer (single fused pallas_call).

    x       : [T, B, Din] f32
    wih_cat : [Din, 8H]   (forward 4H | backward 4H), MXU dtype
    whh_cat : [H, 8H]     MXU dtype
    b_cat   : [1, 8H]     f32 (b_ih + b_hh per direction)
    returns y [T, B, 2H], hT [B, 2H], cT [B, 2H]  (forward half | backward half)
    """
    T, B, Din = x.shape
    H = hidden_dim
    x_flat = x.reshape(T * B, Din)

    return pl.pallas_call(
        _bilstm_layer_kernel,
        out_shape=(
            jax.ShapeDtypeStruct((T, B, 2 * H), jnp.float32),
            jax.ShapeDtypeStruct((B, 2 * H), jnp.float32),
            jax.ShapeDtypeStruct((B, 2 * H), jnp.float32),
        ),
        in_specs=[_VMEM, _VMEM, _VMEM, _VMEM],
        out_specs=(_VMEM, _VMEM, _VMEM),
        scratch_shapes=[
            pltpu.VMEM((T, B, 4 * H), jnp.float32),   # gx, forward direction
            pltpu.VMEM((T, B, 4 * H), jnp.float32),   # gx, backward direction
            pltpu.VMEM((2 * B, H), jnp.float32),      # h state, both directions
            pltpu.VMEM((2 * B, H), jnp.float32),      # c state, both directions
        ],
    )(x_flat, wih_cat, whh_cat, b_cat)


def fc_tanh_all(hc_flat, w, b, dec_hidden):
    """Single fused fc+tanh over all layers' h and c final states."""
    return pl.pallas_call(
        _fc_tanh_kernel,
        out_shape=jax.ShapeDtypeStruct((hc_flat.shape[0], dec_hidden),
                                       jnp.float32),
        in_specs=[_VMEM, _VMEM, _VMEM],
        out_specs=_VMEM,
    )(hc_flat, w, b)


# ----------------------------------------------------------------------------
# Parameter construction (deterministic, synthetic)
# ----------------------------------------------------------------------------
def init_params(key, input_dim, embed_dim, enc_hidden, dec_hidden, nlayers):
    params = {}
    key, k = jax.random.split(key)
    params["embedding"] = 0.1 * jax.random.normal(
        k, (input_dim, embed_dim), jnp.float32)

    lstm = []
    for layer in range(nlayers):
        din = embed_dim if layer == 0 else 2 * enc_hidden
        key, k1, k2, k3 = jax.random.split(key, 4)
        # [forward 4H | backward 4H] concatenated along the output axis.
        wih = (0.1 * jax.random.normal(
            k1, (din, 8 * enc_hidden), jnp.float32)).astype(MXU_DTYPE)
        whh = (0.1 * jax.random.normal(
            k2, (enc_hidden, 8 * enc_hidden), jnp.float32)).astype(MXU_DTYPE)
        b = 0.1 * jax.random.normal(k3, (1, 8 * enc_hidden), jnp.float32)
        lstm.append((wih, whh, b))
    params["lstm"] = lstm

    key, k1, k2 = jax.random.split(key, 3)
    params["fc_w"] = (0.1 * jax.random.normal(
        k1, (2 * enc_hidden, dec_hidden), jnp.float32)).astype(MXU_DTYPE)
    params["fc_b"] = 0.1 * jax.random.normal(k2, (1, dec_hidden), jnp.float32)
    return params


# ----------------------------------------------------------------------------
# Full forward pass (glue in plain JAX; hot path in Pallas kernels)
# ----------------------------------------------------------------------------
def attn_encoder_forward(params, x_tokens, enc_hidden, dec_hidden, nlayers):
    """
    x_tokens: [T, B] int32
    returns (outputs [T, B, 2H], h_out [nlayers, B, dec], c_out [nlayers, B, dec])
    """
    T, B = x_tokens.shape
    H = enc_hidden

    # Embedding lookup (gather) + dropout(identity, eval mode) in plain XLA.
    layer_in = params["embedding"][x_tokens]            # [T, B, E] f32

    h_finals, c_finals = [], []
    for layer in range(nlayers):
        wih, whh, b = params["lstm"][layer]
        y, hT, cT = bilstm_layer(layer_in, wih, whh, b, H)
        h_finals.append(hT)           # [B, 2H] = cat(forward_h, backward_h)
        c_finals.append(cT)
        layer_in = y                  # inter-layer dropout = identity

    outputs = layer_in                                  # [T, B, 2H]

    # One fused fc+tanh over every layer's h and c final states.
    hc = jnp.concatenate(
        [jnp.stack(h_finals, axis=0), jnp.stack(c_finals, axis=0)], axis=0)
    hc_flat = hc.reshape(2 * nlayers * B, 2 * H)
    fc_out = fc_tanh_all(hc_flat, params["fc_w"], params["fc_b"], dec_hidden)
    h_out = fc_out[: nlayers * B].reshape(nlayers, B, dec_hidden)
    c_out = fc_out[nlayers * B:].reshape(nlayers, B, dec_hidden)
    return outputs, h_out, c_out


# ----------------------------------------------------------------------------
# Pure-JAX f32 reference (for correctness check)
# ----------------------------------------------------------------------------
def _ref_lstm_dir(x, wih, whh, b, H):
    T, B, _ = x.shape
    h = jnp.zeros((B, H), jnp.float32)
    c = jnp.zeros((B, H), jnp.float32)

    def step(carry, x_t):
        h, c = carry
        g = x_t @ wih + h @ whh + b
        i = jax.nn.sigmoid(g[:, 0 * H:1 * H])
        f = jax.nn.sigmoid(g[:, 1 * H:2 * H])
        gg = jnp.tanh(g[:, 2 * H:3 * H])
        o = jax.nn.sigmoid(g[:, 3 * H:4 * H])
        c = f * c + i * gg
        h = o * jnp.tanh(c)
        return (h, c), h

    (h, c), ys = lax.scan(step, (h, c), x)
    return ys, h, c


def reference_forward(params, x_tokens, enc_hidden, dec_hidden, nlayers):
    H = enc_hidden
    layer_in = params["embedding"][x_tokens].astype(jnp.float32)
    h_states, c_states = [], []
    for layer in range(nlayers):
        wih, whh, b = params["lstm"][layer]
        wih = wih.astype(jnp.float32)
        whh = whh.astype(jnp.float32)
        b = b.astype(jnp.float32)
        yf, hf, cf = _ref_lstm_dir(layer_in, wih[:, :4 * H], whh[:, :4 * H],
                                   b[:, :4 * H], H)
        yb_r, hb, cb = _ref_lstm_dir(jnp.flip(layer_in, 0), wih[:, 4 * H:],
                                     whh[:, 4 * H:], b[:, 4 * H:], H)
        yb = jnp.flip(yb_r, 0)
        layer_in = jnp.concatenate([yf, yb], -1)
        h_states.append(jnp.concatenate([hf, hb], -1))
        c_states.append(jnp.concatenate([cf, cb], -1))
    outputs = layer_in
    h = jnp.stack(h_states, 0)                          # [nlayers, B, 2H]
    c = jnp.stack(c_states, 0)
    fc_w = params["fc_w"].astype(jnp.float32)
    fc_b = params["fc_b"].astype(jnp.float32)
    h_out = jnp.tanh(h @ fc_w + fc_b)
    c_out = jnp.tanh(c @ fc_w + fc_b)
    return outputs, h_out, c_out


# ----------------------------------------------------------------------------
if __name__ == "__main__":
    # Small shapes; H = dec_hidden = 128 so gate slices and every output block
    # are lane-aligned (multiples of 128).
    SEQ_LEN = 8
    BATCH = 2
    INPUT_DIM = 16     # vocab size
    EMBED_DIM = 128
    ENC_HIDDEN = 128
    DEC_HIDDEN = 128
    NLAYERS = 2

    key = jax.random.PRNGKey(0)
    key, pkey, xkey = jax.random.split(key, 3)
    params = init_params(pkey, INPUT_DIM, EMBED_DIM, ENC_HIDDEN, DEC_HIDDEN,
                         NLAYERS)
    x_tokens = jax.random.randint(xkey, (SEQ_LEN, BATCH), 0, INPUT_DIM,
                                  dtype=jnp.int32)

    fwd = jax.jit(functools.partial(
        attn_encoder_forward,
        enc_hidden=ENC_HIDDEN, dec_hidden=DEC_HIDDEN, nlayers=NLAYERS))
    outputs, h_out, c_out = fwd(params, x_tokens)
    jax.block_until_ready((outputs, h_out, c_out))

    assert outputs.shape == (SEQ_LEN, BATCH, 2 * ENC_HIDDEN)
    assert h_out.shape == (NLAYERS, BATCH, DEC_HIDDEN)
    assert c_out.shape == (NLAYERS, BATCH, DEC_HIDDEN)

    # Correctness check against a pure-JAX f32 reference.  Tolerance accounts
    # for the deliberate bf16 MXU weight casts in the Pallas path.
    r_out, r_h, r_c = reference_forward(params, x_tokens, ENC_HIDDEN,
                                        DEC_HIDDEN, NLAYERS)
    assert jnp.allclose(outputs, r_out, rtol=2e-2, atol=2e-2)
    assert jnp.allclose(h_out, r_h, rtol=2e-2, atol=2e-2)
    assert jnp.allclose(c_out, r_c, rtol=2e-2, atol=2e-2)

    print("KERNEL_OK")
</pallas_src>

<mosaic_0001>
module attributes {stable_mosaic.version = 11 : i64} {
  func.func @_fc_tanh_kernel(%arg0: memref<8x256xf32, #tpu.memory_space<vmem>>, %arg1: memref<256x128xbf16, #tpu.memory_space<vmem>>, %arg2: memref<1x128xf32, #tpu.memory_space<vmem>>, %arg3: memref<8x128xf32, #tpu.memory_space<vmem>>) attributes {dimension_semantics = [], scalar_prefetch = 0 : i64, scratch_operands = 0 : i64, tpu.core_type = #tpu.core_type<tc>} {
    %c0 = arith.constant 0 : index
    %c0_0 = arith.constant 0 : index
    %0 = vector.load %arg0[%c0, %c0_0] : memref<8x256xf32, #tpu.memory_space<vmem>>, vector<8x256xf32>
    %1 = arith.truncf %0 : vector<8x256xf32> to vector<8x256xbf16>
    %c0_1 = arith.constant 0 : index
    %c0_2 = arith.constant 0 : index
    %2 = vector.load %arg1[%c0_1, %c0_2] : memref<256x128xbf16, #tpu.memory_space<vmem>>, vector<256x128xbf16>
    %cst = arith.constant dense<0.000000e+00> : vector<8x128xf32>
    %3 = tpu.matmul %1, %2, %cst {dimension_numbers = #tpu.dot_dimension_numbers<[1], [0], [0], [1], [0, 0, 1, 1], [], []>} : vector<8x256xbf16>, vector<256x128xbf16>, vector<8x128xf32> -> vector<8x128xf32>
    %c0_3 = arith.constant 0 : index
    %c0_4 = arith.constant 0 : index
    %4 = vector.load %arg2[%c0_3, %c0_4] : memref<1x128xf32, #tpu.memory_space<vmem>>, vector<1x128xf32>
    %5 = vector.broadcast %4 : vector<1x128xf32> to vector<8x128xf32>
    %6 = arith.addf %3, %5 : vector<8x128xf32>
    %7 = math.tanh %6 : vector<8x128xf32>
    %c0_5 = arith.constant 0 : index
    %c0_6 = arith.constant 0 : index
    %8 = vector.load %arg3[%c0_5, %c0_6] : memref<8x128xf32, #tpu.memory_space<vmem>>, vector<8x128xf32>
    tpu.vector_store %arg3[%c0_5, %c0_6], %7 {strides = array<i32>} : memref<8x128xf32, #tpu.memory_space<vmem>>, vector<8x128xf32>,
    return
  }
}

module attributes {stable_mosaic.version = 11 : i64} {
  func.func @_bilstm_layer_kernel(%arg0: memref<16x128xf32, #tpu.memory_space<vmem>>, %arg1: memref<128x1024xbf16, #tpu.memory_space<vmem>>, %arg2: memref<128x1024xbf16, #tpu.memory_space<vmem>>, %arg3: memref<1x1024xf32, #tpu.memory_space<vmem>>, %arg4: memref<8x2x256xf32, #tpu.memory_space<vmem>>, %arg5: memref<2x256xf32, #tpu.memory_space<vmem>>, %arg6: memref<2x256xf32, #tpu.memory_space<vmem>>, %arg7: memref<8x2x512xf32, #tpu.memory_space<vmem>>, %arg8: memref<8x2x512xf32, #tpu.memory_space<vmem>>, %arg9: memref<4x128xf32, #tpu.memory_space<vmem>>, %arg10: memref<4x128xf32, #tpu.memory_space<vmem>>) attributes {dimension_semantics = [], scalar_prefetch = 0 : i64, scratch_operands = 4 : i64, tpu.core_type = #tpu.core_type<tc>} {
    %c0 = arith.constant 0 : index
    %c0_0 = arith.constant 0 : index
    %0 = vector.load %arg0[%c0, %c0_0] : memref<16x128xf32, #tpu.memory_space<vmem>>, vector<16x128xf32>
    %1 = arith.truncf %0 : vector<16x128xf32> to vector<16x128xbf16>
    %c0_1 = arith.constant 0 : index
    %c0_2 = arith.constant 0 : index
    %2 = vector.load %arg1[%c0_1, %c0_2] : memref<128x1024xbf16, #tpu.memory_space<vmem>>, vector<128x1024xbf16>
    %cst = arith.constant dense<0.000000e+00> : vector<16x1024xf32>
    %3 = tpu.matmul %1, %2, %cst {dimension_numbers = #tpu.dot_dimension_numbers<[1], [0], [0], [1], [0, 0, 1, 1], [], []>} : vector<16x128xbf16>, vector<128x1024xbf16>, vector<16x1024xf32> -> vector<16x1024xf32>
    %c0_3 = arith.constant 0 : index
    %c0_4 = arith.constant 0 : index
    %4 = vector.load %arg3[%c0_3, %c0_4] : memref<1x1024xf32, #tpu.memory_space<vmem>>, vector<1x1024xf32>
    %5 = vector.broadcast %4 : vector<1x1024xf32> to vector<16x1024xf32>
    %6 = arith.addf %3, %5 : vector<16x1024xf32>
    %7 = vector.extract_strided_slice %6 {offsets = [0, 0], sizes = [2, 1024], strides = [1, 1]} : vector<16x1024xf32> to vector<2x1024xf32>
    %8 = vector.extract_strided_slice %7 {offsets = [0, 0], sizes = [2, 512], strides = [1, 1]} : vector<2x1024xf32> to vector<2x512xf32>
    %c0_5 = arith.constant 0 : index
    %c0_6 = arith.constant 0 : index
    %c0_7 = arith.constant 0 : index
    %9 = vector.load %arg7[%c0_5, %c0_6, %c0_7] : memref<8x2x512xf32, #tpu.memory_space<vmem>>, vector<1x2x512xf32>
    %10 = vector.shape_cast %9 : vector<1x2x512xf32> to vector<2x512xf32>
    %11 = vector.shape_cast %8 : vector<2x512xf32> to vector<1x2x512xf32>
    tpu.vector_store %arg7[%c0_5, %c0_6, %c0_7], %11 {strides = array<i32>} : memref<8x2x512xf32, #tpu.memory_space<vmem>>, vector<1x2x512xf32>,
    %12 = vector.extract_strided_slice %7 {offsets = [0, 512], sizes = [2, 512], strides = [1, 1]} : vector<2x1024xf32> to vector<2x512xf32>
    %c0_8 = arith.constant 0 : index
    %c0_9 = arith.constant 0 : index
    %c0_10 = arith.constant 0 : index
    %13 = vector.load %arg8[%c0_8, %c0_9, %c0_10] : memref<8x2x512xf32, #tpu.memory_space<vmem>>, vector<1x2x512xf32>
    %14 = vector.shape_cast %13 : vector<1x2x512xf32> to vector<2x512xf32>
    %15 = vector.shape_cast %12 : vector<2x512xf32> to vector<1x2x512xf32>
    tpu.vector_store %arg8[%c0_8, %c0_9, %c0_10], %15 {strides = array<i32>} : memref<8x2x512xf32, #tpu.memory_space<vmem>>, vector<1x2x512xf32>,
    %16 = vector.extract_strided_slice %6 {offsets = [2, 0], sizes = [2, 1024], strides = [1, 1]} : vector<16x1024xf32> to vector<2x1024xf32>
    %17 = vector.extract_strided_slice %16 {offsets = [0, 0], sizes = [2, 512], strides = [1, 1]} : vector<2x1024xf32> to vector<2x512xf32>
    %c1 = arith.constant 1 : index
    %c0_11 = arith.constant 0 : index
    %c0_12 = arith.constant 0 : index
    %18 = vector.load %arg7[%c1, %c0_11, %c0_12] : memref<8x2x512xf32, #tpu.memory_space<vmem>>, vector<1x2x512xf32>
    %19 = vector.shape_cast %18 : vector<1x2x512xf32> to vector<2x512xf32>
    %20 = vector.shape_cast %17 : vector<2x512xf32> to vector<1x2x512xf32>
    tpu.vector_store %arg7[%c1, %c0_11, %c0_12], %20 {strides = array<i32>} : memref<8x2x512xf32, #tpu.memory_space<vmem>>, vector<1x2x512xf32>,
    %21 = vector.extract_strided_slice %16 {offsets = [0, 512], sizes = [2, 512], strides = [1, 1]} : vector<2x1024xf32> to vector<2x512xf32>
    %c1_13 = arith.constant 1 : index
    %c0_14 = arith.constant 0 : index
    %c0_15 = arith.constant 0 : index
    %22 = vector.load %arg8[%c1_13, %c0_14, %c0_15] : memref<8x2x512xf32, #tpu.memory_space<vmem>>, vector<1x2x512xf32>
    %23 = vector.shape_cast %22 : vector<1x2x512xf32> to vector<2x512xf32>
    %24 = vector.shape_cast %21 : vector<2x512xf32> to vector<1x2x512xf32>
    tpu.vector_store %arg8[%c1_13, %c0_14, %c0_15], %24 {strides = array<i32>} : memref<8x2x512xf32, #tpu.memory_space<vmem>>, vector<1x2x512xf32>,
    %25 = vector.extract_strided_slice %6 {offsets = [4, 0], sizes = [2, 1024], strides = [1, 1]} : vector<16x1024xf32> to vector<2x1024xf32>
    %26 = vector.extract_strided_slice %25 {offsets = [0, 0], sizes = [2, 512], strides = [1, 1]} : vector<2x1024xf32> to vector<2x512xf32>
    %c2 = arith.constant 2 : index
    %c0_16 = arith.constant 0 : index
    %c0_17 = arith.constant 0 : index
    %27 = vector.load %arg7[%c2, %c0_16, %c0_17] : memref<8x2x512xf32, #tpu.memory_space<vmem>>, vector<1x2x512xf32>
    %28 = vector.shape_cast %27 : vector<1x2x512xf32> to vector<2x512xf32>
    %29 = vector.shape_cast %26 : vector<2x512xf32> to vector<1x2x512xf32>
    tpu.vector_store %arg7[%c2, %c0_16, %c0_17], %29 {strides = array<i32>} : memref<8x2x512xf32, #tpu.memory_space<vmem>>, vector<1x2x512xf32>,
    %30 = vector.extract_strided_slice %25 {offsets = [0, 512], sizes = [2, 512], strides = [1, 1]} : vector<2x1024xf32> to vector<2x512xf32>
    %c2_18 = arith.constant 2 : index
    %c0_19 = arith.constant 0 : index
    %c0_20 = arith.constant 0 : index
    %31 = vector.load %arg8[%c2_18, %c0_19, %c0_20] : memref<8x2x512xf32, #tpu.memory_space<vmem>>, vector<1x2x512xf32>
    %32 = vector.shape_cast %31 : vector<1x2x512xf32> to vector<2x512xf32>
    %33 = vector.shape_cast %30 : vector<2x512xf32> to vector<1x2x512xf32>
    tpu.vector_store %arg8[%c2_18, %c0_19, %c0_20], %33 {strides = array<i32>} : memref<8x2x512xf32, #tpu.memory_space<vmem>>, vector<1x2x512xf32>,
    %34 = vector.extract_strided_slice %6 {offsets = [6, 0], sizes = [2, 1024], strides = [1, 1]} : vector<16x1024xf32> to vector<2x1024xf32>
    %35 = vector.extract_strided_slice %34 {offsets = [0, 0], sizes = [2, 512], strides = [1, 1]} : vector<2x1024xf32> to vector<2x512xf32>
    %c3 = arith.constant 3 : index
    %c0_21 = arith.constant 0 : index
    %c0_22 = arith.constant 0 : index
    %36 = vector.load %arg7[%c3, %c0_21, %c0_22] : memref<8x2x512xf32, #tpu.memory_space<vmem>>, vector<1x2x512xf32>
    %37 = vector.shape_cast %36 : vector<1x2x512xf32> to vector<2x512xf32>
    %38 = vector.shape_cast %35 : vector<2x512xf32> to vector<1x2x512xf32>
    tpu.vector_store %arg7[%c3, %c0_21, %c0_22], %38 {strides = array<i32>} : memref<8x2x512xf32, #tpu.memory_space<vmem>>, vector<1x2x512xf32>,
    %39 = vector.extract_strided_slice %34 {offsets = [0, 512], sizes = [2, 512], strides = [1, 1]} : vector<2x1024xf32> to vector<2x512xf32>
    %c3_23 = arith.constant 3 : index
    %c0_24 = arith.constant 0 : index
    %c0_25 = arith.constant 0 : index
    %40 = vector.load %arg8[%c3_23, %c0_24, %c0_25] : memref<8x2x512xf32, #tpu.memory_space<vmem>>, vector<1x2x512xf32>
    %41 = vector.shape_cast %40 : vector<1x2x512xf32> to vector<2x512xf32>
    %42 = vector.shape_cast %39 : vector<2x512xf32> to vector<1x2x512xf32>
    tpu.vector_store %arg8[%c3_23, %c0_24, %c0_25], %42 {strides = array<i32>} : memref<8x2x512xf32, #tpu.memory_space<vmem>>, vector<1x2x512xf32>,
    %43 = vector.extract_strided_slice %6 {offsets = [8, 0], sizes = [2, 1024], strides = [1, 1]} : vector<16x1024xf32> to vector<2x1024xf32>
    %44 = vector.extract_strided_slice %43 {offsets = [0, 0], sizes = [2, 512], strides = [1, 1]} : vector<2x1024xf32> to vector<2x512xf32>
    %c4 = arith.constant 4 : index
    %c0_26 = arith.constant 0 : index
    %c0_27 = arith.constant 0 : index
    %45 = vector.load %arg7[%c4, %c0_26, %c0_27] : memref<8x2x512xf32, #tpu.memory_space<vmem>>, vector<1x2x512xf32>
    %46 = vector.shape_cast %45 : vector<1x2x512xf32> to vector<2x512xf32>
    %47 = vector.shape_cast %44 : vector<2x512xf32> to vector<1x2x512xf32>
    tpu.vector_store %arg7[%c4, %c0_26, %c0_27], %47 {strides = array<i32>} : memref<8x2x512xf32, #tpu.memory_space<vmem>>, vector<1x2x512xf32>,
    %48 = vector.extract_strided_slice %43 {offsets = [0, 512], sizes = [2, 512], strides = [1, 1]} : vector<2x1024xf32> to vector<2x512xf32>
    %c4_28 = arith.constant 4 : index
    %c0_29 = arith.constant 0 : index
    %c0_30 = arith.constant 0 : index
    %49 = vector.load %arg8[%c4_28, %c0_29, %c0_30] : memref<8x2x512xf32, #tpu.memory_space<vmem>>, vector<1x2x512xf32>
    %50 = vector.shape_cast %49 : vector<1x2x512xf32> to vector<2x512xf32>
    %51 = vector.shape_cast %48 : vector<2x512xf32> to vector<1x2x512xf32>
    tpu.vector_store %arg8[%c4_28, %c0_29, %c0_30], %51 {strides = array<i32>} : memref<8x2x512xf32, #tpu.memory_space<vmem>>, vector<1x2x512xf32>,
    %52 = vector.extract_strided_slice %6 {offsets = [10, 0], sizes = [2, 1024], strides = [1, 1]} : vector<16x1024xf32> to vector<2x1024xf32>
    %53 = vector.extract_strided_slice %52 {offsets = [0, 0], sizes = [2, 512], strides = [1, 1]} : vector<2x1024xf32> to vector<2x512xf32>
    %c5 = arith.constant 5 : index
    %c0_31 = arith.constant 0 : index
    %c0_32 = arith.constant 0 : index
    %54 = vector.load %arg7[%c5, %c0_31, %c0_32] : memref<8x2x512xf32, #tpu.memory_space<vmem>>, vector<1x2x512xf32>
    %55 = vector.shape_cast %54 : vector<1x2x512xf32> to vector<2x512xf32>
    %56 = vector.shape_cast %53 : vector<2x512xf32> to vector<1x2x512xf32>
    tpu.vector_store %arg7[%c5, %c0_31, %c0_32], %56 {strides = array<i32>} : memref<8x2x512xf32, #tpu.memory_space<vmem>>, vector<1x2x512xf32>,
    %57 = vector.extract_strided_slice %52 {offsets = [0, 512], sizes = [2, 512], strides = [1, 1]} : vector<2x1024xf32> to vector<2x512xf32>
    %c5_33 = arith.constant 5 : index
    %c0_34 = arith.constant 0 : index
    %c0_35 = arith.constant 0 : index
    %58 = vector.load %arg8[%c5_33, %c0_34, %c0_35] : memref<8x2x512xf32, #tpu.memory_space<vmem>>, vector<1x2x512xf32>
    %59 = vector.shape_cast %58 : vector<1x2x512xf32> to vector<2x512xf32>
    %60 = vector.shape_cast %57 : vector<2x512xf32> to vector<1x2x512xf32>
    tpu.vector_store %arg8[%c5_33, %c0_34, %c0_35], %60 {strides = array<i32>} : memref<8x2x512xf32, #tpu.memory_space<vmem>>, vector<1x2x512xf32>,
    %61 = vector.extract_strided_slice %6 {offsets = [12, 0], sizes = [2, 1024], strides = [1, 1]} : vector<16x1024xf32> to vector<2x1024xf32>
    %62 = vector.extract_strided_slice %61 {offsets = [0, 0], sizes = [2, 512], strides = [1, 1]} : vector<2x1024xf32> to vector<2x512xf32>
    %c6 = arith.constant 6 : index
    %c0_36 = arith.constant 0 : index
    %c0_37 = arith.constant 0 : index
    %63 = vector.load %arg7[%c6, %c0_36, %c0_37] : memref<8x2x512xf32, #tpu.memory_space<vmem>>, vector<1x2x512xf32>
    %64 = vector.shape_cast %63 : vector<1x2x512xf32> to vector<2x512xf32>
    %65 = vector.shape_cast %62 : vector<2x512xf32> to vector<1x2x512xf32>
    tpu.vector_store %arg7[%c6, %c0_36, %c0_37], %65 {strides = array<i32>} : memref<8x2x512xf32, #tpu.memory_space<vmem>>, vector<1x2x512xf32>,
    %66 = vector.extract_strided_slice %61 {offsets = [0, 512], sizes = [2, 512], strides = [1, 1]} : vector<2x1024xf32> to vector<2x512xf32>
    %c6_38 = arith.constant 6 : index
    %c0_39 = arith.constant 0 : index
    %c0_40 = arith.constant 0 : index
    %67 = vector.load %arg8[%c6_38, %c0_39, %c0_40] : memref<8x2x512xf32, #tpu.memory_space<vmem>>, vector<1x2x512xf32>
    %68 = vector.shape_cast %67 : vector<1x2x512xf32> to vector<2x512xf32>
    %69 = vector.shape_cast %66 : vector<2x512xf32> to vector<1x2x512xf32>
    tpu.vector_store %arg8[%c6_38, %c0_39, %c0_40], %69 {strides = array<i32>} : memref<8x2x512xf32, #tpu.memory_space<vmem>>, vector<1x2x512xf32>,
    %70 = vector.extract_strided_slice %6 {offsets = [14, 0], sizes = [2, 1024], strides = [1, 1]} : vector<16x1024xf32> to vector<2x1024xf32>
    %71 = vector.extract_strided_slice %70 {offsets = [0, 0], sizes = [2, 512], strides = [1, 1]} : vector<2x1024xf32> to vector<2x512xf32>
    %c7 = arith.constant 7 : index
    %c0_41 = arith.constant 0 : index
    %c0_42 = arith.constant 0 : index
    %72 = vector.load %arg7[%c7, %c0_41, %c0_42] : memref<8x2x512xf32, #tpu.memory_space<vmem>>, vector<1x2x512xf32>
    %73 = vector.shape_cast %72 : vector<1x2x512xf32> to vector<2x512xf32>
    %74 = vector.shape_cast %71 : vector<2x512xf32> to vector<1x2x512xf32>
    tpu.vector_store %arg7[%c7, %c0_41, %c0_42], %74 {strides = array<i32>} : memref<8x2x512xf32, #tpu.memory_space<vmem>>, vector<1x2x512xf32>,
    %75 = vector.extract_strided_slice %70 {offsets = [0, 512], sizes = [2, 512], strides = [1, 1]} : vector<2x1024xf32> to vector<2x512xf32>
    %c7_43 = arith.constant 7 : index
    %c0_44 = arith.constant 0 : index
    %c0_45 = arith.constant 0 : index
    %76 = vector.load %arg8[%c7_43, %c0_44, %c0_45] : memref<8x2x512xf32, #tpu.memory_space<vmem>>, vector<1x2x512xf32>
    %77 = vector.shape_cast %76 : vector<1x2x512xf32> to vector<2x512xf32>
    %78 = vector.shape_cast %75 : vector<2x512xf32> to vector<1x2x512xf32>
    tpu.vector_store %arg8[%c7_43, %c0_44, %c0_45], %78 {strides = array<i32>} : memref<8x2x512xf32, #tpu.memory_space<vmem>>, vector<1x2x512xf32>,
    %cst_46 = arith.constant 0.000000e+00 : f32
    %79 = vector.broadcast %cst_46 : f32 to vector<4x128xf32>
    %c0_47 = arith.constant 0 : index
    %c0_48 = arith.constant 0 : index
    %80 = vector.load %arg9[%c0_47, %c0_48] : memref<4x128xf32, #tpu.memory_space<vmem>>, vector<4x128xf32>
    tpu.vector_store %arg9[%c0_47, %c0_48], %79 {strides = array<i32>} : memref<4x128xf32, #tpu.memory_space<vmem>>, vector<4x128xf32>,
    %cst_49 = arith.constant 0.000000e+00 : f32
    %81 = vector.broadcast %cst_49 : f32 to vector<4x128xf32>
    %c0_50 = arith.constant 0 : index
    %c0_51 = arith.constant 0 : index
    %82 = vector.load %arg10[%c0_50, %c0_51] : memref<4x128xf32, #tpu.memory_space<vmem>>, vector<4x128xf32>
    tpu.vector_store %arg10[%c0_50, %c0_51], %81 {strides = array<i32>} : memref<4x128xf32, #tpu.memory_space<vmem>>, vector<4x128xf32>,
    %c0_52 = arith.constant 0 : index
    %c0_53 = arith.constant 0 : index
    %83 = vector.load %arg2[%c0_52, %c0_53] : memref<128x1024xbf16, #tpu.memory_space<vmem>>, vector<128x1024xbf16>
    %c0_i32 = arith.constant 0 : i32
    %c7_i32 = arith.constant 7 : i32
    %84 = arith.subi %c7_i32, %c0_i32 : i32
    %c0_54 = arith.constant 0 : index
    %c0_55 = arith.constant 0 : index
    %85 = vector.load %arg9[%c0_54, %c0_55] : memref<4x128xf32, #tpu.memory_space<vmem>>, vector<4x128xf32>
    %c0_56 = arith.constant 0 : index
    %c0_57 = arith.constant 0 : index
    %86 = vector.load %arg10[%c0_56, %c0_57] : memref<4x128xf32, #tpu.memory_space<vmem>>, vector<4x128xf32>
    %87 = arith.truncf %85 : vector<4x128xf32> to vector<4x128xbf16>
    %cst_58 = arith.constant dense<0.000000e+00> : vector<4x1024xf32>
    %88 = tpu.matmul %87, %83, %cst_58 {dimension_numbers = #tpu.dot_dimension_numbers<[1], [0], [0], [1], [0, 0, 1, 1], [], []>} : vector<4x128xbf16>, vector<128x1024xbf16>, vector<4x1024xf32> -> vector<4x1024xf32>
    %89 = arith.index_cast %c0_i32 : i32 to index
    %c0_59 = arith.constant 0 : index
    %c0_60 = arith.constant 0 : index
    %90 = vector.load %arg7[%89, %c0_59, %c0_60] : memref<8x2x512xf32, #tpu.memory_space<vmem>>, vector<1x2x512xf32>
    %91 = vector.shape_cast %90 : vector<1x2x512xf32> to vector<2x512xf32>
    %92 = vector.extract_strided_slice %88 {offsets = [0, 0], sizes = [2, 512], strides = [1, 1]} : vector<4x1024xf32> to vector<2x512xf32>
    %93 = arith.addf %91, %92 : vector<2x512xf32>
    %94 = arith.index_cast %84 : i32 to index
    %c0_61 = arith.constant 0 : index
    %c0_62 = arith.constant 0 : index
    %95 = vector.load %arg8[%94, %c0_61, %c0_62] : memref<8x2x512xf32, #tpu.memory_space<vmem>>, vector<1x2x512xf32>
    %96 = vector.shape_cast %95 : vector<1x2x512xf32> to vector<2x512xf32>
    %97 = vector.extract_strided_slice %88 {offsets = [2, 512], sizes = [2, 512], strides = [1, 1]} : vector<4x1024xf32> to vector<2x512xf32>
    %98 = arith.addf %96, %97 : vector<2x512xf32>
    %99 = tpu.concatenate %93, %98 in 0 : vector<2x512xf32>, vector<2x512xf32> -> vector<4x512xf32>
    %100 = vector.extract_strided_slice %99 {offsets = [0, 0], sizes = [4, 128], strides = [1, 1]} : vector<4x512xf32> to vector<4x128xf32>
    %101 = arith.negf %100 : vector<4x128xf32>
    %102 = math.exp %101 : vector<4x128xf32>
    %cst_63 = arith.constant 1.000000e+00 : f32
    %103 = vector.broadcast %cst_63 : f32 to vector<4x128xf32>
    %104 = arith.addf %103, %102 : vector<4x128xf32>
    %105 = arith.divf %103, %104 : vector<4x128xf32>
    %106 = vector.extract_strided_slice %99 {offsets = [0, 128], sizes = [4, 128], strides = [1, 1]} : vector<4x512xf32> to vector<4x128xf32>
    %107 = arith.negf %106 : vector<4x128xf32>
    %108 = math.exp %107 : vector<4x128xf32>
    %cst_64 = arith.constant 1.000000e+00 : f32
    %109 = vector.broadcast %cst_64 : f32 to vector<4x128xf32>
    %110 = arith.addf %109, %108 : vector<4x128xf32>
    %111 = arith.divf %109, %110 : vector<4x128xf32>
    %112 = vector.extract_strided_slice %99 {offsets = [0, 256], sizes = [4, 128], strides = [1, 1]} : vector<4x512xf32> to vector<4x128xf32>
    %113 = math.tanh %112 : vector<4x128xf32>
    %114 = vector.extract_strided_slice %99 {offsets = [0, 384], sizes = [4, 128], strides = [1, 1]} : vector<4x512xf32> to vector<4x128xf32>
    %115 = arith.negf %114 : vector<4x128xf32>
    %116 = math.exp %115 : vector<4x128xf32>
    %cst_65 = arith.constant 1.000000e+00 : f32
    %117 = vector.broadcast %cst_65 : f32 to vector<4x128xf32>
    %118 = arith.addf %117, %116 : vector<4x128xf32>
    %119 = arith.divf %117, %118 : vector<4x128xf32>
    %120 = arith.mulf %111, %86 : vector<4x128xf32>
    %121 = arith.mulf %105, %113 : vector<4x128xf32>
    %122 = arith.addf %120, %121 : vector<4x128xf32>
    %123 = math.tanh %122 : vector<4x128xf32>
    %124 = arith.mulf %119, %123 : vector<4x128xf32>
    %c0_66 = arith.constant 0 : index
    %c0_67 = arith.constant 0 : index
    %125 = vector.load %arg10[%c0_66, %c0_67] : memref<4x128xf32, #tpu.memory_space<vmem>>, vector<4x128xf32>
    tpu.vector_store %arg10[%c0_66, %c0_67], %122 {strides = array<i32>} : memref<4x128xf32, #tpu.memory_space<vmem>>, vector<4x128xf32>,
    %c0_68 = arith.constant 0 : index
    %c0_69 = arith.constant 0 : index
    %126 = vector.load %arg9[%c0_68, %c0_69] : memref<4x128xf32, #tpu.memory_space<vmem>>, vector<4x128xf32>
    tpu.vector_store %arg9[%c0_68, %c0_69], %124 {strides = array<i32>} : memref<4x128xf32, #tpu.memory_space<vmem>>, vector<4x128xf32>,
    %127 = vector.extract_strided_slice %124 {offsets = [0, 0], sizes = [2, 128], strides = [1, 1]} : vector<4x128xf32> to vector<2x128xf32>
    %128 = arith.index_cast %c0_i32 : i32 to index
    %c0_70 = arith.constant 0 : index
    %c0_71 = arith.constant 0 : index
    %129 = vector.load %arg4[%128, %c0_70, %c0_71] : memref<8x2x256xf32, #tpu.memory_space<vmem>>, vector<1x2x128xf32>
    %130 = vector.shape_cast %129 : vector<1x2x128xf32> to vector<2x128xf32>
    %131 = vector.shape_cast %127 : vector<2x128xf32> to vector<1x2x128xf32>
    tpu.vector_store %arg4[%128, %c0_70, %c0_71], %131 {strides = array<i32>} : memref<8x2x256xf32, #tpu.memory_space<vmem>>, vector<1x2x128xf32>,
    %132 = vector.extract_strided_slice %124 {offsets = [2, 0], sizes = [2, 128], strides = [1, 1]} : vector<4x128xf32> to vector<2x128xf32>
    %133 = arith.index_cast %84 : i32 to index
    %c0_72 = arith.constant 0 : index
    %c128 = arith.constant 128 : index
    %134 = vector.load %arg4[%133, %c0_72, %c128] : memref<8x2x256xf32, #tpu.memory_space<vmem>>, vector<1x2x128xf32>
    %135 = vector.shape_cast %134 : vector<1x2x128xf32> to vector<2x128xf32>
    %136 = vector.shape_cast %132 : vector<2x128xf32> to vector<1x2x128xf32>
    tpu.vector_store %arg4[%133, %c0_72, %c128], %136 {strides = array<i32>} : memref<8x2x256xf32, #tpu.memory_space<vmem>>, vector<1x2x128xf32>,
    %c1_i32 = arith.constant 1 : i32
    %c7_i32_73 = arith.constant 7 : i32
    %137 = arith.subi %c7_i32_73, %c1_i32 : i32
    %c0_74 = arith.constant 0 : index
    %c0_75 = arith.constant 0 : index
    %138 = vector.load %arg9[%c0_74, %c0_75] : memref<4x128xf32, #tpu.memory_space<vmem>>, vector<4x128xf32>
    %c0_76 = arith.constant 0 : index
    %c0_77 = arith.constant 0 : index
    %139 = vector.load %arg10[%c0_76, %c0_77] : memref<4x128xf32, #tpu.memory_space<vmem>>, vector<4x128xf32>
    %140 = arith.truncf %138 : vector<4x128xf32> to vector<4x128xbf16>
    %cst_78 = arith.constant dense<0.000000e+00> : vector<4x1024xf32>
    %141 = tpu.matmul %140, %83, %cst_78 {dimension_numbers = #tpu.dot_dimension_numbers<[1], [0], [0], [1], [0, 0, 1, 1], [], []>} : vector<4x128xbf16>, vector<128x1024xbf16>, vector<4x1024xf32> -> vector<4x1024xf32>
    %142 = arith.index_cast %c1_i32 : i32 to index
    %c0_79 = arith.constant 0 : index
    %c0_80 = arith.constant 0 : index
    %143 = vector.load %arg7[%142, %c0_79, %c0_80] : memref<8x2x512xf32, #tpu.memory_space<vmem>>, vector<1x2x512xf32>
    %144 = vector.shape_cast %143 : vector<1x2x512xf32> to vector<2x512xf32>
    %145 = vector.extract_strided_slice %141 {offsets = [0, 0], sizes = [2, 512], strides = [1, 1]} : vector<4x1024xf32> to vector<2x512xf32>
    %146 = arith.addf %144, %145 : vector<2x512xf32>
    %147 = arith.index_cast %137 : i32 to index
    %c0_81 = arith.constant 0 : index
    %c0_82 = arith.constant 0 : index
    %148 = vector.load %arg8[%147, %c0_81, %c0_82] : memref<8x2x512xf32, #tpu.memory_space<vmem>>, vector<1x2x512xf32>
    %149 = vector.shape_cast %148 : vector<1x2x512xf32> to vector<2x512xf32>
    %150 = vector.extract_strided_slice %141 {offsets = [2, 512], sizes = [2, 512], strides = [1, 1]} : vector<4x1024xf32> to vector<2x512xf32>
    %151 = arith.addf %149, %150 : vector<2x512xf32>
    %152 = tpu.concatenate %146, %151 in 0 : vector<2x512xf32>, vector<2x512xf32> -> vector<4x512xf32>
    %153 = vector.extract_strided_slice %152 {offsets = [0, 0], sizes = [4, 128], strides = [1, 1]} : vector<4x512xf32> to vector<4x128xf32>
    %154 = arith.negf %153 : vector<4x128xf32>
    %155 = math.exp %154 : vector<4x128xf32>
    %cst_83 = arith.constant 1.000000e+00 : f32
    %156 = vector.broadcast %cst_83 : f32 to vector<4x128xf32>
    %157 = arith.addf %156, %155 : vector<4x128xf32>
    %158 = arith.divf %156, %157 : vector<4x128xf32>
    %159 = vector.extract_strided_slice %152 {offsets = [0, 128], sizes = [4, 128], strides = [1, 1]} : vector<4x512xf32> to vector<4x128xf32>
    %160 = arith.negf %159 : vector<4x128xf32>
    %161 = math.exp %160 : vector<4x128xf32>
    %cst_84 = arith.constant 1.000000e+00 : f32
    %162 = vector.broadcast %cst_84 : f32 to vector<4x128xf32>
    %163 = arith.addf %162, %161 : vector<4x128xf32>
    %164 = arith.divf %162, %163 : vector<4x128xf32>
    %165 = vector.extract_strided_slice %152 {offsets = [0, 256], sizes = [4, 128], strides = [1, 1]} : vector<4x512xf32> to vector<4x128xf32>
    %166 = math.tanh %165 : vector<4x128xf32>
    %167 = vector.extract_strided_slice %152 {offsets = [0, 384], sizes = [4, 128], strides = [1, 1]} : vector<4x512xf32> to vector<4x128xf32>
    %168 = arith.negf %167 : vector<4x128xf32>
    %169 = math.exp %168 : vector<4x128xf32>
    %cst_85 = arith.constant 1.000000e+00 : f32
    %170 = vector.broadcast %cst_85 : f32 to vector<4x128xf32>
    %171 = arith.addf %170, %169 : vector<4x128xf32>
    %172 = arith.divf %170, %171 : vector<4x128xf32>
    %173 = arith.mulf %164, %139 : vector<4x128xf32>
    %174 = arith.mulf %158, %166 : vector<4x128xf32>
    %175 = arith.addf %173, %174 : vector<4x128xf32>
    %176 = math.tanh %175 : vector<4x128xf32>
    %177 = arith.mulf %172, %176 : vector<4x128xf32>
    %c0_86 = arith.constant 0 : index
    %c0_87 = arith.constant 0 : index
    %178 = vector.load %arg10[%c0_86, %c0_87] : memref<4x128xf32, #tpu.memory_space<vmem>>, vector<4x128xf32>
    tpu.vector_store %arg10[%c0_86, %c0_87], %175 {strides = array<i32>} : memref<4x128xf32, #tpu.memory_space<vmem>>, vector<4x128xf32>,
    %c0_88 = arith.constant 0 : index
    %c0_89 = arith.constant 0 : index
    %179 = vector.load %arg9[%c0_88, %c0_89] : memref<4x128xf32, #tpu.memory_space<vmem>>, vector<4x128xf32>
    tpu.vector_store %arg9[%c0_88, %c0_89], %177 {strides = array<i32>} : memref<4x128xf32, #tpu.memory_space<vmem>>, vector<4x128xf32>,
    %180 = vector.extract_strided_slice %177 {offsets = [0, 0], sizes = [2, 128], strides = [1, 1]} : vector<4x128xf32> to vector<2x128xf32>
    %181 = arith.index_cast %c1_i32 : i32 to index
    %c0_90 = arith.constant 0 : index
    %c0_91 = arith.constant 0 : index
    %182 = vector.load %arg4[%181, %c0_90, %c0_91] : memref<8x2x256xf32, #tpu.memory_space<vmem>>, vector<1x2x128xf32>
    %183 = vector.shape_cast %182 : vector<1x2x128xf32> to vector<2x128xf32>
    %184 = vector.shape_cast %180 : vector<2x128xf32> to vector<1x2x128xf32>
    tpu.vector_store %arg4[%181, %c0_90, %c0_91], %184 {strides = array<i32>} : memref<8x2x256xf32, #tpu.memory_space<vmem>>, vector<1x2x128xf32>,
    %185 = vector.extract_strided_slice %177 {offsets = [2, 0], sizes = [2, 128], strides = [1, 1]} : vector<4x128xf32> to vector<2x128xf32>
    %186 = arith.index_cast %137 : i32 to index
    %c0_92 = arith.constant 0 : index
    %c128_93 = arith.constant 128 : index
    %187 = vector.load %arg4[%186, %c0_92, %c128_93] : memref<8x2x256xf32, #tpu.memory_space<vmem>>, vector<1x2x128xf32>
    %188 = vector.shape_cast %187 : vector<1x2x128xf32> to vector<2x128xf32>
    %189 = vector.shape_cast %185 : vector<2x128xf32> to vector<1x2x128xf32>
    tpu.vector_store %arg4[%186, %c0_92, %c128_93], %189 {strides = array<i32>} : memref<8x2x256xf32, #tpu.memory_space<vmem>>, vector<1x2x128xf32>,
    %c2_i32 = arith.constant 2 : i32
    %c7_i32_94 = arith.constant 7 : i32
    %190 = arith.subi %c7_i32_94, %c2_i32 : i32
    %c0_95 = arith.constant 0 : index
    %c0_96 = arith.constant 0 : index
    %191 = vector.load %arg9[%c0_95, %c0_96] : memref<4x128xf32, #tpu.memory_space<vmem>>, vector<4x128xf32>
    %c0_97 = arith.constant 0 : index
    %c0_98 = arith.constant 0 : index
    %192 = vector.load %arg10[%c0_97, %c0_98] : memref<4x128xf32, #tpu.memory_space<vmem>>, vector<4x128xf32>
    %193 = arith.truncf %191 : vector<4x128xf32> to vector<4x128xbf16>
    %cst_99 = arith.constant dense<0.000000e+00> : vector<4x1024xf32>
    %194 = tpu.matmul %193, %83, %cst_99 {dimension_numbers = #tpu.dot_dimension_numbers<[1], [0], [0], [1], [0, 0, 1, 1], [], []>} : vector<4x128xbf16>, vector<128x1024xbf16>, vector<4x1024xf32> -> vector<4x1024xf32>
    %195 = arith.index_cast %c2_i32 : i32 to index
    %c0_100 = arith.constant 0 : index
    %c0_101 = arith.constant 0 : index
    %196 = vector.load %arg7[%195, %c0_100, %c0_101] : memref<8x2x512xf32, #tpu.memory_space<vmem>>, vector<1x2x512xf32>
    %197 = vector.shape_cast %196 : vector<1x2x512xf32> to vector<2x512xf32>
    %198 = vector.extract_strided_slice %194 {offsets = [0, 0], sizes = [2, 512], strides = [1, 1]} : vector<4x1024xf32> to vector<2x512xf32>
    %199 = arith.addf %197, %198 : vector<2x512xf32>
    %200 = arith.index_cast %190 : i32 to index
    %c0_102 = arith.constant 0 : index
    %c0_103 = arith.constant 0 : index
    %201 = vector.load %arg8[%200, %c0_102, %c0_103] : memref<8x2x512xf32, #tpu.memory_space<vmem>>, vector<1x2x512xf32>
    %202 = vector.shape_cast %201 : vector<1x2x512xf32> to vector<2x512xf32>
    %203 = vector.extract_strided_slice %194 {offsets = [2, 512], sizes = [2, 512], strides = [1, 1]} : vector<4x1024xf32> to vector<2x512xf32>
    %204 = arith.addf %202, %203 : vector<2x512xf32>
    %205 = tpu.concatenate %199, %204 in 0 : vector<2x512xf32>, vector<2x512xf32> -> vector<4x512xf32>
    %206 = vector.extract_strided_slice %205 {offsets = [0, 0], sizes = [4, 128], strides = [1, 1]} : vector<4x512xf32> to vector<4x128xf32>
    %207 = arith.negf %206 : vector<4x128xf32>
    %208 = math.exp %207 : vector<4x128xf32>
    %cst_104 = arith.constant 1.000000e+00 : f32
    %209 = vector.broadcast %cst_104 : f32 to vector<4x128xf32>
    %210 = arith.addf %209, %208 : vector<4x128xf32>
    %211 = arith.divf %209, %210 : vector<4x128xf32>
    %212 = vector.extract_strided_slice %205 {offsets = [0, 128], sizes = [4, 128], strides = [1, 1]} : vector<4x512xf32> to vector<4x128xf32>
    %213 = arith.negf %212 : vector<4x128xf32>
    %214 = math.exp %213 : vector<4x128xf32>
    %cst_105 = arith.constant 1.000000e+00 : f32
    %215 = vector.broadcast %cst_105 : f32 to vector<4x128xf32>
    %216 = arith.addf %215, %214 : vector<4x128xf32>
    %217 = arith.divf %215, %216 : vector<4x128xf32>
    %218 = vector.extract_strided_slice %205 {offsets = [0, 256], sizes = [4, 128], strides = [1, 1]} : vector<4x512xf32> to vector<4x128xf32>
    %219 = math.tanh %218 : vector<4x128xf32>
    %220 = vector.extract_strided_slice %205 {offsets = [0, 384], sizes = [4, 128], strides = [1, 1]} : vector<4x512xf32> to vector<4x128xf32>
    %221 = arith.negf %220 : vector<4x128xf32>
    %222 = math.exp %221 : vector<4x128xf32>
    %cst_106 = arith.constant 1.000000e+00 : f32
    %223 = vector.broadcast %cst_106 : f32 to vector<4x128xf32>
    %224 = arith.addf %223, %222 : vector<4x128xf32>
    %225 = arith.divf %223, %224 : vector<4x128xf32>
    %226 = arith.mulf %217, %192 : vector<4x128xf32>
    %227 = arith.mulf %211, %219 : vector<4x128xf32>
    %228 = arith.addf %226, %227 : vector<4x128xf32>
    %229 = math.tanh %228 : vector<4x128xf32>
    %230 = arith.mulf %225, %229 : vector<4x128xf32>
    %c0_107 = arith.constant 0 : index
    %c0_108 = arith.constant 0 : index
    %231 = vector.load %arg10[%c0_107, %c0_108] : memref<4x128xf32, #tpu.memory_space<vmem>>, vector<4x128xf32>
    tpu.vector_store %arg10[%c0_107, %c0_108], %228 {strides = array<i32>} : memref<4x128xf32, #tpu.memory_space<vmem>>, vector<4x128xf32>,
    %c0_109 = arith.constant 0 : index
    %c0_110 = arith.constant 0 : index
    %232 = vector.load %arg9[%c0_109, %c0_110] : memref<4x128xf32, #tpu.memory_space<vmem>>, vector<4x128xf32>
    tpu.vector_store %arg9[%c0_109, %c0_110], %230 {strides = array<i32>} : memref<4x128xf32, #tpu.memory_space<vmem>>, vector<4x128xf32>,
    %233 = vector.extract_strided_slice %230 {offsets = [0, 0], sizes = [2, 128], strides = [1, 1]} : vector<4x128xf32> to vector<2x128xf32>
    %234 = arith.index_cast %c2_i32 : i32 to index
    %c0_111 = arith.constant 0 : index
    %c0_112 = arith.constant 0 : index
    %235 = vector.load %arg4[%234, %c0_111, %c0_112] : memref<8x2x256xf32, #tpu.memory_space<vmem>>, vector<1x2x128xf32>
    %236 = vector.shape_cast %235 : vector<1x2x128xf32> to vector<2x128xf32>
    %237 = vector.shape_cast %233 : vector<2x128xf32> to vector<1x2x128xf32>
    tpu.vector_store %arg4[%234, %c0_111, %c0_112], %237 {strides = array<i32>} : memref<8x2x256xf32, #tpu.memory_space<vmem>>, vector<1x2x128xf32>,
    %238 = vector.extract_strided_slice %230 {offsets = [2, 0], sizes = [2, 128], strides = [1, 1]} : vector<4x128xf32> to vector<2x128xf32>
    %239 = arith.index_cast %190 : i32 to index
    %c0_113 = arith.constant 0 : index
    %c128_114 = arith.constant 128 : index
    %240 = vector.load %arg4[%239, %c0_113, %c128_114] : memref<8x2x256xf32, #tpu.memory_space<vmem>>, vector<1x2x128xf32>
    %241 = vector.shape_cast %240 : vector<1x2x128xf32> to vector<2x128xf32>
    %242 = vector.shape_cast %238 : vector<2x128xf32> to vector<1x2x128xf32>
    tpu.vector_store %arg4[%239, %c0_113, %c128_114], %242 {strides = array<i32>} : memref<8x2x256xf32, #tpu.memory_space<vmem>>, vector<1x2x128xf32>,
    %c3_i32 = arith.constant 3 : i32
    %c7_i32_115 = arith.constant 7 : i32
    %243 = arith.subi %c7_i32_115, %c3_i32 : i32
    %c0_116 = arith.constant 0 : index
    %c0_117 = arith.constant 0 : index
    %244 = vector.load %arg9[%c0_116, %c0_117] : memref<4x128xf32, #tpu.memory_space<vmem>>, vector<4x128xf32>
    %c0_118 = arith.constant 0 : index
    %c0_119 = arith.constant 0 : index
    %245 = vector.load %arg10[%c0_118, %c0_119] : memref<4x128xf32, #tpu.memory_space<vmem>>, vector<4x128xf32>
    %246 = arith.truncf %244 : vector<4x128xf32> to vector<4x128xbf16>
    %cst_120 = arith.constant dense<0.000000e+00> : vector<4x1024xf32>
    %247 = tpu.matmul %246, %83, %cst_120 {dimension_numbers = #tpu.dot_dimension_numbers<[1], [0], [0], [1], [0, 0, 1, 1], [], []>} : vector<4x128xbf16>, vector<128x1024xbf16>, vector<4x1024xf32> -> vector<4x1024xf32>
    %248 = arith.index_cast %c3_i32 : i32 to index
    %c0_121 = arith.constant 0 : index
    %c0_122 = arith.constant 0 : index
    %249 = vector.load %arg7[%248, %c0_121, %c0_122] : memref<8x2x512xf32, #tpu.memory_space<vmem>>, vector<1x2x512xf32>
    %250 = vector.shape_cast %249 : vector<1x2x512xf32> to vector<2x512xf32>
    %251 = vector.extract_strided_slice %247 {offsets = [0, 0], sizes = [2, 512], strides = [1, 1]} : vector<4x1024xf32> to vector<2x512xf32>
    %252 = arith.addf %250, %251 : vector<2x512xf32>
    %253 = arith.index_cast %243 : i32 to index
    %c0_123 = arith.constant 0 : index
    %c0_124 = arith.constant 0 : index
    %254 = vector.load %arg8[%253, %c0_123, %c0_124] : memref<8x2x512xf32, #tpu.memory_space<vmem>>, vector<1x2x512xf32>
    %255 = vector.shape_cast %254 : vector<1x2x512xf32> to vector<2x512xf32>
    %256 = vector.extract_strided_slice %247 {offsets = [2, 512], sizes = [2, 512], strides = [1, 1]} : vector<4x1024xf32> to vector<2x512xf32>
    %257 = arith.addf %255, %256 : vector<2x512xf32>
    %258 = tpu.concatenate %252, %257 in 0 : vector<2x512xf32>, vector<2x512xf32> -> vector<4x512xf32>
    %259 = vector.extract_strided_slice %258 {offsets = [0, 0], sizes = [4, 128], strides = [1, 1]} : vector<4x512xf32> to vector<4x128xf32>
    %260 = arith.negf %259 : vector<4x128xf32>
    %261 = math.exp %260 : vector<4x128xf32>
    %cst_125 = arith.constant 1.000000e+00 : f32
    %262 = vector.broadcast %cst_125 : f32 to vector<4x128xf32>
    %263 = arith.addf %262, %261 : vector<4x128xf32>
    %264 = arith.divf %262, %263 : vector<4x128xf32>
    %265 = vector.extract_strided_slice %258 {offsets = [0, 128], sizes = [4, 128], strides = [1, 1]} : vector<4x512xf32> to vector<4x128xf32>
    %266 = arith.negf %265 : vector<4x128xf32>
    %267 = math.exp %266 : vector<4x128xf32>
    %cst_126 = arith.constant 1.000000e+00 : f32
    %268 = vector.broadcast %cst_126 : f32 to vector<4x128xf32>
    %269 = arith.addf %268, %267 : vector<4x128xf32>
    %270 = arith.divf %268, %269 : vector<4x128xf32>
    %271 = vector.extract_strided_slice %258 {offsets = [0, 256], sizes = [4, 128], strides = [1, 1]} : vector<4x512xf32> to vector<4x128xf32>
    %272 = math.tanh %271 : vector<4x128xf32>
    %273 = vector.extract_strided_slice %258 {offsets = [0, 384], sizes = [4, 128], strides = [1, 1]} : vector<4x512xf32> to vector<4x128xf32>
    %274 = arith.negf %273 : vector<4x128xf32>
    %275 = math.exp %274 : vector<4x128xf32>
    %cst_127 = arith.constant 1.000000e+00 : f32
    %276 = vector.broadcast %cst_127 : f32 to vector<4x128xf32>
    %277 = arith.addf %276, %275 : vector<4x128xf32>
    %278 = arith.divf %276, %277 : vector<4x128xf32>
    %279 = arith.mulf %270, %245 : vector<4x128xf32>
    %280 = arith.mulf %264, %272 : vector<4x128xf32>
    %281 = arith.addf %279, %280 : vector<4x128xf32>
    %282 = math.tanh %281 : vector<4x128xf32>
    %283 = arith.mulf %278, %282 : vector<4x128xf32>
    %c0_128 = arith.constant 0 : index
    %c0_129 = arith.constant 0 : index
    %284 = vector.load %arg10[%c0_128, %c0_129] : memref<4x128xf32, #tpu.memory_space<vmem>>, vector<4x128xf32>
    tpu.vector_store %arg10[%c0_128, %c0_129], %281 {strides = array<i32>} : memref<4x128xf32, #tpu.memory_space<vmem>>, vector<4x128xf32>,
    %c0_130 = arith.constant 0 : index
    %c0_131 = arith.constant 0 : index
    %285 = vector.load %arg9[%c0_130, %c0_131] : memref<4x128xf32, #tpu.memory_space<vmem>>, vector<4x128xf32>
    tpu.vector_store %arg9[%c0_130, %c0_131], %283 {strides = array<i32>} : memref<4x128xf32, #tpu.memory_space<vmem>>, vector<4x128xf32>,
    %286 = vector.extract_strided_slice %283 {offsets = [0, 0], sizes = [2, 128], strides = [1, 1]} : vector<4x128xf32> to vector<2x128xf32>
    %287 = arith.index_cast %c3_i32 : i32 to index
    %c0_132 = arith.constant 0 : index
    %c0_133 = arith.constant 0 : index
    %288 = vector.load %arg4[%287, %c0_132, %c0_133] : memref<8x2x256xf32, #tpu.memory_space<vmem>>, vector<1x2x128xf32>
    %289 = vector.shape_cast %288 : vector<1x2x128xf32> to vector<2x128xf32>
    %290 = vector.shape_cast %286 : vector<2x128xf32> to vector<1x2x128xf32>
    tpu.vector_store %arg4[%287, %c0_132, %c0_133], %290 {strides = array<i32>} : memref<8x2x256xf32, #tpu.memory_space<vmem>>, vector<1x2x128xf32>,
    %291 = vector.extract_strided_slice %283 {offsets = [2, 0], sizes = [2, 128], strides = [1, 1]} : vector<4x128xf32> to vector<2x128xf32>
    %292 = arith.index_cast %243 : i32 to index
    %c0_134 = arith.constant 0 : index
    %c128_135 = arith.constant 128 : index
    %293 = vector.load %arg4[%292, %c0_134, %c128_135] : memref<8x2x256xf32, #tpu.memory_space<vmem>>, vector<1x2x128xf32>
    %294 = vector.shape_cast %293 : vector<1x2x128xf32> to vector<2x128xf32>
    %295 = vector.shape_cast %291 : vector<2x128xf32> to vector<1x2x128xf32>
    tpu.vector_store %arg4[%292, %c0_134, %c128_135], %295 {strides = array<i32>} : memref<8x2x256xf32, #tpu.memory_space<vmem>>, vector<1x2x128xf32>,
    %c4_i32 = arith.constant 4 : i32
    %c7_i32_136 = arith.constant 7 : i32
    %296 = arith.subi %c7_i32_136, %c4_i32 : i32
    %c0_137 = arith.constant 0 : index
    %c0_138 = arith.constant 0 : index
    %297 = vector.load %arg9[%c0_137, %c0_138] : memref<4x128xf32, #tpu.memory_space<vmem>>, vector<4x128xf32>
    %c0_139 = arith.constant 0 : index
    %c0_140 = arith.constant 0 : index
    %298 = vector.load %arg10[%c0_139, %c0_140] : memref<4x128xf32, #tpu.memory_space<vmem>>, vector<4x128xf32>
    %299 = arith.truncf %297 : vector<4x128xf32> to vector<4x128xbf16>
    %cst_141 = arith.constant dense<0.000000e+00> : vector<4x1024xf32>
    %300 = tpu.matmul %299, %83, %cst_141 {dimension_numbers = #tpu.dot_dimension_numbers<[1], [0], [0], [1], [0, 0, 1, 1], [], []>} : vector<4x128xbf16>, vector<128x1024xbf16>, vector<4x1024xf32> -> vector<4x1024xf32>
    %301 = arith.index_cast %c4_i32 : i32 to index
    %c0_142 = arith.constant 0 : index
    %c0_143 = arith.constant 0 : index
    %302 = vector.load %arg7[%301, %c0_142, %c0_143] : memref<8x2x512xf32, #tpu.memory_space<vmem>>, vector<1x2x512xf32>
    %303 = vector.shape_cast %302 : vector<1x2x512xf32> to vector<2x512xf32>
    %304 = vector.extract_strided_slice %300 {offsets = [0, 0], sizes = [2, 512], strides = [1, 1]} : vector<4x1024xf32> to vector<2x512xf32>
    %305 = arith.addf %303, %304 : vector<2x512xf32>
    %306 = arith.index_cast %296 : i32 to index
    %c0_144 = arith.constant 0 : index
    %c0_145 = arith.constant 0 : index
    %307 = vector.load %arg8[%306, %c0_144, %c0_145] : memref<8x2x512xf32, #tpu.memory_space<vmem>>, vector<1x2x512xf32>
    %308 = vector.shape_cast %307 : vector<1x2x512xf32> to vector<2x512xf32>
    %309 = vector.extract_strided_slice %300 {offsets = [2, 512], sizes = [2, 512], strides = [1, 1]} : vector<4x1024xf32> to vector<2x512xf32>
    %310 = arith.addf %308, %309 : vector<2x512xf32>
    %311 = tpu.concatenate %305, %310 in 0 : vector<2x512xf32>, vector<2x512xf32> -> vector<4x512xf32>
    %312 = vector.extract_strided_slice %311 {offsets = [0, 0], sizes = [4, 128], strides = [1, 1]} : vector<4x512xf32> to vector<4x128xf32>
    %313 = arith.negf %312 : vector<4x128xf32>
    %314 = math.exp %313 : vector<4x128xf32>
    %cst_146 = arith.constant 1.000000e+00 : f32
    %315 = vector.broadcast %cst_146 : f32 to vector<4x128xf32>
    %316 = arith.addf %315, %314 : vector<4x128xf32>
    %317 = arith.divf %315, %316 : vector<4x128xf32>
    %318 = vector.extract_strided_slice %311 {offsets = [0, 128], sizes = [4, 128], strides = [1, 1]} : vector<4x512xf32> to vector<4x128xf32>
    %319 = arith.negf %318 : vector<4x128xf32>
    %320 = math.exp %319 : vector<4x128xf32>
    %cst_147 = arith.constant 1.000000e+00 : f32
    %321 = vector.broadcast %cst_147 : f32 to vector<4x128xf32>
    %322 = arith.addf %321, %320 : vector<4x128xf32>
    %323 = arith.divf %321, %322 : vector<4x128xf32>
    %324 = vector.extract_strided_slice %311 {offsets = [0, 256], sizes = [4, 128], strides = [1, 1]} : vector<4x512xf32> to vector<4x128xf32>
    %325 = math.tanh %324 : vector<4x128xf32>
    %326 = vector.extract_strided_slice %311 {offsets = [0, 384], sizes = [4, 128], strides = [1, 1]} : vector<4x512xf32> to vector<4x128xf32>
    %327 = arith.negf %326 : vector<4x128xf32>
    %328 = math.exp %327 : vector<4x128xf32>
    %cst_148 = arith.constant 1.000000e+00 : f32
    %329 = vector.broadcast %cst_148 : f32 to vector<4x128xf32>
    %330 = arith.addf %329, %328 : vector<4x128xf32>
    %331 = arith.divf %329, %330 : vector<4x128xf32>
    %332 = arith.mulf %323, %298 : vector<4x128xf32>
    %333 = arith.mulf %317, %325 : vector<4x128xf32>
    %334 = arith.addf %332, %333 : vector<4x128xf32>
    %335 = math.tanh %334 : vector<4x128xf32>
    %336 = arith.mulf %331, %335 : vector<4x128xf32>
    %c0_149 = arith.constant 0 : index
    %c0_150 = arith.constant 0 : index
    %337 = vector.load %arg10[%c0_149, %c0_150] : memref<4x128xf32, #tpu.memory_space<vmem>>, vector<4x128xf32>
    tpu.vector_store %arg10[%c0_149, %c0_150], %334 {strides = array<i32>} : memref<4x128xf32, #tpu.memory_space<vmem>>, vector<4x128xf32>,
    %c0_151 = arith.constant 0 : index
    %c0_152 = arith.constant 0 : index
    %338 = vector.load %arg9[%c0_151, %c0_152] : memref<4x128xf32, #tpu.memory_space<vmem>>, vector<4x128xf32>
    tpu.vector_store %arg9[%c0_151, %c0_152], %336 {strides = array<i32>} : memref<4x128xf32, #tpu.memory_space<vmem>>, vector<4x128xf32>,
    %339 = vector.extract_strided_slice %336 {offsets = [0, 0], sizes = [2, 128], strides = [1, 1]} : vector<4x128xf32> to vector<2x128xf32>
    %340 = arith.index_cast %c4_i32 : i32 to index
    %c0_153 = arith.constant 0 : index
    %c0_154 = arith.constant 0 : index
    %341 = vector.load %arg4[%340, %c0_153, %c0_154] : memref<8x2x256xf32, #tpu.memory_space<vmem>>, vector<1x2x128xf32>
    %342 = vector.shape_cast %341 : vector<1x2x128xf32> to vector<2x128xf32>
    %343 = vector.shape_cast %339 : vector<2x128xf32> to vector<1x2x128xf32>
    tpu.vector_store %arg4[%340, %c0_153, %c0_154], %343 {strides = array<i32>} : memref<8x2x256xf32, #tpu.memory_space<vmem>>, vector<1x2x128xf32>,
    %344 = vector.extract_strided_slice %336 {offsets = [2, 0], sizes = [2, 128], strides = [1, 1]} : vector<4x128xf32> to vector<2x128xf32>
    %345 = arith.index_cast %296 : i32 to index
    %c0_155 = arith.constant 0 : index
    %c128_156 = arith.constant 128 : index
    %346 = vector.load %arg4[%345, %c0_155, %c128_156] : memref<8x2x256xf32, #tpu.memory_space<vmem>>, vector<1x2x128xf32>
    %347 = vector.shape_cast %346 : vector<1x2x128xf32> to vector<2x128xf32>
    %348 = vector.shape_cast %344 : vector<2x128xf32> to vector<1x2x128xf32>
    tpu.vector_store %arg4[%345, %c0_155, %c128_156], %348 {strides = array<i32>} : memref<8x2x256xf32, #tpu.memory_space<vmem>>, vector<1x2x128xf32>,
    %c5_i32 = arith.constant 5 : i32
    %c7_i32_157 = arith.constant 7 : i32
    %349 = arith.subi %c7_i32_157, %c5_i32 : i32
    %c0_158 = arith.constant 0 : index
    %c0_159 = arith.constant 0 : index
    %350 = vector.load %arg9[%c0_158, %c0_159] : memref<4x128xf32, #tpu.memory_space<vmem>>, vector<4x128xf32>
    %c0_160 = arith.constant 0 : index
    %c0_161 = arith.constant 0 : index
    %351 = vector.load %arg10[%c0_160, %c0_161] : memref<4x128xf32, #tpu.memory_space<vmem>>, vector<4x128xf32>
    %352 = arith.truncf %350 : vector<4x128xf32> to vector<4x128xbf16>
    %cst_162 = arith.constant dense<0.000000e+00> : vector<4x1024xf32>
    %353 = tpu.matmul %352, %83, %cst_162 {dimension_numbers = #tpu.dot_dimension_numbers<[1], [0], [0], [1], [0, 0, 1, 1], [], []>} : vector<4x128xbf16>, vector<128x1024xbf16>, vector<4x1024xf32> -> vector<4x1024xf32>
    %354 = arith.index_cast %c5_i32 : i32 to index
    %c0_163 = arith.constant 0 : index
    %c0_164 = arith.constant 0 : index
    %355 = vector.load %arg7[%354, %c0_163, %c0_164] : memref<8x2x512xf32, #tpu.memory_space<vmem>>, vector<1x2x512xf32>
    %356 = vector.shape_cast %355 : vector<1x2x512xf32> to vector<2x512xf32>
    %357 = vector.extract_strided_slice %353 {offsets = [0, 0], sizes = [2, 512], strides = [1, 1]} : vector<4x1024xf32> to vector<2x512xf32>
    %358 = arith.addf %356, %357 : vector<2x512xf32>
    %359 = arith.index_cast %349 : i32 to index
    %c0_165 = arith.constant 0 : index
    %c0_166 = arith.constant 0 : index
    %360 = vector.load %arg8[%359, %c0_165, %c0_166] : memref<8x2x512xf32, #tpu.memory_space<vmem>>, vector<1x2x512xf32>
    %361 = vector.shape_cast %360 : vector<1x2x512xf32> to vector<2x512xf32>
    %362 = vector.extract_strided_slice %353 {offsets = [2, 512], sizes = [2, 512], strides = [1, 1]} : vector<4x1024xf32> to vector<2x512xf32>
    %363 = arith.addf %361, %362 : vector<2x512xf32>
    %364 = tpu.concatenate %358, %363 in 0 : vector<2x512xf32>, vector<2x512xf32> -> vector<4x512xf32>
    %365 = vector.extract_strided_slice %364 {offsets = [0, 0], sizes = [4, 128], strides = [1, 1]} : vector<4x512xf32> to vector<4x128xf32>
    %366 = arith.negf %365 : vector<4x128xf32>
    %367 = math.exp %366 : vector<4x128xf32>
    %cst_167 = arith.constant 1.000000e+00 : f32
    %368 = vector.broadcast %cst_167 : f32 to vector<4x128xf32>
    %369 = arith.addf %368, %367 : vector<4x128xf32>
    %370 = arith.divf %368, %369 : vector<4x128xf32>
    %371 = vector.extract_strided_slice %364 {offsets = [0, 128], sizes = [4, 128], strides = [1, 1]} : vector<4x512xf32> to vector<4x128xf32>
    %372 = arith.negf %371 : vector<4x128xf32>
    %373 = math.exp %372 : vector<4x128xf32>
    %cst_168 = arith.constant 1.000000e+00 : f32
    %374 = vector.broadcast %cst_168 : f32 to vector<4x128xf32>
    %375 = arith.addf %374, %373 : vector<4x128xf32>
    %376 = arith.divf %374, %375 : vector<4x128xf32>
    %377 = vector.extract_strided_slice %364 {offsets = [0, 256], sizes = [4, 128], strides = [1, 1]} : vector<4x512xf32> to vector<4x128xf32>
    %378 = math.tanh %377 : vector<4x128xf32>
    %379 = vector.extract_strided_slice %364 {offsets = [0, 384], sizes = [4, 128], strides = [1, 1]} : vector<4x512xf32> to vector<4x128xf32>
    %380 = arith.negf %379 : vector<4x128xf32>
    %381 = math.exp %380 : vector<4x128xf32>
    %cst_169 = arith.constant 1.000000e+00 : f32
    %382 = vector.broadcast %cst_169 : f32 to vector<4x128xf32>
    %383 = arith.addf %382, %381 : vector<4x128xf32>
    %384 = arith.divf %382, %383 : vector<4x128xf32>
    %385 = arith.mulf %376, %351 : vector<4x128xf32>
    %386 = arith.mulf %370, %378 : vector<4x128xf32>
    %387 = arith.addf %385, %386 : vector<4x128xf32>
    %388 = math.tanh %387 : vector<4x128xf32>
    %389 = arith.mulf %384, %388 : vector<4x128xf32>
    %c0_170 = arith.constant 0 : index
    %c0_171 = arith.constant 0 : index
    %390 = vector.load %arg10[%c0_170, %c0_171] : memref<4x128xf32, #tpu.memory_space<vmem>>, vector<4x128xf32>
    tpu.vector_store %arg10[%c0_170, %c0_171], %387 {strides = array<i32>} : memref<4x128xf32, #tpu.memory_space<vmem>>, vector<4x128xf32>,
    %c0_172 = arith.constant 0 : index
    %c0_173 = arith.constant 0 : index
    %391 = vector.load %arg9[%c0_172, %c0_173] : memref<4x128xf32, #tpu.memory_space<vmem>>, vector<4x128xf32>
    tpu.vector_store %arg9[%c0_172, %c0_173], %389 {strides = array<i32>} : memref<4x128xf32, #tpu.memory_space<vmem>>, vector<4x128xf32>,
    %392 = vector.extract_strided_slice %389 {offsets = [0, 0], sizes = [2, 128], strides = [1, 1]} : vector<4x128xf32> to vector<2x128xf32>
    %393 = arith.index_cast %c5_i32 : i32 to index
    %c0_174 = arith.constant 0 : index
    %c0_175 = arith.constant 0 : index
    %394 = vector.load %arg4[%393, %c0_174, %c0_175] : memref<8x2x256xf32, #tpu.memory_space<vmem>>, vector<1x2x128xf32>
    %395 = vector.shape_cast %394 : vector<1x2x128xf32> to vector<2x128xf32>
    %396 = vector.shape_cast %392 : vector<2x128xf32> to vector<1x2x128xf32>
    tpu.vector_store %arg4[%393, %c0_174, %c0_175], %396 {strides = array<i32>} : memref<8x2x256xf32, #tpu.memory_space<vmem>>, vector<1x2x128xf32>,
    %397 = vector.extract_strided_slice %389 {offsets = [2, 0], sizes = [2, 128], strides = [1, 1]} : vector<4x128xf32> to vector<2x128xf32>
    %398 = arith.index_cast %349 : i32 to index
    %c0_176 = arith.constant 0 : index
    %c128_177 = arith.constant 128 : index
    %399 = vector.load %arg4[%398, %c0_176, %c128_177] : memref<8x2x256xf32, #tpu.memory_space<vmem>>, vector<1x2x128xf32>
    %400 = vector.shape_cast %399 : vector<1x2x128xf32> to vector<2x128xf32>
    %401 = vector.shape_cast %397 : vector<2x128xf32> to vector<1x2x128xf32>
    tpu.vector_store %arg4[%398, %c0_176, %c128_177], %401 {strides = array<i32>} : memref<8x2x256xf32, #tpu.memory_space<vmem>>, vector<1x2x128xf32>,
    %c6_i32 = arith.constant 6 : i32
    %c7_i32_178 = arith.constant 7 : i32
    %402 = arith.subi %c7_i32_178, %c6_i32 : i32
    %c0_179 = arith.constant 0 : index
    %c0_180 = arith.constant 0 : index
    %403 = vector.load %arg9[%c0_179, %c0_180] : memref<4x128xf32, #tpu.memory_space<vmem>>, vector<4x128xf32>
    %c0_181 = arith.constant 0 : index
    %c0_182 = arith.constant 0 : index
    %404 = vector.load %arg10[%c0_181, %c0_182] : memref<4x128xf32, #tpu.memory_space<vmem>>, vector<4x128xf32>
    %405 = arith.truncf %403 : vector<4x128xf32> to vector<4x128xbf16>
    %cst_183 = arith.constant dense<0.000000e+00> : vector<4x1024xf32>
    %406 = tpu.matmul %405, %83, %cst_183 {dimension_numbers = #tpu.dot_dimension_numbers<[1], [0], [0], [1], [0, 0, 1, 1], [], []>} : vector<4x128xbf16>, vector<128x1024xbf16>, vector<4x1024xf32> -> vector<4x1024xf32>
    %407 = arith.index_cast %c6_i32 : i32 to index
    %c0_184 = arith.constant 0 : index
    %c0_185 = arith.constant 0 : index
    %408 = vector.load %arg7[%407, %c0_184, %c0_185] : memref<8x2x512xf32, #tpu.memory_space<vmem>>, vector<1x2x512xf32>
    %409 = vector.shape_cast %408 : vector<1x2x512xf32> to vector<2x512xf32>
    %410 = vector.extract_strided_slice %406 {offsets = [0, 0], sizes = [2, 512], strides = [1, 1]} : vector<4x1024xf32> to vector<2x512xf32>
    %411 = arith.addf %409, %410 : vector<2x512xf32>
    %412 = arith.index_cast %402 : i32 to index
    %c0_186 = arith.constant 0 : index
    %c0_187 = arith.constant 0 : index
    %413 = vector.load %arg8[%412, %c0_186, %c0_187] : memref<8x2x512xf32, #tpu.memory_space<vmem>>, vector<1x2x512xf32>
    %414 = vector.shape_cast %413 : vector<1x2x512xf32> to vector<2x512xf32>
    %415 = vector.extract_strided_slice %406 {offsets = [2, 512], sizes = [2, 512], strides = [1, 1]} : vector<4x1024xf32> to vector<2x512xf32>
    %416 = arith.addf %414, %415 : vector<2x512xf32>
    %417 = tpu.concatenate %411, %416 in 0 : vector<2x512xf32>, vector<2x512xf32> -> vector<4x512xf32>
    %418 = vector.extract_strided_slice %417 {offsets = [0, 0], sizes = [4, 128], strides = [1, 1]} : vector<4x512xf32> to vector<4x128xf32>
    %419 = arith.negf %418 : vector<4x128xf32>
    %420 = math.exp %419 : vector<4x128xf32>
    %cst_188 = arith.constant 1.000000e+00 : f32
    %421 = vector.broadcast %cst_188 : f32 to vector<4x128xf32>
    %422 = arith.addf %421, %420 : vector<4x128xf32>
    %423 = arith.divf %421, %422 : vector<4x128xf32>
    %424 = vector.extract_strided_slice %417 {offsets = [0, 128], sizes = [4, 128], strides = [1, 1]} : vector<4x512xf32> to vector<4x128xf32>
    %425 = arith.negf %424 : vector<4x128xf32>
    %426 = math.exp %425 : vector<4x128xf32>
    %cst_189 = arith.constant 1.000000e+00 : f32
    %427 = vector.broadcast %cst_189 : f32 to vector<4x128xf32>
    %428 = arith.addf %427, %426 : vector<4x128xf32>
    %429 = arith.divf %427, %428 : vector<4x128xf32>
    %430 = vector.extract_strided_slice %417 {offsets = [0, 256], sizes = [4, 128], strides = [1, 1]} : vector<4x512xf32> to vector<4x128xf32>
    %431 = math.tanh %430 : vector<4x128xf32>
    %432 = vector.extract_strided_slice %417 {offsets = [0, 384], sizes = [4, 128], strides = [1, 1]} : vector<4x512xf32> to vector<4x128xf32>
    %433 = arith.negf %432 : vector<4x128xf32>
    %434 = math.exp %433 : vector<4x128xf32>
    %cst_190 = arith.constant 1.000000e+00 : f32
    %435 = vector.broadcast %cst_190 : f32 to vector<4x128xf32>
    %436 = arith.addf %435, %434 : vector<4x128xf32>
    %437 = arith.divf %435, %436 : vector<4x128xf32>
    %438 = arith.mulf %429, %404 : vector<4x128xf32>
    %439 = arith.mulf %423, %431 : vector<4x128xf32>
    %440 = arith.addf %438, %439 : vector<4x128xf32>
    %441 = math.tanh %440 : vector<4x128xf32>
    %442 = arith.mulf %437, %441 : vector<4x128xf32>
    %c0_191 = arith.constant 0 : index
    %c0_192 = arith.constant 0 : index
    %443 = vector.load %arg10[%c0_191, %c0_192] : memref<4x128xf32, #tpu.memory_space<vmem>>, vector<4x128xf32>
    tpu.vector_store %arg10[%c0_191, %c0_192], %440 {strides = array<i32>} : memref<4x128xf32, #tpu.memory_space<vmem>>, vector<4x128xf32>,
    %c0_193 = arith.constant 0 : index
    %c0_194 = arith.constant 0 : index
    %444 = vector.load %arg9[%c0_193, %c0_194] : memref<4x128xf32, #tpu.memory_space<vmem>>, vector<4x128xf32>
    tpu.vector_store %arg9[%c0_193, %c0_194], %442 {strides = array<i32>} : memref<4x128xf32, #tpu.memory_space<vmem>>, vector<4x128xf32>,
    %445 = vector.extract_strided_slice %442 {offsets = [0, 0], sizes = [2, 128], strides = [1, 1]} : vector<4x128xf32> to vector<2x128xf32>
    %446 = arith.index_cast %c6_i32 : i32 to index
    %c0_195 = arith.constant 0 : index
    %c0_196 = arith.constant 0 : index
    %447 = vector.load %arg4[%446, %c0_195, %c0_196] : memref<8x2x256xf32, #tpu.memory_space<vmem>>, vector<1x2x128xf32>
    %448 = vector.shape_cast %447 : vector<1x2x128xf32> to vector<2x128xf32>
    %449 = vector.shape_cast %445 : vector<2x128xf32> to vector<1x2x128xf32>
    tpu.vector_store %arg4[%446, %c0_195, %c0_196], %449 {strides = array<i32>} : memref<8x2x256xf32, #tpu.memory_space<vmem>>, vector<1x2x128xf32>,
    %450 = vector.extract_strided_slice %442 {offsets = [2, 0], sizes = [2, 128], strides = [1, 1]} : vector<4x128xf32> to vector<2x128xf32>
    %451 = arith.index_cast %402 : i32 to index
    %c0_197 = arith.constant 0 : index
    %c128_198 = arith.constant 128 : index
    %452 = vector.load %arg4[%451, %c0_197, %c128_198] : memref<8x2x256xf32, #tpu.memory_space<vmem>>, vector<1x2x128xf32>
    %453 = vector.shape_cast %452 : vector<1x2x128xf32> to vector<2x128xf32>
    %454 = vector.shape_cast %450 : vector<2x128xf32> to vector<1x2x128xf32>
    tpu.vector_store %arg4[%451, %c0_197, %c128_198], %454 {strides = array<i32>} : memref<8x2x256xf32, #tpu.memory_space<vmem>>, vector<1x2x128xf32>,
    %c7_i32_199 = arith.constant 7 : i32
    %c7_i32_200 = arith.constant 7 : i32
    %455 = arith.subi %c7_i32_200, %c7_i32_199 : i32
    %c0_201 = arith.constant 0 : index
    %c0_202 = arith.constant 0 : index
    %456 = vector.load %arg9[%c0_201, %c0_202] : memref<4x128xf32, #tpu.memory_space<vmem>>, vector<4x128xf32>
    %c0_203 = arith.constant 0 : index
    %c0_204 = arith.constant 0 : index
    %457 = vector.load %arg10[%c0_203, %c0_204] : memref<4x128xf32, #tpu.memory_space<vmem>>, vector<4x128xf32>
    %458 = arith.truncf %456 : vector<4x128xf32> to vector<4x128xbf16>
    %cst_205 = arith.constant dense<0.000000e+00> : vector<4x1024xf32>
    %459 = tpu.matmul %458, %83, %cst_205 {dimension_numbers = #tpu.dot_dimension_numbers<[1], [0], [0], [1], [0, 0, 1, 1], [], []>} : vector<4x128xbf16>, vector<128x1024xbf16>, vector<4x1024xf32> -> vector<4x1024xf32>
    %460 = arith.index_cast %c7_i32_199 : i32 to index
    %c0_206 = arith.constant 0 : index
    %c0_207 = arith.constant 0 : index
    %461 = vector.load %arg7[%460, %c0_206, %c0_207] : memref<8x2x512xf32, #tpu.memory_space<vmem>>, vector<1x2x512xf32>
    %462 = vector.shape_cast %461 : vector<1x2x512xf32> to vector<2x512xf32>
    %463 = vector.extract_strided_slice %459 {offsets = [0, 0], sizes = [2, 512], strides = [1, 1]} : vector<4x1024xf32> to vector<2x512xf32>
    %464 = arith.addf %462, %463 : vector<2x512xf32>
    %465 = arith.index_cast %455 : i32 to index
    %c0_208 = arith.constant 0 : index
    %c0_209 = arith.constant 0 : index
    %466 = vector.load %arg8[%465, %c0_208, %c0_209] : memref<8x2x512xf32, #tpu.memory_space<vmem>>, vector<1x2x512xf32>
    %467 = vector.shape_cast %466 : vector<1x2x512xf32> to vector<2x512xf32>
    %468 = vector.extract_strided_slice %459 {offsets = [2, 512], sizes = [2, 512], strides = [1, 1]} : vector<4x1024xf32> to vector<2x512xf32>
    %469 = arith.addf %467, %468 : vector<2x512xf32>
    %470 = tpu.concatenate %464, %469 in 0 : vector<2x512xf32>, vector<2x512xf32> -> vector<4x512xf32>
    %471 = vector.extract_strided_slice %470 {offsets = [0, 0], sizes = [4, 128], strides = [1, 1]} : vector<4x512xf32> to vector<4x128xf32>
    %472 = arith.negf %471 : vector<4x128xf32>
    %473 = math.exp %472 : vector<4x128xf32>
    %cst_210 = arith.constant 1.000000e+00 : f32
    %474 = vector.broadcast %cst_210 : f32 to vector<4x128xf32>
    %475 = arith.addf %474, %473 : vector<4x128xf32>
    %476 = arith.divf %474, %475 : vector<4x128xf32>
    %477 = vector.extract_strided_slice %470 {offsets = [0, 128], sizes = [4, 128], strides = [1, 1]} : vector<4x512xf32> to vector<4x128xf32>
    %478 = arith.negf %477 : vector<4x128xf32>
    %479 = math.exp %478 : vector<4x128xf32>
    %cst_211 = arith.constant 1.000000e+00 : f32
    %480 = vector.broadcast %cst_211 : f32 to vector<4x128xf32>
    %481 = arith.addf %480, %479 : vector<4x128xf32>
    %482 = arith.divf %480, %481 : vector<4x128xf32>
    %483 = vector.extract_strided_slice %470 {offsets = [0, 256], sizes = [4, 128], strides = [1, 1]} : vector<4x512xf32> to vector<4x128xf32>
    %484 = math.tanh %483 : vector<4x128xf32>
    %485 = vector.extract_strided_slice %470 {offsets = [0, 384], sizes = [4, 128], strides = [1, 1]} : vector<4x512xf32> to vector<4x128xf32>
    %486 = arith.negf %485 : vector<4x128xf32>
    %487 = math.exp %486 : vector<4x128xf32>
    %cst_212 = arith.constant 1.000000e+00 : f32
    %488 = vector.broadcast %cst_212 : f32 to vector<4x128xf32>
    %489 = arith.addf %488, %487 : vector<4x128xf32>
    %490 = arith.divf %488, %489 : vector<4x128xf32>
    %491 = arith.mulf %482, %457 : vector<4x128xf32>
    %492 = arith.mulf %476, %484 : vector<4x128xf32>
    %493 = arith.addf %491, %492 : vector<4x128xf32>
    %494 = math.tanh %493 : vector<4x128xf32>
    %495 = arith.mulf %490, %494 : vector<4x128xf32>
    %c0_213 = arith.constant 0 : index
    %c0_214 = arith.constant 0 : index
    %496 = vector.load %arg10[%c0_213, %c0_214] : memref<4x128xf32, #tpu.memory_space<vmem>>, vector<4x128xf32>
    tpu.vector_store %arg10[%c0_213, %c0_214], %493 {strides = array<i32>} : memref<4x128xf32, #tpu.memory_space<vmem>>, vector<4x128xf32>,
    %c0_215 = arith.constant 0 : index
    %c0_216 = arith.constant 0 : index
    %497 = vector.load %arg9[%c0_215, %c0_216] : memref<4x128xf32, #tpu.memory_space<vmem>>, vector<4x128xf32>
    tpu.vector_store %arg9[%c0_215, %c0_216], %495 {strides = array<i32>} : memref<4x128xf32, #tpu.memory_space<vmem>>, vector<4x128xf32>,
    %498 = vector.extract_strided_slice %495 {offsets = [0, 0], sizes = [2, 128], strides = [1, 1]} : vector<4x128xf32> to vector<2x128xf32>
    %499 = arith.index_cast %c7_i32_199 : i32 to index
    %c0_217 = arith.constant 0 : index
    %c0_218 = arith.constant 0 : index
    %500 = vector.load %arg4[%499, %c0_217, %c0_218] : memref<8x2x256xf32, #tpu.memory_space<vmem>>, vector<1x2x128xf32>
    %501 = vector.shape_cast %500 : vector<1x2x128xf32> to vector<2x128xf32>
    %502 = vector.shape_cast %498 : vector<2x128xf32> to vector<1x2x128xf32>
    tpu.vector_store %arg4[%499, %c0_217, %c0_218], %502 {strides = array<i32>} : memref<8x2x256xf32, #tpu.memory_space<vmem>>, vector<1x2x128xf32>,
    %503 = vector.extract_strided_slice %495 {offsets = [2, 0], sizes = [2, 128], strides = [1, 1]} : vector<4x128xf32> to vector<2x128xf32>
    %504 = arith.index_cast %455 : i32 to index
    %c0_219 = arith.constant 0 : index
    %c128_220 = arith.constant 128 : index
    %505 = vector.load %arg4[%504, %c0_219, %c128_220] : memref<8x2x256xf32, #tpu.memory_space<vmem>>, vector<1x2x128xf32>
    %506 = vector.shape_cast %505 : vector<1x2x128xf32> to vector<2x128xf32>
    %507 = vector.shape_cast %503 : vector<2x128xf32> to vector<1x2x128xf32>
    tpu.vector_store %arg4[%504, %c0_219, %c128_220], %507 {strides = array<i32>} : memref<8x2x256xf32, #tpu.memory_space<vmem>>, vector<1x2x128xf32>,
    %c8_i32 = arith.constant 8 : i32
    %c0_221 = arith.constant 0 : index
    %c0_222 = arith.constant 0 : index
    %508 = vector.load %arg9[%c0_221, %c0_222] : memref<4x128xf32, #tpu.memory_space<vmem>>, vector<4x128xf32>
    %c0_223 = arith.constant 0 : index
    %c0_224 = arith.constant 0 : index
    %509 = vector.load %arg10[%c0_223, %c0_224] : memref<4x128xf32, #tpu.memory_space<vmem>>, vector<4x128xf32>
    %510 = vector.extract_strided_slice %508 {offsets = [0, 0], sizes = [2, 128], strides = [1, 1]} : vector<4x128xf32> to vector<2x128xf32>
    %511 = vector.extract_strided_slice %508 {offsets = [2, 0], sizes = [2, 128], strides = [1, 1]} : vector<4x128xf32> to vector<2x128xf32>
    %512 = tpu.concatenate %510, %511 in 1 : vector<2x128xf32>, vector<2x128xf32> -> vector<2x256xf32>
    %c0_225 = arith.constant 0 : index
    %c0_226 = arith.constant 0 : index
    %513 = vector.load %arg5[%c0_225, %c0_226] : memref<2x256xf32, #tpu.memory_space<vmem>>, vector<2x256xf32>
    tpu.vector_store %arg5[%c0_225, %c0_226], %512 {strides = array<i32>} : memref<2x256xf32, #tpu.memory_space<vmem>>, vector<2x256xf32>,
    %514 = vector.extract_strided_slice %509 {offsets = [0, 0], sizes = [2, 128], strides = [1, 1]} : vector<4x128xf32> to vector<2x128xf32>
    %515 = vector.extract_strided_slice %509 {offsets = [2, 0], sizes = [2, 128], strides = [1, 1]} : vector<4x128xf32> to vector<2x128xf32>
    %516 = tpu.concatenate %514, %515 in 1 : vector<2x128xf32>, vector<2x128xf32> -> vector<2x256xf32>
    %c0_227 = arith.constant 0 : index
    %c0_228 = arith.constant 0 : index
    %517 = vector.load %arg6[%c0_227, %c0_228] : memref<2x256xf32, #tpu.memory_space<vmem>>, vector<2x256xf32>
    tpu.vector_store %arg6[%c0_227, %c0_228], %516 {strides = array<i32>} : memref<2x256xf32, #tpu.memory_space<vmem>>, vector<2x256xf32>,
    return
  }
}

module attributes {stable_mosaic.version = 11 : i64} {
  func.func @_bilstm_layer_kernel(%arg0: memref<16x256xf32, #tpu.memory_space<vmem>>, %arg1: memref<256x1024xbf16, #tpu.memory_space<vmem>>, %arg2: memref<128x1024xbf16, #tpu.memory_space<vmem>>, %arg3: memref<1x1024xf32, #tpu.memory_space<vmem>>, %arg4: memref<8x2x256xf32, #tpu.memory_space<vmem>>, %arg5: memref<2x256xf32, #tpu.memory_space<vmem>>, %arg6: memref<2x256xf32, #tpu.memory_space<vmem>>, %arg7: memref<8x2x512xf32, #tpu.memory_space<vmem>>, %arg8: memref<8x2x512xf32, #tpu.memory_space<vmem>>, %arg9: memref<4x128xf32, #tpu.memory_space<vmem>>, %arg10: memref<4x128xf32, #tpu.memory_space<vmem>>) attributes {dimension_semantics = [], scalar_prefetch = 0 : i64, scratch_operands = 4 : i64, tpu.core_type = #tpu.core_type<tc>} {
    %c0 = arith.constant 0 : index
    %c0_0 = arith.constant 0 : index
    %0 = vector.load %arg0[%c0, %c0_0] : memref<16x256xf32, #tpu.memory_space<vmem>>, vector<16x256xf32>
    %1 = arith.truncf %0 : vector<16x256xf32> to vector<16x256xbf16>
    %c0_1 = arith.constant 0 : index
    %c0_2 = arith.constant 0 : index
    %2 = vector.load %arg1[%c0_1, %c0_2] : memref<256x1024xbf16, #tpu.memory_space<vmem>>, vector<256x1024xbf16>
    %cst = arith.constant dense<0.000000e+00> : vector<16x1024xf32>
    %3 = tpu.matmul %1, %2, %cst {dimension_numbers = #tpu.dot_dimension_numbers<[1], [0], [0], [1], [0, 0, 1, 1], [], []>} : vector<16x256xbf16>, vector<256x1024xbf16>, vector<16x1024xf32> -> vector<16x1024xf32>
    %c0_3 = arith.constant 0 : index
    %c0_4 = arith.constant 0 : index
    %4 = vector.load %arg3[%c0_3, %c0_4] : memref<1x1024xf32, #tpu.memory_space<vmem>>, vector<1x1024xf32>
    %5 = vector.broadcast %4 : vector<1x1024xf32> to vector<16x1024xf32>
    %6 = arith.addf %3, %5 : vector<16x1024xf32>
    %7 = vector.extract_strided_slice %6 {offsets = [0, 0], sizes = [2, 1024], strides = [1, 1]} : vector<16x1024xf32> to vector<2x1024xf32>
    %8 = vector.extract_strided_slice %7 {offsets = [0, 0], sizes = [2, 512], strides = [1, 1]} : vector<2x1024xf32> to vector<2x512xf32>
    %c0_5 = arith.constant 0 : index
    %c0_6 = arith.constant 0 : index
    %c0_7 = arith.constant 0 : index
    %9 = vector.load %arg7[%c0_5, %c0_6, %c0_7] : memref<8x2x512xf32, #tpu.memory_space<vmem>>, vector<1x2x512xf32>
    %10 = vector.shape_cast %9 : vector<1x2x512xf32> to vector<2x512xf32>
    %11 = vector.shape_cast %8 : vector<2x512xf32> to vector<1x2x512xf32>
    tpu.vector_store %arg7[%c0_5, %c0_6, %c0_7], %11 {strides = array<i32>} : memref<8x2x512xf32, #tpu.memory_space<vmem>>, vector<1x2x512xf32>,
    %12 = vector.extract_strided_slice %7 {offsets = [0, 512], sizes = [2, 512], strides = [1, 1]} : vector<2x1024xf32> to vector<2x512xf32>
    %c0_8 = arith.constant 0 : index
    %c0_9 = arith.constant 0 : index
    %c0_10 = arith.constant 0 : index
    %13 = vector.load %arg8[%c0_8, %c0_9, %c0_10] : memref<8x2x512xf32, #tpu.memory_space<vmem>>, vector<1x2x512xf32>
    %14 = vector.shape_cast %13 : vector<1x2x512xf32> to vector<2x512xf32>
    %15 = vector.shape_cast %12 : vector<2x512xf32> to vector<1x2x512xf32>
    tpu.vector_store %arg8[%c0_8, %c0_9, %c0_10], %15 {strides = array<i32>} : memref<8x2x512xf32, #tpu.memory_space<vmem>>, vector<1x2x512xf32>,
    %16 = vector.extract_strided_slice %6 {offsets = [2, 0], sizes = [2, 1024], strides = [1, 1]} : vector<16x1024xf32> to vector<2x1024xf32>
    %17 = vector.extract_strided_slice %16 {offsets = [0, 0], sizes = [2, 512], strides = [1, 1]} : vector<2x1024xf32> to vector<2x512xf32>
    %c1 = arith.constant 1 : index
    %c0_11 = arith.constant 0 : index
    %c0_12 = arith.constant 0 : index
    %18 = vector.load %arg7[%c1, %c0_11, %c0_12] : memref<8x2x512xf32, #tpu.memory_space<vmem>>, vector<1x2x512xf32>
    %19 = vector.shape_cast %18 : vector<1x2x512xf32> to vector<2x512xf32>
    %20 = vector.shape_cast %17 : vector<2x512xf32> to vector<1x2x512xf32>
    tpu.vector_store %arg7[%c1, %c0_11, %c0_12], %20 {strides = array<i32>} : memref<8x2x512xf32, #tpu.memory_space<vmem>>, vector<1x2x512xf32>,
    %21 = vector.extract_strided_slice %16 {offsets = [0, 512], sizes = [2, 512], strides = [1, 1]} : vector<2x1024xf32> to vector<2x512xf32>
    %c1_13 = arith.constant 1 : index
    %c0_14 = arith.constant 0 : index
    %c0_15 = arith.constant 0 : index
    %22 = vector.load %arg8[%c1_13, %c0_14, %c0_15] : memref<8x2x512xf32, #tpu.memory_space<vmem>>, vector<1x2x512xf32>
    %23 = vector.shape_cast %22 : vector<1x2x512xf32> to vector<2x512xf32>
    %24 = vector.shape_cast %21 : vector<2x512xf32> to vector<1x2x512xf32>
    tpu.vector_store %arg8[%c1_13, %c0_14, %c0_15], %24 {strides = array<i32>} : memref<8x2x512xf32, #tpu.memory_space<vmem>>, vector<1x2x512xf32>,
    %25 = vector.extract_strided_slice %6 {offsets = [4, 0], sizes = [2, 1024], strides = [1, 1]} : vector<16x1024xf32> to vector<2x1024xf32>
    %26 = vector.extract_strided_slice %25 {offsets = [0, 0], sizes = [2, 512], strides = [1, 1]} : vector<2x1024xf32> to vector<2x512xf32>
    %c2 = arith.constant 2 : index
    %c0_16 = arith.constant 0 : index
    %c0_17 = arith.constant 0 : index
    %27 = vector.load %arg7[%c2, %c0_16, %c0_17] : memref<8x2x512xf32, #tpu.memory_space<vmem>>, vector<1x2x512xf32>
    %28 = vector.shape_cast %27 : vector<1x2x512xf32> to vector<2x512xf32>
    %29 = vector.shape_cast %26 : vector<2x512xf32> to vector<1x2x512xf32>
    tpu.vector_store %arg7[%c2, %c0_16, %c0_17], %29 {strides = array<i32>} : memref<8x2x512xf32, #tpu.memory_space<vmem>>, vector<1x2x512xf32>,
    %30 = vector.extract_strided_slice %25 {offsets = [0, 512], sizes = [2, 512], strides = [1, 1]} : vector<2x1024xf32> to vector<2x512xf32>
    %c2_18 = arith.constant 2 : index
    %c0_19 = arith.constant 0 : index
    %c0_20 = arith.constant 0 : index
    %31 = vector.load %arg8[%c2_18, %c0_19, %c0_20] : memref<8x2x512xf32, #tpu.memory_space<vmem>>, vector<1x2x512xf32>
    %32 = vector.shape_cast %31 : vector<1x2x512xf32> to vector<2x512xf32>
    %33 = vector.shape_cast %30 : vector<2x512xf32> to vector<1x2x512xf32>
    tpu.vector_store %arg8[%c2_18, %c0_19, %c0_20], %33 {strides = array<i32>} : memref<8x2x512xf32, #tpu.memory_space<vmem>>, vector<1x2x512xf32>,
    %34 = vector.extract_strided_slice %6 {offsets = [6, 0], sizes = [2, 1024], strides = [1, 1]} : vector<16x1024xf32> to vector<2x1024xf32>
    %35 = vector.extract_strided_slice %34 {offsets = [0, 0], sizes = [2, 512], strides = [1, 1]} : vector<2x1024xf32> to vector<2x512xf32>
    %c3 = arith.constant 3 : index
    %c0_21 = arith.constant 0 : index
    %c0_22 = arith.constant 0 : index
    %36 = vector.load %arg7[%c3, %c0_21, %c0_22] : memref<8x2x512xf32, #tpu.memory_space<vmem>>, vector<1x2x512xf32>
    %37 = vector.shape_cast %36 : vector<1x2x512xf32> to vector<2x512xf32>
    %38 = vector.shape_cast %35 : vector<2x512xf32> to vector<1x2x512xf32>
    tpu.vector_store %arg7[%c3, %c0_21, %c0_22], %38 {strides = array<i32>} : memref<8x2x512xf32, #tpu.memory_space<vmem>>, vector<1x2x512xf32>,
    %39 = vector.extract_strided_slice %34 {offsets = [0, 512], sizes = [2, 512], strides = [1, 1]} : vector<2x1024xf32> to vector<2x512xf32>
    %c3_23 = arith.constant 3 : index
    %c0_24 = arith.constant 0 : index
    %c0_25 = arith.constant 0 : index
    %40 = vector.load %arg8[%c3_23, %c0_24, %c0_25] : memref<8x2x512xf32, #tpu.memory_space<vmem>>, vector<1x2x512xf32>
    %41 = vector.shape_cast %40 : vector<1x2x512xf32> to vector<2x512xf32>
    %42 = vector.shape_cast %39 : vector<2x512xf32> to vector<1x2x512xf32>
    tpu.vector_store %arg8[%c3_23, %c0_24, %c0_25], %42 {strides = array<i32>} : memref<8x2x512xf32, #tpu.memory_space<vmem>>, vector<1x2x512xf32>,
    %43 = vector.extract_strided_slice %6 {offsets = [8, 0], sizes = [2, 1024], strides = [1, 1]} : vector<16x1024xf32> to vector<2x1024xf32>
    %44 = vector.extract_strided_slice %43 {offsets = [0, 0], sizes = [2, 512], strides = [1, 1]} : vector<2x1024xf32> to vector<2x512xf32>
    %c4 = arith.constant 4 : index
    %c0_26 = arith.constant 0 : index
    %c0_27 = arith.constant 0 : index
    %45 = vector.load %arg7[%c4, %c0_26, %c0_27] : memref<8x2x512xf32, #tpu.memory_space<vmem>>, vector<1x2x512xf32>
    %46 = vector.shape_cast %45 : vector<1x2x512xf32> to vector<2x512xf32>
    %47 = vector.shape_cast %44 : vector<2x512xf32> to vector<1x2x512xf32>
    tpu.vector_store %arg7[%c4, %c0_26, %c0_27], %47 {strides = array<i32>} : memref<8x2x512xf32, #tpu.memory_space<vmem>>, vector<1x2x512xf32>,
    %48 = vector.extract_strided_slice %43 {offsets = [0, 512], sizes = [2, 512], strides = [1, 1]} : vector<2x1024xf32> to vector<2x512xf32>
    %c4_28 = arith.constant 4 : index
    %c0_29 = arith.constant 0 : index
    %c0_30 = arith.constant 0 : index
    %49 = vector.load %arg8[%c4_28, %c0_29, %c0_30] : memref<8x2x512xf32, #tpu.memory_space<vmem>>, vector<1x2x512xf32>
    %50 = vector.shape_cast %49 : vector<1x2x512xf32> to vector<2x512xf32>
    %51 = vector.shape_cast %48 : vector<2x512xf32> to vector<1x2x512xf32>
    tpu.vector_store %arg8[%c4_28, %c0_29, %c0_30], %51 {strides = array<i32>} : memref<8x2x512xf32, #tpu.memory_space<vmem>>, vector<1x2x512xf32>,
    %52 = vector.extract_strided_slice %6 {offsets = [10, 0], sizes = [2, 1024], strides = [1, 1]} : vector<16x1024xf32> to vector<2x1024xf32>
    %53 = vector.extract_strided_slice %52 {offsets = [0, 0], sizes = [2, 512], strides = [1, 1]} : vector<2x1024xf32> to vector<2x512xf32>
    %c5 = arith.constant 5 : index
    %c0_31 = arith.constant 0 : index
    %c0_32 = arith.constant 0 : index
    %54 = vector.load %arg7[%c5, %c0_31, %c0_32] : memref<8x2x512xf32, #tpu.memory_space<vmem>>, vector<1x2x512xf32>
    %55 = vector.shape_cast %54 : vector<1x2x512xf32> to vector<2x512xf32>
    %56 = vector.shape_cast %53 : vector<2x512xf32> to vector<1x2x512xf32>
    tpu.vector_store %arg7[%c5, %c0_31, %c0_32], %56 {strides = array<i32>} : memref<8x2x512xf32, #tpu.memory_space<vmem>>, vector<1x2x512xf32>,
    %57 = vector.extract_strided_slice %52 {offsets = [0, 512], sizes = [2, 512], strides = [1, 1]} : vector<2x1024xf32> to vector<2x512xf32>
    %c5_33 = arith.constant 5 : index
    %c0_34 = arith.constant 0 : index
    %c0_35 = arith.constant 0 : index
    %58 = vector.load %arg8[%c5_33, %c0_34, %c0_35] : memref<8x2x512xf32, #tpu.memory_space<vmem>>, vector<1x2x512xf32>
    %59 = vector.shape_cast %58 : vector<1x2x512xf32> to vector<2x512xf32>
    %60 = vector.shape_cast %57 : vector<2x512xf32> to vector<1x2x512xf32>
    tpu.vector_store %arg8[%c5_33, %c0_34, %c0_35], %60 {strides = array<i32>} : memref<8x2x512xf32, #tpu.memory_space<vmem>>, vector<1x2x512xf32>,
    %61 = vector.extract_strided_slice %6 {offsets = [12, 0], sizes = [2, 1024], strides = [1, 1]} : vector<16x1024xf32> to vector<2x1024xf32>
    %62 = vector.extract_strided_slice %61 {offsets = [0, 0], sizes = [2, 512], strides = [1, 1]} : vector<2x1024xf32> to vector<2x512xf32>
    %c6 = arith.constant 6 : index
    %c0_36 = arith.constant 0 : index
    %c0_37 = arith.constant 0 : index
    %63 = vector.load %arg7[%c6, %c0_36, %c0_37] : memref<8x2x512xf32, #tpu.memory_space<vmem>>, vector<1x2x512xf32>
    %64 = vector.shape_cast %63 : vector<1x2x512xf32> to vector<2x512xf32>
    %65 = vector.shape_cast %62 : vector<2x512xf32> to vector<1x2x512xf32>
    tpu.vector_store %arg7[%c6, %c0_36, %c0_37], %65 {strides = array<i32>} : memref<8x2x512xf32, #tpu.memory_space<vmem>>, vector<1x2x512xf32>,
    %66 = vector.extract_strided_slice %61 {offsets = [0, 512], sizes = [2, 512], strides = [1, 1]} : vector<2x1024xf32> to vector<2x512xf32>
    %c6_38 = arith.constant 6 : index
    %c0_39 = arith.constant 0 : index
    %c0_40 = arith.constant 0 : index
    %67 = vector.load %arg8[%c6_38, %c0_39, %c0_40] : memref<8x2x512xf32, #tpu.memory_space<vmem>>, vector<1x2x512xf32>
    %68 = vector.shape_cast %67 : vector<1x2x512xf32> to vector<2x512xf32>
    %69 = vector.shape_cast %66 : vector<2x512xf32> to vector<1x2x512xf32>
    tpu.vector_store %arg8[%c6_38, %c0_39, %c0_40], %69 {strides = array<i32>} : memref<8x2x512xf32, #tpu.memory_space<vmem>>, vector<1x2x512xf32>,
    %70 = vector.extract_strided_slice %6 {offsets = [14, 0], sizes = [2, 1024], strides = [1, 1]} : vector<16x1024xf32> to vector<2x1024xf32>
    %71 = vector.extract_strided_slice %70 {offsets = [0, 0], sizes = [2, 512], strides = [1, 1]} : vector<2x1024xf32> to vector<2x512xf32>
    %c7 = arith.constant 7 : index
    %c0_41 = arith.constant 0 : index
    %c0_42 = arith.constant 0 : index
    %72 = vector.load %arg7[%c7, %c0_41, %c0_42] : memref<8x2x512xf32, #tpu.memory_space<vmem>>, vector<1x2x512xf32>
    %73 = vector.shape_cast %72 : vector<1x2x512xf32> to vector<2x512xf32>
    %74 = vector.shape_cast %71 : vector<2x512xf32> to vector<1x2x512xf32>
    tpu.vector_store %arg7[%c7, %c0_41, %c0_42], %74 {strides = array<i32>} : memref<8x2x512xf32, #tpu.memory_space<vmem>>, vector<1x2x512xf32>,
    %75 = vector.extract_strided_slice %70 {offsets = [0, 512], sizes = [2, 512], strides = [1, 1]} : vector<2x1024xf32> to vector<2x512xf32>
    %c7_43 = arith.constant 7 : index
    %c0_44 = arith.constant 0 : index
    %c0_45 = arith.constant 0 : index
    %76 = vector.load %arg8[%c7_43, %c0_44, %c0_45] : memref<8x2x512xf32, #tpu.memory_space<vmem>>, vector<1x2x512xf32>
    %77 = vector.shape_cast %76 : vector<1x2x512xf32> to vector<2x512xf32>
    %78 = vector.shape_cast %75 : vector<2x512xf32> to vector<1x2x512xf32>
    tpu.vector_store %arg8[%c7_43, %c0_44, %c0_45], %78 {strides = array<i32>} : memref<8x2x512xf32, #tpu.memory_space<vmem>>, vector<1x2x512xf32>,
    %cst_46 = arith.constant 0.000000e+00 : f32
    %79 = vector.broadcast %cst_46 : f32 to vector<4x128xf32>
    %c0_47 = arith.constant 0 : index
    %c0_48 = arith.constant 0 : index
    %80 = vector.load %arg9[%c0_47, %c0_48] : memref<4x128xf32, #tpu.memory_space<vmem>>, vector<4x128xf32>
    tpu.vector_store %arg9[%c0_47, %c0_48], %79 {strides = array<i32>} : memref<4x128xf32, #tpu.memory_space<vmem>>, vector<4x128xf32>,
    %cst_49 = arith.constant 0.000000e+00 : f32
    %81 = vector.broadcast %cst_49 : f32 to vector<4x128xf32>
    %c0_50 = arith.constant 0 : index
    %c0_51 = arith.constant 0 : index
    %82 = vector.load %arg10[%c0_50, %c0_51] : memref<4x128xf32, #tpu.memory_space<vmem>>, vector<4x128xf32>
    tpu.vector_store %arg10[%c0_50, %c0_51], %81 {strides = array<i32>} : memref<4x128xf32, #tpu.memory_space<vmem>>, vector<4x128xf32>,
    %c0_52 = arith.constant 0 : index
    %c0_53 = arith.constant 0 : index
    %83 = vector.load %arg2[%c0_52, %c0_53] : memref<128x1024xbf16, #tpu.memory_space<vmem>>, vector<128x1024xbf16>
    %c0_i32 = arith.constant 0 : i32
    %c7_i32 = arith.constant 7 : i32
    %84 = arith.subi %c7_i32, %c0_i32 : i32
    %c0_54 = arith.constant 0 : index
    %c0_55 = arith.constant 0 : index
    %85 = vector.load %arg9[%c0_54, %c0_55] : memref<4x128xf32, #tpu.memory_space<vmem>>, vector<4x128xf32>
    %c0_56 = arith.constant 0 : index
    %c0_57 = arith.constant 0 : index
    %86 = vector.load %arg10[%c0_56, %c0_57] : memref<4x128xf32, #tpu.memory_space<vmem>>, vector<4x128xf32>
    %87 = arith.truncf %85 : vector<4x128xf32> to vector<4x128xbf16>
    %cst_58 = arith.constant dense<0.000000e+00> : vector<4x1024xf32>
    %88 = tpu.matmul %87, %83, %cst_58 {dimension_numbers = #tpu.dot_dimension_numbers<[1], [0], [0], [1], [0, 0, 1, 1], [], []>} : vector<4x128xbf16>, vector<128x1024xbf16>, vector<4x1024xf32> -> vector<4x1024xf32>
    %89 = arith.index_cast %c0_i32 : i32 to index
    %c0_59 = arith.constant 0 : index
    %c0_60 = arith.constant 0 : index
    %90 = vector.load %arg7[%89, %c0_59, %c0_60] : memref<8x2x512xf32, #tpu.memory_space<vmem>>, vector<1x2x512xf32>
    %91 = vector.shape_cast %90 : vector<1x2x512xf32> to vector<2x512xf32>
    %92 = vector.extract_strided_slice %88 {offsets = [0, 0], sizes = [2, 512], strides = [1, 1]} : vector<4x1024xf32> to vector<2x512xf32>
    %93 = arith.addf %91, %92 : vector<2x512xf32>
    %94 = arith.index_cast %84 : i32 to index
    %c0_61 = arith.constant 0 : index
    %c0_62 = arith.constant 0 : index
    %95 = vector.load %arg8[%94, %c0_61, %c0_62] : memref<8x2x512xf32, #tpu.memory_space<vmem>>, vector<1x2x512xf32>
    %96 = vector.shape_cast %95 : vector<1x2x512xf32> to vector<2x512xf32>
    %97 = vector.extract_strided_slice %88 {offsets = [2, 512], sizes = [2, 512], strides = [1, 1]} : vector<4x1024xf32> to vector<2x512xf32>
    %98 = arith.addf %96, %97 : vector<2x512xf32>
    %99 = tpu.concatenate %93, %98 in 0 : vector<2x512xf32>, vector<2x512xf32> -> vector<4x512xf32>
    %100 = vector.extract_strided_slice %99 {offsets = [0, 0], sizes = [4, 128], strides = [1, 1]} : vector<4x512xf32> to vector<4x128xf32>
    %101 = arith.negf %100 : vector<4x128xf32>
    %102 = math.exp %101 : vector<4x128xf32>
    %cst_63 = arith.constant 1.000000e+00 : f32
    %103 = vector.broadcast %cst_63 : f32 to vector<4x128xf32>
    %104 = arith.addf %103, %102 : vector<4x128xf32>
    %105 = arith.divf %103, %104 : vector<4x128xf32>
    %106 = vector.extract_strided_slice %99 {offsets = [0, 128], sizes = [4, 128], strides = [1, 1]} : vector<4x512xf32> to vector<4x128xf32>
    %107 = arith.negf %106 : vector<4x128xf32>
    %108 = math.exp %107 : vector<4x128xf32>
    %cst_64 = arith.constant 1.000000e+00 : f32
    %109 = vector.broadcast %cst_64 : f32 to vector<4x128xf32>
    %110 = arith.addf %109, %108 : vector<4x128xf32>
    %111 = arith.divf %109, %110 : vector<4x128xf32>
    %112 = vector.extract_strided_slice %99 {offsets = [0, 256], sizes = [4, 128], strides = [1, 1]} : vector<4x512xf32> to vector<4x128xf32>
    %113 = math.tanh %112 : vector<4x128xf32>
    %114 = vector.extract_strided_slice %99 {offsets = [0, 384], sizes = [4, 128], strides = [1, 1]} : vector<4x512xf32> to vector<4x128xf32>
    %115 = arith.negf %114 : vector<4x128xf32>
    %116 = math.exp %115 : vector<4x128xf32>
    %cst_65 = arith.constant 1.000000e+00 : f32
    %117 = vector.broadcast %cst_65 : f32 to vector<4x128xf32>
    %118 = arith.addf %117, %116 : vector<4x128xf32>
    %119 = arith.divf %117, %118 : vector<4x128xf32>
    %120 = arith.mulf %111, %86 : vector<4x128xf32>
    %121 = arith.mulf %105, %113 : vector<4x128xf32>
    %122 = arith.addf %120, %121 : vector<4x128xf32>
    %123 = math.tanh %122 : vector<4x128xf32>
    %124 = arith.mulf %119, %123 : vector<4x128xf32>
    %c0_66 = arith.constant 0 : index
    %c0_67 = arith.constant 0 : index
    %125 = vector.load %arg10[%c0_66, %c0_67] : memref<4x128xf32, #tpu.memory_space<vmem>>, vector<4x128xf32>
    tpu.vector_store %arg10[%c0_66, %c0_67], %122 {strides = array<i32>} : memref<4x128xf32, #tpu.memory_space<vmem>>, vector<4x128xf32>,
    %c0_68 = arith.constant 0 : index
    %c0_69 = arith.constant 0 : index
    %126 = vector.load %arg9[%c0_68, %c0_69] : memref<4x128xf32, #tpu.memory_space<vmem>>, vector<4x128xf32>
    tpu.vector_store %arg9[%c0_68, %c0_69], %124 {strides = array<i32>} : memref<4x128xf32, #tpu.memory_space<vmem>>, vector<4x128xf32>,
    %127 = vector.extract_strided_slice %124 {offsets = [0, 0], sizes = [2, 128], strides = [1, 1]} : vector<4x128xf32> to vector<2x128xf32>
    %128 = arith.index_cast %c0_i32 : i32 to index
    %c0_70 = arith.constant 0 : index
    %c0_71 = arith.constant 0 : index
    %129 = vector.load %arg4[%128, %c0_70, %c0_71] : memref<8x2x256xf32, #tpu.memory_space<vmem>>, vector<1x2x128xf32>
    %130 = vector.shape_cast %129 : vector<1x2x128xf32> to vector<2x128xf32>
    %131 = vector.shape_cast %127 : vector<2x128xf32> to vector<1x2x128xf32>
    tpu.vector_store %arg4[%128, %c0_70, %c0_71], %131 {strides = array<i32>} : memref<8x2x256xf32, #tpu.memory_space<vmem>>, vector<1x2x128xf32>,
    %132 = vector.extract_strided_slice %124 {offsets = [2, 0], sizes = [2, 128], strides = [1, 1]} : vector<4x128xf32> to vector<2x128xf32>
    %133 = arith.index_cast %84 : i32 to index
    %c0_72 = arith.constant 0 : index
    %c128 = arith.constant 128 : index
    %134 = vector.load %arg4[%133, %c0_72, %c128] : memref<8x2x256xf32, #tpu.memory_space<vmem>>, vector<1x2x128xf32>
    %135 = vector.shape_cast %134 : vector<1x2x128xf32> to vector<2x128xf32>
    %136 = vector.shape_cast %132 : vector<2x128xf32> to vector<1x2x128xf32>
    tpu.vector_store %arg4[%133, %c0_72, %c128], %136 {strides = array<i32>} : memref<8x2x256xf32, #tpu.memory_space<vmem>>, vector<1x2x128xf32>,
    %c1_i32 = arith.constant 1 : i32
    %c7_i32_73 = arith.constant 7 : i32
    %137 = arith.subi %c7_i32_73, %c1_i32 : i32
    %c0_74 = arith.constant 0 : index
    %c0_75 = arith.constant 0 : index
    %138 = vector.load %arg9[%c0_74, %c0_75] : memref<4x128xf32, #tpu.memory_space<vmem>>, vector<4x128xf32>
    %c0_76 = arith.constant 0 : index
    %c0_77 = arith.constant 0 : index
    %139 = vector.load %arg10[%c0_76, %c0_77] : memref<4x128xf32, #tpu.memory_space<vmem>>, vector<4x128xf32>
    %140 = arith.truncf %138 : vector<4x128xf32> to vector<4x128xbf16>
    %cst_78 = arith.constant dense<0.000000e+00> : vector<4x1024xf32>
    %141 = tpu.matmul %140, %83, %cst_78 {dimension_numbers = #tpu.dot_dimension_numbers<[1], [0], [0], [1], [0, 0, 1, 1], [], []>} : vector<4x128xbf16>, vector<128x1024xbf16>, vector<4x1024xf32> -> vector<4x1024xf32>
    %142 = arith.index_cast %c1_i32 : i32 to index
    %c0_79 = arith.constant 0 : index
    %c0_80 = arith.constant 0 : index
    %143 = vector.load %arg7[%142, %c0_79, %c0_80] : memref<8x2x512xf32, #tpu.memory_space<vmem>>, vector<1x2x512xf32>
    %144 = vector.shape_cast %143 : vector<1x2x512xf32> to vector<2x512xf32>
    %145 = vector.extract_strided_slice %141 {offsets = [0, 0], sizes = [2, 512], strides = [1, 1]} : vector<4x1024xf32> to vector<2x512xf32>
    %146 = arith.addf %144, %145 : vector<2x512xf32>
    %147 = arith.index_cast %137 : i32 to index
    %c0_81 = arith.constant 0 : index
    %c0_82 = arith.constant 0 : index
    %148 = vector.load %arg8[%147, %c0_81, %c0_82] : memref<8x2x512xf32, #tpu.memory_space<vmem>>, vector<1x2x512xf32>
    %149 = vector.shape_cast %148 : vector<1x2x512xf32> to vector<2x512xf32>
    %150 = vector.extract_strided_slice %141 {offsets = [2, 512], sizes = [2, 512], strides = [1, 1]} : vector<4x1024xf32> to vector<2x512xf32>
    %151 = arith.addf %149, %150 : vector<2x512xf32>
    %152 = tpu.concatenate %146, %151 in 0 : vector<2x512xf32>, vector<2x512xf32> -> vector<4x512xf32>
    %153 = vector.extract_strided_slice %152 {offsets = [0, 0], sizes = [4, 128], strides = [1, 1]} : vector<4x512xf32> to vector<4x128xf32>
    %154 = arith.negf %153 : vector<4x128xf32>
    %155 = math.exp %154 : vector<4x128xf32>
    %cst_83 = arith.constant 1.000000e+00 : f32
    %156 = vector.broadcast %cst_83 : f32 to vector<4x128xf32>
    %157 = arith.addf %156, %155 : vector<4x128xf32>
    %158 = arith.divf %156, %157 : vector<4x128xf32>
    %159 = vector.extract_strided_slice %152 {offsets = [0, 128], sizes = [4, 128], strides = [1, 1]} : vector<4x512xf32> to vector<4x128xf32>
    %160 = arith.negf %159 : vector<4x128xf32>
    %161 = math.exp %160 : vector<4x128xf32>
    %cst_84 = arith.constant 1.000000e+00 : f32
    %162 = vector.broadcast %cst_84 : f32 to vector<4x128xf32>
    %163 = arith.addf %162, %161 : vector<4x128xf32>
    %164 = arith.divf %162, %163 : vector<4x128xf32>
    %165 = vector.extract_strided_slice %152 {offsets = [0, 256], sizes = [4, 128], strides = [1, 1]} : vector<4x512xf32> to vector<4x128xf32>
    %166 = math.tanh %165 : vector<4x128xf32>
    %167 = vector.extract_strided_slice %152 {offsets = [0, 384], sizes = [4, 128], strides = [1, 1]} : vector<4x512xf32> to vector<4x128xf32>
    %168 = arith.negf %167 : vector<4x128xf32>
    %169 = math.exp %168 : vector<4x128xf32>
    %cst_85 = arith.constant 1.000000e+00 : f32
    %170 = vector.broadcast %cst_85 : f32 to vector<4x128xf32>
    %171 = arith.addf %170, %169 : vector<4x128xf32>
    %172 = arith.divf %170, %171 : vector<4x128xf32>
    %173 = arith.mulf %164, %139 : vector<4x128xf32>
    %174 = arith.mulf %158, %166 : vector<4x128xf32>
    %175 = arith.addf %173, %174 : vector<4x128xf32>
    %176 = math.tanh %175 : vector<4x128xf32>
    %177 = arith.mulf %172, %176 : vector<4x128xf32>
    %c0_86 = arith.constant 0 : index
    %c0_87 = arith.constant 0 : index
    %178 = vector.load %arg10[%c0_86, %c0_87] : memref<4x128xf32, #tpu.memory_space<vmem>>, vector<4x128xf32>
    tpu.vector_store %arg10[%c0_86, %c0_87], %175 {strides = array<i32>} : memref<4x128xf32, #tpu.memory_space<vmem>>, vector<4x128xf32>,
    %c0_88 = arith.constant 0 : index
    %c0_89 = arith.constant 0 : index
    %179 = vector.load %arg9[%c0_88, %c0_89] : memref<4x128xf32, #tpu.memory_space<vmem>>, vector<4x128xf32>
    tpu.vector_store %arg9[%c0_88, %c0_89], %177 {strides = array<i32>} : memref<4x128xf32, #tpu.memory_space<vmem>>, vector<4x128xf32>,
    %180 = vector.extract_strided_slice %177 {offsets = [0, 0], sizes = [2, 128], strides = [1, 1]} : vector<4x128xf32> to vector<2x128xf32>
    %181 = arith.index_cast %c1_i32 : i32 to index
    %c0_90 = arith.constant 0 : index
    %c0_91 = arith.constant 0 : index
    %182 = vector.load %arg4[%181, %c0_90, %c0_91] : memref<8x2x256xf32, #tpu.memory_space<vmem>>, vector<1x2x128xf32>
    %183 = vector.shape_cast %182 : vector<1x2x128xf32> to vector<2x128xf32>
    %184 = vector.shape_cast %180 : vector<2x128xf32> to vector<1x2x128xf32>
    tpu.vector_store %arg4[%181, %c0_90, %c0_91], %184 {strides = array<i32>} : memref<8x2x256xf32, #tpu.memory_space<vmem>>, vector<1x2x128xf32>,
    %185 = vector.extract_strided_slice %177 {offsets = [2, 0], sizes = [2, 128], strides = [1, 1]} : vector<4x128xf32> to vector<2x128xf32>
    %186 = arith.index_cast %137 : i32 to index
    %c0_92 = arith.constant 0 : index
    %c128_93 = arith.constant 128 : index
    %187 = vector.load %arg4[%186, %c0_92, %c128_93] : memref<8x2x256xf32, #tpu.memory_space<vmem>>, vector<1x2x128xf32>
    %188 = vector.shape_cast %187 : vector<1x2x128xf32> to vector<2x128xf32>
    %189 = vector.shape_cast %185 : vector<2x128xf32> to vector<1x2x128xf32>
    tpu.vector_store %arg4[%186, %c0_92, %c128_93], %189 {strides = array<i32>} : memref<8x2x256xf32, #tpu.memory_space<vmem>>, vector<1x2x128xf32>,
    %c2_i32 = arith.constant 2 : i32
    %c7_i32_94 = arith.constant 7 : i32
    %190 = arith.subi %c7_i32_94, %c2_i32 : i32
    %c0_95 = arith.constant 0 : index
    %c0_96 = arith.constant 0 : index
    %191 = vector.load %arg9[%c0_95, %c0_96] : memref<4x128xf32, #tpu.memory_space<vmem>>, vector<4x128xf32>
    %c0_97 = arith.constant 0 : index
    %c0_98 = arith.constant 0 : index
    %192 = vector.load %arg10[%c0_97, %c0_98] : memref<4x128xf32, #tpu.memory_space<vmem>>, vector<4x128xf32>
    %193 = arith.truncf %191 : vector<4x128xf32> to vector<4x128xbf16>
    %cst_99 = arith.constant dense<0.000000e+00> : vector<4x1024xf32>
    %194 = tpu.matmul %193, %83, %cst_99 {dimension_numbers = #tpu.dot_dimension_numbers<[1], [0], [0], [1], [0, 0, 1, 1], [], []>} : vector<4x128xbf16>, vector<128x1024xbf16>, vector<4x1024xf32> -> vector<4x1024xf32>
    %195 = arith.index_cast %c2_i32 : i32 to index
    %c0_100 = arith.constant 0 : index
    %c0_101 = arith.constant 0 : index
    %196 = vector.load %arg7[%195, %c0_100, %c0_101] : memref<8x2x512xf32, #tpu.memory_space<vmem>>, vector<1x2x512xf32>
    %197 = vector.shape_cast %196 : vector<1x2x512xf32> to vector<2x512xf32>
    %198 = vector.extract_strided_slice %194 {offsets = [0, 0], sizes = [2, 512], strides = [1, 1]} : vector<4x1024xf32> to vector<2x512xf32>
    %199 = arith.addf %197, %198 : vector<2x512xf32>
    %200 = arith.index_cast %190 : i32 to index
    %c0_102 = arith.constant 0 : index
    %c0_103 = arith.constant 0 : index
    %201 = vector.load %arg8[%200, %c0_102, %c0_103] : memref<8x2x512xf32, #tpu.memory_space<vmem>>, vector<1x2x512xf32>
    %202 = vector.shape_cast %201 : vector<1x2x512xf32> to vector<2x512xf32>
    %203 = vector.extract_strided_slice %194 {offsets = [2, 512], sizes = [2, 512], strides = [1, 1]} : vector<4x1024xf32> to vector<2x512xf32>
    %204 = arith.addf %202, %203 : vector<2x512xf32>
    %205 = tpu.concatenate %199, %204 in 0 : vector<2x512xf32>, vector<2x512xf32> -> vector<4x512xf32>
    %206 = vector.extract_strided_slice %205 {offsets = [0, 0], sizes = [4, 128], strides = [1, 1]} : vector<4x512xf32> to vector<4x128xf32>
    %207 = arith.negf %206 : vector<4x128xf32>
    %208 = math.exp %207 : vector<4x128xf32>
    %cst_104 = arith.constant 1.000000e+00 : f32
    %209 = vector.broadcast %cst_104 : f32 to vector<4x128xf32>
    %210 = arith.addf %209, %208 : vector<4x128xf32>
    %211 = arith.divf %209, %210 : vector<4x128xf32>
    %212 = vector.extract_strided_slice %205 {offsets = [0, 128], sizes = [4, 128], strides = [1, 1]} : vector<4x512xf32> to vector<4x128xf32>
    %213 = arith.negf %212 : vector<4x128xf32>
    %214 = math.exp %213 : vector<4x128xf32>
    %cst_105 = arith.constant 1.000000e+00 : f32
    %215 = vector.broadcast %cst_105 : f32 to vector<4x128xf32>
    %216 = arith.addf %215, %214 : vector<4x128xf32>
    %217 = arith.divf %215, %216 : vector<4x128xf32>
    %218 = vector.extract_strided_slice %205 {offsets = [0, 256], sizes = [4, 128], strides = [1, 1]} : vector<4x512xf32> to vector<4x128xf32>
    %219 = math.tanh %218 : vector<4x128xf32>
    %220 = vector.extract_strided_slice %205 {offsets = [0, 384], sizes = [4, 128], strides = [1, 1]} : vector<4x512xf32> to vector<4x128xf32>
    %221 = arith.negf %220 : vector<4x128xf32>
    %222 = math.exp %221 : vector<4x128xf32>
    %cst_106 = arith.constant 1.000000e+00 : f32
    %223 = vector.broadcast %cst_106 : f32 to vector<4x128xf32>
    %224 = arith.addf %223, %222 : vector<4x128xf32>
    %225 = arith.divf %223, %224 : vector<4x128xf32>
    %226 = arith.mulf %217, %192 : vector<4x128xf32>
    %227 = arith.mulf %211, %219 : vector<4x128xf32>
    %228 = arith.addf %226, %227 : vector<4x128xf32>
    %229 = math.tanh %228 : vector<4x128xf32>
    %230 = arith.mulf %225, %229 : vector<4x128xf32>
    %c0_107 = arith.constant 0 : index
    %c0_108 = arith.constant 0 : index
    %231 = vector.load %arg10[%c0_107, %c0_108] : memref<4x128xf32, #tpu.memory_space<vmem>>, vector<4x128xf32>
    tpu.vector_store %arg10[%c0_107, %c0_108], %228 {strides = array<i32>} : memref<4x128xf32, #tpu.memory_space<vmem>>, vector<4x128xf32>,
    %c0_109 = arith.constant 0 : index
    %c0_110 = arith.constant 0 : index
    %232 = vector.load %arg9[%c0_109, %c0_110] : memref<4x128xf32, #tpu.memory_space<vmem>>, vector<4x128xf32>
    tpu.vector_store %arg9[%c0_109, %c0_110], %230 {strides = array<i32>} : memref<4x128xf32, #tpu.memory_space<vmem>>, vector<4x128xf32>,
    %233 = vector.extract_strided_slice %230 {offsets = [0, 0], sizes = [2, 128], strides = [1, 1]} : vector<4x128xf32> to vector<2x128xf32>
    %234 = arith.index_cast %c2_i32 : i32 to index
    %c0_111 = arith.constant 0 : index
    %c0_112 = arith.constant 0 : index
    %235 = vector.load %arg4[%234, %c0_111, %c0_112] : memref<8x2x256xf32, #tpu.memory_space<vmem>>, vector<1x2x128xf32>
    %236 = vector.shape_cast %235 : vector<1x2x128xf32> to vector<2x128xf32>
    %237 = vector.shape_cast %233 : vector<2x128xf32> to vector<1x2x128xf32>
    tpu.vector_store %arg4[%234, %c0_111, %c0_112], %237 {strides = array<i32>} : memref<8x2x256xf32, #tpu.memory_space<vmem>>, vector<1x2x128xf32>,
    %238 = vector.extract_strided_slice %230 {offsets = [2, 0], sizes = [2, 128], strides = [1, 1]} : vector<4x128xf32> to vector<2x128xf32>
    %239 = arith.index_cast %190 : i32 to index
    %c0_113 = arith.constant 0 : index
    %c128_114 = arith.constant 128 : index
    %240 = vector.load %arg4[%239, %c0_113, %c128_114] : memref<8x2x256xf32, #tpu.memory_space<vmem>>, vector<1x2x128xf32>
    %241 = vector.shape_cast %240 : vector<1x2x128xf32> to vector<2x128xf32>
    %242 = vector.shape_cast %238 : vector<2x128xf32> to vector<1x2x128xf32>
    tpu.vector_store %arg4[%239, %c0_113, %c128_114], %242 {strides = array<i32>} : memref<8x2x256xf32, #tpu.memory_space<vmem>>, vector<1x2x128xf32>,
    %c3_i32 = arith.constant 3 : i32
    %c7_i32_115 = arith.constant 7 : i32
    %243 = arith.subi %c7_i32_115, %c3_i32 : i32
    %c0_116 = arith.constant 0 : index
    %c0_117 = arith.constant 0 : index
    %244 = vector.load %arg9[%c0_116, %c0_117] : memref<4x128xf32, #tpu.memory_space<vmem>>, vector<4x128xf32>
    %c0_118 = arith.constant 0 : index
    %c0_119 = arith.constant 0 : index
    %245 = vector.load %arg10[%c0_118, %c0_119] : memref<4x128xf32, #tpu.memory_space<vmem>>, vector<4x128xf32>
    %246 = arith.truncf %244 : vector<4x128xf32> to vector<4x128xbf16>
    %cst_120 = arith.constant dense<0.000000e+00> : vector<4x1024xf32>
    %247 = tpu.matmul %246, %83, %cst_120 {dimension_numbers = #tpu.dot_dimension_numbers<[1], [0], [0], [1], [0, 0, 1, 1], [], []>} : vector<4x128xbf16>, vector<128x1024xbf16>, vector<4x1024xf32> -> vector<4x1024xf32>
    %248 = arith.index_cast %c3_i32 : i32 to index
    %c0_121 = arith.constant 0 : index
    %c0_122 = arith.constant 0 : index
    %249 = vector.load %arg7[%248, %c0_121, %c0_122] : memref<8x2x512xf32, #tpu.memory_space<vmem>>, vector<1x2x512xf32>
    %250 = vector.shape_cast %249 : vector<1x2x512xf32> to vector<2x512xf32>
    %251 = vector.extract_strided_slice %247 {offsets = [0, 0], sizes = [2, 512], strides = [1, 1]} : vector<4x1024xf32> to vector<2x512xf32>
    %252 = arith.addf %250, %251 : vector<2x512xf32>
    %253 = arith.index_cast %243 : i32 to index
    %c0_123 = arith.constant 0 : index
    %c0_124 = arith.constant 0 : index
    %254 = vector.load %arg8[%253, %c0_123, %c0_124] : memref<8x2x512xf32, #tpu.memory_space<vmem>>, vector<1x2x512xf32>
    %255 = vector.shape_cast %254 : vector<1x2x512xf32> to vector<2x512xf32>
    %256 = vector.extract_strided_slice %247 {offsets = [2, 512], sizes = [2, 512], strides = [1, 1]} : vector<4x1024xf32> to vector<2x512xf32>
    %257 = arith.addf %255, %256 : vector<2x512xf32>
    %258 = tpu.concatenate %252, %257 in 0 : vector<2x512xf32>, vector<2x512xf32> -> vector<4x512xf32>
    %259 = vector.extract_strided_slice %258 {offsets = [0, 0], sizes = [4, 128], strides = [1, 1]} : vector<4x512xf32> to vector<4x128xf32>
    %260 = arith.negf %259 : vector<4x128xf32>
    %261 = math.exp %260 : vector<4x128xf32>
    %cst_125 = arith.constant 1.000000e+00 : f32
    %262 = vector.broadcast %cst_125 : f32 to vector<4x128xf32>
    %263 = arith.addf %262, %261 : vector<4x128xf32>
    %264 = arith.divf %262, %263 : vector<4x128xf32>
    %265 = vector.extract_strided_slice %258 {offsets = [0, 128], sizes = [4, 128], strides = [1, 1]} : vector<4x512xf32> to vector<4x128xf32>
    %266 = arith.negf %265 : vector<4x128xf32>
    %267 = math.exp %266 : vector<4x128xf32>
    %cst_126 = arith.constant 1.000000e+00 : f32
    %268 = vector.broadcast %cst_126 : f32 to vector<4x128xf32>
    %269 = arith.addf %268, %267 : vector<4x128xf32>
    %270 = arith.divf %268, %269 : vector<4x128xf32>
    %271 = vector.extract_strided_slice %258 {offsets = [0, 256], sizes = [4, 128], strides = [1, 1]} : vector<4x512xf32> to vector<4x128xf32>
    %272 = math.tanh %271 : vector<4x128xf32>
    %273 = vector.extract_strided_slice %258 {offsets = [0, 384], sizes = [4, 128], strides = [1, 1]} : vector<4x512xf32> to vector<4x128xf32>
    %274 = arith.negf %273 : vector<4x128xf32>
    %275 = math.exp %274 : vector<4x128xf32>
    %cst_127 = arith.constant 1.000000e+00 : f32
    %276 = vector.broadcast %cst_127 : f32 to vector<4x128xf32>
    %277 = arith.addf %276, %275 : vector<4x128xf32>
    %278 = arith.divf %276, %277 : vector<4x128xf32>
    %279 = arith.mulf %270, %245 : vector<4x128xf32>
    %280 = arith.mulf %264, %272 : vector<4x128xf32>
    %281 = arith.addf %279, %280 : vector<4x128xf32>
    %282 = math.tanh %281 : vector<4x128xf32>
    %283 = arith.mulf %278, %282 : vector<4x128xf32>
    %c0_128 = arith.constant 0 : index
    %c0_129 = arith.constant 0 : index
    %284 = vector.load %arg10[%c0_128, %c0_129] : memref<4x128xf32, #tpu.memory_space<vmem>>, vector<4x128xf32>
    tpu.vector_store %arg10[%c0_128, %c0_129], %281 {strides = array<i32>} : memref<4x128xf32, #tpu.memory_space<vmem>>, vector<4x128xf32>,
    %c0_130 = arith.constant 0 : index
    %c0_131 = arith.constant 0 : index
    %285 = vector.load %arg9[%c0_130, %c0_131] : memref<4x128xf32, #tpu.memory_space<vmem>>, vector<4x128xf32>
    tpu.vector_store %arg9[%c0_130, %c0_131], %283 {strides = array<i32>} : memref<4x128xf32, #tpu.memory_space<vmem>>, vector<4x128xf32>,
    %286 = vector.extract_strided_slice %283 {offsets = [0, 0], sizes = [2, 128], strides = [1, 1]} : vector<4x128xf32> to vector<2x128xf32>
    %287 = arith.index_cast %c3_i32 : i32 to index
    %c0_132 = arith.constant 0 : index
    %c0_133 = arith.constant 0 : index
    %288 = vector.load %arg4[%287, %c0_132, %c0_133] : memref<8x2x256xf32, #tpu.memory_space<vmem>>, vector<1x2x128xf32>
    %289 = vector.shape_cast %288 : vector<1x2x128xf32> to vector<2x128xf32>
    %290 = vector.shape_cast %286 : vector<2x128xf32> to vector<1x2x128xf32>
    tpu.vector_store %arg4[%287, %c0_132, %c0_133], %290 {strides = array<i32>} : memref<8x2x256xf32, #tpu.memory_space<vmem>>, vector<1x2x128xf32>,
    %291 = vector.extract_strided_slice %283 {offsets = [2, 0], sizes = [2, 128], strides = [1, 1]} : vector<4x128xf32> to vector<2x128xf32>
    %292 = arith.index_cast %243 : i32 to index
    %c0_134 = arith.constant 0 : index
    %c128_135 = arith.constant 128 : index
    %293 = vector.load %arg4[%292, %c0_134, %c128_135] : memref<8x2x256xf32, #tpu.memory_space<vmem>>, vector<1x2x128xf32>
    %294 = vector.shape_cast %293 : vector<1x2x128xf32> to vector<2x128xf32>
    %295 = vector.shape_cast %291 : vector<2x128xf32> to vector<1x2x128xf32>
    tpu.vector_store %arg4[%292, %c0_134, %c128_135], %295 {strides = array<i32>} : memref<8x2x256xf32, #tpu.memory_space<vmem>>, vector<1x2x128xf32>,
    %c4_i32 = arith.constant 4 : i32
    %c7_i32_136 = arith.constant 7 : i32
    %296 = arith.subi %c7_i32_136, %c4_i32 : i32
    %c0_137 = arith.constant 0 : index
    %c0_138 = arith.constant 0 : index
    %297 = vector.load %arg9[%c0_137, %c0_138] : memref<4x128xf32, #tpu.memory_space<vmem>>, vector<4x128xf32>
    %c0_139 = arith.constant 0 : index
    %c0_140 = arith.constant 0 : index
    %298 = vector.load %arg10[%c0_139, %c0_140] : memref<4x128xf32, #tpu.memory_space<vmem>>, vector<4x128xf32>
    %299 = arith.truncf %297 : vector<4x128xf32> to vector<4x128xbf16>
    %cst_141 = arith.constant dense<0.000000e+00> : vector<4x1024xf32>
    %300 = tpu.matmul %299, %83, %cst_141 {dimension_numbers = #tpu.dot_dimension_numbers<[1], [0], [0], [1], [0, 0, 1, 1], [], []>} : vector<4x128xbf16>, vector<128x1024xbf16>, vector<4x1024xf32> -> vector<4x1024xf32>
    %301 = arith.index_cast %c4_i32 : i32 to index
    %c0_142 = arith.constant 0 : index
    %c0_143 = arith.constant 0 : index
    %302 = vector.load %arg7[%301, %c0_142, %c0_143] : memref<8x2x512xf32, #tpu.memory_space<vmem>>, vector<1x2x512xf32>
    %303 = vector.shape_cast %302 : vector<1x2x512xf32> to vector<2x512xf32>
    %304 = vector.extract_strided_slice %300 {offsets = [0, 0], sizes = [2, 512], strides = [1, 1]} : vector<4x1024xf32> to vector<2x512xf32>
    %305 = arith.addf %303, %304 : vector<2x512xf32>
    %306 = arith.index_cast %296 : i32 to index
    %c0_144 = arith.constant 0 : index
    %c0_145 = arith.constant 0 : index
    %307 = vector.load %arg8[%306, %c0_144, %c0_145] : memref<8x2x512xf32, #tpu.memory_space<vmem>>, vector<1x2x512xf32>
    %308 = vector.shape_cast %307 : vector<1x2x512xf32> to vector<2x512xf32>
    %309 = vector.extract_strided_slice %300 {offsets = [2, 512], sizes = [2, 512], strides = [1, 1]} : vector<4x1024xf32> to vector<2x512xf32>
    %310 = arith.addf %308, %309 : vector<2x512xf32>
    %311 = tpu.concatenate %305, %310 in 0 : vector<2x512xf32>, vector<2x512xf32> -> vector<4x512xf32>
    %312 = vector.extract_strided_slice %311 {offsets = [0, 0], sizes = [4, 128], strides = [1, 1]} : vector<4x512xf32> to vector<4x128xf32>
    %313 = arith.negf %312 : vector<4x128xf32>
    %314 = math.exp %313 : vector<4x128xf32>
    %cst_146 = arith.constant 1.000000e+00 : f32
    %315 = vector.broadcast %cst_146 : f32 to vector<4x128xf32>
    %316 = arith.addf %315, %314 : vector<4x128xf32>
    %317 = arith.divf %315, %316 : vector<4x128xf32>
    %318 = vector.extract_strided_slice %311 {offsets = [0, 128], sizes = [4, 128], strides = [1, 1]} : vector<4x512xf32> to vector<4x128xf32>
    %319 = arith.negf %318 : vector<4x128xf32>
    %320 = math.exp %319 : vector<4x128xf32>
    %cst_147 = arith.constant 1.000000e+00 : f32
    %321 = vector.broadcast %cst_147 : f32 to vector<4x128xf32>
    %322 = arith.addf %321, %320 : vector<4x128xf32>
    %323 = arith.divf %321, %322 : vector<4x128xf32>
    %324 = vector.extract_strided_slice %311 {offsets = [0, 256], sizes = [4, 128], strides = [1, 1]} : vector<4x512xf32> to vector<4x128xf32>
    %325 = math.tanh %324 : vector<4x128xf32>
    %326 = vector.extract_strided_slice %311 {offsets = [0, 384], sizes = [4, 128], strides = [1, 1]} : vector<4x512xf32> to vector<4x128xf32>
    %327 = arith.negf %326 : vector<4x128xf32>
    %328 = math.exp %327 : vector<4x128xf32>
    %cst_148 = arith.constant 1.000000e+00 : f32
    %329 = vector.broadcast %cst_148 : f32 to vector<4x128xf32>
    %330 = arith.addf %329, %328 : vector<4x128xf32>
    %331 = arith.divf %329, %330 : vector<4x128xf32>
    %332 = arith.mulf %323, %298 : vector<4x128xf32>
    %333 = arith.mulf %317, %325 : vector<4x128xf32>
    %334 = arith.addf %332, %333 : vector<4x128xf32>
    %335 = math.tanh %334 : vector<4x128xf32>
    %336 = arith.mulf %331, %335 : vector<4x128xf32>
    %c0_149 = arith.constant 0 : index
    %c0_150 = arith.constant 0 : index
    %337 = vector.load %arg10[%c0_149, %c0_150] : memref<4x128xf32, #tpu.memory_space<vmem>>, vector<4x128xf32>
    tpu.vector_store %arg10[%c0_149, %c0_150], %334 {strides = array<i32>} : memref<4x128xf32, #tpu.memory_space<vmem>>, vector<4x128xf32>,
    %c0_151 = arith.constant 0 : index
    %c0_152 = arith.constant 0 : index
    %338 = vector.load %arg9[%c0_151, %c0_152] : memref<4x128xf32, #tpu.memory_space<vmem>>, vector<4x128xf32>
    tpu.vector_store %arg9[%c0_151, %c0_152], %336 {strides = array<i32>} : memref<4x128xf32, #tpu.memory_space<vmem>>, vector<4x128xf32>,
    %339 = vector.extract_strided_slice %336 {offsets = [0, 0], sizes = [2, 128], strides = [1, 1]} : vector<4x128xf32> to vector<2x128xf32>
    %340 = arith.index_cast %c4_i32 : i32 to index
    %c0_153 = arith.constant 0 : index
    %c0_154 = arith.constant 0 : index
    %341 = vector.load %arg4[%340, %c0_153, %c0_154] : memref<8x2x256xf32, #tpu.memory_space<vmem>>, vector<1x2x128xf32>
    %342 = vector.shape_cast %341 : vector<1x2x128xf32> to vector<2x128xf32>
    %343 = vector.shape_cast %339 : vector<2x128xf32> to vector<1x2x128xf32>
    tpu.vector_store %arg4[%340, %c0_153, %c0_154], %343 {strides = array<i32>} : memref<8x2x256xf32, #tpu.memory_space<vmem>>, vector<1x2x128xf32>,
    %344 = vector.extract_strided_slice %336 {offsets = [2, 0], sizes = [2, 128], strides = [1, 1]} : vector<4x128xf32> to vector<2x128xf32>
    %345 = arith.index_cast %296 : i32 to index
    %c0_155 = arith.constant 0 : index
    %c128_156 = arith.constant 128 : index
    %346 = vector.load %arg4[%345, %c0_155, %c128_156] : memref<8x2x256xf32, #tpu.memory_space<vmem>>, vector<1x2x128xf32>
    %347 = vector.shape_cast %346 : vector<1x2x128xf32> to vector<2x128xf32>
    %348 = vector.shape_cast %344 : vector<2x128xf32> to vector<1x2x128xf32>
    tpu.vector_store %arg4[%345, %c0_155, %c128_156], %348 {strides = array<i32>} : memref<8x2x256xf32, #tpu.memory_space<vmem>>, vector<1x2x128xf32>,
    %c5_i32 = arith.constant 5 : i32
    %c7_i32_157 = arith.constant 7 : i32
    %349 = arith.subi %c7_i32_157, %c5_i32 : i32
    %c0_158 = arith.constant 0 : index
    %c0_159 = arith.constant 0 : index
    %350 = vector.load %arg9[%c0_158, %c0_159] : memref<4x128xf32, #tpu.memory_space<vmem>>, vector<4x128xf32>
    %c0_160 = arith.constant 0 : index
    %c0_161 = arith.constant 0 : index
    %351 = vector.load %arg10[%c0_160, %c0_161] : memref<4x128xf32, #tpu.memory_space<vmem>>, vector<4x128xf32>
    %352 = arith.truncf %350 : vector<4x128xf32> to vector<4x128xbf16>
    %cst_162 = arith.constant dense<0.000000e+00> : vector<4x1024xf32>
    %353 = tpu.matmul %352, %83, %cst_162 {dimension_numbers = #tpu.dot_dimension_numbers<[1], [0], [0], [1], [0, 0, 1, 1], [], []>} : vector<4x128xbf16>, vector<128x1024xbf16>, vector<4x1024xf32> -> vector<4x1024xf32>
    %354 = arith.index_cast %c5_i32 : i32 to index
    %c0_163 = arith.constant 0 : index
    %c0_164 = arith.constant 0 : index
    %355 = vector.load %arg7[%354, %c0_163, %c0_164] : memref<8x2x512xf32, #tpu.memory_space<vmem>>, vector<1x2x512xf32>
    %356 = vector.shape_cast %355 : vector<1x2x512xf32> to vector<2x512xf32>
    %357 = vector.extract_strided_slice %353 {offsets = [0, 0], sizes = [2, 512], strides = [1, 1]} : vector<4x1024xf32> to vector<2x512xf32>
    %358 = arith.addf %356, %357 : vector<2x512xf32>
    %359 = arith.index_cast %349 : i32 to index
    %c0_165 = arith.constant 0 : index
    %c0_166 = arith.constant 0 : index
    %360 = vector.load %arg8[%359, %c0_165, %c0_166] : memref<8x2x512xf32, #tpu.memory_space<vmem>>, vector<1x2x512xf32>
    %361 = vector.shape_cast %360 : vector<1x2x512xf32> to vector<2x512xf32>
    %362 = vector.extract_strided_slice %353 {offsets = [2, 512], sizes = [2, 512], strides = [1, 1]} : vector<4x1024xf32> to vector<2x512xf32>
    %363 = arith.addf %361, %362 : vector<2x512xf32>
    %364 = tpu.concatenate %358, %363 in 0 : vector<2x512xf32>, vector<2x512xf32> -> vector<4x512xf32>
    %365 = vector.extract_strided_slice %364 {offsets = [0, 0], sizes = [4, 128], strides = [1, 1]} : vector<4x512xf32> to vector<4x128xf32>
    %366 = arith.negf %365 : vector<4x128xf32>
    %367 = math.exp %366 : vector<4x128xf32>
    %cst_167 = arith.constant 1.000000e+00 : f32
    %368 = vector.broadcast %cst_167 : f32 to vector<4x128xf32>
    %369 = arith.addf %368, %367 : vector<4x128xf32>
    %370 = arith.divf %368, %369 : vector<4x128xf32>
    %371 = vector.extract_strided_slice %364 {offsets = [0, 128], sizes = [4, 128], strides = [1, 1]} : vector<4x512xf32> to vector<4x128xf32>
    %372 = arith.negf %371 : vector<4x128xf32>
    %373 = math.exp %372 : vector<4x128xf32>
    %cst_168 = arith.constant 1.000000e+00 : f32
    %374 = vector.broadcast %cst_168 : f32 to vector<4x128xf32>
    %375 = arith.addf %374, %373 : vector<4x128xf32>
    %376 = arith.divf %374, %375 : vector<4x128xf32>
    %377 = vector.extract_strided_slice %364 {offsets = [0, 256], sizes = [4, 128], strides = [1, 1]} : vector<4x512xf32> to vector<4x128xf32>
    %378 = math.tanh %377 : vector<4x128xf32>
    %379 = vector.extract_strided_slice %364 {offsets = [0, 384], sizes = [4, 128], strides = [1, 1]} : vector<4x512xf32> to vector<4x128xf32>
    %380 = arith.negf %379 : vector<4x128xf32>
    %381 = math.exp %380 : vector<4x128xf32>
    %cst_169 = arith.constant 1.000000e+00 : f32
    %382 = vector.broadcast %cst_169 : f32 to vector<4x128xf32>
    %383 = arith.addf %382, %381 : vector<4x128xf32>
    %384 = arith.divf %382, %383 : vector<4x128xf32>
    %385 = arith.mulf %376, %351 : vector<4x128xf32>
    %386 = arith.mulf %370, %378 : vector<4x128xf32>
    %387 = arith.addf %385, %386 : vector<4x128xf32>
    %388 = math.tanh %387 : vector<4x128xf32>
    %389 = arith.mulf %384, %388 : vector<4x128xf32>
    %c0_170 = arith.constant 0 : index
    %c0_171 = arith.constant 0 : index
    %390 = vector.load %arg10[%c0_170, %c0_171] : memref<4x128xf32, #tpu.memory_space<vmem>>, vector<4x128xf32>
    tpu.vector_store %arg10[%c0_170, %c0_171], %387 {strides = array<i32>} : memref<4x128xf32, #tpu.memory_space<vmem>>, vector<4x128xf32>,
    %c0_172 = arith.constant 0 : index
    %c0_173 = arith.constant 0 : index
    %391 = vector.load %arg9[%c0_172, %c0_173] : memref<4x128xf32, #tpu.memory_space<vmem>>, vector<4x128xf32>
    tpu.vector_store %arg9[%c0_172, %c0_173], %389 {strides = array<i32>} : memref<4x128xf32, #tpu.memory_space<vmem>>, vector<4x128xf32>,
    %392 = vector.extract_strided_slice %389 {offsets = [0, 0], sizes = [2, 128], strides = [1, 1]} : vector<4x128xf32> to vector<2x128xf32>
    %393 = arith.index_cast %c5_i32 : i32 to index
    %c0_174 = arith.constant 0 : index
    %c0_175 = arith.constant 0 : index
    %394 = vector.load %arg4[%393, %c0_174, %c0_175] : memref<8x2x256xf32, #tpu.memory_space<vmem>>, vector<1x2x128xf32>
    %395 = vector.shape_cast %394 : vector<1x2x128xf32> to vector<2x128xf32>
    %396 = vector.shape_cast %392 : vector<2x128xf32> to vector<1x2x128xf32>
    tpu.vector_store %arg4[%393, %c0_174, %c0_175], %396 {strides = array<i32>} : memref<8x2x256xf32, #tpu.memory_space<vmem>>, vector<1x2x128xf32>,
    %397 = vector.extract_strided_slice %389 {offsets = [2, 0], sizes = [2, 128], strides = [1, 1]} : vector<4x128xf32> to vector<2x128xf32>
    %398 = arith.index_cast %349 : i32 to index
    %c0_176 = arith.constant 0 : index
    %c128_177 = arith.constant 128 : index
    %399 = vector.load %arg4[%398, %c0_176, %c128_177] : memref<8x2x256xf32, #tpu.memory_space<vmem>>, vector<1x2x128xf32>
    %400 = vector.shape_cast %399 : vector<1x2x128xf32> to vector<2x128xf32>
    %401 = vector.shape_cast %397 : vector<2x128xf32> to vector<1x2x128xf32>
    tpu.vector_store %arg4[%398, %c0_176, %c128_177], %401 {strides = array<i32>} : memref<8x2x256xf32, #tpu.memory_space<vmem>>, vector<1x2x128xf32>,
    %c6_i32 = arith.constant 6 : i32
    %c7_i32_178 = arith.constant 7 : i32
    %402 = arith.subi %c7_i32_178, %c6_i32 : i32
    %c0_179 = arith.constant 0 : index
    %c0_180 = arith.constant 0 : index
    %403 = vector.load %arg9[%c0_179, %c0_180] : memref<4x128xf32, #tpu.memory_space<vmem>>, vector<4x128xf32>
    %c0_181 = arith.constant 0 : index
    %c0_182 = arith.constant 0 : index
    %404 = vector.load %arg10[%c0_181, %c0_182] : memref<4x128xf32, #tpu.memory_space<vmem>>, vector<4x128xf32>
    %405 = arith.truncf %403 : vector<4x128xf32> to vector<4x128xbf16>
    %cst_183 = arith.constant dense<0.000000e+00> : vector<4x1024xf32>
    %406 = tpu.matmul %405, %83, %cst_183 {dimension_numbers = #tpu.dot_dimension_numbers<[1], [0], [0], [1], [0, 0, 1, 1], [], []>} : vector<4x128xbf16>, vector<128x1024xbf16>, vector<4x1024xf32> -> vector<4x1024xf32>
    %407 = arith.index_cast %c6_i32 : i32 to index
    %c0_184 = arith.constant 0 : index
    %c0_185 = arith.constant 0 : index
    %408 = vector.load %arg7[%407, %c0_184, %c0_185] : memref<8x2x512xf32, #tpu.memory_space<vmem>>, vector<1x2x512xf32>
    %409 = vector.shape_cast %408 : vector<1x2x512xf32> to vector<2x512xf32>
    %410 = vector.extract_strided_slice %406 {offsets = [0, 0], sizes = [2, 512], strides = [1, 1]} : vector<4x1024xf32> to vector<2x512xf32>
    %411 = arith.addf %409, %410 : vector<2x512xf32>
    %412 = arith.index_cast %402 : i32 to index
    %c0_186 = arith.constant 0 : index
    %c0_187 = arith.constant 0 : index
    %413 = vector.load %arg8[%412, %c0_186, %c0_187] : memref<8x2x512xf32, #tpu.memory_space<vmem>>, vector<1x2x512xf32>
    %414 = vector.shape_cast %413 : vector<1x2x512xf32> to vector<2x512xf32>
    %415 = vector.extract_strided_slice %406 {offsets = [2, 512], sizes = [2, 512], strides = [1, 1]} : vector<4x1024xf32> to vector<2x512xf32>
    %416 = arith.addf %414, %415 : vector<2x512xf32>
    %417 = tpu.concatenate %411, %416 in 0 : vector<2x512xf32>, vector<2x512xf32> -> vector<4x512xf32>
    %418 = vector.extract_strided_slice %417 {offsets = [0, 0], sizes = [4, 128], strides = [1, 1]} : vector<4x512xf32> to vector<4x128xf32>
    %419 = arith.negf %418 : vector<4x128xf32>
    %420 = math.exp %419 : vector<4x128xf32>
    %cst_188 = arith.constant 1.000000e+00 : f32
    %421 = vector.broadcast %cst_188 : f32 to vector<4x128xf32>
    %422 = arith.addf %421, %420 : vector<4x128xf32>
    %423 = arith.divf %421, %422 : vector<4x128xf32>
    %424 = vector.extract_strided_slice %417 {offsets = [0, 128], sizes = [4, 128], strides = [1, 1]} : vector<4x512xf32> to vector<4x128xf32>
    %425 = arith.negf %424 : vector<4x128xf32>
    %426 = math.exp %425 : vector<4x128xf32>
    %cst_189 = arith.constant 1.000000e+00 : f32
    %427 = vector.broadcast %cst_189 : f32 to vector<4x128xf32>
    %428 = arith.addf %427, %426 : vector<4x128xf32>
    %429 = arith.divf %427, %428 : vector<4x128xf32>
    %430 = vector.extract_strided_slice %417 {offsets = [0, 256], sizes = [4, 128], strides = [1, 1]} : vector<4x512xf32> to vector<4x128xf32>
    %431 = math.tanh %430 : vector<4x128xf32>
    %432 = vector.extract_strided_slice %417 {offsets = [0, 384], sizes = [4, 128], strides = [1, 1]} : vector<4x512xf32> to vector<4x128xf32>
    %433 = arith.negf %432 : vector<4x128xf32>
    %434 = math.exp %433 : vector<4x128xf32>
    %cst_190 = arith.constant 1.000000e+00 : f32
    %435 = vector.broadcast %cst_190 : f32 to vector<4x128xf32>
    %436 = arith.addf %435, %434 : vector<4x128xf32>
    %437 = arith.divf %435, %436 : vector<4x128xf32>
    %438 = arith.mulf %429, %404 : vector<4x128xf32>
    %439 = arith.mulf %423, %431 : vector<4x128xf32>
    %440 = arith.addf %438, %439 : vector<4x128xf32>
    %441 = math.tanh %440 : vector<4x128xf32>
    %442 = arith.mulf %437, %441 : vector<4x128xf32>
    %c0_191 = arith.constant 0 : index
    %c0_192 = arith.constant 0 : index
    %443 = vector.load %arg10[%c0_191, %c0_192] : memref<4x128xf32, #tpu.memory_space<vmem>>, vector<4x128xf32>
    tpu.vector_store %arg10[%c0_191, %c0_192], %440 {strides = array<i32>} : memref<4x128xf32, #tpu.memory_space<vmem>>, vector<4x128xf32>,
    %c0_193 = arith.constant 0 : index
    %c0_194 = arith.constant 0 : index
    %444 = vector.load %arg9[%c0_193, %c0_194] : memref<4x128xf32, #tpu.memory_space<vmem>>, vector<4x128xf32>
    tpu.vector_store %arg9[%c0_193, %c0_194], %442 {strides = array<i32>} : memref<4x128xf32, #tpu.memory_space<vmem>>, vector<4x128xf32>,
    %445 = vector.extract_strided_slice %442 {offsets = [0, 0], sizes = [2, 128], strides = [1, 1]} : vector<4x128xf32> to vector<2x128xf32>
    %446 = arith.index_cast %c6_i32 : i32 to index
    %c0_195 = arith.constant 0 : index
    %c0_196 = arith.constant 0 : index
    %447 = vector.load %arg4[%446, %c0_195, %c0_196] : memref<8x2x256xf32, #tpu.memory_space<vmem>>, vector<1x2x128xf32>
    %448 = vector.shape_cast %447 : vector<1x2x128xf32> to vector<2x128xf32>
    %449 = vector.shape_cast %445 : vector<2x128xf32> to vector<1x2x128xf32>
    tpu.vector_store %arg4[%446, %c0_195, %c0_196], %449 {strides = array<i32>} : memref<8x2x256xf32, #tpu.memory_space<vmem>>, vector<1x2x128xf32>,
    %450 = vector.extract_strided_slice %442 {offsets = [2, 0], sizes = [2, 128], strides = [1, 1]} : vector<4x128xf32> to vector<2x128xf32>
    %451 = arith.index_cast %402 : i32 to index
    %c0_197 = arith.constant 0 : index
    %c128_198 = arith.constant 128 : index
    %452 = vector.load %arg4[%451, %c0_197, %c128_198] : memref<8x2x256xf32, #tpu.memory_space<vmem>>, vector<1x2x128xf32>
    %453 = vector.shape_cast %452 : vector<1x2x128xf32> to vector<2x128xf32>
    %454 = vector.shape_cast %450 : vector<2x128xf32> to vector<1x2x128xf32>
    tpu.vector_store %arg4[%451, %c0_197, %c128_198], %454 {strides = array<i32>} : memref<8x2x256xf32, #tpu.memory_space<vmem>>, vector<1x2x128xf32>,
    %c7_i32_199 = arith.constant 7 : i32
    %c7_i32_200 = arith.constant 7 : i32
    %455 = arith.subi %c7_i32_200, %c7_i32_199 : i32
    %c0_201 = arith.constant 0 : index
    %c0_202 = arith.constant 0 : index
    %456 = vector.load %arg9[%c0_201, %c0_202] : memref<4x128xf32, #tpu.memory_space<vmem>>, vector<4x128xf32>
    %c0_203 = arith.constant 0 : index
    %c0_204 = arith.constant 0 : index
    %457 = vector.load %arg10[%c0_203, %c0_204] : memref<4x128xf32, #tpu.memory_space<vmem>>, vector<4x128xf32>
    %458 = arith.truncf %456 : vector<4x128xf32> to vector<4x128xbf16>
    %cst_205 = arith.constant dense<0.000000e+00> : vector<4x1024xf32>
    %459 = tpu.matmul %458, %83, %cst_205 {dimension_numbers = #tpu.dot_dimension_numbers<[1], [0], [0], [1], [0, 0, 1, 1], [], []>} : vector<4x128xbf16>, vector<128x1024xbf16>, vector<4x1024xf32> -> vector<4x1024xf32>
    %460 = arith.index_cast %c7_i32_199 : i32 to index
    %c0_206 = arith.constant 0 : index
    %c0_207 = arith.constant 0 : index
    %461 = vector.load %arg7[%460, %c0_206, %c0_207] : memref<8x2x512xf32, #tpu.memory_space<vmem>>, vector<1x2x512xf32>
    %462 = vector.shape_cast %461 : vector<1x2x512xf32> to vector<2x512xf32>
    %463 = vector.extract_strided_slice %459 {offsets = [0, 0], sizes = [2, 512], strides = [1, 1]} : vector<4x1024xf32> to vector<2x512xf32>
    %464 = arith.addf %462, %463 : vector<2x512xf32>
    %465 = arith.index_cast %455 : i32 to index
    %c0_208 = arith.constant 0 : index
    %c0_209 = arith.constant 0 : index
    %466 = vector.load %arg8[%465, %c0_208, %c0_209] : memref<8x2x512xf32, #tpu.memory_space<vmem>>, vector<1x2x512xf32>
    %467 = vector.shape_cast %466 : vector<1x2x512xf32> to vector<2x512xf32>
    %468 = vector.extract_strided_slice %459 {offsets = [2, 512], sizes = [2, 512], strides = [1, 1]} : vector<4x1024xf32> to vector<2x512xf32>
    %469 = arith.addf %467, %468 : vector<2x512xf32>
    %470 = tpu.concatenate %464, %469 in 0 : vector<2x512xf32>, vector<2x512xf32> -> vector<4x512xf32>
    %471 = vector.extract_strided_slice %470 {offsets = [0, 0], sizes = [4, 128], strides = [1, 1]} : vector<4x512xf32> to vector<4x128xf32>
    %472 = arith.negf %471 : vector<4x128xf32>
    %473 = math.exp %472 : vector<4x128xf32>
    %cst_210 = arith.constant 1.000000e+00 : f32
    %474 = vector.broadcast %cst_210 : f32 to vector<4x128xf32>
    %475 = arith.addf %474, %473 : vector<4x128xf32>
    %476 = arith.divf %474, %475 : vector<4x128xf32>
    %477 = vector.extract_strided_slice %470 {offsets = [0, 128], sizes = [4, 128], strides = [1, 1]} : vector<4x512xf32> to vector<4x128xf32>
    %478 = arith.negf %477 : vector<4x128xf32>
    %479 = math.exp %478 : vector<4x128xf32>
    %cst_211 = arith.constant 1.000000e+00 : f32
    %480 = vector.broadcast %cst_211 : f32 to vector<4x128xf32>
    %481 = arith.addf %480, %479 : vector<4x128xf32>
    %482 = arith.divf %480, %481 : vector<4x128xf32>
    %483 = vector.extract_strided_slice %470 {offsets = [0, 256], sizes = [4, 128], strides = [1, 1]} : vector<4x512xf32> to vector<4x128xf32>
    %484 = math.tanh %483 : vector<4x128xf32>
    %485 = vector.extract_strided_slice %470 {offsets = [0, 384], sizes = [4, 128], strides = [1, 1]} : vector<4x512xf32> to vector<4x128xf32>
    %486 = arith.negf %485 : vector<4x128xf32>
    %487 = math.exp %486 : vector<4x128xf32>
    %cst_212 = arith.constant 1.000000e+00 : f32
    %488 = vector.broadcast %cst_212 : f32 to vector<4x128xf32>
    %489 = arith.addf %488, %487 : vector<4x128xf32>
    %490 = arith.divf %488, %489 : vector<4x128xf32>
    %491 = arith.mulf %482, %457 : vector<4x128xf32>
    %492 = arith.mulf %476, %484 : vector<4x128xf32>
    %493 = arith.addf %491, %492 : vector<4x128xf32>
    %494 = math.tanh %493 : vector<4x128xf32>
    %495 = arith.mulf %490, %494 : vector<4x128xf32>
    %c0_213 = arith.constant 0 : index
    %c0_214 = arith.constant 0 : index
    %496 = vector.load %arg10[%c0_213, %c0_214] : memref<4x128xf32, #tpu.memory_space<vmem>>, vector<4x128xf32>
    tpu.vector_store %arg10[%c0_213, %c0_214], %493 {strides = array<i32>} : memref<4x128xf32, #tpu.memory_space<vmem>>, vector<4x128xf32>,
    %c0_215 = arith.constant 0 : index
    %c0_216 = arith.constant 0 : index
    %497 = vector.load %arg9[%c0_215, %c0_216] : memref<4x128xf32, #tpu.memory_space<vmem>>, vector<4x128xf32>
    tpu.vector_store %arg9[%c0_215, %c0_216], %495 {strides = array<i32>} : memref<4x128xf32, #tpu.memory_space<vmem>>, vector<4x128xf32>,
    %498 = vector.extract_strided_slice %495 {offsets = [0, 0], sizes = [2, 128], strides = [1, 1]} : vector<4x128xf32> to vector<2x128xf32>
    %499 = arith.index_cast %c7_i32_199 : i32 to index
    %c0_217 = arith.constant 0 : index
    %c0_218 = arith.constant 0 : index
    %500 = vector.load %arg4[%499, %c0_217, %c0_218] : memref<8x2x256xf32, #tpu.memory_space<vmem>>, vector<1x2x128xf32>
    %501 = vector.shape_cast %500 : vector<1x2x128xf32> to vector<2x128xf32>
    %502 = vector.shape_cast %498 : vector<2x128xf32> to vector<1x2x128xf32>
    tpu.vector_store %arg4[%499, %c0_217, %c0_218], %502 {strides = array<i32>} : memref<8x2x256xf32, #tpu.memory_space<vmem>>, vector<1x2x128xf32>,
    %503 = vector.extract_strided_slice %495 {offsets = [2, 0], sizes = [2, 128], strides = [1, 1]} : vector<4x128xf32> to vector<2x128xf32>
    %504 = arith.index_cast %455 : i32 to index
    %c0_219 = arith.constant 0 : index
    %c128_220 = arith.constant 128 : index
    %505 = vector.load %arg4[%504, %c0_219, %c128_220] : memref<8x2x256xf32, #tpu.memory_space<vmem>>, vector<1x2x128xf32>
    %506 = vector.shape_cast %505 : vector<1x2x128xf32> to vector<2x128xf32>
    %507 = vector.shape_cast %503 : vector<2x128xf32> to vector<1x2x128xf32>
    tpu.vector_store %arg4[%504, %c0_219, %c128_220], %507 {strides = array<i32>} : memref<8x2x256xf32, #tpu.memory_space<vmem>>, vector<1x2x128xf32>,
    %c8_i32 = arith.constant 8 : i32
    %c0_221 = arith.constant 0 : index
    %c0_222 = arith.constant 0 : index
    %508 = vector.load %arg9[%c0_221, %c0_222] : memref<4x128xf32, #tpu.memory_space<vmem>>, vector<4x128xf32>
    %c0_223 = arith.constant 0 : index
    %c0_224 = arith.constant 0 : index
    %509 = vector.load %arg10[%c0_223, %c0_224] : memref<4x128xf32, #tpu.memory_space<vmem>>, vector<4x128xf32>
    %510 = vector.extract_strided_slice %508 {offsets = [0, 0], sizes = [2, 128], strides = [1, 1]} : vector<4x128xf32> to vector<2x128xf32>
    %511 = vector.extract_strided_slice %508 {offsets = [2, 0], sizes = [2, 128], strides = [1, 1]} : vector<4x128xf32> to vector<2x128xf32>
    %512 = tpu.concatenate %510, %511 in 1 : vector<2x128xf32>, vector<2x128xf32> -> vector<2x256xf32>
    %c0_225 = arith.constant 0 : index
    %c0_226 = arith.constant 0 : index
    %513 = vector.load %arg5[%c0_225, %c0_226] : memref<2x256xf32, #tpu.memory_space<vmem>>, vector<2x256xf32>
    tpu.vector_store %arg5[%c0_225, %c0_226], %512 {strides = array<i32>} : memref<2x256xf32, #tpu.memory_space<vmem>>, vector<2x256xf32>,
    %514 = vector.extract_strided_slice %509 {offsets = [0, 0], sizes = [2, 128], strides = [1, 1]} : vector<4x128xf32> to vector<2x128xf32>
    %515 = vector.extract_strided_slice %509 {offsets = [2, 0], sizes = [2, 128], strides = [1, 1]} : vector<4x128xf32> to vector<2x128xf32>
    %516 = tpu.concatenate %514, %515 in 1 : vector<2x128xf32>, vector<2x128xf32> -> vector<2x256xf32>
    %c0_227 = arith.constant 0 : index
    %c0_228 = arith.constant 0 : index
    %517 = vector.load %arg6[%c0_227, %c0_228] : memref<2x256xf32, #tpu.memory_space<vmem>>, vector<2x256xf32>
    tpu.vector_store %arg6[%c0_227, %c0_228], %516 {strides = array<i32>} : memref<2x256xf32, #tpu.memory_space<vmem>>, vector<2x256xf32>,
    return
  }
}

</mosaic_0001>

<llo_original>
// kernel: attn_encoder_forward.5
$region0: #{attn_encoder_forward.5}
  #allocation0 [shape = 'u32[]', space=smem, size = 0x4, offset = 0x4, fixed_abs, tag = 'smem constant byte address 0x4 - core index']
  #allocation1 [shape = 'u32[144,128]{1,0:T(1,128)}', space=vmem, size = 0x12000, scoped, tag = 'internal scratch']
  %s0 = inlined_call_operand.vmem [shape: f32[8,256], index: 0, kind: input, shape index: {}]
  %s1 = inlined_call_operand.vmem [shape: bf16[256,128], index: 1, kind: input, shape index: {}]
  %s2 = inlined_call_operand.vmem [shape: f32[1,128], index: 2, kind: input, shape index: {}]
  %s3 = inlined_call_operand.vmem [shape: f32[8,128], index: 3, kind: output, shape index: {}]
  %s4 = sld [smem:[#allocation0]]
  $region22: #{attn_encoder_forward.5} parent=0
    _
  %s6 = ssub.s32 1, %s4
  %s7 = scalar_select 0, %s6, %s4
  // Predicated region
  $region2: #{attn_encoder_forward.5} parent=0 // pred_check
    _
  $region3: #{attn_encoder_forward.5} parent=0 // pred_check_branch
    %9 = sbr.rel (0) target = $region5
  $region4: #{attn_encoder_forward.5} parent=0 // pred_region
    _
  $region5: #{attn_encoder_forward.5} parent=0 // pred_fallthru
    _
  // Predicated region
  $region6: #{attn_encoder_forward.5} parent=0 // pred_check
    _
  $region7: #{attn_encoder_forward.5} parent=0 // pred_check_branch
    %11 = sbr.rel (0) target = $region9
  $region8: #{attn_encoder_forward.5} parent=0 // pred_region
    _
  $region9: #{attn_encoder_forward.5} parent=0 // pred_fallthru
    _
  // Predicated region
  $region10: #{attn_encoder_forward.5} parent=0 // pred_check
    _
  $region11: #{attn_encoder_forward.5} parent=0 // pred_check_branch
    %13 = sbr.rel (0) target = $region13
  $region12: #{attn_encoder_forward.5} parent=0 // pred_region
    _
  $region13: #{attn_encoder_forward.5} parent=0 // pred_fallthru
    _
  %v15 = vld [vmem:[%s0] sm:$0xff]
  %v16 = vld [vmem:[%s0 + $0x8] sm:$0xff]
  %v17 = vpack.c.bf16 %v15, %v15
  %v18 = vpack.c.bf16 %v16, %v16
  %v19 = vld [vmem:[%s1] sm:$0xf]
  %v20 = vld [vmem:[%s1 + $0x4] sm:$0xf]
  %v21 = vld [vmem:[%s1 + $0x8] sm:$0xf]
  %v22 = vld [vmem:[%s1 + $0xc] sm:$0xf]
  %v23 = vld [vmem:[%s1 + $0x10] sm:$0xf]
  %v24 = vld [vmem:[%s1 + $0x14] sm:$0xf]
  %v25 = vld [vmem:[%s1 + $0x18] sm:$0xf]
  %v26 = vld [vmem:[%s1 + $0x1c] sm:$0xf]
  %v27 = vld [vmem:[%s1 + $0x20] sm:$0xf]
  %v28 = vld [vmem:[%s1 + $0x24] sm:$0xf]
  %v29 = vld [vmem:[%s1 + $0x28] sm:$0xf]
  %v30 = vld [vmem:[%s1 + $0x2c] sm:$0xf]
  %v31 = vld [vmem:[%s1 + $0x30] sm:$0xf]
  %v32 = vld [vmem:[%s1 + $0x34] sm:$0xf]
  %v33 = vld [vmem:[%s1 + $0x38] sm:$0xf]
  %v34 = vld [vmem:[%s1 + $0x3c] sm:$0xf]
  %v35 = vld [vmem:[%s1 + $0x40] sm:$0xf]
  %v36 = vld [vmem:[%s1 + $0x44] sm:$0xf]
  %v37 = vld [vmem:[%s1 + $0x48] sm:$0xf]
  %v38 = vld [vmem:[%s1 + $0x4c] sm:$0xf]
  %v39 = vld [vmem:[%s1 + $0x50] sm:$0xf]
  %v40 = vld [vmem:[%s1 + $0x54] sm:$0xf]
  %v41 = vld [vmem:[%s1 + $0x58] sm:$0xf]
  %v42 = vld [vmem:[%s1 + $0x5c] sm:$0xf]
  %v43 = vld [vmem:[%s1 + $0x60] sm:$0xf]
  %v44 = vld [vmem:[%s1 + $0x64] sm:$0xf]
  %v45 = vld [vmem:[%s1 + $0x68] sm:$0xf]
  %v46 = vld [vmem:[%s1 + $0x6c] sm:$0xf]
  %v47 = vld [vmem:[%s1 + $0x70] sm:$0xf]
  %v48 = vld [vmem:[%s1 + $0x74] sm:$0xf]
  %v49 = vld [vmem:[%s1 + $0x78] sm:$0xf]
  %v50 = vld [vmem:[%s1 + $0x7c] sm:$0xf]
  %v51 = vld [vmem:[%s2] sm:$0x1]
  %v53 = vlaneseq
  %v54 = vshrl.u32 %v53, 7
  %v55 = vsub.s32 0, %v54
  %v56 = vrot.slane %v51, %v55
  %v90 = vunpack.c.l.b16 %v19
  %v91 = vunpack.c.l.b16 %v20
  %v92 = vunpack.c.l.b16 %v21
  %v93 = vunpack.c.l.b16 %v22
  %v94 = vunpack.c.l.b16 %v23
  %v95 = vunpack.c.l.b16 %v24
  %v96 = vunpack.c.l.b16 %v25
  %v97 = vunpack.c.l.b16 %v26
  %v98 = vunpack.c.l.b16 %v27
  %v99 = vunpack.c.l.b16 %v28
  %v100 = vunpack.c.l.b16 %v29
  %v101 = vunpack.c.l.b16 %v30
  %v102 = vunpack.c.l.b16 %v31
  %v103 = vunpack.c.l.b16 %v32
  %v104 = vunpack.c.l.b16 %v33
  %v105 = vunpack.c.l.b16 %v34
  %v106 = vunpack.c.l.b16 %v35
  %v107 = vunpack.c.l.b16 %v36
  %v108 = vunpack.c.l.b16 %v37
  %v109 = vunpack.c.l.b16 %v38
  %v110 = vunpack.c.l.b16 %v39
  %v111 = vunpack.c.l.b16 %v40
  %v112 = vunpack.c.l.b16 %v41
  %v113 = vunpack.c.l.b16 %v42
  %v114 = vunpack.c.l.b16 %v43
  %v115 = vunpack.c.l.b16 %v44
  %v116 = vunpack.c.l.b16 %v45
  %v117 = vunpack.c.l.b16 %v46
  %v118 = vunpack.c.l.b16 %v47
  %v119 = vunpack.c.l.b16 %v48
  %v120 = vunpack.c.l.b16 %v49
  %v121 = vunpack.c.l.b16 %v50
  %v122 = vpack.c.b16 %v91, %v90
  %v123 = vpack.c.b16 %v93, %v92
  %v124 = vpack.c.b16 %v95, %v94
  %v125 = vpack.c.b16 %v97, %v96
  %v126 = vpack.c.b16 %v99, %v98
  %v127 = vpack.c.b16 %v101, %v100
  %v128 = vpack.c.b16 %v103, %v102
  %v129 = vpack.c.b16 %v105, %v104
  %v130 = vpack.c.b16 %v107, %v106
  %v131 = vpack.c.b16 %v109, %v108
  %v132 = vpack.c.b16 %v111, %v110
  %v133 = vpack.c.b16 %v113, %v112
  %v134 = vpack.c.b16 %v115, %v114
  %v135 = vpack.c.b16 %v117, %v116
  %v136 = vpack.c.b16 %v119, %v118
  %v137 = vpack.c.b16 %v121, %v120
  %154 = vmatprep.subr.bf16.mxu0 0
  %155 = vmatpush1.bf16.msra.mxu0 %v129
  %156 = vmatprep.subr.bf16.mxu0 0
  %157 = vmatpush1.bf16.msra.mxu0 %v128
  %158 = vmatprep.subr.bf16.mxu0 0
  %159 = vmatpush1.bf16.msra.mxu0 %v127
  %160 = vmatprep.subr.bf16.mxu0 0
  %161 = vmatpush1.bf16.msra.mxu0 %v126
  %162 = vmatprep.subr.bf16.mxu0 0
  %163 = vmatpush1.bf16.msra.mxu0 %v125
  %164 = vmatprep.subr.bf16.mxu0 0
  %165 = vmatpush1.bf16.msra.mxu0 %v124
  %166 = vmatprep.subr.bf16.mxu0 0
  %167 = vmatpush1.bf16.msra.mxu0 %v123
  %168 = vmatprep.subr.bf16.mxu0 0
  %169 = vmatpush1.bf16.msra.mxu0 %v122
  %170 = vmatprep.subr.bf16.mxu0 0
  %171 = vmatpush2.bf16.msra.mxu0 %v137
  %172 = vmatprep.subr.bf16.mxu0 0
  %173 = vmatpush2.bf16.msra.mxu0 %v136
  %174 = vmatprep.subr.bf16.mxu0 0
  %175 = vmatpush2.bf16.msra.mxu0 %v135
  %176 = vmatprep.subr.bf16.mxu0 0
  %177 = vmatpush2.bf16.msra.mxu0 %v134
  %178 = vmatprep.subr.bf16.mxu0 0
  %179 = vmatpush2.bf16.msra.mxu0 %v133
  %180 = vmatprep.subr.bf16.mxu0 0
  %181 = vmatpush2.bf16.msra.mxu0 %v132
  %182 = vmatprep.subr.bf16.mxu0 0
  %183 = vmatpush2.bf16.msra.mxu0 %v131
  %184 = vmatprep.subr.bf16.mxu0 0
  %185 = vmatpush2.bf16.msra.mxu0 %v130
  %186 = vmatprep.mubr.bf16.mxu0 %v18
  %187 = vmatmul.mubr.bf16.gmra.mxu0 %v17
  %v188 = vpop.f32.mrf.mxu0
  %v189 = vadd.f32 %v56, %v188
  %v190 = vpop.f32.mrf.mxu0
  %v191 = vpop.f32.mrf.mxu0
  %v192 = vpop.f32.mrf.mxu0
  %193 = vdwg.mxu0
  %v194 = vtanh.pop %v189
  %195 = vst [vmem:[%s3] sm:$0xff] %v194
  // Predicated region
  $region14: #{attn_encoder_forward.5} parent=0 // pred_check
    _
  $region15: #{attn_encoder_forward.5} parent=0 // pred_check_branch
    %197 = sbr.rel (0) target = $region17
  $region16: #{attn_encoder_forward.5} parent=0 // pred_region
    _
  $region17: #{attn_encoder_forward.5} parent=0 // pred_fallthru
    _
  // Predicated region
  $region18: #{attn_encoder_forward.5} parent=0 // pred_check
    _
  $region19: #{attn_encoder_forward.5} parent=0 // pred_check_branch
    %199 = sbr.rel (0) target = $region21
  $region20: #{attn_encoder_forward.5} parent=0 // pred_region
    _
  $region21: #{attn_encoder_forward.5} parent=0 // pred_fallthru
    _

// kernel: attn_encoder_forward.3
$region0: #{attn_encoder_forward.3}
  #allocation0 [shape = 'u32[]', space=smem, size = 0x4, offset = 0x4, fixed_abs, tag = 'smem constant byte address 0x4 - core index']
  #allocation1 [shape = 'u32[144,128]{1,0:T(1,128)}', space=vmem, size = 0x12000, scoped, tag = 'internal scratch']
  #allocation2 [shape = 'f32[8,2,512]{2,1,0:T(2,128)}', space=vmem, size = 0x8000, scoped, tag = 'scratch operand']
  #allocation3 [shape = 'f32[8,2,512]{2,1,0:T(2,128)}', space=vmem, size = 0x8000, scoped, tag = 'scratch operand']
  #allocation4 [shape = 'f32[4,128]{1,0:T(4,128)}', space=vmem, size = 0x800, scoped, tag = 'scratch operand']
  #allocation5 [shape = 'f32[4,128]{1,0:T(4,128)}', space=vmem, size = 0x800, scoped, tag = 'scratch operand']
  %s0 = inlined_call_operand.vmem [shape: f32[16,128], index: 0, kind: input, shape index: {}]
  %s1 = inlined_call_operand.hbm [shape: bf16[128,1024], index: 1, kind: input, shape index: {}]
  %s2 = inlined_call_operand.hbm [shape: bf16[128,1024], index: 2, kind: input, shape index: {}]
  %s3 = inlined_call_operand.hbm [shape: f32[1,1024], index: 3, kind: input, shape index: {}]
  %s4 = inlined_call_operand.vmem [shape: f32[8,2,256], index: 4, kind: output, shape index: {0}]
  %s5 = inlined_call_operand.vmem [shape: f32[2,256], index: 5, kind: output, shape index: {1}]
  %s6 = inlined_call_operand.vmem [shape: f32[2,256], index: 6, kind: output, shape index: {2}]
  %7 = xla_tuple %s4, %s5, %s6
  %s8 = sld [smem:[#allocation0]]
  $region54: #{attn_encoder_forward.3} parent=0
    _
  %s10 = ssub.s32 1, %s8
  %s11 = scalar_select 0, %s10, %s8
  $region1: #{attn_encoder_forward.3} parent=0
    #allocation6 [shape = 'u8[262144]{0}', space=vmem, size = 0x40000, scoped, tag = 'input window, operand 1, single buffered']
    #allocation7 [shape = 's32[1]{0}', space=sflag, size = 0x4, scoped, tag = 'scoped memory for attn_encoder_forward.3']
    #allocation8 [shape = 'u8[262144]{0}', space=vmem, size = 0x40000, scoped, tag = 'input window, operand 2, single buffered']
    #allocation9 [shape = 's32[1]{0}', space=sflag, size = 0x4, scoped, tag = 'scoped memory for attn_encoder_forward.3']
    #allocation10 [shape = 'u8[4096]{0}', space=vmem, size = 0x1000, scoped, tag = 'input window, operand 3, single buffered']
    %12 = vsyncpa [#allocation7], 0
    %13 = vsyncpa [#allocation9], 0
    // Predicated region
    $region2: #{attn_encoder_forward.3} parent=1 // pred_check
      _
    $region3: #{attn_encoder_forward.3} parent=1 // pred_check_branch
      %15 = sbr.rel (0) target = $region5
    $region4: #{attn_encoder_forward.3} parent=1 // pred_region
      _
    $region5: #{attn_encoder_forward.3} parent=1 // pred_fallthru
      _
    // Predicated region
    $region6: #{attn_encoder_forward.3} parent=1 // pred_check
      _
    $region7: #{attn_encoder_forward.3} parent=1 // pred_check_branch
      %17 = sbr.rel (0) target = $region9
    $region8: #{attn_encoder_forward.3} parent=1 // pred_region
      %s19 = ssub.s32 8192, 8192
      %20 = vsyncadd [#allocation7], %s19
      %s21 = sshll.u32 [#allocation6], 4
      %s22 = int_to_ptr.vmem [resolvable:$true] %s21
      %27 = dma.hbm_to_vmem [thread:$0]  %s1, 8192, %s22, [#allocation7], 512, 512, 32
    $region9: #{attn_encoder_forward.3} parent=1 // pred_fallthru
      _
    // Predicated region
    $region10: #{attn_encoder_forward.3} parent=1 // pred_check
      _
    $region11: #{attn_encoder_forward.3} parent=1 // pred_check_branch
      %29 = sbr.rel (0) target = $region13
    $region12: #{attn_encoder_forward.3} parent=1 // pred_region
      %s31 = ssub.s32 8192, 8192
      %32 = vsyncadd [#allocation9], %s31
      %s33 = sshll.u32 [#allocation8], 4
      %s34 = int_to_ptr.vmem [resolvable:$true] %s33
      %39 = dma.hbm_to_vmem [thread:$0]  %s2, 8192, %s34, [#allocation9], 512, 512, 32
    $region13: #{attn_encoder_forward.3} parent=1 // pred_fallthru
      _
    // Predicated region
    $region14: #{attn_encoder_forward.3} parent=1 // pred_check
      _
    $region15: #{attn_encoder_forward.3} parent=1 // pred_check_branch
      %41 = sbr.rel (0) target = $region17
    $region16: #{attn_encoder_forward.3} parent=1 // pred_region
      %s43 = ssub.s32 128, 128
      %44 = vsyncadd [#allocation9], %s43
      %s46 = sshll.u32 [#allocation10], 4
      %s47 = int_to_ptr.vmem [resolvable:$true] %s46
      %49 = dma.hbm_to_vmem [thread:$0]  %s3, 128, %s47, [#allocation9]
    $region17: #{attn_encoder_forward.3} parent=1 // pred_fallthru
      _
    // Predicated region
    $region18: #{attn_encoder_forward.3} parent=1 // pred_check
      _
    $region19: #{attn_encoder_forward.3} parent=1 // pred_check_branch
      %51 = sbr.rel (0) target = $region21
    $region20: #{attn_encoder_forward.3} parent=1 // pred_region
      %52 = dma.done [#allocation7], 8192
    $region21: #{attn_encoder_forward.3} parent=1 // pred_fallthru
      _
    // Predicated region
    $region22: #{attn_encoder_forward.3} parent=1 // pred_check
      _
    $region23: #{attn_encoder_forward.3} parent=1 // pred_check_branch
      %54 = sbr.rel (0) target = $region25
    $region24: #{attn_encoder_forward.3} parent=1 // pred_region
      %55 = dma.done [#allocation9], 8192
    $region25: #{attn_encoder_forward.3} parent=1 // pred_fallthru
      _
    // Predicated region
    $region26: #{attn_encoder_forward.3} parent=1 // pred_check
      _
    $region27: #{attn_encoder_forward.3} parent=1 // pred_check_branch
      %57 = sbr.rel (0) target = $region29
    $region28: #{attn_encoder_forward.3} parent=1 // pred_region
      %58 = dma.done [#allocation9], 128
    $region29: #{attn_encoder_forward.3} parent=1 // pred_fallthru
      _
    %v60 = vld [vmem:[%s0] sm:$0xff]
    %v61 = vld [vmem:[%s0 + $0x8] sm:$0xff]
    %v62 = vpack.c.bf16 %v61, %v60
    %v63 = vld [vmem:[#allocation6] sm:$0xff]
    %v64 = vld [vmem:[#allocation6 + $0x8] sm:$0xff]
    %v65 = vld [vmem:[#allocation6 + $0x10] sm:$0xff]
    %v66 = vld [vmem:[#allocation6 + $0x18] sm:$0xff]
    %v67 = vld [vmem:[#allocation6 + $0x20] sm:$0xff]
    %v68 = vld [vmem:[#allocation6 + $0x28] sm:$0xff]
    %v69 = vld [vmem:[#allocation6 + $0x30] sm:$0xff]
    %v70 = vld [vmem:[#allocation6 + $0x38] sm:$0xff]
    %v71 = vld [vmem:[#allocation6 + $0x40] sm:$0xff]
    %v72 = vld [vmem:[#allocation6 + $0x48] sm:$0xff]
    %v73 = vld [vmem:[#allocation6 + $0x50] sm:$0xff]
    %v74 = vld [vmem:[#allocation6 + $0x58] sm:$0xff]
    %v75 = vld [vmem:[#allocation6 + $0x60] sm:$0xff]
    %v76 = vld [vmem:[#allocation6 + $0x68] sm:$0xff]
    %v77 = vld [vmem:[#allocation6 + $0x70] sm:$0xff]
    %v78 = vld [vmem:[#allocation6 + $0x78] sm:$0xff]
    %v79 = vld [vmem:[#allocation6 + $0x80] sm:$0xff]
    %v80 = vld [vmem:[#allocation6 + $0x88] sm:$0xff]
    %v81 = vld [vmem:[#allocation6 + $0x90] sm:$0xff]
    %v82 = vld [vmem:[#allocation6 + $0x98] sm:$0xff]
    %v83 = vld [vmem:[#allocation6 + $0xa0] sm:$0xff]
    %v84 = vld [vmem:[#allocation6 + $0xa8] sm:$0xff]
    %v85 = vld [vmem:[#allocation6 + $0xb0] sm:$0xff]
    %v86 = vld [vmem:[#allocation6 + $0xb8] sm:$0xff]
    %v87 = vld [vmem:[#allocation6 + $0xc0] sm:$0xff]
    %v88 = vld [vmem:[#allocation6 + $0xc8] sm:$0xff]
    %v89 = vld [vmem:[#allocation6 + $0xd0] sm:$0xff]
    %v90 = vld [vmem:[#allocation6 + $0xd8] sm:$0xff]
    %v91 = vld [vmem:[#allocation6 + $0xe0] sm:$0xff]
    %v92 = vld [vmem:[#allocation6 + $0xe8] sm:$0xff]
    %v93 = vld [vmem:[#allocation6 + $0xf0] sm:$0xff]
    %v94 = vld [vmem:[#allocation6 + $0xf8] sm:$0xff]
    %v95 = vld [vmem:[#allocation6 + $0x100] sm:$0xff]
    %v96 = vld [vmem:[#allocation6 + $0x108] sm:$0xff]
    %v97 = vld [vmem:[#allocation6 + $0x110] sm:$0xff]
    %v98 = vld [vmem:[#allocation6 + $0x118] sm:$0xff]
    %v99 = vld [vmem:[#allocation6 + $0x120] sm:$0xff]
    %v100 = vld [vmem:[#allocation6 + $0x128] sm:$0xff]
    %v101 = vld [vmem:[#allocation6 + $0x130] sm:$0xff]
    %v102 = vld [vmem:[#allocation6 + $0x138] sm:$0xff]
    %v103 = vld [vmem:[#allocation6 + $0x140] sm:$0xff]
    %v104 = vld [vmem:[#allocation6 + $0x148] sm:$0xff]
    %v105 = vld [vmem:[#allocation6 + $0x150] sm:$0xff]
    %v106 = vld [vmem:[#allocation6 + $0x158] sm:$0xff]
    %v107 = vld [vmem:[#allocation6 + $0x160] sm:$0xff]
    %v108 = vld [vmem:[#allocation6 + $0x168] sm:$0xff]
    %v109 = vld [vmem:[#allocation6 + $0x170] sm:$0xff]
    %v110 = vld [vmem:[#allocation6 + $0x178] sm:$0xff]
    %v111 = vld [vmem:[#allocation6 + $0x180] sm:$0xff]
    %v112 = vld [vmem:[#allocation6 + $0x188] sm:$0xff]
    %v113 = vld [vmem:[#allocation6 + $0x190] sm:$0xff]
    %v114 = vld [vmem:[#allocation6 + $0x198] sm:$0xff]
    %v115 = vld [vmem:[#allocation6 + $0x1a0] sm:$0xff]
    %v116 = vld [vmem:[#allocation6 + $0x1a8] sm:$0xff]
    %v117 = vld [vmem:[#allocation6 + $0x1b0] sm:$0xff]
    %v118 = vld [vmem:[#allocation6 + $0x1b8] sm:$0xff]
    %v119 = vld [vmem:[#allocation6 + $0x1c0] sm:$0xff]
    %v120 = vld [vmem:[#allocation6 + $0x1c8] sm:$0xff]
    %v121 = vld [vmem:[#allocation6 + $0x1d0] sm:$0xff]
    %v122 = vld [vmem:[#allocation6 + $0x1d8] sm:$0xff]
    %v123 = vld [vmem:[#allocation6 + $0x1e0] sm:$0xff]
    %v124 = vld [vmem:[#allocation6 + $0x1e8] sm:$0xff]
    %v125 = vld [vmem:[#allocation6 + $0x1f0] sm:$0xff]
    %v126 = vld [vmem:[#allocation6 + $0x1f8] sm:$0xff]
    %v127 = vld [vmem:[#allocation10] sm:$0xff]
    %v129 = vlaneseq
    %v130 = vshrl.u32 %v129, 7
    %v131 = vsub.s32 0, %v130
    %v132 = vrot.slane %v127, %v131
    %v133 = vlaneseq
    %v134 = vshrl.u32 %v133, 7
    %v135 = vsub.s32 1, %v134
    %v136 = vrot.slane %v127, %v135
    %v137 = vlaneseq
    %v138 = vshrl.u32 %v137, 7
    %v139 = vsub.s32 2, %v138
    %v140 = vrot.slane %v127, %v139
    %v141 = vlaneseq
    %v142 = vshrl.u32 %v141, 7
    %v143 = vsub.s32 3, %v142
    %v144 = vrot.slane %v127, %v143
    %v145 = vlaneseq
    %v146 = vshrl.u32 %v145, 7
    %v147 = vsub.s32 4, %v146
    %v148 = vrot.slane %v127, %v147
    %v149 = vlaneseq
    %v150 = vshrl.u32 %v149, 7
    %v151 = vsub.s32 5, %v150
    %v152 = vrot.slane %v127, %v151
    %v153 = vlaneseq
    %v154 = vshrl.u32 %v153, 7
    %v155 = vsub.s32 6, %v154
    %v156 = vrot.slane %v127, %v155
    %v157 = vlaneseq
    %v158 = vshrl.u32 %v157, 7
    %v159 = vsub.s32 7, %v158
    %v160 = vrot.slane %v127, %v159
    %v233 = vunpack.c.l.b16 %v63
    %v234 = vunpack.c.h.b16 %v63
    %v235 = vunpack.c.l.b16 %v64
    %v236 = vunpack.c.h.b16 %v64
    %v237 = vunpack.c.l.b16 %v65
    %v238 = vunpack.c.h.b16 %v65
    %v239 = vunpack.c.l.b16 %v66
    %v240 = vunpack.c.h.b16 %v66
    %v241 = vunpack.c.l.b16 %v67
    %v242 = vunpack.c.h.b16 %v67
    %v243 = vunpack.c.l.b16 %v68
    %v244 = vunpack.c.h.b16 %v68
    %v245 = vunpack.c.l.b16 %v69
    %v246 = vunpack.c.h.b16 %v69
    %v247 = vunpack.c.l.b16 %v70
    %v248 = vunpack.c.h.b16 %v70
    %v249 = vunpack.c.l.b16 %v71
    %v250 = vunpack.c.h.b16 %v71
    %v251 = vunpack.c.l.b16 %v72
    %v252 = vunpack.c.h.b16 %v72
    %v253 = vunpack.c.l.b16 %v73
    %v254 = vunpack.c.h.b16 %v73
    %v255 = vunpack.c.l.b16 %v74
    %v256 = vunpack.c.h.b16 %v74
    %v257 = vunpack.c.l.b16 %v75
    %v258 = vunpack.c.h.b16 %v75
    %v259 = vunpack.c.l.b16 %v76
    %v260 = vunpack.c.h.b16 %v76
    %v261 = vunpack.c.l.b16 %v77
    %v262 = vunpack.c.h.b16 %v77
    %v263 = vunpack.c.l.b16 %v78
    %v264 = vunpack.c.h.b16 %v78
    %v265 = vunpack.c.l.b16 %v79
    %v266 = vunpack.c.h.b16 %v79
    %v267 = vunpack.c.l.b16 %v80
    %v268 = vunpack.c.h.b16 %v80
    %v269 = vunpack.c.l.b16 %v81
    %v270 = vunpack.c.h.b16 %v81
    %v271 = vunpack.c.l.b16 %v82
    %v272 = vunpack.c.h.b16 %v82
    %v273 = vunpack.c.l.b16 %v83
    %v274 = vunpack.c.h.b16 %v83
    %v275 = vunpack.c.l.b16 %v84
    %v276 = vunpack.c.h.b16 %v84
    %v277 = vunpack.c.l.b16 %v85
    %v278 = vunpack.c.h.b16 %v85
    %v279 = vunpack.c.l.b16 %v86
    %v280 = vunpack.c.h.b16 %v86
    %v281 = vunpack.c.l.b16 %v87
    %v282 = vunpack.c.h.b16 %v87
    %v283 = vunpack.c.l.b16 %v88
    %v284 = vunpack.c.h.b16 %v88
    %v285 = vunpack.c.l.b16 %v89
    %v286 = vunpack.c.h.b16 %v89
    %v287 = vunpack.c.l.b16 %v90
    %v288 = vunpack.c.h.b16 %v90
    %v289 = vunpack.c.l.b16 %v91
    %v290 = vunpack.c.h.b16 %v91
    %v291 = vunpack.c.l.b16 %v92
    %v292 = vunpack.c.h.b16 %v92
    %v293 = vunpack.c.l.b16 %v93
    %v294 = vunpack.c.h.b16 %v93
    %v295 = vunpack.c.l.b16 %v94
    %v296 = vunpack.c.h.b16 %v94
    %v297 = vunpack.c.l.b16 %v95
    %v298 = vunpack.c.h.b16 %v95
    %v299 = vunpack.c.l.b16 %v96
    %v300 = vunpack.c.h.b16 %v96
    %v301 = vunpack.c.l.b16 %v97
    %v302 = vunpack.c.h.b16 %v97
    %v303 = vunpack.c.l.b16 %v98
    %v304 = vunpack.c.h.b16 %v98
    %v305 = vunpack.c.l.b16 %v99
    %v306 = vunpack.c.h.b16 %v99
    %v307 = vunpack.c.l.b16 %v100
    %v308 = vunpack.c.h.b16 %v100
    %v309 = vunpack.c.l.b16 %v101
    %v310 = vunpack.c.h.b16 %v101
    %v311 = vunpack.c.l.b16 %v102
    %v312 = vunpack.c.h.b16 %v102
    %v313 = vunpack.c.l.b16 %v103
    %v314 = vunpack.c.h.b16 %v103
    %v315 = vunpack.c.l.b16 %v104
    %v316 = vunpack.c.h.b16 %v104
    %v317 = vunpack.c.l.b16 %v105
    %v318 = vunpack.c.h.b16 %v105
    %v319 = vunpack.c.l.b16 %v106
    %v320 = vunpack.c.h.b16 %v106
    %v321 = vunpack.c.l.b16 %v107
    %v322 = vunpack.c.h.b16 %v107
    %v323 = vunpack.c.l.b16 %v108
    %v324 = vunpack.c.h.b16 %v108
    %v325 = vunpack.c.l.b16 %v109
    %v326 = vunpack.c.h.b16 %v109
    %v327 = vunpack.c.l.b16 %v110
    %v328 = vunpack.c.h.b16 %v110
    %v329 = vunpack.c.l.b16 %v111
    %v330 = vunpack.c.h.b16 %v111
    %v331 = vunpack.c.l.b16 %v112
    %v332 = vunpack.c.h.b16 %v112
    %v333 = vunpack.c.l.b16 %v113
    %v334 = vunpack.c.h.b16 %v113
    %v335 = vunpack.c.l.b16 %v114
    %v336 = vunpack.c.h.b16 %v114
    %v337 = vunpack.c.l.b16 %v115
    %v338 = vunpack.c.h.b16 %v115
    %v339 = vunpack.c.l.b16 %v116
    %v340 = vunpack.c.h.b16 %v116
    %v341 = vunpack.c.l.b16 %v117
    %v342 = vunpack.c.h.b16 %v117
    %v343 = vunpack.c.l.b16 %v118
    %v344 = vunpack.c.h.b16 %v118
    %v345 = vunpack.c.l.b16 %v119
    %v346 = vunpack.c.h.b16 %v119
    %v347 = vunpack.c.l.b16 %v120
    %v348 = vunpack.c.h.b16 %v120
    %v349 = vunpack.c.l.b16 %v121
    %v350 = vunpack.c.h.b16 %v121
    %v351 = vunpack.c.l.b16 %v122
    %v352 = vunpack.c.h.b16 %v122
    %v353 = vunpack.c.l.b16 %v123
    %v354 = vunpack.c.h.b16 %v123
    %v355 = vunpack.c.l.b16 %v124
    %v356 = vunpack.c.h.b16 %v124
    %v357 = vunpack.c.l.b16 %v125
    %v358 = vunpack.c.h.b16 %v125
    %v359 = vunpack.c.l.b16 %v126
    %v360 = vunpack.c.h.b16 %v126
    %v361 = vpack.c.b16 %v241, %v233
    %v362 = vpack.c.b16 %v242, %v234
    %v363 = vpack.c.b16 %v243, %v235
    %v364 = vpack.c.b16 %v244, %v236
    %v365 = vpack.c.b16 %v245, %v237
    %v366 = vpack.c.b16 %v246, %v238
    %v367 = vpack.c.b16 %v247, %v239
    %v368 = vpack.c.b16 %v248, %v240
    %v369 = vpack.c.b16 %v257, %v249
    %v370 = vpack.c.b16 %v258, %v250
    %v371 = vpack.c.b16 %v259, %v251
    %v372 = vpack.c.b16 %v260, %v252
    %v373 = vpack.c.b16 %v261, %v253
    %v374 = vpack.c.b16 %v262, %v254
    %v375 = vpack.c.b16 %v263, %v255
    %v376 = vpack.c.b16 %v264, %v256
    %v377 = vpack.c.b16 %v273, %v265
    %v378 = vpack.c.b16 %v274, %v266
    %v379 = vpack.c.b16 %v275, %v267
    %v380 = vpack.c.b16 %v276, %v268
    %v381 = vpack.c.b16 %v277, %v269
    %v382 = vpack.c.b16 %v278, %v270
    %v383 = vpack.c.b16 %v279, %v271
    %v384 = vpack.c.b16 %v280, %v272
    %v385 = vpack.c.b16 %v289, %v281
    %v386 = vpack.c.b16 %v290, %v282
    %v387 = vpack.c.b16 %v291, %v283
    %v388 = vpack.c.b16 %v292, %v284
    %v389 = vpack.c.b16 %v293, %v285
    %v390 = vpack.c.b16 %v294, %v286
    %v391 = vpack.c.b16 %v295, %v287
    %v392 = vpack.c.b16 %v296, %v288
    %v393 = vpack.c.b16 %v305, %v297
    %v394 = vpack.c.b16 %v306, %v298
    %v395 = vpack.c.b16 %v307, %v299
    %v396 = vpack.c.b16 %v308, %v300
    %v397 = vpack.c.b16 %v309, %v301
    %v398 = vpack.c.b16 %v310, %v302
    %v399 = vpack.c.b16 %v311, %v303
    %v400 = vpack.c.b16 %v312, %v304
    %v401 = vpack.c.b16 %v321, %v313
    %v402 = vpack.c.b16 %v322, %v314
    %v403 = vpack.c.b16 %v323, %v315
    %v404 = vpack.c.b16 %v324, %v316
    %v405 = vpack.c.b16 %v325, %v317
    %v406 = vpack.c.b16 %v326, %v318
    %v407 = vpack.c.b16 %v327, %v319
    %v408 = vpack.c.b16 %v328, %v320
    %v409 = vpack.c.b16 %v337, %v329
    %v410 = vpack.c.b16 %v338, %v330
    %v411 = vpack.c.b16 %v339, %v331
    %v412 = vpack.c.b16 %v340, %v332
    %v413 = vpack.c.b16 %v341, %v333
    %v414 = vpack.c.b16 %v342, %v334
    %v415 = vpack.c.b16 %v343, %v335
    %v416 = vpack.c.b16 %v344, %v336
    %v417 = vpack.c.b16 %v353, %v345
    %v418 = vpack.c.b16 %v354, %v346
    %v419 = vpack.c.b16 %v355, %v347
    %v420 = vpack.c.b16 %v356, %v348
    %v421 = vpack.c.b16 %v357, %v349
    %v422 = vpack.c.b16 %v358, %v350
    %v423 = vpack.c.b16 %v359, %v351
    %v424 = vpack.c.b16 %v360, %v352
    %489 = vmatprep.subr.bf16.mxu0 %v418
    %490 = vmatpush1.bf16.msra.mxu0 %v417
    %491 = vmatprep.subr.bf16.mxu0 %v410
    %492 = vmatpush1.bf16.msra.mxu0 %v409
    %493 = vmatprep.subr.bf16.mxu0 %v402
    %494 = vmatpush1.bf16.msra.mxu0 %v401
    %495 = vmatprep.subr.bf16.mxu0 %v394
    %496 = vmatpush1.bf16.msra.mxu0 %v393
    %497 = vmatprep.subr.bf16.mxu0 %v386
    %498 = vmatpush1.bf16.msra.mxu0 %v385
    %499 = vmatprep.subr.bf16.mxu0 %v378
    %500 = vmatpush1.bf16.msra.mxu0 %v377
    %501 = vmatprep.subr.bf16.mxu0 %v370
    %502 = vmatpush1.bf16.msra.mxu0 %v369
    %503 = vmatprep.subr.bf16.mxu0 %v362
    %504 = vmatpush1.bf16.msra.mxu0 %v361
    %505 = vmatprep.subr.bf16.mxu0 0
    %506 = vmatpush2.bf16.msra.mxu0 0
    %507 = vmatprep.subr.bf16.mxu0 0
    %508 = vmatpush2.bf16.msra.mxu0 0
    %509 = vmatprep.subr.bf16.mxu0 0
    %510 = vmatpush2.bf16.msra.mxu0 0
    %511 = vmatprep.subr.bf16.mxu0 0
    %512 = vmatpush2.bf16.msra.mxu0 0
    %513 = vmatprep.subr.bf16.mxu0 0
    %514 = vmatpush2.bf16.msra.mxu0 0
    %515 = vmatprep.subr.bf16.mxu0 0
    %516 = vmatpush2.bf16.msra.mxu0 0
    %517 = vmatprep.subr.bf16.mxu0 0
    %518 = vmatpush2.bf16.msra.mxu0 0
    %519 = vmatprep.subr.bf16.mxu0 0
    %520 = vmatpush2.bf16.msra.mxu0 0
    %521 = vmatprep.mubr.bf16.mxu0 0
    %522 = vmatmul.mubr.bf16.gmra.mxu0 %v62
    %v523 = vpop.f32.mrf.mxu0
    %v524 = vadd.f32 %v132, %v523
    %v525 = vpop.f32.mrf.mxu0
    %v526 = vadd.f32 %v136, %v525
    %v527 = vpop.f32.mrf.mxu0
    %v528 = vadd.f32 %v132, %v527
    %v529 = vpop.f32.mrf.mxu0
    %v530 = vadd.f32 %v136, %v529
    %531 = vdwg.mxu0
    %532 = vmatprep.subr.bf16.mxu0 %v420
    %533 = vmatpush1.bf16.msra.mxu0 %v419
    %534 = vmatprep.subr.bf16.mxu0 %v412
    %535 = vmatpush1.bf16.msra.mxu0 %v411
    %536 = vmatprep.subr.bf16.mxu0 %v404
    %537 = vmatpush1.bf16.msra.mxu0 %v403
    %538 = vmatprep.subr.bf16.mxu0 %v396
    %539 = vmatpush1.bf16.msra.mxu0 %v395
    %540 = vmatprep.subr.bf16.mxu0 %v388
    %541 = vmatpush1.bf16.msra.mxu0 %v387
    %542 = vmatprep.subr.bf16.mxu0 %v380
    %543 = vmatpush1.bf16.msra.mxu0 %v379
    %544 = vmatprep.subr.bf16.mxu0 %v372
    %545 = vmatpush1.bf16.msra.mxu0 %v371
    %546 = vmatprep.subr.bf16.mxu0 %v364
    %547 = vmatpush1.bf16.msra.mxu0 %v363
    %548 = vmatprep.subr.bf16.mxu0 0
    %549 = vmatpush2.bf16.msra.mxu0 0
    %550 = vmatprep.subr.bf16.mxu0 0
    %551 = vmatpush2.bf16.msra.mxu0 0
    %552 = vmatprep.subr.bf16.mxu0 0
    %553 = vmatpush2.bf16.msra.mxu0 0
    %554 = vmatprep.subr.bf16.mxu0 0
    %555 = vmatpush2.bf16.msra.mxu0 0
    %556 = vmatprep.subr.bf16.mxu0 0
    %557 = vmatpush2.bf16.msra.mxu0 0
    %558 = vmatprep.subr.bf16.mxu0 0
    %559 = vmatpush2.bf16.msra.mxu0 0
    %560 = vmatprep.subr.bf16.mxu0 0
    %561 = vmatpush2.bf16.msra.mxu0 0
    %562 = vmatprep.subr.bf16.mxu0 0
    %563 = vmatpush2.bf16.msra.mxu0 0
    %564 = vmatprep.mubr.bf16.mxu0 0
    %565 = vmatmul.mubr.bf16.gmra.mxu0 %v62
    %v566 = vpop.f32.mrf.mxu0
    %v567 = vadd.f32 %v140, %v566
    %v568 = vpop.f32.mrf.mxu0
    %v569 = vadd.f32 %v144, %v568
    %v570 = vpop.f32.mrf.mxu0
    %v571 = vadd.f32 %v140, %v570
    %v572 = vpop.f32.mrf.mxu0
    %v573 = vadd.f32 %v144, %v572
    %574 = vdwg.mxu0
    %575 = vmatprep.subr.bf16.mxu0 %v422
    %576 = vmatpush1.bf16.msra.mxu0 %v421
    %577 = vmatprep.subr.bf16.mxu0 %v414
    %578 = vmatpush1.bf16.msra.mxu0 %v413
    %579 = vmatprep.subr.bf16.mxu0 %v406
    %580 = vmatpush1.bf16.msra.mxu0 %v405
    %581 = vmatprep.subr.bf16.mxu0 %v398
    %582 = vmatpush1.bf16.msra.mxu0 %v397
    %583 = vmatprep.subr.bf16.mxu0 %v390
    %584 = vmatpush1.bf16.msra.mxu0 %v389
    %585 = vmatprep.subr.bf16.mxu0 %v382
    %586 = vmatpush1.bf16.msra.mxu0 %v381
    %587 = vmatprep.subr.bf16.mxu0 %v374
    %588 = vmatpush1.bf16.msra.mxu0 %v373
    %589 = vmatprep.subr.bf16.mxu0 %v366
    %590 = vmatpush1.bf16.msra.mxu0 %v365
    %591 = vmatprep.subr.bf16.mxu0 0
    %592 = vmatpush2.bf16.msra.mxu0 0
    %593 = vmatprep.subr.bf16.mxu0 0
    %594 = vmatpush2.bf16.msra.mxu0 0
    %595 = vmatprep.subr.bf16.mxu0 0
    %596 = vmatpush2.bf16.msra.mxu0 0
    %597 = vmatprep.subr.bf16.mxu0 0
    %598 = vmatpush2.bf16.msra.mxu0 0
    %599 = vmatprep.subr.bf16.mxu0 0
    %600 = vmatpush2.bf16.msra.mxu0 0
    %601 = vmatprep.subr.bf16.mxu0 0
    %602 = vmatpush2.bf16.msra.mxu0 0
    %603 = vmatprep.subr.bf16.mxu0 0
    %604 = vmatpush2.bf16.msra.mxu0 0
    %605 = vmatprep.subr.bf16.mxu0 0
    %606 = vmatpush2.bf16.msra.mxu0 0
    %607 = vmatprep.mubr.bf16.mxu0 0
    %608 = vmatmul.mubr.bf16.gmra.mxu0 %v62
    %v609 = vpop.f32.mrf.mxu0
    %v610 = vadd.f32 %v148, %v609
    %v611 = vpop.f32.mrf.mxu0
    %v612 = vadd.f32 %v152, %v611
    %v613 = vpop.f32.mrf.mxu0
    %v614 = vadd.f32 %v148, %v613
    %v615 = vpop.f32.mrf.mxu0
    %v616 = vadd.f32 %v152, %v615
    %617 = vdwg.mxu0
    %618 = vmatprep.subr.bf16.mxu0 %v424
    %619 = vmatpush1.bf16.msra.mxu0 %v423
    %620 = vmatprep.subr.bf16.mxu0 %v416
    %621 = vmatpush1.bf16.msra.mxu0 %v415
    %622 = vmatprep.subr.bf16.mxu0 %v408
    %623 = vmatpush1.bf16.msra.mxu0 %v407
    %624 = vmatprep.subr.bf16.mxu0 %v400
    %625 = vmatpush1.bf16.msra.mxu0 %v399
    %626 = vmatprep.subr.bf16.mxu0 %v392
    %627 = vmatpush1.bf16.msra.mxu0 %v391
    %628 = vmatprep.subr.bf16.mxu0 %v384
    %629 = vmatpush1.bf16.msra.mxu0 %v383
    %630 = vmatprep.subr.bf16.mxu0 %v376
    %631 = vmatpush1.bf16.msra.mxu0 %v375
    %632 = vmatprep.subr.bf16.mxu0 %v368
    %633 = vmatpush1.bf16.msra.mxu0 %v367
    %634 = vmatprep.subr.bf16.mxu0 0
    %635 = vmatpush2.bf16.msra.mxu0 0
    %636 = vmatprep.subr.bf16.mxu0 0
    %637 = vmatpush2.bf16.msra.mxu0 0
    %638 = vmatprep.subr.bf16.mxu0 0
    %639 = vmatpush2.bf16.msra.mxu0 0
    %640 = vmatprep.subr.bf16.mxu0 0
    %641 = vmatpush2.bf16.msra.mxu0 0
    %642 = vmatprep.subr.bf16.mxu0 0
    %643 = vmatpush2.bf16.msra.mxu0 0
    %644 = vmatprep.subr.bf16.mxu0 0
    %645 = vmatpush2.bf16.msra.mxu0 0
    %646 = vmatprep.subr.bf16.mxu0 0
    %647 = vmatpush2.bf16.msra.mxu0 0
    %648 = vmatprep.subr.bf16.mxu0 0
    %649 = vmatpush2.bf16.msra.mxu0 0
    %650 = vmatprep.mubr.bf16.mxu0 0
    %651 = vmatmul.mubr.bf16.gmra.mxu0 %v62
    %v652 = vpop.f32.mrf.mxu0
    %v653 = vadd.f32 %v156, %v652
    %v654 = vpop.f32.mrf.mxu0
    %v655 = vadd.f32 %v160, %v654
    %v656 = vpop.f32.mrf.mxu0
    %v657 = vadd.f32 %v156, %v656
    %v658 = vpop.f32.mrf.mxu0
    %v659 = vadd.f32 %v160, %v658
    %660 = vdwg.mxu0
    %v665 = vcombine.low %v524, %v526
    %v666 = vcombine.low %v567, %v569
    %v668 = vunpack.c.l.s4 1983009808
    %v669 = vunpack.c.0.s8 %v668
    %v670 = vlaneseq
    %v671 = vshrl.u32 %v670, 7
    %v672 = vsub.s32 %v669, %v671
    %v673 = vrot.slane %v665, %v672
    %v675 = vunpack.c.l.s4 1983009808
    %v676 = vunpack.c.0.s8 %v675
    %v677 = vlaneseq
    %v678 = vshrl.u32 %v677, 7
    %v679 = vsub.s32 %v676, %v678
    %v680 = vrot.slane %v666, %v679
    %v681 = vcombine.low %v673, %v680
    %683 = vst [vmem:[#allocation2] sm:$0xff] %v681
    %v688 = vcombine.low %v610, %v612
    %v689 = vcombine.low %v653, %v655
    %v691 = vunpack.c.l.s4 1983009808
    %v692 = vunpack.c.0.s8 %v691
    %v693 = vlaneseq
    %v694 = vshrl.u32 %v693, 7
    %v695 = vsub.s32 %v692, %v694
    %v696 = vrot.slane %v688, %v695
    %v698 = vunpack.c.l.s4 1983009808
    %v699 = vunpack.c.0.s8 %v698
    %v700 = vlaneseq
    %v701 = vshrl.u32 %v700, 7
    %v702 = vsub.s32 %v699, %v701
    %v703 = vrot.slane %v689, %v702
    %v704 = vcombine.low %v696, %v703
    %706 = vst [vmem:[#allocation3] sm:$0xff] %v704
    %v707 = vcombine.high %v673, %v680
    %s709 = scalar_lea.vmem [#allocation2], 8
    %710 = vst [vmem:[%s709] sm:$0xff] %v707
    %v711 = vcombine.high %v696, %v703
    %s713 = scalar_lea.vmem [#allocation3], 8
    %714 = vst [vmem:[%s713] sm:$0xff] %v711
    %v715 = vcombine.high %v524, %v526
    %v716 = vcombine.high %v567, %v569
    %v718 = vunpack.c.l.s4 1983009808
    %v719 = vunpack.c.0.s8 %v718
    %v720 = vlaneseq
    %v721 = vshrl.u32 %v720, 7
    %v722 = vsub.s32 %v719, %v721
    %v723 = vrot.slane %v715, %v722
    %v725 = vunpack.c.l.s4 1983009808
    %v726 = vunpack.c.0.s8 %v725
    %v727 = vlaneseq
    %v728 = vshrl.u32 %v727, 7
    %v729 = vsub.s32 %v726, %v728
    %v730 = vrot.slane %v716, %v729
    %v731 = vcombine.low %v723, %v730
    %s733 = scalar_lea.vmem [#allocation2], 16
    %734 = vst [vmem:[%s733] sm:$0xff] %v731
    %v735 = vcombine.high %v610, %v612
    %v736 = vcombine.high %v653, %v655
    %v738 = vunpack.c.l.s4 1983009808
    %v739 = vunpack.c.0.s8 %v738
    %v740 = vlaneseq
    %v741 = vshrl.u32 %v740, 7
    %v742 = vsub.s32 %v739, %v741
    %v743 = vrot.slane %v735, %v742
    %v745 = vunpack.c.l.s4 1983009808
    %v746 = vunpack.c.0.s8 %v745
    %v747 = vlaneseq
    %v748 = vshrl.u32 %v747, 7
    %v749 = vsub.s32 %v746, %v748
    %v750 = vrot.slane %v736, %v749
    %v751 = vcombine.low %v743, %v750
    %s753 = scalar_lea.vmem [#allocation3], 16
    %754 = vst [vmem:[%s753] sm:$0xff] %v751
    %v755 = vcombine.high %v723, %v730
    %s757 = scalar_lea.vmem [#allocation2], 24
    %758 = vst [vmem:[%s757] sm:$0xff] %v755
    %v759 = vcombine.high %v743, %v750
    %s761 = scalar_lea.vmem [#allocation3], 24
    %762 = vst [vmem:[%s761] sm:$0xff] %v759
    %v767 = vcombine.low %v528, %v530
    %v768 = vcombine.low %v571, %v573
    %v770 = vunpack.c.l.s4 1983009808
    %v771 = vunpack.c.0.s8 %v770
    %v772 = vlaneseq
    %v773 = vshrl.u32 %v772, 7
    %v774 = vsub.s32 %v771, %v773
    %v775 = vrot.slane %v767, %v774
    %v777 = vunpack.c.l.s4 1983009808
    %v778 = vunpack.c.0.s8 %v777
    %v779 = vlaneseq
    %v780 = vshrl.u32 %v779, 7
    %v781 = vsub.s32 %v778, %v780
    %v782 = vrot.slane %v768, %v781
    %v783 = vcombine.low %v775, %v782
    %s785 = scalar_lea.vmem [#allocation2], 32
    %786 = vst [vmem:[%s785] sm:$0xff] %v783
    %v791 = vcombine.low %v614, %v616
    %v792 = vcombine.low %v657, %v659
    %v794 = vunpack.c.l.s4 1983009808
    %v795 = vunpack.c.0.s8 %v794
    %v796 = vlaneseq
    %v797 = vshrl.u32 %v796, 7
    %v798 = vsub.s32 %v795, %v797
    %v799 = vrot.slane %v791, %v798
    %v801 = vunpack.c.l.s4 1983009808
    %v802 = vunpack.c.0.s8 %v801
    %v803 = vlaneseq
    %v804 = vshrl.u32 %v803, 7
    %v805 = vsub.s32 %v802, %v804
    %v806 = vrot.slane %v792, %v805
    %v807 = vcombine.low %v799, %v806
    %s809 = scalar_lea.vmem [#allocation3], 32
    %810 = vst [vmem:[%s809] sm:$0xff] %v807
    %v811 = vcombine.high %v775, %v782
    %s813 = scalar_lea.vmem [#allocation2], 40
    %814 = vst [vmem:[%s813] sm:$0xff] %v811
    %v815 = vcombine.high %v799, %v806
    %s817 = scalar_lea.vmem [#allocation3], 40
    %818 = vst [vmem:[%s817] sm:$0xff] %v815
    %v819 = vcombine.high %v528, %v530
    %v820 = vcombine.high %v571, %v573
    %v822 = vunpack.c.l.s4 1983009808
    %v823 = vunpack.c.0.s8 %v822
    %v824 = vlaneseq
    %v825 = vshrl.u32 %v824, 7
    %v826 = vsub.s32 %v823, %v825
    %v827 = vrot.slane %v819, %v826
    %v829 = vunpack.c.l.s4 1983009808
    %v830 = vunpack.c.0.s8 %v829
    %v831 = vlaneseq
    %v832 = vshrl.u32 %v831, 7
    %v833 = vsub.s32 %v830, %v832
    %v834 = vrot.slane %v820, %v833
    %v835 = vcombine.low %v827, %v834
    %s837 = scalar_lea.vmem [#allocation2], 48
    %838 = vst [vmem:[%s837] sm:$0xff] %v835
    %v839 = vcombine.high %v614, %v616
    %v840 = vcombine.high %v657, %v659
    %v842 = vunpack.c.l.s4 1983009808
    %v843 = vunpack.c.0.s8 %v842
    %v844 = vlaneseq
    %v845 = vshrl.u32 %v844, 7
    %v846 = vsub.s32 %v843, %v845
    %v847 = vrot.slane %v839, %v846
    %v849 = vunpack.c.l.s4 1983009808
    %v850 = vunpack.c.0.s8 %v849
    %v851 = vlaneseq
    %v852 = vshrl.u32 %v851, 7
    %v853 = vsub.s32 %v850, %v852
    %v854 = vrot.slane %v840, %v853
    %v855 = vcombine.low %v847, %v854
    %s857 = scalar_lea.vmem [#allocation3], 48
    %858 = vst [vmem:[%s857] sm:$0xff] %v855
    %v859 = vcombine.high %v827, %v834
    %s861 = scalar_lea.vmem [#allocation2], 56
    %862 = vst [vmem:[%s861] sm:$0xff] %v859
    %v863 = vcombine.high %v847, %v854
    %s865 = scalar_lea.vmem [#allocation3], 56
    %866 = vst [vmem:[%s865] sm:$0xff] %v863
    %867 = vst [vmem:[#allocation4] sm:$0xf] 0.0
    %868 = vst [vmem:[#allocation5] sm:$0xf] 0.0
    %v869 = vld [vmem:[#allocation8] sm:$0xff]
    %v870 = vld [vmem:[#allocation8 + $0x8] sm:$0xff]
    %v871 = vld [vmem:[#allocation8 + $0x10] sm:$0xff]
    %v872 = vld [vmem:[#allocation8 + $0x18] sm:$0xff]
    %v873 = vld [vmem:[#allocation8 + $0x20] sm:$0xff]
    %v874 = vld [vmem:[#allocation8 + $0x28] sm:$0xff]
    %v875 = vld [vmem:[#allocation8 + $0x30] sm:$0xff]
    %v876 = vld [vmem:[#allocation8 + $0x38] sm:$0xff]
    %v877 = vld [vmem:[#allocation8 + $0x40] sm:$0xff]
    %v878 = vld [vmem:[#allocation8 + $0x48] sm:$0xff]
    %v879 = vld [vmem:[#allocation8 + $0x50] sm:$0xff]
    %v880 = vld [vmem:[#allocation8 + $0x58] sm:$0xff]
    %v881 = vld [vmem:[#allocation8 + $0x60] sm:$0xff]
    %v882 = vld [vmem:[#allocation8 + $0x68] sm:$0xff]
    %v883 = vld [vmem:[#allocation8 + $0x70] sm:$0xff]
    %v884 = vld [vmem:[#allocation8 + $0x78] sm:$0xff]
    %v885 = vld [vmem:[#allocation8 + $0x80] sm:$0xff]
    %v886 = vld [vmem:[#allocation8 + $0x88] sm:$0xff]
    %v887 = vld [vmem:[#allocation8 + $0x90] sm:$0xff]
    %v888 = vld [vmem:[#allocation8 + $0x98] sm:$0xff]
    %v889 = vld [vmem:[#allocation8 + $0xa0] sm:$0xff]
    %v890 = vld [vmem:[#allocation8 + $0xa8] sm:$0xff]
    %v891 = vld [vmem:[#allocation8 + $0xb0] sm:$0xff]
    %v892 = vld [vmem:[#allocation8 + $0xb8] sm:$0xff]
    %v893 = vld [vmem:[#allocation8 + $0xc0] sm:$0xff]
    %v894 = vld [vmem:[#allocation8 + $0xc8] sm:$0xff]
    %v895 = vld [vmem:[#allocation8 + $0xd0] sm:$0xff]
    %v896 = vld [vmem:[#allocation8 + $0xd8] sm:$0xff]
    %v897 = vld [vmem:[#allocation8 + $0xe0] sm:$0xff]
    %v898 = vld [vmem:[#allocation8 + $0xe8] sm:$0xff]
    %v899 = vld [vmem:[#allocation8 + $0xf0] sm:$0xff]
    %v900 = vld [vmem:[#allocation8 + $0xf8] sm:$0xff]
    %v901 = vld [vmem:[#allocation8 + $0x100] sm:$0xff]
    %v902 = vld [vmem:[#allocation8 + $0x108] sm:$0xff]
    %v903 = vld [vmem:[#allocation8 + $0x110] sm:$0xff]
    %v904 = vld [vmem:[#allocation8 + $0x118] sm:$0xff]
    %v905 = vld [vmem:[#allocation8 + $0x120] sm:$0xff]
    %v906 = vld [vmem:[#allocation8 + $0x128] sm:$0xff]
    %v907 = vld [vmem:[#allocation8 + $0x130] sm:$0xff]
    %v908 = vld [vmem:[#allocation8 + $0x138] sm:$0xff]
    %v909 = vld [vmem:[#allocation8 + $0x140] sm:$0xff]
    %v910 = vld [vmem:[#allocation8 + $0x148] sm:$0xff]
    %v911 = vld [vmem:[#allocation8 + $0x150] sm:$0xff]
    %v912 = vld [vmem:[#allocation8 + $0x158] sm:$0xff]
    %v913 = vld [vmem:[#allocation8 + $0x160] sm:$0xff]
    %v914 = vld [vmem:[#allocation8 + $0x168] sm:$0xff]
    %v915 = vld [vmem:[#allocation8 + $0x170] sm:$0xff]
    %v916 = vld [vmem:[#allocation8 + $0x178] sm:$0xff]
    %v917 = vld [vmem:[#allocation8 + $0x180] sm:$0xff]
    %v918 = vld [vmem:[#allocation8 + $0x188] sm:$0xff]
    %v919 = vld [vmem:[#allocation8 + $0x190] sm:$0xff]
    %v920 = vld [vmem:[#allocation8 + $0x198] sm:$0xff]
    %v921 = vld [vmem:[#allocation8 + $0x1a0] sm:$0xff]
    %v922 = vld [vmem:[#allocation8 + $0x1a8] sm:$0xff]
    %v923 = vld [vmem:[#allocation8 + $0x1b0] sm:$0xff]
    %v924 = vld [vmem:[#allocation8 + $0x1b8] sm:$0xff]
    %v925 = vld [vmem:[#allocation8 + $0x1c0] sm:$0xff]
    %v926 = vld [vmem:[#allocation8 + $0x1c8] sm:$0xff]
    %v927 = vld [vmem:[#allocation8 + $0x1d0] sm:$0xff]
    %v928 = vld [vmem:[#allocation8 + $0x1d8] sm:$0xff]
    %v929 = vld [vmem:[#allocation8 + $0x1e0] sm:$0xff]
    %v930 = vld [vmem:[#allocation8 + $0x1e8] sm:$0xff]
    %v931 = vld [vmem:[#allocation8 + $0x1f0] sm:$0xff]
    %v932 = vld [vmem:[#allocation8 + $0x1f8] sm:$0xff]
    %v933 = vld [vmem:[#allocation4] sm:$0xf]
    %v934 = vld [vmem:[#allocation5] sm:$0xf]
    %v935 = vpack.c.bf16 %v933, %v933
    %v1000 = vunpack.c.l.b16 %v869
    %v1001 = vunpack.c.h.b16 %v869
    %v1002 = vunpack.c.l.b16 %v870
    %v1003 = vunpack.c.h.b16 %v870
    %v1004 = vunpack.c.l.b16 %v871
    %v1005 = vunpack.c.h.b16 %v871
    %v1006 = vunpack.c.l.b16 %v872
    %v1007 = vunpack.c.h.b16 %v872
    %v1008 = vunpack.c.l.b16 %v873
    %v1009 = vunpack.c.h.b16 %v873
    %v1010 = vunpack.c.l.b16 %v874
    %v1011 = vunpack.c.h.b16 %v874
    %v1012 = vunpack.c.l.b16 %v875
    %v1013 = vunpack.c.h.b16 %v875
    %v1014 = vunpack.c.l.b16 %v876
    %v1015 = vunpack.c.h.b16 %v876
    %v1016 = vunpack.c.l.b16 %v877
    %v1017 = vunpack.c.h.b16 %v877
    %v1018 = vunpack.c.l.b16 %v878
    %v1019 = vunpack.c.h.b16 %v878
    %v1020 = vunpack.c.l.b16 %v879
    %v1021 = vunpack.c.h.b16 %v879
    %v1022 = vunpack.c.l.b16 %v880
    %v1023 = vunpack.c.h.b16 %v880
    %v1024 = vunpack.c.l.b16 %v881
    %v1025 = vunpack.c.h.b16 %v881
    %v1026 = vunpack.c.l.b16 %v882
    %v1027 = vunpack.c.h.b16 %v882
    %v1028 = vunpack.c.l.b16 %v883
    %v1029 = vunpack.c.h.b16 %v883
    %v1030 = vunpack.c.l.b16 %v884
    %v1031 = vunpack.c.h.b16 %v884
    %v1032 = vunpack.c.l.b16 %v885
    %v1033 = vunpack.c.h.b16 %v885
    %v1034 = vunpack.c.l.b16 %v886
    %v1035 = vunpack.c.h.b16 %v886
    %v1036 = vunpack.c.l.b16 %v887
    %v1037 = vunpack.c.h.b16 %v887
    %v1038 = vunpack.c.l.b16 %v888
    %v1039 = vunpack.c.h.b16 %v888
    %v1040 = vunpack.c.l.b16 %v889
    %v1041 = vunpack.c.h.b16 %v889
    %v1042 = vunpack.c.l.b16 %v890
    %v1043 = vunpack.c.h.b16 %v890
    %v1044 = vunpack.c.l.b16 %v891
    %v1045 = vunpack.c.h.b16 %v891
    %v1046 = vunpack.c.l.b16 %v892
    %v1047 = vunpack.c.h.b16 %v892
    %v1048 = vunpack.c.l.b16 %v893
    %v1049 = vunpack.c.h.b16 %v893
    %v1050 = vunpack.c.l.b16 %v894
    %v1051 = vunpack.c.h.b16 %v894
    %v1052 = vunpack.c.l.b16 %v895
    %v1053 = vunpack.c.h.b16 %v895
    %v1054 = vunpack.c.l.b16 %v896
    %v1055 = vunpack.c.h.b16 %v896
    %v1056 = vunpack.c.l.b16 %v897
    %v1057 = vunpack.c.h.b16 %v897
    %v1058 = vunpack.c.l.b16 %v898
    %v1059 = vunpack.c.h.b16 %v898
    %v1060 = vunpack.c.l.b16 %v899
    %v1061 = vunpack.c.h.b16 %v899
    %v1062 = vunpack.c.l.b16 %v900
    %v1063 = vunpack.c.h.b16 %v900
    %v1064 = vunpack.c.l.b16 %v901
    %v1065 = vunpack.c.h.b16 %v901
    %v1066 = vunpack.c.l.b16 %v902
    %v1067 = vunpack.c.h.b16 %v902
    %v1068 = vunpack.c.l.b16 %v903
    %v1069 = vunpack.c.h.b16 %v903
    %v1070 = vunpack.c.l.b16 %v904
    %v1071 = vunpack.c.h.b16 %v904
    %v1072 = vunpack.c.l.b16 %v905
    %v1073 = vunpack.c.h.b16 %v905
    %v1074 = vunpack.c.l.b16 %v906
    %v1075 = vunpack.c.h.b16 %v906
    %v1076 = vunpack.c.l.b16 %v907
    %v1077 = vunpack.c.h.b16 %v907
    %v1078 = vunpack.c.l.b16 %v908
    %v1079 = vunpack.c.h.b16 %v908
    %v1080 = vunpack.c.l.b16 %v909
    %v1081 = vunpack.c.h.b16 %v909
    %v1082 = vunpack.c.l.b16 %v910
    %v1083 = vunpack.c.h.b16 %v910
    %v1084 = vunpack.c.l.b16 %v911
    %v1085 = vunpack.c.h.b16 %v911
    %v1086 = vunpack.c.l.b16 %v912
    %v1087 = vunpack.c.h.b16 %v912
    %v1088 = vunpack.c.l.b16 %v913
    %v1089 = vunpack.c.h.b16 %v913
    %v1090 = vunpack.c.l.b16 %v914
    %v1091 = vunpack.c.h.b16 %v914
    %v1092 = vunpack.c.l.b16 %v915
    %v1093 = vunpack.c.h.b16 %v915
    %v1094 = vunpack.c.l.b16 %v916
    %v1095 = vunpack.c.h.b16 %v916
    %v1096 = vunpack.c.l.b16 %v917
    %v1097 = vunpack.c.h.b16 %v917
    %v1098 = vunpack.c.l.b16 %v918
    %v1099 = vunpack.c.h.b16 %v918
    %v1100 = vunpack.c.l.b16 %v919
    %v1101 = vunpack.c.h.b16 %v919
    %v1102 = vunpack.c.l.b16 %v920
    %v1103 = vunpack.c.h.b16 %v920
    %v1104 = vunpack.c.l.b16 %v921
    %v1105 = vunpack.c.h.b16 %v921
    %v1106 = vunpack.c.l.b16 %v922
    %v1107 = vunpack.c.h.b16 %v922
    %v1108 = vunpack.c.l.b16 %v923
    %v1109 = vunpack.c.h.b16 %v923
    %v1110 = vunpack.c.l.b16 %v924
    %v1111 = vunpack.c.h.b16 %v924
    %v1112 = vunpack.c.l.b16 %v925
    %v1113 = vunpack.c.h.b16 %v925
    %v1114 = vunpack.c.l.b16 %v926
    %v1115 = vunpack.c.h.b16 %v926
    %v1116 = vunpack.c.l.b16 %v927
    %v1117 = vunpack.c.h.b16 %v927
    %v1118 = vunpack.c.l.b16 %v928
    %v1119 = vunpack.c.h.b16 %v928
    %v1120 = vunpack.c.l.b16 %v929
    %v1121 = vunpack.c.h.b16 %v929
    %v1122 = vunpack.c.l.b16 %v930
    %v1123 = vunpack.c.h.b16 %v930
    %v1124 = vunpack.c.l.b16 %v931
    %v1125 = vunpack.c.h.b16 %v931
    %v1126 = vunpack.c.l.b16 %v932
    %v1127 = vunpack.c.h.b16 %v932
    %v1128 = vpack.c.b16 %v1008, %v1000
    %v1129 = vpack.c.b16 %v1009, %v1001
    %v1130 = vpack.c.b16 %v1010, %v1002
    %v1131 = vpack.c.b16 %v1011, %v1003
    %v1132 = vpack.c.b16 %v1012, %v1004
    %v1133 = vpack.c.b16 %v1013, %v1005
    %v1134 = vpack.c.b16 %v1014, %v1006
    %v1135 = vpack.c.b16 %v1015, %v1007
    %v1136 = vpack.c.b16 %v1024, %v1016
    %v1137 = vpack.c.b16 %v1025, %v1017
    %v1138 = vpack.c.b16 %v1026, %v1018
    %v1139 = vpack.c.b16 %v1027, %v1019
    %v1140 = vpack.c.b16 %v1028, %v1020
    %v1141 = vpack.c.b16 %v1029, %v1021
    %v1142 = vpack.c.b16 %v1030, %v1022
    %v1143 = vpack.c.b16 %v1031, %v1023
    %v1144 = vpack.c.b16 %v1040, %v1032
    %v1145 = vpack.c.b16 %v1041, %v1033
    %v1146 = vpack.c.b16 %v1042, %v1034
    %v1147 = vpack.c.b16 %v1043, %v1035
    %v1148 = vpack.c.b16 %v1044, %v1036
    %v1149 = vpack.c.b16 %v1045, %v1037
    %v1150 = vpack.c.b16 %v1046, %v1038
    %v1151 = vpack.c.b16 %v1047, %v1039
    %v1152 = vpack.c.b16 %v1056, %v1048
    %v1153 = vpack.c.b16 %v1057, %v1049
    %v1154 = vpack.c.b16 %v1058, %v1050
    %v1155 = vpack.c.b16 %v1059, %v1051
    %v1156 = vpack.c.b16 %v1060, %v1052
    %v1157 = vpack.c.b16 %v1061, %v1053
    %v1158 = vpack.c.b16 %v1062, %v1054
    %v1159 = vpack.c.b16 %v1063, %v1055
    %v1160 = vpack.c.b16 %v1072, %v1064
    %v1161 = vpack.c.b16 %v1073, %v1065
    %v1162 = vpack.c.b16 %v1074, %v1066
    %v1163 = vpack.c.b16 %v1075, %v1067
    %v1164 = vpack.c.b16 %v1076, %v1068
    %v1165 = vpack.c.b16 %v1077, %v1069
    %v1166 = vpack.c.b16 %v1078, %v1070
    %v1167 = vpack.c.b16 %v1079, %v1071
    %v1168 = vpack.c.b16 %v1088, %v1080
    %v1169 = vpack.c.b16 %v1089, %v1081
    %v1170 = vpack.c.b16 %v1090, %v1082
    %v1171 = vpack.c.b16 %v1091, %v1083
    %v1172 = vpack.c.b16 %v1092, %v1084
    %v1173 = vpack.c.b16 %v1093, %v1085
    %v1174 = vpack.c.b16 %v1094, %v1086
    %v1175 = vpack.c.b16 %v1095, %v1087
    %v1176 = vpack.c.b16 %v1104, %v1096
    %v1177 = vpack.c.b16 %v1105, %v1097
    %v1178 = vpack.c.b16 %v1106, %v1098
    %v1179 = vpack.c.b16 %v1107, %v1099
    %v1180 = vpack.c.b16 %v1108, %v1100
    %v1181 = vpack.c.b16 %v1109, %v1101
    %v1182 = vpack.c.b16 %v1110, %v1102
    %v1183 = vpack.c.b16 %v1111, %v1103
    %v1184 = vpack.c.b16 %v1120, %v1112
    %v1185 = vpack.c.b16 %v1121, %v1113
    %v1186 = vpack.c.b16 %v1122, %v1114
    %v1187 = vpack.c.b16 %v1123, %v1115
    %v1188 = vpack.c.b16 %v1124, %v1116
    %v1189 = vpack.c.b16 %v1125, %v1117
    %v1190 = vpack.c.b16 %v1126, %v1118
    %v1191 = vpack.c.b16 %v1127, %v1119
    %1256 = vmatprep.subr.bf16.mxu0 %v1185
    %1257 = vmatpush1.bf16.msra.mxu0 %v1184
    %1258 = vmatprep.subr.bf16.mxu0 %v1177
    %1259 = vmatpush1.bf16.msra.mxu0 %v1176
    %1260 = vmatprep.subr.bf16.mxu0 %v1169
    %1261 = vmatpush1.bf16.msra.mxu0 %v1168
    %1262 = vmatprep.subr.bf16.mxu0 %v1161
    %1263 = vmatpush1.bf16.msra.mxu0 %v1160
    %1264 = vmatprep.subr.bf16.mxu0 %v1153
    %1265 = vmatpush1.bf16.msra.mxu0 %v1152
    %1266 = vmatprep.subr.bf16.mxu0 %v1145
    %1267 = vmatpush1.bf16.msra.mxu0 %v1144
    %1268 = vmatprep.subr.bf16.mxu0 %v1137
    %1269 = vmatpush1.bf16.msra.mxu0 %v1136
    %1270 = vmatprep.subr.bf16.mxu0 %v1129
    %1271 = vmatpush1.bf16.msra.mxu0 %v1128
    %1272 = vmatprep.subr.bf16.mxu0 0
    %1273 = vmatpush2.bf16.msra.mxu0 0
    %1274 = vmatprep.subr.bf16.mxu0 0
    %1275 = vmatpush2.bf16.msra.mxu0 0
    %1276 = vmatprep.subr.bf16.mxu0 0
    %1277 = vmatpush2.bf16.msra.mxu0 0
    %1278 = vmatprep.subr.bf16.mxu0 0
    %1279 = vmatpush2.bf16.msra.mxu0 0
    %1280 = vmatprep.subr.bf16.mxu0 0
    %1281 = vmatpush2.bf16.msra.mxu0 0
    %1282 = vmatprep.subr.bf16.mxu0 0
    %1283 = vmatpush2.bf16.msra.mxu0 0
    %1284 = vmatprep.subr.bf16.mxu0 0
    %1285 = vmatpush2.bf16.msra.mxu0 0
    %1286 = vmatprep.subr.bf16.mxu0 0
    %1287 = vmatpush2.bf16.msra.mxu0 0
    %1288 = vmatprep.mubr.bf16.mxu0 0
    %1289 = vmatmul.mubr.bf16.gmra.mxu0 %v935
    %v1290 = vpop.f32.mrf.mxu0
    %v1291 = vadd.f32 0.0, %v1290
    %v1292 = vpop.f32.mrf.mxu0
    %v1293 = vadd.f32 0.0, %v1292
    %v1294 = vpop.f32.mrf.mxu0
    %v1295 = vpop.f32.mrf.mxu0
    %1296 = vdwg.mxu0
    %1297 = vmatprep.subr.bf16.mxu0 %v1187
    %1298 = vmatpush1.bf16.msra.mxu0 %v1186
    %1299 = vmatprep.subr.bf16.mxu0 %v1179
    %1300 = vmatpush1.bf16.msra.mxu0 %v1178
    %1301 = vmatprep.subr.bf16.mxu0 %v1171
    %1302 = vmatpush1.bf16.msra.mxu0 %v1170
    %1303 = vmatprep.subr.bf16.mxu0 %v1163
    %1304 = vmatpush1.bf16.msra.mxu0 %v1162
    %1305 = vmatprep.subr.bf16.mxu0 %v1155
    %1306 = vmatpush1.bf16.msra.mxu0 %v1154
    %1307 = vmatprep.subr.bf16.mxu0 %v1147
    %1308 = vmatpush1.bf16.msra.mxu0 %v1146
    %1309 = vmatprep.subr.bf16.mxu0 %v1139
    %1310 = vmatpush1.bf16.msra.mxu0 %v1138
    %1311 = vmatprep.subr.bf16.mxu0 %v1131
    %1312 = vmatpush1.bf16.msra.mxu0 %v1130
    %1313 = vmatprep.subr.bf16.mxu0 0
    %1314 = vmatpush2.bf16.msra.mxu0 0
    %1315 = vmatprep.subr.bf16.mxu0 0
    %1316 = vmatpush2.bf16.msra.mxu0 0
    %1317 = vmatprep.subr.bf16.mxu0 0
    %1318 = vmatpush2.bf16.msra.mxu0 0
    %1319 = vmatprep.subr.bf16.mxu0 0
    %1320 = vmatpush2.bf16.msra.mxu0 0
    %1321 = vmatprep.subr.bf16.mxu0 0
    %1322 = vmatpush2.bf16.msra.mxu0 0
    %1323 = vmatprep.subr.bf16.mxu0 0
    %1324 = vmatpush2.bf16.msra.mxu0 0
    %1325 = vmatprep.subr.bf16.mxu0 0
    %1326 = vmatpush2.bf16.msra.mxu0 0
    %1327 = vmatprep.subr.bf16.mxu0 0
    %1328 = vmatpush2.bf16.msra.mxu0 0
    %1329 = vmatprep.mubr.bf16.mxu0 0
    %1330 = vmatmul.mubr.bf16.gmra.mxu0 %v935
    %v1331 = vpop.f32.mrf.mxu0
    %v1332 = vadd.f32 0.0, %v1331
    %v1333 = vpop.f32.mrf.mxu0
    %v1334 = vadd.f32 0.0, %v1333
    %v1335 = vpop.f32.mrf.mxu0
    %v1336 = vpop.f32.mrf.mxu0
    %1337 = vdwg.mxu0
    %1338 = vmatprep.subr.bf16.mxu0 %v1189
    %1339 = vmatpush1.bf16.msra.mxu0 %v1188
    %1340 = vmatprep.subr.bf16.mxu0 %v1181
    %1341 = vmatpush1.bf16.msra.mxu0 %v1180
    %1342 = vmatprep.subr.bf16.mxu0 %v1173
    %1343 = vmatpush1.bf16.msra.mxu0 %v1172
    %1344 = vmatprep.subr.bf16.mxu0 %v1165
    %1345 = vmatpush1.bf16.msra.mxu0 %v1164
    %1346 = vmatprep.subr.bf16.mxu0 %v1157
    %1347 = vmatpush1.bf16.msra.mxu0 %v1156
    %1348 = vmatprep.subr.bf16.mxu0 %v1149
    %1349 = vmatpush1.bf16.msra.mxu0 %v1148
    %1350 = vmatprep.subr.bf16.mxu0 %v1141
    %1351 = vmatpush1.bf16.msra.mxu0 %v1140
    %1352 = vmatprep.subr.bf16.mxu0 %v1133
    %1353 = vmatpush1.bf16.msra.mxu0 %v1132
    %1354 = vmatprep.subr.bf16.mxu0 0
    %1355 = vmatpush2.bf16.msra.mxu0 0
    %1356 = vmatprep.subr.bf16.mxu0 0
    %1357 = vmatpush2.bf16.msra.mxu0 0
    %1358 = vmatprep.subr.bf16.mxu0 0
    %1359 = vmatpush2.bf16.msra.mxu0 0
    %1360 = vmatprep.subr.bf16.mxu0 0
    %1361 = vmatpush2.bf16.msra.mxu0 0
    %1362 = vmatprep.subr.bf16.mxu0 0
    %1363 = vmatpush2.bf16.msra.mxu0 0
    %1364 = vmatprep.subr.bf16.mxu0 0
    %1365 = vmatpush2.bf16.msra.mxu0 0
    %1366 = vmatprep.subr.bf16.mxu0 0
    %1367 = vmatpush2.bf16.msra.mxu0 0
    %1368 = vmatprep.subr.bf16.mxu0 0
    %1369 = vmatpush2.bf16.msra.mxu0 0
    %1370 = vmatprep.mubr.bf16.mxu0 0
    %1371 = vmatmul.mubr.bf16.gmra.mxu0 %v935
    %v1372 = vpop.f32.mrf.mxu0
    %v1373 = vadd.f32 0.0, %v1372
    %v1374 = vpop.f32.mrf.mxu0
    %v1375 = vadd.f32 0.0, %v1374
    %v1376 = vpop.f32.mrf.mxu0
    %v1377 = vpop.f32.mrf.mxu0
    %1378 = vdwg.mxu0
    %1379 = vmatprep.subr.bf16.mxu0 %v1191
    %1380 = vmatpush1.bf16.msra.mxu0 %v1190
    %1381 = vmatprep.subr.bf16.mxu0 %v1183
    %1382 = vmatpush1.bf16.msra.mxu0 %v1182
    %1383 = vmatprep.subr.bf16.mxu0 %v1175
    %1384 = vmatpush1.bf16.msra.mxu0 %v1174
    %1385 = vmatprep.subr.bf16.mxu0 %v1167
    %1386 = vmatpush1.bf16.msra.mxu0 %v1166
    %1387 = vmatprep.subr.bf16.mxu0 %v1159
    %1388 = vmatpush1.bf16.msra.mxu0 %v1158
    %1389 = vmatprep.subr.bf16.mxu0 %v1151
    %1390 = vmatpush1.bf16.msra.mxu0 %v1150
    %1391 = vmatprep.subr.bf16.mxu0 %v1143
    %1392 = vmatpush1.bf16.msra.mxu0 %v1142
    %1393 = vmatprep.subr.bf16.mxu0 %v1135
    %1394 = vmatpush1.bf16.msra.mxu0 %v1134
    %1395 = vmatprep.subr.bf16.mxu0 0
    %1396 = vmatpush2.bf16.msra.mxu0 0
    %1397 = vmatprep.subr.bf16.mxu0 0
    %1398 = vmatpush2.bf16.msra.mxu0 0
    %1399 = vmatprep.subr.bf16.mxu0 0
    %1400 = vmatpush2.bf16.msra.mxu0 0
    %1401 = vmatprep.subr.bf16.mxu0 0
    %1402 = vmatpush2.bf16.msra.mxu0 0
    %1403 = vmatprep.subr.bf16.mxu0 0
    %1404 = vmatpush2.bf16.msra.mxu0 0
    %1405 = vmatprep.subr.bf16.mxu0 0
    %1406 = vmatpush2.bf16.msra.mxu0 0
    %1407 = vmatprep.subr.bf16.mxu0 0
    %1408 = vmatpush2.bf16.msra.mxu0 0
    %1409 = vmatprep.subr.bf16.mxu0 0
    %1410 = vmatpush2.bf16.msra.mxu0 0
    %1411 = vmatprep.mubr.bf16.mxu0 0
    %1412 = vmatmul.mubr.bf16.gmra.mxu0 %v935
    %v1413 = vpop.f32.mrf.mxu0
    %v1414 = vadd.f32 0.0, %v1413
    %v1415 = vpop.f32.mrf.mxu0
    %v1416 = vadd.f32 0.0, %v1415
    %v1417 = vpop.f32.mrf.mxu0
    %v1418 = vpop.f32.mrf.mxu0
    %1419 = vdwg.mxu0
    %v1420 = vld [vmem:[#allocation2] sm:$0xff]
    %v1425 = vcombine.low %v1291, %v1293
    %v1426 = vcombine.low %v1332, %v1334
    %v1428 = vunpack.c.l.s4 1983009808
    %v1429 = vunpack.c.0.s8 %v1428
    %v1430 = vlaneseq
    %v1431 = vshrl.u32 %v1430, 7
    %v1432 = vsub.s32 %v1429, %v1431
    %v1433 = vrot.slane %v1425, %v1432
    %v1435 = vunpack.c.l.s4 1983009808
    %v1436 = vunpack.c.0.s8 %v1435
    %v1437 = vlaneseq
    %v1438 = vshrl.u32 %v1437, 7
    %v1439 = vsub.s32 %v1436, %v1438
    %v1440 = vrot.slane %v1426, %v1439
    %v1441 = vcombine.low %v1433, %v1440
    %v1443 = vadd.f32 %v1420, %v1441
    %v1444 = vld [vmem:[%s865] sm:$0xff]
    %v1449 = vcombine.low %v1373, %v1375
    %v1450 = vcombine.low %v1414, %v1416
    %v1452 = vunpack.c.l.s4 1983009808
    %v1453 = vunpack.c.0.s8 %v1452
    %v1454 = vlaneseq
    %v1455 = vshrl.u32 %v1454, 7
    %v1456 = vsub.s32 %v1453, %v1455
    %v1457 = vrot.slane %v1449, %v1456
    %v1459 = vunpack.c.l.s4 1983009808
    %v1460 = vunpack.c.0.s8 %v1459
    %v1461 = vlaneseq
    %v1462 = vshrl.u32 %v1461, 7
    %v1463 = vsub.s32 %v1460, %v1462
    %v1464 = vrot.slane %v1450, %v1463
    %v1465 = vcombine.high %v1457, %v1464
    %v1467 = vadd.f32 %v1444, %v1465
    %v1469 = vcombine.high %v1443, %v1443
    %v1471 = vunpack.c.l.s4 1983009808
    %v1472 = vunpack.c.0.s8 %v1471
    %v1473 = vlaneseq
    %v1474 = vshrl.u32 %v1473, 7
    %v1475 = vsub.s32 %v1472, %v1474
    %v1476 = vrot.slane %v1443, %v1475
    %v1478 = vunpack.c.l.s4 1983009808
    %v1479 = vunpack.c.0.s8 %v1478
    %v1480 = vlaneseq
    %v1481 = vshrl.u32 %v1480, 7
    %v1482 = vsub.s32 %v1479, %v1481
    %v1483 = vrot.slane %v1469, %v1482
    %v1484 = vcombine.high %v1476, %v1476
    %v1485 = vcombine.high %v1483, %v1483
    %v1491 = vcombine.low %v1467, %v1467
    %v1493 = vunpack.c.l.s4 1983009808
    %v1494 = vunpack.c.0.s8 %v1493
    %v1495 = vlaneseq
    %v1496 = vshrl.u32 %v1495, 7
    %v1497 = vsub.s32 %v1494, %v1496
    %v1498 = vrot.slane %v1491, %v1497
    %v1500 = vunpack.c.l.s4 1983009808
    %v1501 = vunpack.c.0.s8 %v1500
    %v1502 = vlaneseq
    %v1503 = vshrl.u32 %v1502, 7
    %v1504 = vsub.s32 %v1501, %v1503
    %v1505 = vrot.slane %v1467, %v1504
    %v1506 = vcombine.high %v1498, %v1498
    %v1507 = vcombine.high %v1505, %v1505
    %vm1512 = vcmask 1041408
    %v1513 = vsel %vm1512, %v1476, %v1498
    %v1514 = vsel %vm1512, %v1484, %v1506
    %v1515 = vsel %vm1512, %v1483, %v1505
    %v1516 = vsel %vm1512, %v1485, %v1507
    %v1517 = vxor.u32 %v1513, 2147483648
    %v1518 = vmul.f32 %v1517, 1.442695
    %v1519 = vpow.pop %v1518
    %v1520 = vadd.f32 %v1519, 1.0
    %v1521 = vrcp.pop %v1520
    %v1522 = vmul.f32 1.0, %v1521
    %v1523 = vxor.u32 %v1514, 2147483648
    %v1524 = vmul.f32 %v1523, 1.442695
    %v1525 = vpow.pop %v1524
    %v1526 = vadd.f32 %v1525, 1.0
    %v1527 = vrcp.pop %v1526
    %v1528 = vmul.f32 1.0, %v1527
    %v1529 = vtanh.pop %v1515
    %v1530 = vxor.u32 %v1516, 2147483648
    %v1531 = vmul.f32 %v1530, 1.442695
    %v1532 = vpow.pop %v1531
    %v1533 = vadd.f32 %v1532, 1.0
    %v1534 = vrcp.pop %v1533
    %v1535 = vmul.f32 1.0, %v1534
    %v1536 = vmul.f32 %v1528, %v934
    %v1537 = vmul.f32 %v1522, %v1529
    %v1538 = vadd.f32 %v1536, %v1537
    %v1539 = vtanh.pop %v1538
    %v1540 = vmul.f32 %v1535, %v1539
    %1541 = vst [vmem:[#allocation5] sm:$0xf] %v1538
    %1542 = vst [vmem:[#allocation4] sm:$0xf] %v1540
    %1543 = vst [vmem:[%s4] sm:$0x3] %v1540
    %v1546 = vunpack.c.l.s4 1983009808
    %v1547 = vunpack.c.0.s8 %v1546
    %v1548 = vlaneseq
    %v1549 = vshrl.u32 %v1548, 7
    %v1550 = vsub.s32 %v1547, %v1549
    %v1551 = vrot.slane %v1540, %v1550
    %v1552 = vcombine.high %v1551, %v1551
    %s1554 = scalar_lea.vmem %s4, 28
    %1555 = vst [vmem:[%s1554 + $0x2] sm:$0x3] %v1552
    %v1556 = vld [vmem:[#allocation4] sm:$0xf]
    %v1557 = vld [vmem:[#allocation5] sm:$0xf]
    %v1558 = vpack.c.bf16 %v1556, %v1556
    %1559 = vmatprep.subr.bf16.mxu0 %v1185
    %1560 = vmatpush1.bf16.msra.mxu0 %v1184
    %1561 = vmatprep.subr.bf16.mxu0 %v1177
    %1562 = vmatpush1.bf16.msra.mxu0 %v1176
    %1563 = vmatprep.subr.bf16.mxu0 %v1169
    %1564 = vmatpush1.bf16.msra.mxu0 %v1168
    %1565 = vmatprep.subr.bf16.mxu0 %v1161
    %1566 = vmatpush1.bf16.msra.mxu0 %v1160
    %1567 = vmatprep.subr.bf16.mxu0 %v1153
    %1568 = vmatpush1.bf16.msra.mxu0 %v1152
    %1569 = vmatprep.subr.bf16.mxu0 %v1145
    %1570 = vmatpush1.bf16.msra.mxu0 %v1144
    %1571 = vmatprep.subr.bf16.mxu0 %v1137
    %1572 = vmatpush1.bf16.msra.mxu0 %v1136
    %1573 = vmatprep.subr.bf16.mxu0 %v1129
    %1574 = vmatpush1.bf16.msra.mxu0 %v1128
    %1575 = vmatprep.subr.bf16.mxu0 0
    %1576 = vmatpush2.bf16.msra.mxu0 0
    %1577 = vmatprep.subr.bf16.mxu0 0
    %1578 = vmatpush2.bf16.msra.mxu0 0
    %1579 = vmatprep.subr.bf16.mxu0 0
    %1580 = vmatpush2.bf16.msra.mxu0 0
    %1581 = vmatprep.subr.bf16.mxu0 0
    %1582 = vmatpush2.bf16.msra.mxu0 0
    %1583 = vmatprep.subr.bf16.mxu0 0
    %1584 = vmatpush2.bf16.msra.mxu0 0
    %1585 = vmatprep.subr.bf16.mxu0 0
    %1586 = vmatpush2.bf16.msra.mxu0 0
    %1587 = vmatprep.subr.bf16.mxu0 0
    %1588 = vmatpush2.bf16.msra.mxu0 0
    %1589 = vmatprep.subr.bf16.mxu0 0
    %1590 = vmatpush2.bf16.msra.mxu0 0
    %1591 = vmatprep.mubr.bf16.mxu0 0
    %1592 = vmatmul.mubr.bf16.gmra.mxu0 %v1558
    %v1593 = vpop.f32.mrf.mxu0
    %v1594 = vadd.f32 0.0, %v1593
    %v1595 = vpop.f32.mrf.mxu0
    %v1596 = vadd.f32 0.0, %v1595
    %v1597 = vpop.f32.mrf.mxu0
    %v1598 = vpop.f32.mrf.mxu0
    %1599 = vdwg.mxu0
    %1600 = vmatprep.subr.bf16.mxu0 %v1187
    %1601 = vmatpush1.bf16.msra.mxu0 %v1186
    %1602 = vmatprep.subr.bf16.mxu0 %v1179
    %1603 = vmatpush1.bf16.msra.mxu0 %v1178
    %1604 = vmatprep.subr.bf16.mxu0 %v1171
    %1605 = vmatpush1.bf16.msra.mxu0 %v1170
    %1606 = vmatprep.subr.bf16.mxu0 %v1163
    %1607 = vmatpush1.bf16.msra.mxu0 %v1162
    %1608 = vmatprep.subr.bf16.mxu0 %v1155
    %1609 = vmatpush1.bf16.msra.mxu0 %v1154
    %1610 = vmatprep.subr.bf16.mxu0 %v1147
    %1611 = vmatpush1.bf16.msra.mxu0 %v1146
    %1612 = vmatprep.subr.bf16.mxu0 %v1139
    %1613 = vmatpush1.bf16.msra.mxu0 %v1138
    %1614 = vmatprep.subr.bf16.mxu0 %v1131
    %1615 = vmatpush1.bf16.msra.mxu0 %v1130
    %1616 = vmatprep.subr.bf16.mxu0 0
    %1617 = vmatpush2.bf16.msra.mxu0 0
    %1618 = vmatprep.subr.bf16.mxu0 0
    %1619 = vmatpush2.bf16.msra.mxu0 0
    %1620 = vmatprep.subr.bf16.mxu0 0
    %1621 = vmatpush2.bf16.msra.mxu0 0
    %1622 = vmatprep.subr.bf16.mxu0 0
    %1623 = vmatpush2.bf16.msra.mxu0 0
    %1624 = vmatprep.subr.bf16.mxu0 0
    %1625 = vmatpush2.bf16.msra.mxu0 0
    %1626 = vmatprep.subr.bf16.mxu0 0
    %1627 = vmatpush2.bf16.msra.mxu0 0
    %1628 = vmatprep.subr.bf16.mxu0 0
    %1629 = vmatpush2.bf16.msra.mxu0 0
    %1630 = vmatprep.subr.bf16.mxu0 0
    %1631 = vmatpush2.bf16.msra.mxu0 0
    %1632 = vmatprep.mubr.bf16.mxu0 0
    %1633 = vmatmul.mubr.bf16.gmra.mxu0 %v1558
    %v1634 = vpop.f32.mrf.mxu0
    %v1635 = vadd.f32 0.0, %v1634
    %v1636 = vpop.f32.mrf.mxu0
    %v1637 = vadd.f32 0.0, %v1636
    %v1638 = vpop.f32.mrf.mxu0
    %v1639 = vpop.f32.mrf.mxu0
    %1640 = vdwg.mxu0
    %1641 = vmatprep.subr.bf16.mxu0 %v1189
    %1642 = vmatpush1.bf16.msra.mxu0 %v1188
    %1643 = vmatprep.subr.bf16.mxu0 %v1181
    %1644 = vmatpush1.bf16.msra.mxu0 %v1180
    %1645 = vmatprep.subr.bf16.mxu0 %v1173
    %1646 = vmatpush1.bf16.msra.mxu0 %v1172
    %1647 = vmatprep.subr.bf16.mxu0 %v1165
    %1648 = vmatpush1.bf16.msra.mxu0 %v1164
    %1649 = vmatprep.subr.bf16.mxu0 %v1157
    %1650 = vmatpush1.bf16.msra.mxu0 %v1156
    %1651 = vmatprep.subr.bf16.mxu0 %v1149
    %1652 = vmatpush1.bf16.msra.mxu0 %v1148
    %1653 = vmatprep.subr.bf16.mxu0 %v1141
    %1654 = vmatpush1.bf16.msra.mxu0 %v1140
    %1655 = vmatprep.subr.bf16.mxu0 %v1133
    %1656 = vmatpush1.bf16.msra.mxu0 %v1132
    %1657 = vmatprep.subr.bf16.mxu0 0
    %1658 = vmatpush2.bf16.msra.mxu0 0
    %1659 = vmatprep.subr.bf16.mxu0 0
    %1660 = vmatpush2.bf16.msra.mxu0 0
    %1661 = vmatprep.subr.bf16.mxu0 0
    %1662 = vmatpush2.bf16.msra.mxu0 0
    %1663 = vmatprep.subr.bf16.mxu0 0
    %1664 = vmatpush2.bf16.msra.mxu0 0
    %1665 = vmatprep.subr.bf16.mxu0 0
    %1666 = vmatpush2.bf16.msra.mxu0 0
    %1667 = vmatprep.subr.bf16.mxu0 0
    %1668 = vmatpush2.bf16.msra.mxu0 0
    %1669 = vmatprep.subr.bf16.mxu0 0
    %1670 = vmatpush2.bf16.msra.mxu0 0
    %1671 = vmatprep.subr.bf16.mxu0 0
    %1672 = vmatpush2.bf16.msra.mxu0 0
    %1673 = vmatprep.mubr.bf16.mxu0 0
    %1674 = vmatmul.mubr.bf16.gmra.mxu0 %v1558
    %v1675 = vpop.f32.mrf.mxu0
    %v1676 = vadd.f32 0.0, %v1675
    %v1677 = vpop.f32.mrf.mxu0
    %v1678 = vadd.f32 0.0, %v1677
    %v1679 = vpop.f32.mrf.mxu0
    %v1680 = vpop.f32.mrf.mxu0
    %1681 = vdwg.mxu0
    %1682 = vmatprep.subr.bf16.mxu0 %v1191
    %1683 = vmatpush1.bf16.msra.mxu0 %v1190
    %1684 = vmatprep.subr.bf16.mxu0 %v1183
    %1685 = vmatpush1.bf16.msra.mxu0 %v1182
    %1686 = vmatprep.subr.bf16.mxu0 %v1175
    %1687 = vmatpush1.bf16.msra.mxu0 %v1174
    %1688 = vmatprep.subr.bf16.mxu0 %v1167
    %1689 = vmatpush1.bf16.msra.mxu0 %v1166
    %1690 = vmatprep.subr.bf16.mxu0 %v1159
    %1691 = vmatpush1.bf16.msra.mxu0 %v1158
    %1692 = vmatprep.subr.bf16.mxu0 %v1151
    %1693 = vmatpush1.bf16.msra.mxu0 %v1150
    %1694 = vmatprep.subr.bf16.mxu0 %v1143
    %1695 = vmatpush1.bf16.msra.mxu0 %v1142
    %1696 = vmatprep.subr.bf16.mxu0 %v1135
    %1697 = vmatpush1.bf16.msra.mxu0 %v1134
    %1698 = vmatprep.subr.bf16.mxu0 0
    %1699 = vmatpush2.bf16.msra.mxu0 0
    %1700 = vmatprep.subr.bf16.mxu0 0
    %1701 = vmatpush2.bf16.msra.mxu0 0
    %1702 = vmatprep.subr.bf16.mxu0 0
    %1703 = vmatpush2.bf16.msra.mxu0 0
    %1704 = vmatprep.subr.bf16.mxu0 0
    %1705 = vmatpush2.bf16.msra.mxu0 0
    %1706 = vmatprep.subr.bf16.mxu0 0
    %1707 = vmatpush2.bf16.msra.mxu0 0
    %1708 = vmatprep.subr.bf16.mxu0 0
    %1709 = vmatpush2.bf16.msra.mxu0 0
    %1710 = vmatprep.subr.bf16.mxu0 0
    %1711 = vmatpush2.bf16.msra.mxu0 0
    %1712 = vmatprep.subr.bf16.mxu0 0
    %1713 = vmatpush2.bf16.msra.mxu0 0
    %1714 = vmatprep.mubr.bf16.mxu0 0
    %1715 = vmatmul.mubr.bf16.gmra.mxu0 %v1558
    %v1716 = vpop.f32.mrf.mxu0
    %v1717 = vadd.f32 0.0, %v1716
    %v1718 = vpop.f32.mrf.mxu0
    %v1719 = vadd.f32 0.0, %v1718
    %v1720 = vpop.f32.mrf.mxu0
    %v1721 = vpop.f32.mrf.mxu0
    %1722 = vdwg.mxu0
    %v1723 = vld [vmem:[%s709] sm:$0xff]
    %v1728 = vcombine.low %v1594, %v1596
    %v1729 = vcombine.low %v1635, %v1637
    %v1731 = vunpack.c.l.s4 1983009808
    %v1732 = vunpack.c.0.s8 %v1731
    %v1733 = vlaneseq
    %v1734 = vshrl.u32 %v1733, 7
    %v1735 = vsub.s32 %v1732, %v1734
    %v1736 = vrot.slane %v1728, %v1735
    %v1738 = vunpack.c.l.s4 1983009808
    %v1739 = vunpack.c.0.s8 %v1738
    %v1740 = vlaneseq
    %v1741 = vshrl.u32 %v1740, 7
    %v1742 = vsub.s32 %v1739, %v1741
    %v1743 = vrot.slane %v1729, %v1742
    %v1744 = vcombine.low %v1736, %v1743
    %v1746 = vadd.f32 %v1723, %v1744
    %v1747 = vld [vmem:[%s857] sm:$0xff]
    %v1752 = vcombine.low %v1676, %v1678
    %v1753 = vcombine.low %v1717, %v1719
    %v1755 = vunpack.c.l.s4 1983009808
    %v1756 = vunpack.c.0.s8 %v1755
    %v1757 = vlaneseq
    %v1758 = vshrl.u32 %v1757, 7
    %v1759 = vsub.s32 %v1756, %v1758
    %v1760 = vrot.slane %v1752, %v1759
    %v1762 = vunpack.c.l.s4 1983009808
    %v1763 = vunpack.c.0.s8 %v1762
    %v1764 = vlaneseq
    %v1765 = vshrl.u32 %v1764, 7
    %v1766 = vsub.s32 %v1763, %v1765
    %v1767 = vrot.slane %v1753, %v1766
    %v1768 = vcombine.high %v1760, %v1767
    %v1770 = vadd.f32 %v1747, %v1768
    %v1772 = vcombine.high %v1746, %v1746
    %v1774 = vunpack.c.l.s4 1983009808
    %v1775 = vunpack.c.0.s8 %v1774
    %v1776 = vlaneseq
    %v1777 = vshrl.u32 %v1776, 7
    %v1778 = vsub.s32 %v1775, %v1777
    %v1779 = vrot.slane %v1746, %v1778
    %v1781 = vunpack.c.l.s4 1983009808
    %v1782 = vunpack.c.0.s8 %v1781
    %v1783 = vlaneseq
    %v1784 = vshrl.u32 %v1783, 7
    %v1785 = vsub.s32 %v1782, %v1784
    %v1786 = vrot.slane %v1772, %v1785
    %v1787 = vcombine.high %v1779, %v1779
    %v1788 = vcombine.high %v1786, %v1786
    %v1794 = vcombine.low %v1770, %v1770
    %v1796 = vunpack.c.l.s4 1983009808
    %v1797 = vunpack.c.0.s8 %v1796
    %v1798 = vlaneseq
    %v1799 = vshrl.u32 %v1798, 7
    %v1800 = vsub.s32 %v1797, %v1799
    %v1801 = vrot.slane %v1794, %v1800
    %v1803 = vunpack.c.l.s4 1983009808
    %v1804 = vunpack.c.0.s8 %v1803
    %v1805 = vlaneseq
    %v1806 = vshrl.u32 %v1805, 7
    %v1807 = vsub.s32 %v1804, %v1806
    %v1808 = vrot.slane %v1770, %v1807
    %v1809 = vcombine.high %v1801, %v1801
    %v1810 = vcombine.high %v1808, %v1808
    %v1815 = vsel %vm1512, %v1779, %v1801
    %v1816 = vsel %vm1512, %v1787, %v1809
    %v1817 = vsel %vm1512, %v1786, %v1808
    %v1818 = vsel %vm1512, %v1788, %v1810
    %v1819 = vxor.u32 %v1815, 2147483648
    %v1820 = vmul.f32 %v1819, 1.442695
    %v1821 = vpow.pop %v1820
    %v1822 = vadd.f32 %v1821, 1.0
    %v1823 = vrcp.pop %v1822
    %v1824 = vmul.f32 1.0, %v1823
    %v1825 = vxor.u32 %v1816, 2147483648
    %v1826 = vmul.f32 %v1825, 1.442695
    %v1827 = vpow.pop %v1826
    %v1828 = vadd.f32 %v1827, 1.0
    %v1829 = vrcp.pop %v1828
    %v1830 = vmul.f32 1.0, %v1829
    %v1831 = vtanh.pop %v1817
    %v1832 = vxor.u32 %v1818, 2147483648
    %v1833 = vmul.f32 %v1832, 1.442695
    %v1834 = vpow.pop %v1833
    %v1835 = vadd.f32 %v1834, 1.0
    %v1836 = vrcp.pop %v1835
    %v1837 = vmul.f32 1.0, %v1836
    %v1838 = vmul.f32 %v1830, %v1557
    %v1839 = vmul.f32 %v1824, %v1831
    %v1840 = vadd.f32 %v1838, %v1839
    %v1841 = vtanh.pop %v1840
    %v1842 = vmul.f32 %v1837, %v1841
    %1843 = vst [vmem:[#allocation5] sm:$0xf] %v1840
    %1844 = vst [vmem:[#allocation4] sm:$0xf] %v1842
    %s1845 = scalar_lea.vmem %s4, 4
    %1846 = vst [vmem:[%s1845] sm:$0x3] %v1842
    %v1849 = vunpack.c.l.s4 1983009808
    %v1850 = vunpack.c.0.s8 %v1849
    %v1851 = vlaneseq
    %v1852 = vshrl.u32 %v1851, 7
    %v1853 = vsub.s32 %v1850, %v1852
    %v1854 = vrot.slane %v1842, %v1853
    %v1855 = vcombine.high %v1854, %v1854
    %s1857 = scalar_lea.vmem %s4, 24
    %1858 = vst [vmem:[%s1857 + $0x2] sm:$0x3] %v1855
    %v1859 = vld [vmem:[#allocation4] sm:$0xf]
    %v1860 = vld [vmem:[#allocation5] sm:$0xf]
    %v1861 = vpack.c.bf16 %v1859, %v1859
    %1862 = vmatprep.subr.bf16.mxu0 %v1185
    %1863 = vmatpush1.bf16.msra.mxu0 %v1184
    %1864 = vmatprep.subr.bf16.mxu0 %v1177
    %1865 = vmatpush1.bf16.msra.mxu0 %v1176
    %1866 = vmatprep.subr.bf16.mxu0 %v1169
    %1867 = vmatpush1.bf16.msra.mxu0 %v1168
    %1868 = vmatprep.subr.bf16.mxu0 %v1161
    %1869 = vmatpush1.bf16.msra.mxu0 %v1160
    %1870 = vmatprep.subr.bf16.mxu0 %v1153
    %1871 = vmatpush1.bf16.msra.mxu0 %v1152
    %1872 = vmatprep.subr.bf16.mxu0 %v1145
    %1873 = vmatpush1.bf16.msra.mxu0 %v1144
    %1874 = vmatprep.subr.bf16.mxu0 %v1137
    %1875 = vmatpush1.bf16.msra.mxu0 %v1136
    %1876 = vmatprep.subr.bf16.mxu0 %v1129
    %1877 = vmatpush1.bf16.msra.mxu0 %v1128
    %1878 = vmatprep.subr.bf16.mxu0 0
    %1879 = vmatpush2.bf16.msra.mxu0 0
    %1880 = vmatprep.subr.bf16.mxu0 0
    %1881 = vmatpush2.bf16.msra.mxu0 0
    %1882 = vmatprep.subr.bf16.mxu0 0
    %1883 = vmatpush2.bf16.msra.mxu0 0
    %1884 = vmatprep.subr.bf16.mxu0 0
    %1885 = vmatpush2.bf16.msra.mxu0 0
    %1886 = vmatprep.subr.bf16.mxu0 0
    %1887 = vmatpush2.bf16.msra.mxu0 0
    %1888 = vmatprep.subr.bf16.mxu0 0
    %1889 = vmatpush2.bf16.msra.mxu0 0
    %1890 = vmatprep.subr.bf16.mxu0 0
    %1891 = vmatpush2.bf16.msra.mxu0 0
    %1892 = vmatprep.subr.bf16.mxu0 0
    %1893 = vmatpush2.bf16.msra.mxu0 0
    %1894 = vmatprep.mubr.bf16.mxu0 0
    %1895 = vmatmul.mubr.bf16.gmra.mxu0 %v1861
    %v1896 = vpop.f32.mrf.mxu0
    %v1897 = vadd.f32 0.0, %v1896
    %v1898 = vpop.f32.mrf.mxu0
    %v1899 = vadd.f32 0.0, %v1898
    %v1900 = vpop.f32.mrf.mxu0
    %v1901 = vpop.f32.mrf.mxu0
    %1902 = vdwg.mxu0
    %1903 = vmatprep.subr.bf16.mxu0 %v1187
    %1904 = vmatpush1.bf16.msra.mxu0 %v1186
    %1905 = vmatprep.subr.bf16.mxu0 %v1179
    %1906 = vmatpush1.bf16.msra.mxu0 %v1178
    %1907 = vmatprep.subr.bf16.mxu0 %v1171
    %1908 = vmatpush1.bf16.msra.mxu0 %v1170
    %1909 = vmatprep.subr.bf16.mxu0 %v1163
    %1910 = vmatpush1.bf16.msra.mxu0 %v1162
    %1911 = vmatprep.subr.bf16.mxu0 %v1155
    %1912 = vmatpush1.bf16.msra.mxu0 %v1154
    %1913 = vmatprep.subr.bf16.mxu0 %v1147
    %1914 = vmatpush1.bf16.msra.mxu0 %v1146
    %1915 = vmatprep.subr.bf16.mxu0 %v1139
    %1916 = vmatpush1.bf16.msra.mxu0 %v1138
    %1917 = vmatprep.subr.bf16.mxu0 %v1131
    %1918 = vmatpush1.bf16.msra.mxu0 %v1130
    %1919 = vmatprep.subr.bf16.mxu0 0
    %1920 = vmatpush2.bf16.msra.mxu0 0
    %1921 = vmatprep.subr.bf16.mxu0 0
    %1922 = vmatpush2.bf16.msra.mxu0 0
    %1923 = vmatprep.subr.bf16.mxu0 0
    %1924 = vmatpush2.bf16.msra.mxu0 0
    %1925 = vmatprep.subr.bf16.mxu0 0
    %1926 = vmatpush2.bf16.msra.mxu0 0
    %1927 = vmatprep.subr.bf16.mxu0 0
    %1928 = vmatpush2.bf16.msra.mxu0 0
    %1929 = vmatprep.subr.bf16.mxu0 0
    %1930 = vmatpush2.bf16.msra.mxu0 0
    %1931 = vmatprep.subr.bf16.mxu0 0
    %1932 = vmatpush2.bf16.msra.mxu0 0
    %1933 = vmatprep.subr.bf16.mxu0 0
    %1934 = vmatpush2.bf16.msra.mxu0 0
    %1935 = vmatprep.mubr.bf16.mxu0 0
    %1936 = vmatmul.mubr.bf16.gmra.mxu0 %v1861
    %v1937 = vpop.f32.mrf.mxu0
    %v1938 = vadd.f32 0.0, %v1937
    %v1939 = vpop.f32.mrf.mxu0
    %v1940 = vadd.f32 0.0, %v1939
    %v1941 = vpop.f32.mrf.mxu0
    %v1942 = vpop.f32.mrf.mxu0
    %1943 = vdwg.mxu0
    %1944 = vmatprep.subr.bf16.mxu0 %v1189
    %1945 = vmatpush1.bf16.msra.mxu0 %v1188
    %1946 = vmatprep.subr.bf16.mxu0 %v1181
    %1947 = vmatpush1.bf16.msra.mxu0 %v1180
    %1948 = vmatprep.subr.bf16.mxu0 %v1173
    %1949 = vmatpush1.bf16.msra.mxu0 %v1172
    %1950 = vmatprep.subr.bf16.mxu0 %v1165
    %1951 = vmatpush1.bf16.msra.mxu0 %v1164
    %1952 = vmatprep.subr.bf16.mxu0 %v1157
    %1953 = vmatpush1.bf16.msra.mxu0 %v1156
    %1954 = vmatprep.subr.bf16.mxu0 %v1149
    %1955 = vmatpush1.bf16.msra.mxu0 %v1148
    %1956 = vmatprep.subr.bf16.mxu0 %v1141
    %1957 = vmatpush1.bf16.msra.mxu0 %v1140
    %1958 = vmatprep.subr.bf16.mxu0 %v1133
    %1959 = vmatpush1.bf16.msra.mxu0 %v1132
    %1960 = vmatprep.subr.bf16.mxu0 0
    %1961 = vmatpush2.bf16.msra.mxu0 0
    %1962 = vmatprep.subr.bf16.mxu0 0
    %1963 = vmatpush2.bf16.msra.mxu0 0
    %1964 = vmatprep.subr.bf16.mxu0 0
    %1965 = vmatpush2.bf16.msra.mxu0 0
    %1966 = vmatprep.subr.bf16.mxu0 0
    %1967 = vmatpush2.bf16.msra.mxu0 0
    %1968 = vmatprep.subr.bf16.mxu0 0
    %1969 = vmatpush2.bf16.msra.mxu0 0
    %1970 = vmatprep.subr.bf16.mxu0 0
    %1971 = vmatpush2.bf16.msra.mxu0 0
    %1972 = vmatprep.subr.bf16.mxu0 0
    %1973 = vmatpush2.bf16.msra.mxu0 0
    %1974 = vmatprep.subr.bf16.mxu0 0
    %1975 = vmatpush2.bf16.msra.mxu0 0
    %1976 = vmatprep.mubr.bf16.mxu0 0
    %1977 = vmatmul.mubr.bf16.gmra.mxu0 %v1861
    %v1978 = vpop.f32.mrf.mxu0
    %v1979 = vadd.f32 0.0, %v1978
    %v1980 = vpop.f32.mrf.mxu0
    %v1981 = vadd.f32 0.0, %v1980
    %v1982 = vpop.f32.mrf.mxu0
    %v1983 = vpop.f32.mrf.mxu0
    %1984 = vdwg.mxu0
    %1985 = vmatprep.subr.bf16.mxu0 %v1191
    %1986 = vmatpush1.bf16.msra.mxu0 %v1190
    %1987 = vmatprep.subr.bf16.mxu0 %v1183
    %1988 = vmatpush1.bf16.msra.mxu0 %v1182
    %1989 = vmatprep.subr.bf16.mxu0 %v1175
    %1990 = vmatpush1.bf16.msra.mxu0 %v1174
    %1991 = vmatprep.subr.bf16.mxu0 %v1167
    %1992 = vmatpush1.bf16.msra.mxu0 %v1166
    %1993 = vmatprep.subr.bf16.mxu0 %v1159
    %1994 = vmatpush1.bf16.msra.mxu0 %v1158
    %1995 = vmatprep.subr.bf16.mxu0 %v1151
    %1996 = vmatpush1.bf16.msra.mxu0 %v1150
    %1997 = vmatprep.subr.bf16.mxu0 %v1143
    %1998 = vmatpush1.bf16.msra.mxu0 %v1142
    %1999 = vmatprep.subr.bf16.mxu0 %v1135
    %2000 = vmatpush1.bf16.msra.mxu0 %v1134
    %2001 = vmatprep.subr.bf16.mxu0 0
    %2002 = vmatpush2.bf16.msra.mxu0 0
    %2003 = vmatprep.subr.bf16.mxu0 0
    %2004 = vmatpush2.bf16.msra.mxu0 0
    %2005 = vmatprep.subr.bf16.mxu0 0
    %2006 = vmatpush2.bf16.msra.mxu0 0
    %2007 = vmatprep.subr.bf16.mxu0 0
    %2008 = vmatpush2.bf16.msra.mxu0 0
    %2009 = vmatprep.subr.bf16.mxu0 0
    %2010 = vmatpush2.bf16.msra.mxu0 0
    %2011 = vmatprep.subr.bf16.mxu0 0
    %2012 = vmatpush2.bf16.msra.mxu0 0
    %2013 = vmatprep.subr.bf16.mxu0 0
    %2014 = vmatpush2.bf16.msra.mxu0 0
    %2015 = vmatprep.subr.bf16.mxu0 0
    %2016 = vmatpush2.bf16.msra.mxu0 0
    %2017 = vmatprep.mubr.bf16.mxu0 0
    %2018 = vmatmul.mubr.bf16.gmra.mxu0 %v1861
    %v2019 = vpop.f32.mrf.mxu0
    %v2020 = vadd.f32 0.0, %v2019
    %v2021 = vpop.f32.mrf.mxu0
    %v2022 = vadd.f32 0.0, %v2021
    %v2023 = vpop.f32.mrf.mxu0
    %v2024 = vpop.f32.mrf.mxu0
    %2025 = vdwg.mxu0
    %v2026 = vld [vmem:[%s733] sm:$0xff]
    %v2031 = vcombine.low %v1897, %v1899
    %v2032 = vcombine.low %v1938, %v1940
    %v2034 = vunpack.c.l.s4 1983009808
    %v2035 = vunpack.c.0.s8 %v2034
    %v2036 = vlaneseq
    %v2037 = vshrl.u32 %v2036, 7
    %v2038 = vsub.s32 %v2035, %v2037
    %v2039 = vrot.slane %v2031, %v2038
    %v2041 = vunpack.c.l.s4 1983009808
    %v2042 = vunpack.c.0.s8 %v2041
    %v2043 = vlaneseq
    %v2044 = vshrl.u32 %v2043, 7
    %v2045 = vsub.s32 %v2042, %v2044
    %v2046 = vrot.slane %v2032, %v2045
    %v2047 = vcombine.low %v2039, %v2046
    %v2049 = vadd.f32 %v2026, %v2047
    %v2050 = vld [vmem:[%s817] sm:$0xff]
    %v2055 = vcombine.low %v1979, %v1981
    %v2056 = vcombine.low %v2020, %v2022
    %v2058 = vunpack.c.l.s4 1983009808
    %v2059 = vunpack.c.0.s8 %v2058
    %v2060 = vlaneseq
    %v2061 = vshrl.u32 %v2060, 7
    %v2062 = vsub.s32 %v2059, %v2061
    %v2063 = vrot.slane %v2055, %v2062
    %v2065 = vunpack.c.l.s4 1983009808
    %v2066 = vunpack.c.0.s8 %v2065
    %v2067 = vlaneseq
    %v2068 = vshrl.u32 %v2067, 7
    %v2069 = vsub.s32 %v2066, %v2068
    %v2070 = vrot.slane %v2056, %v2069
    %v2071 = vcombine.high %v2063, %v2070
    %v2073 = vadd.f32 %v2050, %v2071
    %v2075 = vcombine.high %v2049, %v2049
    %v2077 = vunpack.c.l.s4 1983009808
    %v2078 = vunpack.c.0.s8 %v2077
    %v2079 = vlaneseq
    %v2080 = vshrl.u32 %v2079, 7
    %v2081 = vsub.s32 %v2078, %v2080
    %v2082 = vrot.slane %v2049, %v2081
    %v2084 = vunpack.c.l.s4 1983009808
    %v2085 = vunpack.c.0.s8 %v2084
    %v2086 = vlaneseq
    %v2087 = vshrl.u32 %v2086, 7
    %v2088 = vsub.s32 %v2085, %v2087
    %v2089 = vrot.slane %v2075, %v2088
    %v2090 = vcombine.high %v2082, %v2082
    %v2091 = vcombine.high %v2089, %v2089
    %v2097 = vcombine.low %v2073, %v2073
    %v2099 = vunpack.c.l.s4 1983009808
    %v2100 = vunpack.c.0.s8 %v2099
    %v2101 = vlaneseq
    %v2102 = vshrl.u32 %v2101, 7
    %v2103 = vsub.s32 %v2100, %v2102
    %v2104 = vrot.slane %v2097, %v2103
    %v2106 = vunpack.c.l.s4 1983009808
    %v2107 = vunpack.c.0.s8 %v2106
    %v2108 = vlaneseq
    %v2109 = vshrl.u32 %v2108, 7
    %v2110 = vsub.s32 %v2107, %v2109
    %v2111 = vrot.slane %v2073, %v2110
    %v2112 = vcombine.high %v2104, %v2104
    %v2113 = vcombine.high %v2111, %v2111
    %v2118 = vsel %vm1512, %v2082, %v2104
    %v2119 = vsel %vm1512, %v2090, %v2112
    %v2120 = vsel %vm1512, %v2089, %v2111
    %v2121 = vsel %vm1512, %v2091, %v2113
    %v2122 = vxor.u32 %v2118, 2147483648
    %v2123 = vmul.f32 %v2122, 1.442695
    %v2124 = vpow.pop %v2123
    %v2125 = vadd.f32 %v2124, 1.0
    %v2126 = vrcp.pop %v2125
    %v2127 = vmul.f32 1.0, %v2126
    %v2128 = vxor.u32 %v2119, 2147483648
    %v2129 = vmul.f32 %v2128, 1.442695
    %v2130 = vpow.pop %v2129
    %v2131 = vadd.f32 %v2130, 1.0
    %v2132 = vrcp.pop %v2131
    %v2133 = vmul.f32 1.0, %v2132
    %v2134 = vtanh.pop %v2120
    %v2135 = vxor.u32 %v2121, 2147483648
    %v2136 = vmul.f32 %v2135, 1.442695
    %v2137 = vpow.pop %v2136
    %v2138 = vadd.f32 %v2137, 1.0
    %v2139 = vrcp.pop %v2138
    %v2140 = vmul.f32 1.0, %v2139
    %v2141 = vmul.f32 %v2133, %v1860
    %v2142 = vmul.f32 %v2127, %v2134
    %v2143 = vadd.f32 %v2141, %v2142
    %v2144 = vtanh.pop %v2143
    %v2145 = vmul.f32 %v2140, %v2144
    %2146 = vst [vmem:[#allocation5] sm:$0xf] %v2143
    %2147 = vst [vmem:[#allocation4] sm:$0xf] %v2145
    %s2148 = scalar_lea.vmem %s4, 8
    %2149 = vst [vmem:[%s2148] sm:$0x3] %v2145
    %v2152 = vunpack.c.l.s4 1983009808
    %v2153 = vunpack.c.0.s8 %v2152
    %v2154 = vlaneseq
    %v2155 = vshrl.u32 %v2154, 7
    %v2156 = vsub.s32 %v2153, %v2155
    %v2157 = vrot.slane %v2145, %v2156
    %v2158 = vcombine.high %v2157, %v2157
    %s2160 = scalar_lea.vmem %s4, 20
    %2161 = vst [vmem:[%s2160 + $0x2] sm:$0x3] %v2158
    %v2162 = vld [vmem:[#allocation4] sm:$0xf]
    %v2163 = vld [vmem:[#allocation5] sm:$0xf]
    %v2164 = vpack.c.bf16 %v2162, %v2162
    %2165 = vmatprep.subr.bf16.mxu0 %v1185
    %2166 = vmatpush1.bf16.msra.mxu0 %v1184
    %2167 = vmatprep.subr.bf16.mxu0 %v1177
    %2168 = vmatpush1.bf16.msra.mxu0 %v1176
    %2169 = vmatprep.subr.bf16.mxu0 %v1169
    %2170 = vmatpush1.bf16.msra.mxu0 %v1168
    %2171 = vmatprep.subr.bf16.mxu0 %v1161
    %2172 = vmatpush1.bf16.msra.mxu0 %v1160
    %2173 = vmatprep.subr.bf16.mxu0 %v1153
    %2174 = vmatpush1.bf16.msra.mxu0 %v1152
    %2175 = vmatprep.subr.bf16.mxu0 %v1145
    %2176 = vmatpush1.bf16.msra.mxu0 %v1144
    %2177 = vmatprep.subr.bf16.mxu0 %v1137
    %2178 = vmatpush1.bf16.msra.mxu0 %v1136
    %2179 = vmatprep.subr.bf16.mxu0 %v1129
    %2180 = vmatpush1.bf16.msra.mxu0 %v1128
    %2181 = vmatprep.subr.bf16.mxu0 0
    %2182 = vmatpush2.bf16.msra.mxu0 0
    %2183 = vmatprep.subr.bf16.mxu0 0
    %2184 = vmatpush2.bf16.msra.mxu0 0
    %2185 = vmatprep.subr.bf16.mxu0 0
    %2186 = vmatpush2.bf16.msra.mxu0 0
    %2187 = vmatprep.subr.bf16.mxu0 0
    %2188 = vmatpush2.bf16.msra.mxu0 0
    %2189 = vmatprep.subr.bf16.mxu0 0
    %2190 = vmatpush2.bf16.msra.mxu0 0
    %2191 = vmatprep.subr.bf16.mxu0 0
    %2192 = vmatpush2.bf16.msra.mxu0 0
    %2193 = vmatprep.subr.bf16.mxu0 0
    %2194 = vmatpush2.bf16.msra.mxu0 0
    %2195 = vmatprep.subr.bf16.mxu0 0
    %2196 = vmatpush2.bf16.msra.mxu0 0
    %2197 = vmatprep.mubr.bf16.mxu0 0
    %2198 = vmatmul.mubr.bf16.gmra.mxu0 %v2164
    %v2199 = vpop.f32.mrf.mxu0
    %v2200 = vadd.f32 0.0, %v2199
    %v2201 = vpop.f32.mrf.mxu0
    %v2202 = vadd.f32 0.0, %v2201
    %v2203 = vpop.f32.mrf.mxu0
    %v2204 = vpop.f32.mrf.mxu0
    %2205 = vdwg.mxu0
    %2206 = vmatprep.subr.bf16.mxu0 %v1187
    %2207 = vmatpush1.bf16.msra.mxu0 %v1186
    %2208 = vmatprep.subr.bf16.mxu0 %v1179
    %2209 = vmatpush1.bf16.msra.mxu0 %v1178
    %2210 = vmatprep.subr.bf16.mxu0 %v1171
    %2211 = vmatpush1.bf16.msra.mxu0 %v1170
    %2212 = vmatprep.subr.bf16.mxu0 %v1163
    %2213 = vmatpush1.bf16.msra.mxu0 %v1162
    %2214 = vmatprep.subr.bf16.mxu0 %v1155
    %2215 = vmatpush1.bf16.msra.mxu0 %v1154
    %2216 = vmatprep.subr.bf16.mxu0 %v1147
    %2217 = vmatpush1.bf16.msra.mxu0 %v1146
    %2218 = vmatprep.subr.bf16.mxu0 %v1139
    %2219 = vmatpush1.bf16.msra.mxu0 %v1138
    %2220 = vmatprep.subr.bf16.mxu0 %v1131
    %2221 = vmatpush1.bf16.msra.mxu0 %v1130
    %2222 = vmatprep.subr.bf16.mxu0 0
    %2223 = vmatpush2.bf16.msra.mxu0 0
    %2224 = vmatprep.subr.bf16.mxu0 0
    %2225 = vmatpush2.bf16.msra.mxu0 0
    %2226 = vmatprep.subr.bf16.mxu0 0
    %2227 = vmatpush2.bf16.msra.mxu0 0
    %2228 = vmatprep.subr.bf16.mxu0 0
    %2229 = vmatpush2.bf16.msra.mxu0 0
    %2230 = vmatprep.subr.bf16.mxu0 0
    %2231 = vmatpush2.bf16.msra.mxu0 0
    %2232 = vmatprep.subr.bf16.mxu0 0
    %2233 = vmatpush2.bf16.msra.mxu0 0
    %2234 = vmatprep.subr.bf16.mxu0 0
    %2235 = vmatpush2.bf16.msra.mxu0 0
    %2236 = vmatprep.subr.bf16.mxu0 0
    %2237 = vmatpush2.bf16.msra.mxu0 0
    %2238 = vmatprep.mubr.bf16.mxu0 0
    %2239 = vmatmul.mubr.bf16.gmra.mxu0 %v2164
    %v2240 = vpop.f32.mrf.mxu0
    %v2241 = vadd.f32 0.0, %v2240
    %v2242 = vpop.f32.mrf.mxu0
    %v2243 = vadd.f32 0.0, %v2242
    %v2244 = vpop.f32.mrf.mxu0
    %v2245 = vpop.f32.mrf.mxu0
    %2246 = vdwg.mxu0
    %2247 = vmatprep.subr.bf16.mxu0 %v1189
    %2248 = vmatpush1.bf16.msra.mxu0 %v1188
    %2249 = vmatprep.subr.bf16.mxu0 %v1181
    %2250 = vmatpush1.bf16.msra.mxu0 %v1180
    %2251 = vmatprep.subr.bf16.mxu0 %v1173
    %2252 = vmatpush1.bf16.msra.mxu0 %v1172
    %2253 = vmatprep.subr.bf16.mxu0 %v1165
    %2254 = vmatpush1.bf16.msra.mxu0 %v1164
    %2255 = vmatprep.subr.bf16.mxu0 %v1157
    %2256 = vmatpush1.bf16.msra.mxu0 %v1156
    %2257 = vmatprep.subr.bf16.mxu0 %v1149
    %2258 = vmatpush1.bf16.msra.mxu0 %v1148
    %2259 = vmatprep.subr.bf16.mxu0 %v1141
    %2260 = vmatpush1.bf16.msra.mxu0 %v1140
    %2261 = vmatprep.subr.bf16.mxu0 %v1133
    %2262 = vmatpush1.bf16.msra.mxu0 %v1132
    %2263 = vmatprep.subr.bf16.mxu0 0
    %2264 = vmatpush2.bf16.msra.mxu0 0
    %2265 = vmatprep.subr.bf16.mxu0 0
    %2266 = vmatpush2.bf16.msra.mxu0 0
    %2267 = vmatprep.subr.bf16.mxu0 0
    %2268 = vmatpush2.bf16.msra.mxu0 0
    %2269 = vmatprep.subr.bf16.mxu0 0
    %2270 = vmatpush2.bf16.msra.mxu0 0
    %2271 = vmatprep.subr.bf16.mxu0 0
    %2272 = vmatpush2.bf16.msra.mxu0 0
    %2273 = vmatprep.subr.bf16.mxu0 0
    %2274 = vmatpush2.bf16.msra.mxu0 0
    %2275 = vmatprep.subr.bf16.mxu0 0
    %2276 = vmatpush2.bf16.msra.mxu0 0
    %2277 = vmatprep.subr.bf16.mxu0 0
    %2278 = vmatpush2.bf16.msra.mxu0 0
    %2279 = vmatprep.mubr.bf16.mxu0 0
    %2280 = vmatmul.mubr.bf16.gmra.mxu0 %v2164
    %v2281 = vpop.f32.mrf.mxu0
    %v2282 = vadd.f32 0.0, %v2281
    %v2283 = vpop.f32.mrf.mxu0
    %v2284 = vadd.f32 0.0, %v2283
    %v2285 = vpop.f32.mrf.mxu0
    %v2286 = vpop.f32.mrf.mxu0
    %2287 = vdwg.mxu0
    %2288 = vmatprep.subr.bf16.mxu0 %v1191
    %2289 = vmatpush1.bf16.msra.mxu0 %v1190
    %2290 = vmatprep.subr.bf16.mxu0 %v1183
    %2291 = vmatpush1.bf16.msra.mxu0 %v1182
    %2292 = vmatprep.subr.bf16.mxu0 %v1175
    %2293 = vmatpush1.bf16.msra.mxu0 %v1174
    %2294 = vmatprep.subr.bf16.mxu0 %v1167
    %2295 = vmatpush1.bf16.msra.mxu0 %v1166
    %2296 = vmatprep.subr.bf16.mxu0 %v1159
    %2297 = vmatpush1.bf16.msra.mxu0 %v1158
    %2298 = vmatprep.subr.bf16.mxu0 %v1151
    %2299 = vmatpush1.bf16.msra.mxu0 %v1150
    %2300 = vmatprep.subr.bf16.mxu0 %v1143
    %2301 = vmatpush1.bf16.msra.mxu0 %v1142
    %2302 = vmatprep.subr.bf16.mxu0 %v1135
    %2303 = vmatpush1.bf16.msra.mxu0 %v1134
    %2304 = vmatprep.subr.bf16.mxu0 0
    %2305 = vmatpush2.bf16.msra.mxu0 0
    %2306 = vmatprep.subr.bf16.mxu0 0
    %2307 = vmatpush2.bf16.msra.mxu0 0
    %2308 = vmatprep.subr.bf16.mxu0 0
    %2309 = vmatpush2.bf16.msra.mxu0 0
    %2310 = vmatprep.subr.bf16.mxu0 0
    %2311 = vmatpush2.bf16.msra.mxu0 0
    %2312 = vmatprep.subr.bf16.mxu0 0
    %2313 = vmatpush2.bf16.msra.mxu0 0
    %2314 = vmatprep.subr.bf16.mxu0 0
    %2315 = vmatpush2.bf16.msra.mxu0 0
    %2316 = vmatprep.subr.bf16.mxu0 0
    %2317 = vmatpush2.bf16.msra.mxu0 0
    %2318 = vmatprep.subr.bf16.mxu0 0
    %2319 = vmatpush2.bf16.msra.mxu0 0
    %2320 = vmatprep.mubr.bf16.mxu0 0
    %2321 = vmatmul.mubr.bf16.gmra.mxu0 %v2164
    %v2322 = vpop.f32.mrf.mxu0
    %v2323 = vadd.f32 0.0, %v2322
    %v2324 = vpop.f32.mrf.mxu0
    %v2325 = vadd.f32 0.0, %v2324
    %v2326 = vpop.f32.mrf.mxu0
    %v2327 = vpop.f32.mrf.mxu0
    %2328 = vdwg.mxu0
    %v2329 = vld [vmem:[%s757] sm:$0xff]
    %v2334 = vcombine.low %v2200, %v2202
    %v2335 = vcombine.low %v2241, %v2243
    %v2337 = vunpack.c.l.s4 1983009808
    %v2338 = vunpack.c.0.s8 %v2337
    %v2339 = vlaneseq
    %v2340 = vshrl.u32 %v2339, 7
    %v2341 = vsub.s32 %v2338, %v2340
    %v2342 = vrot.slane %v2334, %v2341
    %v2344 = vunpack.c.l.s4 1983009808
    %v2345 = vunpack.c.0.s8 %v2344
    %v2346 = vlaneseq
    %v2347 = vshrl.u32 %v2346, 7
    %v2348 = vsub.s32 %v2345, %v2347
    %v2349 = vrot.slane %v2335, %v2348
    %v2350 = vcombine.low %v2342, %v2349
    %v2352 = vadd.f32 %v2329, %v2350
    %v2353 = vld [vmem:[%s809] sm:$0xff]
    %v2358 = vcombine.low %v2282, %v2284
    %v2359 = vcombine.low %v2323, %v2325
    %v2361 = vunpack.c.l.s4 1983009808
    %v2362 = vunpack.c.0.s8 %v2361
    %v2363 = vlaneseq
    %v2364 = vshrl.u32 %v2363, 7
    %v2365 = vsub.s32 %v2362, %v2364
    %v2366 = vrot.slane %v2358, %v2365
    %v2368 = vunpack.c.l.s4 1983009808
    %v2369 = vunpack.c.0.s8 %v2368
    %v2370 = vlaneseq
    %v2371 = vshrl.u32 %v2370, 7
    %v2372 = vsub.s32 %v2369, %v2371
    %v2373 = vrot.slane %v2359, %v2372
    %v2374 = vcombine.high %v2366, %v2373
    %v2376 = vadd.f32 %v2353, %v2374
    %v2378 = vcombine.high %v2352, %v2352
    %v2380 = vunpack.c.l.s4 1983009808
    %v2381 = vunpack.c.0.s8 %v2380
    %v2382 = vlaneseq
    %v2383 = vshrl.u32 %v2382, 7
    %v2384 = vsub.s32 %v2381, %v2383
    %v2385 = vrot.slane %v2352, %v2384
    %v2387 = vunpack.c.l.s4 1983009808
    %v2388 = vunpack.c.0.s8 %v2387
    %v2389 = vlaneseq
    %v2390 = vshrl.u32 %v2389, 7
    %v2391 = vsub.s32 %v2388, %v2390
    %v2392 = vrot.slane %v2378, %v2391
    %v2393 = vcombine.high %v2385, %v2385
    %v2394 = vcombine.high %v2392, %v2392
    %v2400 = vcombine.low %v2376, %v2376
    %v2402 = vunpack.c.l.s4 1983009808
    %v2403 = vunpack.c.0.s8 %v2402
    %v2404 = vlaneseq
    %v2405 = vshrl.u32 %v2404, 7
    %v2406 = vsub.s32 %v2403, %v2405
    %v2407 = vrot.slane %v2400, %v2406
    %v2409 = vunpack.c.l.s4 1983009808
    %v2410 = vunpack.c.0.s8 %v2409
    %v2411 = vlaneseq
    %v2412 = vshrl.u32 %v2411, 7
    %v2413 = vsub.s32 %v2410, %v2412
    %v2414 = vrot.slane %v2376, %v2413
    %v2415 = vcombine.high %v2407, %v2407
    %v2416 = vcombine.high %v2414, %v2414
    %v2421 = vsel %vm1512, %v2385, %v2407
    %v2422 = vsel %vm1512, %v2393, %v2415
    %v2423 = vsel %vm1512, %v2392, %v2414
    %v2424 = vsel %vm1512, %v2394, %v2416
    %v2425 = vxor.u32 %v2421, 2147483648
    %v2426 = vmul.f32 %v2425, 1.442695
    %v2427 = vpow.pop %v2426
    %v2428 = vadd.f32 %v2427, 1.0
    %v2429 = vrcp.pop %v2428
    %v2430 = vmul.f32 1.0, %v2429
    %v2431 = vxor.u32 %v2422, 2147483648
    %v2432 = vmul.f32 %v2431, 1.442695
    %v2433 = vpow.pop %v2432
    %v2434 = vadd.f32 %v2433, 1.0
    %v2435 = vrcp.pop %v2434
    %v2436 = vmul.f32 1.0, %v2435
    %v2437 = vtanh.pop %v2423
    %v2438 = vxor.u32 %v2424, 2147483648
    %v2439 = vmul.f32 %v2438, 1.442695
    %v2440 = vpow.pop %v2439
    %v2441 = vadd.f32 %v2440, 1.0
    %v2442 = vrcp.pop %v2441
    %v2443 = vmul.f32 1.0, %v2442
    %v2444 = vmul.f32 %v2436, %v2163
    %v2445 = vmul.f32 %v2430, %v2437
    %v2446 = vadd.f32 %v2444, %v2445
    %v2447 = vtanh.pop %v2446
    %v2448 = vmul.f32 %v2443, %v2447
    %2449 = vst [vmem:[#allocation5] sm:$0xf] %v2446
    %2450 = vst [vmem:[#allocation4] sm:$0xf] %v2448
    %s2451 = scalar_lea.vmem %s4, 12
    %2452 = vst [vmem:[%s2451] sm:$0x3] %v2448
    %v2455 = vunpack.c.l.s4 1983009808
    %v2456 = vunpack.c.0.s8 %v2455
    %v2457 = vlaneseq
    %v2458 = vshrl.u32 %v2457, 7
    %v2459 = vsub.s32 %v2456, %v2458
    %v2460 = vrot.slane %v2448, %v2459
    %v2461 = vcombine.high %v2460, %v2460
    %s2463 = scalar_lea.vmem %s4, 16
    %2464 = vst [vmem:[%s2463 + $0x2] sm:$0x3] %v2461
    %v2465 = vld [vmem:[#allocation4] sm:$0xf]
    %v2466 = vld [vmem:[#allocation5] sm:$0xf]
    %v2467 = vpack.c.bf16 %v2465, %v2465
    %2468 = vmatprep.subr.bf16.mxu0 %v1185
    %2469 = vmatpush1.bf16.msra.mxu0 %v1184
    %2470 = vmatprep.subr.bf16.mxu0 %v1177
    %2471 = vmatpush1.bf16.msra.mxu0 %v1176
    %2472 = vmatprep.subr.bf16.mxu0 %v1169
    %2473 = vmatpush1.bf16.msra.mxu0 %v1168
    %2474 = vmatprep.subr.bf16.mxu0 %v1161
    %2475 = vmatpush1.bf16.msra.mxu0 %v1160
    %2476 = vmatprep.subr.bf16.mxu0 %v1153
    %2477 = vmatpush1.bf16.msra.mxu0 %v1152
    %2478 = vmatprep.subr.bf16.mxu0 %v1145
    %2479 = vmatpush1.bf16.msra.mxu0 %v1144
    %2480 = vmatprep.subr.bf16.mxu0 %v1137
    %2481 = vmatpush1.bf16.msra.mxu0 %v1136
    %2482 = vmatprep.subr.bf16.mxu0 %v1129
    %2483 = vmatpush1.bf16.msra.mxu0 %v1128
    %2484 = vmatprep.subr.bf16.mxu0 0
    %2485 = vmatpush2.bf16.msra.mxu0 0
    %2486 = vmatprep.subr.bf16.mxu0 0
    %2487 = vmatpush2.bf16.msra.mxu0 0
    %2488 = vmatprep.subr.bf16.mxu0 0
    %2489 = vmatpush2.bf16.msra.mxu0 0
    %2490 = vmatprep.subr.bf16.mxu0 0
    %2491 = vmatpush2.bf16.msra.mxu0 0
    %2492 = vmatprep.subr.bf16.mxu0 0
    %2493 = vmatpush2.bf16.msra.mxu0 0
    %2494 = vmatprep.subr.bf16.mxu0 0
    %2495 = vmatpush2.bf16.msra.mxu0 0
    %2496 = vmatprep.subr.bf16.mxu0 0
    %2497 = vmatpush2.bf16.msra.mxu0 0
    %2498 = vmatprep.subr.bf16.mxu0 0
    %2499 = vmatpush2.bf16.msra.mxu0 0
    %2500 = vmatprep.mubr.bf16.mxu0 0
    %2501 = vmatmul.mubr.bf16.gmra.mxu0 %v2467
    %v2502 = vpop.f32.mrf.mxu0
    %v2503 = vadd.f32 0.0, %v2502
    %v2504 = vpop.f32.mrf.mxu0
    %v2505 = vadd.f32 0.0, %v2504
    %v2506 = vpop.f32.mrf.mxu0
    %v2507 = vpop.f32.mrf.mxu0
    %2508 = vdwg.mxu0
    %2509 = vmatprep.subr.bf16.mxu0 %v1187
    %2510 = vmatpush1.bf16.msra.mxu0 %v1186
    %2511 = vmatprep.subr.bf16.mxu0 %v1179
    %2512 = vmatpush1.bf16.msra.mxu0 %v1178
    %2513 = vmatprep.subr.bf16.mxu0 %v1171
    %2514 = vmatpush1.bf16.msra.mxu0 %v1170
    %2515 = vmatprep.subr.bf16.mxu0 %v1163
    %2516 = vmatpush1.bf16.msra.mxu0 %v1162
    %2517 = vmatprep.subr.bf16.mxu0 %v1155
    %2518 = vmatpush1.bf16.msra.mxu0 %v1154
    %2519 = vmatprep.subr.bf16.mxu0 %v1147
    %2520 = vmatpush1.bf16.msra.mxu0 %v1146
    %2521 = vmatprep.subr.bf16.mxu0 %v1139
    %2522 = vmatpush1.bf16.msra.mxu0 %v1138
    %2523 = vmatprep.subr.bf16.mxu0 %v1131
    %2524 = vmatpush1.bf16.msra.mxu0 %v1130
    %2525 = vmatprep.subr.bf16.mxu0 0
    %2526 = vmatpush2.bf16.msra.mxu0 0
    %2527 = vmatprep.subr.bf16.mxu0 0
    %2528 = vmatpush2.bf16.msra.mxu0 0
    %2529 = vmatprep.subr.bf16.mxu0 0
    %2530 = vmatpush2.bf16.msra.mxu0 0
    %2531 = vmatprep.subr.bf16.mxu0 0
    %2532 = vmatpush2.bf16.msra.mxu0 0
    %2533 = vmatprep.subr.bf16.mxu0 0
    %2534 = vmatpush2.bf16.msra.mxu0 0
    %2535 = vmatprep.subr.bf16.mxu0 0
    %2536 = vmatpush2.bf16.msra.mxu0 0
    %2537 = vmatprep.subr.bf16.mxu0 0
    %2538 = vmatpush2.bf16.msra.mxu0 0
    %2539 = vmatprep.subr.bf16.mxu0 0
    %2540 = vmatpush2.bf16.msra.mxu0 0
    %2541 = vmatprep.mubr.bf16.mxu0 0
    %2542 = vmatmul.mubr.bf16.gmra.mxu0 %v2467
    %v2543 = vpop.f32.mrf.mxu0
    %v2544 = vadd.f32 0.0, %v2543
    %v2545 = vpop.f32.mrf.mxu0
    %v2546 = vadd.f32 0.0, %v2545
    %v2547 = vpop.f32.mrf.mxu0
    %v2548 = vpop.f32.mrf.mxu0
    %2549 = vdwg.mxu0
    %2550 = vmatprep.subr.bf16.mxu0 %v1189
    %2551 = vmatpush1.bf16.msra.mxu0 %v1188
    %2552 = vmatprep.subr.bf16.mxu0 %v1181
    %2553 = vmatpush1.bf16.msra.mxu0 %v1180
    %2554 = vmatprep.subr.bf16.mxu0 %v1173
    %2555 = vmatpush1.bf16.msra.mxu0 %v1172
    %2556 = vmatprep.subr.bf16.mxu0 %v1165
    %2557 = vmatpush1.bf16.msra.mxu0 %v1164
    %2558 = vmatprep.subr.bf16.mxu0 %v1157
    %2559 = vmatpush1.bf16.msra.mxu0 %v1156
    %2560 = vmatprep.subr.bf16.mxu0 %v1149
    %2561 = vmatpush1.bf16.msra.mxu0 %v1148
    %2562 = vmatprep.subr.bf16.mxu0 %v1141
    %2563 = vmatpush1.bf16.msra.mxu0 %v1140
    %2564 = vmatprep.subr.bf16.mxu0 %v1133
    %2565 = vmatpush1.bf16.msra.mxu0 %v1132
    %2566 = vmatprep.subr.bf16.mxu0 0
    %2567 = vmatpush2.bf16.msra.mxu0 0
    %2568 = vmatprep.subr.bf16.mxu0 0
    %2569 = vmatpush2.bf16.msra.mxu0 0
    %2570 = vmatprep.subr.bf16.mxu0 0
    %2571 = vmatpush2.bf16.msra.mxu0 0
    %2572 = vmatprep.subr.bf16.mxu0 0
    %2573 = vmatpush2.bf16.msra.mxu0 0
    %2574 = vmatprep.subr.bf16.mxu0 0
    %2575 = vmatpush2.bf16.msra.mxu0 0
    %2576 = vmatprep.subr.bf16.mxu0 0
    %2577 = vmatpush2.bf16.msra.mxu0 0
    %2578 = vmatprep.subr.bf16.mxu0 0
    %2579 = vmatpush2.bf16.msra.mxu0 0
    %2580 = vmatprep.subr.bf16.mxu0 0
    %2581 = vmatpush2.bf16.msra.mxu0 0
    %2582 = vmatprep.mubr.bf16.mxu0 0
    %2583 = vmatmul.mubr.bf16.gmra.mxu0 %v2467
    %v2584 = vpop.f32.mrf.mxu0
    %v2585 = vadd.f32 0.0, %v2584
    %v2586 = vpop.f32.mrf.mxu0
    %v2587 = vadd.f32 0.0, %v2586
    %v2588 = vpop.f32.mrf.mxu0
    %v2589 = vpop.f32.mrf.mxu0
    %2590 = vdwg.mxu0
    %2591 = vmatprep.subr.bf16.mxu0 %v1191
    %2592 = vmatpush1.bf16.msra.mxu0 %v1190
    %2593 = vmatprep.subr.bf16.mxu0 %v1183
    %2594 = vmatpush1.bf16.msra.mxu0 %v1182
    %2595 = vmatprep.subr.bf16.mxu0 %v1175
    %2596 = vmatpush1.bf16.msra.mxu0 %v1174
    %2597 = vmatprep.subr.bf16.mxu0 %v1167
    %2598 = vmatpush1.bf16.msra.mxu0 %v1166
    %2599 = vmatprep.subr.bf16.mxu0 %v1159
    %2600 = vmatpush1.bf16.msra.mxu0 %v1158
    %2601 = vmatprep.subr.bf16.mxu0 %v1151
    %2602 = vmatpush1.bf16.msra.mxu0 %v1150
    %2603 = vmatprep.subr.bf16.mxu0 %v1143
    %2604 = vmatpush1.bf16.msra.mxu0 %v1142
    %2605 = vmatprep.subr.bf16.mxu0 %v1135
    %2606 = vmatpush1.bf16.msra.mxu0 %v1134
    %2607 = vmatprep.subr.bf16.mxu0 0
    %2608 = vmatpush2.bf16.msra.mxu0 0
    %2609 = vmatprep.subr.bf16.mxu0 0
    %2610 = vmatpush2.bf16.msra.mxu0 0
    %2611 = vmatprep.subr.bf16.mxu0 0
    %2612 = vmatpush2.bf16.msra.mxu0 0
    %2613 = vmatprep.subr.bf16.mxu0 0
    %2614 = vmatpush2.bf16.msra.mxu0 0
    %2615 = vmatprep.subr.bf16.mxu0 0
    %2616 = vmatpush2.bf16.msra.mxu0 0
    %2617 = vmatprep.subr.bf16.mxu0 0
    %2618 = vmatpush2.bf16.msra.mxu0 0
    %2619 = vmatprep.subr.bf16.mxu0 0
    %2620 = vmatpush2.bf16.msra.mxu0 0
    %2621 = vmatprep.subr.bf16.mxu0 0
    %2622 = vmatpush2.bf16.msra.mxu0 0
    %2623 = vmatprep.mubr.bf16.mxu0 0
    %2624 = vmatmul.mubr.bf16.gmra.mxu0 %v2467
    %v2625 = vpop.f32.mrf.mxu0
    %v2626 = vadd.f32 0.0, %v2625
    %v2627 = vpop.f32.mrf.mxu0
    %v2628 = vadd.f32 0.0, %v2627
    %v2629 = vpop.f32.mrf.mxu0
    %v2630 = vpop.f32.mrf.mxu0
    %2631 = vdwg.mxu0
    %v2632 = vld [vmem:[%s785] sm:$0xff]
    %v2637 = vcombine.low %v2503, %v2505
    %v2638 = vcombine.low %v2544, %v2546
    %v2640 = vunpack.c.l.s4 1983009808
    %v2641 = vunpack.c.0.s8 %v2640
    %v2642 = vlaneseq
    %v2643 = vshrl.u32 %v2642, 7
    %v2644 = vsub.s32 %v2641, %v2643
    %v2645 = vrot.slane %v2637, %v2644
    %v2647 = vunpack.c.l.s4 1983009808
    %v2648 = vunpack.c.0.s8 %v2647
    %v2649 = vlaneseq
    %v2650 = vshrl.u32 %v2649, 7
    %v2651 = vsub.s32 %v2648, %v2650
    %v2652 = vrot.slane %v2638, %v2651
    %v2653 = vcombine.low %v2645, %v2652
    %v2655 = vadd.f32 %v2632, %v2653
    %v2656 = vld [vmem:[%s761] sm:$0xff]
    %v2661 = vcombine.low %v2585, %v2587
    %v2662 = vcombine.low %v2626, %v2628
    %v2664 = vunpack.c.l.s4 1983009808
    %v2665 = vunpack.c.0.s8 %v2664
    %v2666 = vlaneseq
    %v2667 = vshrl.u32 %v2666, 7
    %v2668 = vsub.s32 %v2665, %v2667
    %v2669 = vrot.slane %v2661, %v2668
    %v2671 = vunpack.c.l.s4 1983009808
    %v2672 = vunpack.c.0.s8 %v2671
    %v2673 = vlaneseq
    %v2674 = vshrl.u32 %v2673, 7
    %v2675 = vsub.s32 %v2672, %v2674
    %v2676 = vrot.slane %v2662, %v2675
    %v2677 = vcombine.high %v2669, %v2676
    %v2679 = vadd.f32 %v2656, %v2677
    %v2681 = vcombine.high %v2655, %v2655
    %v2683 = vunpack.c.l.s4 1983009808
    %v2684 = vunpack.c.0.s8 %v2683
    %v2685 = vlaneseq
    %v2686 = vshrl.u32 %v2685, 7
    %v2687 = vsub.s32 %v2684, %v2686
    %v2688 = vrot.slane %v2655, %v2687
    %v2690 = vunpack.c.l.s4 1983009808
    %v2691 = vunpack.c.0.s8 %v2690
    %v2692 = vlaneseq
    %v2693 = vshrl.u32 %v2692, 7
    %v2694 = vsub.s32 %v2691, %v2693
    %v2695 = vrot.slane %v2681, %v2694
    %v2696 = vcombine.high %v2688, %v2688
    %v2697 = vcombine.high %v2695, %v2695
    %v2703 = vcombine.low %v2679, %v2679
    %v2705 = vunpack.c.l.s4 1983009808
    %v2706 = vunpack.c.0.s8 %v2705
    %v2707 = vlaneseq
    %v2708 = vshrl.u32 %v2707, 7
    %v2709 = vsub.s32 %v2706, %v2708
    %v2710 = vrot.slane %v2703, %v2709
    %v2712 = vunpack.c.l.s4 1983009808
    %v2713 = vunpack.c.0.s8 %v2712
    %v2714 = vlaneseq
    %v2715 = vshrl.u32 %v2714, 7
    %v2716 = vsub.s32 %v2713, %v2715
    %v2717 = vrot.slane %v2679, %v2716
    %v2718 = vcombine.high %v2710, %v2710
    %v2719 = vcombine.high %v2717, %v2717
    %v2724 = vsel %vm1512, %v2688, %v2710
    %v2725 = vsel %vm1512, %v2696, %v2718
    %v2726 = vsel %vm1512, %v2695, %v2717
    %v2727 = vsel %vm1512, %v2697, %v2719
    %v2728 = vxor.u32 %v2724, 2147483648
    %v2729 = vmul.f32 %v2728, 1.442695
    %v2730 = vpow.pop %v2729
    %v2731 = vadd.f32 %v2730, 1.0
    %v2732 = vrcp.pop %v2731
    %v2733 = vmul.f32 1.0, %v2732
    %v2734 = vxor.u32 %v2725, 2147483648
    %v2735 = vmul.f32 %v2734, 1.442695
    %v2736 = vpow.pop %v2735
    %v2737 = vadd.f32 %v2736, 1.0
    %v2738 = vrcp.pop %v2737
    %v2739 = vmul.f32 1.0, %v2738
    %v2740 = vtanh.pop %v2726
    %v2741 = vxor.u32 %v2727, 2147483648
    %v2742 = vmul.f32 %v2741, 1.442695
    %v2743 = vpow.pop %v2742
    %v2744 = vadd.f32 %v2743, 1.0
    %v2745 = vrcp.pop %v2744
    %v2746 = vmul.f32 1.0, %v2745
    %v2747 = vmul.f32 %v2739, %v2466
    %v2748 = vmul.f32 %v2733, %v2740
    %v2749 = vadd.f32 %v2747, %v2748
    %v2750 = vtanh.pop %v2749
    %v2751 = vmul.f32 %v2746, %v2750
    %2752 = vst [vmem:[#allocation5] sm:$0xf] %v2749
    %2753 = vst [vmem:[#allocation4] sm:$0xf] %v2751
    %2754 = vst [vmem:[%s2463] sm:$0x3] %v2751
    %v2757 = vunpack.c.l.s4 1983009808
    %v2758 = vunpack.c.0.s8 %v2757
    %v2759 = vlaneseq
    %v2760 = vshrl.u32 %v2759, 7
    %v2761 = vsub.s32 %v2758, %v2760
    %v2762 = vrot.slane %v2751, %v2761
    %v2763 = vcombine.high %v2762, %v2762
    %2765 = vst [vmem:[%s2451 + $0x2] sm:$0x3] %v2763
    %v2766 = vld [vmem:[#allocation4] sm:$0xf]
    %v2767 = vld [vmem:[#allocation5] sm:$0xf]
    %v2768 = vpack.c.bf16 %v2766, %v2766
    %2769 = vmatprep.subr.bf16.mxu0 %v1185
    %2770 = vmatpush1.bf16.msra.mxu0 %v1184
    %2771 = vmatprep.subr.bf16.mxu0 %v1177
    %2772 = vmatpush1.bf16.msra.mxu0 %v1176
    %2773 = vmatprep.subr.bf16.mxu0 %v1169
    %2774 = vmatpush1.bf16.msra.mxu0 %v1168
    %2775 = vmatprep.subr.bf16.mxu0 %v1161
    %2776 = vmatpush1.bf16.msra.mxu0 %v1160
    %2777 = vmatprep.subr.bf16.mxu0 %v1153
    %2778 = vmatpush1.bf16.msra.mxu0 %v1152
    %2779 = vmatprep.subr.bf16.mxu0 %v1145
    %2780 = vmatpush1.bf16.msra.mxu0 %v1144
    %2781 = vmatprep.subr.bf16.mxu0 %v1137
    %2782 = vmatpush1.bf16.msra.mxu0 %v1136
    %2783 = vmatprep.subr.bf16.mxu0 %v1129
    %2784 = vmatpush1.bf16.msra.mxu0 %v1128
    %2785 = vmatprep.subr.bf16.mxu0 0
    %2786 = vmatpush2.bf16.msra.mxu0 0
    %2787 = vmatprep.subr.bf16.mxu0 0
    %2788 = vmatpush2.bf16.msra.mxu0 0
    %2789 = vmatprep.subr.bf16.mxu0 0
    %2790 = vmatpush2.bf16.msra.mxu0 0
    %2791 = vmatprep.subr.bf16.mxu0 0
    %2792 = vmatpush2.bf16.msra.mxu0 0
    %2793 = vmatprep.subr.bf16.mxu0 0
    %2794 = vmatpush2.bf16.msra.mxu0 0
    %2795 = vmatprep.subr.bf16.mxu0 0
    %2796 = vmatpush2.bf16.msra.mxu0 0
    %2797 = vmatprep.subr.bf16.mxu0 0
    %2798 = vmatpush2.bf16.msra.mxu0 0
    %2799 = vmatprep.subr.bf16.mxu0 0
    %2800 = vmatpush2.bf16.msra.mxu0 0
    %2801 = vmatprep.mubr.bf16.mxu0 0
    %2802 = vmatmul.mubr.bf16.gmra.mxu0 %v2768
    %v2803 = vpop.f32.mrf.mxu0
    %v2804 = vadd.f32 0.0, %v2803
    %v2805 = vpop.f32.mrf.mxu0
    %v2806 = vadd.f32 0.0, %v2805
    %v2807 = vpop.f32.mrf.mxu0
    %v2808 = vpop.f32.mrf.mxu0
    %2809 = vdwg.mxu0
    %2810 = vmatprep.subr.bf16.mxu0 %v1187
    %2811 = vmatpush1.bf16.msra.mxu0 %v1186
    %2812 = vmatprep.subr.bf16.mxu0 %v1179
    %2813 = vmatpush1.bf16.msra.mxu0 %v1178
    %2814 = vmatprep.subr.bf16.mxu0 %v1171
    %2815 = vmatpush1.bf16.msra.mxu0 %v1170
    %2816 = vmatprep.subr.bf16.mxu0 %v1163
    %2817 = vmatpush1.bf16.msra.mxu0 %v1162
    %2818 = vmatprep.subr.bf16.mxu0 %v1155
    %2819 = vmatpush1.bf16.msra.mxu0 %v1154
    %2820 = vmatprep.subr.bf16.mxu0 %v1147
    %2821 = vmatpush1.bf16.msra.mxu0 %v1146
    %2822 = vmatprep.subr.bf16.mxu0 %v1139
    %2823 = vmatpush1.bf16.msra.mxu0 %v1138
    %2824 = vmatprep.subr.bf16.mxu0 %v1131
    %2825 = vmatpush1.bf16.msra.mxu0 %v1130
    %2826 = vmatprep.subr.bf16.mxu0 0
    %2827 = vmatpush2.bf16.msra.mxu0 0
    %2828 = vmatprep.subr.bf16.mxu0 0
    %2829 = vmatpush2.bf16.msra.mxu0 0
    %2830 = vmatprep.subr.bf16.mxu0 0
    %2831 = vmatpush2.bf16.msra.mxu0 0
    %2832 = vmatprep.subr.bf16.mxu0 0
    %2833 = vmatpush2.bf16.msra.mxu0 0
    %2834 = vmatprep.subr.bf16.mxu0 0
    %2835 = vmatpush2.bf16.msra.mxu0 0
    %2836 = vmatprep.subr.bf16.mxu0 0
    %2837 = vmatpush2.bf16.msra.mxu0 0
    %2838 = vmatprep.subr.bf16.mxu0 0
    %2839 = vmatpush2.bf16.msra.mxu0 0
    %2840 = vmatprep.subr.bf16.mxu0 0
    %2841 = vmatpush2.bf16.msra.mxu0 0
    %2842 = vmatprep.mubr.bf16.mxu0 0
    %2843 = vmatmul.mubr.bf16.gmra.mxu0 %v2768
    %v2844 = vpop.f32.mrf.mxu0
    %v2845 = vadd.f32 0.0, %v2844
    %v2846 = vpop.f32.mrf.mxu0
    %v2847 = vadd.f32 0.0, %v2846
    %v2848 = vpop.f32.mrf.mxu0
    %v2849 = vpop.f32.mrf.mxu0
    %2850 = vdwg.mxu0
    %2851 = vmatprep.subr.bf16.mxu0 %v1189
    %2852 = vmatpush1.bf16.msra.mxu0 %v1188
    %2853 = vmatprep.subr.bf16.mxu0 %v1181
    %2854 = vmatpush1.bf16.msra.mxu0 %v1180
    %2855 = vmatprep.subr.bf16.mxu0 %v1173
    %2856 = vmatpush1.bf16.msra.mxu0 %v1172
    %2857 = vmatprep.subr.bf16.mxu0 %v1165
    %2858 = vmatpush1.bf16.msra.mxu0 %v1164
    %2859 = vmatprep.subr.bf16.mxu0 %v1157
    %2860 = vmatpush1.bf16.msra.mxu0 %v1156
    %2861 = vmatprep.subr.bf16.mxu0 %v1149
    %2862 = vmatpush1.bf16.msra.mxu0 %v1148
    %2863 = vmatprep.subr.bf16.mxu0 %v1141
    %2864 = vmatpush1.bf16.msra.mxu0 %v1140
    %2865 = vmatprep.subr.bf16.mxu0 %v1133
    %2866 = vmatpush1.bf16.msra.mxu0 %v1132
    %2867 = vmatprep.subr.bf16.mxu0 0
    %2868 = vmatpush2.bf16.msra.mxu0 0
    %2869 = vmatprep.subr.bf16.mxu0 0
    %2870 = vmatpush2.bf16.msra.mxu0 0
    %2871 = vmatprep.subr.bf16.mxu0 0
    %2872 = vmatpush2.bf16.msra.mxu0 0
    %2873 = vmatprep.subr.bf16.mxu0 0
    %2874 = vmatpush2.bf16.msra.mxu0 0
    %2875 = vmatprep.subr.bf16.mxu0 0
    %2876 = vmatpush2.bf16.msra.mxu0 0
    %2877 = vmatprep.subr.bf16.mxu0 0
    %2878 = vmatpush2.bf16.msra.mxu0 0
    %2879 = vmatprep.subr.bf16.mxu0 0
    %2880 = vmatpush2.bf16.msra.mxu0 0
    %2881 = vmatprep.subr.bf16.mxu0 0
    %2882 = vmatpush2.bf16.msra.mxu0 0
    %2883 = vmatprep.mubr.bf16.mxu0 0
    %2884 = vmatmul.mubr.bf16.gmra.mxu0 %v2768
    %v2885 = vpop.f32.mrf.mxu0
    %v2886 = vadd.f32 0.0, %v2885
    %v2887 = vpop.f32.mrf.mxu0
    %v2888 = vadd.f32 0.0, %v2887
    %v2889 = vpop.f32.mrf.mxu0
    %v2890 = vpop.f32.mrf.mxu0
    %2891 = vdwg.mxu0
    %2892 = vmatprep.subr.bf16.mxu0 %v1191
    %2893 = vmatpush1.bf16.msra.mxu0 %v1190
    %2894 = vmatprep.subr.bf16.mxu0 %v1183
    %2895 = vmatpush1.bf16.msra.mxu0 %v1182
    %2896 = vmatprep.subr.bf16.mxu0 %v1175
    %2897 = vmatpush1.bf16.msra.mxu0 %v1174
    %2898 = vmatprep.subr.bf16.mxu0 %v1167
    %2899 = vmatpush1.bf16.msra.mxu0 %v1166
    %2900 = vmatprep.subr.bf16.mxu0 %v1159
    %2901 = vmatpush1.bf16.msra.mxu0 %v1158
    %2902 = vmatprep.subr.bf16.mxu0 %v1151
    %2903 = vmatpush1.bf16.msra.mxu0 %v1150
    %2904 = vmatprep.subr.bf16.mxu0 %v1143
    %2905 = vmatpush1.bf16.msra.mxu0 %v1142
    %2906 = vmatprep.subr.bf16.mxu0 %v1135
    %2907 = vmatpush1.bf16.msra.mxu0 %v1134
    %2908 = vmatprep.subr.bf16.mxu0 0
    %2909 = vmatpush2.bf16.msra.mxu0 0
    %2910 = vmatprep.subr.bf16.mxu0 0
    %2911 = vmatpush2.bf16.msra.mxu0 0
    %2912 = vmatprep.subr.bf16.mxu0 0
    %2913 = vmatpush2.bf16.msra.mxu0 0
    %2914 = vmatprep.subr.bf16.mxu0 0
    %2915 = vmatpush2.bf16.msra.mxu0 0
    %2916 = vmatprep.subr.bf16.mxu0 0
    %2917 = vmatpush2.bf16.msra.mxu0 0
    %2918 = vmatprep.subr.bf16.mxu0 0
    %2919 = vmatpush2.bf16.msra.mxu0 0
    %2920 = vmatprep.subr.bf16.mxu0 0
    %2921 = vmatpush2.bf16.msra.mxu0 0
    %2922 = vmatprep.subr.bf16.mxu0 0
    %2923 = vmatpush2.bf16.msra.mxu0 0
    %2924 = vmatprep.mubr.bf16.mxu0 0
    %2925 = vmatmul.mubr.bf16.gmra.mxu0 %v2768
    %v2926 = vpop.f32.mrf.mxu0
    %v2927 = vadd.f32 0.0, %v2926
    %v2928 = vpop.f32.mrf.mxu0
    %v2929 = vadd.f32 0.0, %v2928
    %v2930 = vpop.f32.mrf.mxu0
    %v2931 = vpop.f32.mrf.mxu0
    %2932 = vdwg.mxu0
    %v2933 = vld [vmem:[%s813] sm:$0xff]
    %v2938 = vcombine.low %v2804, %v2806
    %v2939 = vcombine.low %v2845, %v2847
    %v2941 = vunpack.c.l.s4 1983009808
    %v2942 = vunpack.c.0.s8 %v2941
    %v2943 = vlaneseq
    %v2944 = vshrl.u32 %v2943, 7
    %v2945 = vsub.s32 %v2942, %v2944
    %v2946 = vrot.slane %v2938, %v2945
    %v2948 = vunpack.c.l.s4 1983009808
    %v2949 = vunpack.c.0.s8 %v2948
    %v2950 = vlaneseq
    %v2951 = vshrl.u32 %v2950, 7
    %v2952 = vsub.s32 %v2949, %v2951
    %v2953 = vrot.slane %v2939, %v2952
    %v2954 = vcombine.low %v2946, %v2953
    %v2956 = vadd.f32 %v2933, %v2954
    %v2957 = vld [vmem:[%s753] sm:$0xff]
    %v2962 = vcombine.low %v2886, %v2888
    %v2963 = vcombine.low %v2927, %v2929
    %v2965 = vunpack.c.l.s4 1983009808
    %v2966 = vunpack.c.0.s8 %v2965
    %v2967 = vlaneseq
    %v2968 = vshrl.u32 %v2967, 7
    %v2969 = vsub.s32 %v2966, %v2968
    %v2970 = vrot.slane %v2962, %v2969
    %v2972 = vunpack.c.l.s4 1983009808
    %v2973 = vunpack.c.0.s8 %v2972
    %v2974 = vlaneseq
    %v2975 = vshrl.u32 %v2974, 7
    %v2976 = vsub.s32 %v2973, %v2975
    %v2977 = vrot.slane %v2963, %v2976
    %v2978 = vcombine.high %v2970, %v2977
    %v2980 = vadd.f32 %v2957, %v2978
    %v2982 = vcombine.high %v2956, %v2956
    %v2984 = vunpack.c.l.s4 1983009808
    %v2985 = vunpack.c.0.s8 %v2984
    %v2986 = vlaneseq
    %v2987 = vshrl.u32 %v2986, 7
    %v2988 = vsub.s32 %v2985, %v2987
    %v2989 = vrot.slane %v2956, %v2988
    %v2991 = vunpack.c.l.s4 1983009808
    %v2992 = vunpack.c.0.s8 %v2991
    %v2993 = vlaneseq
    %v2994 = vshrl.u32 %v2993, 7
    %v2995 = vsub.s32 %v2992, %v2994
    %v2996 = vrot.slane %v2982, %v2995
    %v2997 = vcombine.high %v2989, %v2989
    %v2998 = vcombine.high %v2996, %v2996
    %v3004 = vcombine.low %v2980, %v2980
    %v3006 = vunpack.c.l.s4 1983009808
    %v3007 = vunpack.c.0.s8 %v3006
    %v3008 = vlaneseq
    %v3009 = vshrl.u32 %v3008, 7
    %v3010 = vsub.s32 %v3007, %v3009
    %v3011 = vrot.slane %v3004, %v3010
    %v3013 = vunpack.c.l.s4 1983009808
    %v3014 = vunpack.c.0.s8 %v3013
    %v3015 = vlaneseq
    %v3016 = vshrl.u32 %v3015, 7
    %v3017 = vsub.s32 %v3014, %v3016
    %v3018 = vrot.slane %v2980, %v3017
    %v3019 = vcombine.high %v3011, %v3011
    %v3020 = vcombine.high %v3018, %v3018
    %v3025 = vsel %vm1512, %v2989, %v3011
    %v3026 = vsel %vm1512, %v2997, %v3019
    %v3027 = vsel %vm1512, %v2996, %v3018
    %v3028 = vsel %vm1512, %v2998, %v3020
    %v3029 = vxor.u32 %v3025, 2147483648
    %v3030 = vmul.f32 %v3029, 1.442695
    %v3031 = vpow.pop %v3030
    %v3032 = vadd.f32 %v3031, 1.0
    %v3033 = vrcp.pop %v3032
    %v3034 = vmul.f32 1.0, %v3033
    %v3035 = vxor.u32 %v3026, 2147483648
    %v3036 = vmul.f32 %v3035, 1.442695
    %v3037 = vpow.pop %v3036
    %v3038 = vadd.f32 %v3037, 1.0
    %v3039 = vrcp.pop %v3038
    %v3040 = vmul.f32 1.0, %v3039
    %v3041 = vtanh.pop %v3027
    %v3042 = vxor.u32 %v3028, 2147483648
    %v3043 = vmul.f32 %v3042, 1.442695
    %v3044 = vpow.pop %v3043
    %v3045 = vadd.f32 %v3044, 1.0
    %v3046 = vrcp.pop %v3045
    %v3047 = vmul.f32 1.0, %v3046
    %v3048 = vmul.f32 %v3040, %v2767
    %v3049 = vmul.f32 %v3034, %v3041
    %v3050 = vadd.f32 %v3048, %v3049
    %v3051 = vtanh.pop %v3050
    %v3052 = vmul.f32 %v3047, %v3051
    %3053 = vst [vmem:[#allocation5] sm:$0xf] %v3050
    %3054 = vst [vmem:[#allocation4] sm:$0xf] %v3052
    %3055 = vst [vmem:[%s2160] sm:$0x3] %v3052
    %v3058 = vunpack.c.l.s4 1983009808
    %v3059 = vunpack.c.0.s8 %v3058
    %v3060 = vlaneseq
    %v3061 = vshrl.u32 %v3060, 7
    %v3062 = vsub.s32 %v3059, %v3061
    %v3063 = vrot.slane %v3052, %v3062
    %v3064 = vcombine.high %v3063, %v3063
    %3066 = vst [vmem:[%s2148 + $0x2] sm:$0x3] %v3064
    %v3067 = vld [vmem:[#allocation4] sm:$0xf]
    %v3068 = vld [vmem:[#allocation5] sm:$0xf]
    %v3069 = vpack.c.bf16 %v3067, %v3067
    %3070 = vmatprep.subr.bf16.mxu0 %v1185
    %3071 = vmatpush1.bf16.msra.mxu0 %v1184
    %3072 = vmatprep.subr.bf16.mxu0 %v1177
    %3073 = vmatpush1.bf16.msra.mxu0 %v1176
    %3074 = vmatprep.subr.bf16.mxu0 %v1169
    %3075 = vmatpush1.bf16.msra.mxu0 %v1168
    %3076 = vmatprep.subr.bf16.mxu0 %v1161
    %3077 = vmatpush1.bf16.msra.mxu0 %v1160
    %3078 = vmatprep.subr.bf16.mxu0 %v1153
    %3079 = vmatpush1.bf16.msra.mxu0 %v1152
    %3080 = vmatprep.subr.bf16.mxu0 %v1145
    %3081 = vmatpush1.bf16.msra.mxu0 %v1144
    %3082 = vmatprep.subr.bf16.mxu0 %v1137
    %3083 = vmatpush1.bf16.msra.mxu0 %v1136
    %3084 = vmatprep.subr.bf16.mxu0 %v1129
    %3085 = vmatpush1.bf16.msra.mxu0 %v1128
    %3086 = vmatprep.subr.bf16.mxu0 0
    %3087 = vmatpush2.bf16.msra.mxu0 0
    %3088 = vmatprep.subr.bf16.mxu0 0
    %3089 = vmatpush2.bf16.msra.mxu0 0
    %3090 = vmatprep.subr.bf16.mxu0 0
    %3091 = vmatpush2.bf16.msra.mxu0 0
    %3092 = vmatprep.subr.bf16.mxu0 0
    %3093 = vmatpush2.bf16.msra.mxu0 0
    %3094 = vmatprep.subr.bf16.mxu0 0
    %3095 = vmatpush2.bf16.msra.mxu0 0
    %3096 = vmatprep.subr.bf16.mxu0 0
    %3097 = vmatpush2.bf16.msra.mxu0 0
    %3098 = vmatprep.subr.bf16.mxu0 0
    %3099 = vmatpush2.bf16.msra.mxu0 0
    %3100 = vmatprep.subr.bf16.mxu0 0
    %3101 = vmatpush2.bf16.msra.mxu0 0
    %3102 = vmatprep.mubr.bf16.mxu0 0
    %3103 = vmatmul.mubr.bf16.gmra.mxu0 %v3069
    %v3104 = vpop.f32.mrf.mxu0
    %v3105 = vadd.f32 0.0, %v3104
    %v3106 = vpop.f32.mrf.mxu0
    %v3107 = vadd.f32 0.0, %v3106
    %v3108 = vpop.f32.mrf.mxu0
    %v3109 = vpop.f32.mrf.mxu0
    %3110 = vdwg.mxu0
    %3111 = vmatprep.subr.bf16.mxu0 %v1187
    %3112 = vmatpush1.bf16.msra.mxu0 %v1186
    %3113 = vmatprep.subr.bf16.mxu0 %v1179
    %3114 = vmatpush1.bf16.msra.mxu0 %v1178
    %3115 = vmatprep.subr.bf16.mxu0 %v1171
    %3116 = vmatpush1.bf16.msra.mxu0 %v1170
    %3117 = vmatprep.subr.bf16.mxu0 %v1163
    %3118 = vmatpush1.bf16.msra.mxu0 %v1162
    %3119 = vmatprep.subr.bf16.mxu0 %v1155
    %3120 = vmatpush1.bf16.msra.mxu0 %v1154
    %3121 = vmatprep.subr.bf16.mxu0 %v1147
    %3122 = vmatpush1.bf16.msra.mxu0 %v1146
    %3123 = vmatprep.subr.bf16.mxu0 %v1139
    %3124 = vmatpush1.bf16.msra.mxu0 %v1138
    %3125 = vmatprep.subr.bf16.mxu0 %v1131
    %3126 = vmatpush1.bf16.msra.mxu0 %v1130
    %3127 = vmatprep.subr.bf16.mxu0 0
    %3128 = vmatpush2.bf16.msra.mxu0 0
    %3129 = vmatprep.subr.bf16.mxu0 0
    %3130 = vmatpush2.bf16.msra.mxu0 0
    %3131 = vmatprep.subr.bf16.mxu0 0
    %3132 = vmatpush2.bf16.msra.mxu0 0
    %3133 = vmatprep.subr.bf16.mxu0 0
    %3134 = vmatpush2.bf16.msra.mxu0 0
    %3135 = vmatprep.subr.bf16.mxu0 0
    %3136 = vmatpush2.bf16.msra.mxu0 0
    %3137 = vmatprep.subr.bf16.mxu0 0
    %3138 = vmatpush2.bf16.msra.mxu0 0
    %3139 = vmatprep.subr.bf16.mxu0 0
    %3140 = vmatpush2.bf16.msra.mxu0 0
    %3141 = vmatprep.subr.bf16.mxu0 0
    %3142 = vmatpush2.bf16.msra.mxu0 0
    %3143 = vmatprep.mubr.bf16.mxu0 0
    %3144 = vmatmul.mubr.bf16.gmra.mxu0 %v3069
    %v3145 = vpop.f32.mrf.mxu0
    %v3146 = vadd.f32 0.0, %v3145
    %v3147 = vpop.f32.mrf.mxu0
    %v3148 = vadd.f32 0.0, %v3147
    %v3149 = vpop.f32.mrf.mxu0
    %v3150 = vpop.f32.mrf.mxu0
    %3151 = vdwg.mxu0
    %3152 = vmatprep.subr.bf16.mxu0 %v1189
    %3153 = vmatpush1.bf16.msra.mxu0 %v1188
    %3154 = vmatprep.subr.bf16.mxu0 %v1181
    %3155 = vmatpush1.bf16.msra.mxu0 %v1180
    %3156 = vmatprep.subr.bf16.mxu0 %v1173
    %3157 = vmatpush1.bf16.msra.mxu0 %v1172
    %3158 = vmatprep.subr.bf16.mxu0 %v1165
    %3159 = vmatpush1.bf16.msra.mxu0 %v1164
    %3160 = vmatprep.subr.bf16.mxu0 %v1157
    %3161 = vmatpush1.bf16.msra.mxu0 %v1156
    %3162 = vmatprep.subr.bf16.mxu0 %v1149
    %3163 = vmatpush1.bf16.msra.mxu0 %v1148
    %3164 = vmatprep.subr.bf16.mxu0 %v1141
    %3165 = vmatpush1.bf16.msra.mxu0 %v1140
    %3166 = vmatprep.subr.bf16.mxu0 %v1133
    %3167 = vmatpush1.bf16.msra.mxu0 %v1132
    %3168 = vmatprep.subr.bf16.mxu0 0
    %3169 = vmatpush2.bf16.msra.mxu0 0
    %3170 = vmatprep.subr.bf16.mxu0 0
    %3171 = vmatpush2.bf16.msra.mxu0 0
    %3172 = vmatprep.subr.bf16.mxu0 0
    %3173 = vmatpush2.bf16.msra.mxu0 0
    %3174 = vmatprep.subr.bf16.mxu0 0
    %3175 = vmatpush2.bf16.msra.mxu0 0
    %3176 = vmatprep.subr.bf16.mxu0 0
    %3177 = vmatpush2.bf16.msra.mxu0 0
    %3178 = vmatprep.subr.bf16.mxu0 0
    %3179 = vmatpush2.bf16.msra.mxu0 0
    %3180 = vmatprep.subr.bf16.mxu0 0
    %3181 = vmatpush2.bf16.msra.mxu0 0
    %3182 = vmatprep.subr.bf16.mxu0 0
    %3183 = vmatpush2.bf16.msra.mxu0 0
    %3184 = vmatprep.mubr.bf16.mxu0 0
    %3185 = vmatmul.mubr.bf16.gmra.mxu0 %v3069
    %v3186 = vpop.f32.mrf.mxu0
    %v3187 = vadd.f32 0.0, %v3186
    %v3188 = vpop.f32.mrf.mxu0
    %v3189 = vadd.f32 0.0, %v3188
    %v3190 = vpop.f32.mrf.mxu0
    %v3191 = vpop.f32.mrf.mxu0
    %3192 = vdwg.mxu0
    %3193 = vmatprep.subr.bf16.mxu0 %v1191
    %3194 = vmatpush1.bf16.msra.mxu0 %v1190
    %3195 = vmatprep.subr.bf16.mxu0 %v1183
    %3196 = vmatpush1.bf16.msra.mxu0 %v1182
    %3197 = vmatprep.subr.bf16.mxu0 %v1175
    %3198 = vmatpush1.bf16.msra.mxu0 %v1174
    %3199 = vmatprep.subr.bf16.mxu0 %v1167
    %3200 = vmatpush1.bf16.msra.mxu0 %v1166
    %3201 = vmatprep.subr.bf16.mxu0 %v1159
    %3202 = vmatpush1.bf16.msra.mxu0 %v1158
    %3203 = vmatprep.subr.bf16.mxu0 %v1151
    %3204 = vmatpush1.bf16.msra.mxu0 %v1150
    %3205 = vmatprep.subr.bf16.mxu0 %v1143
    %3206 = vmatpush1.bf16.msra.mxu0 %v1142
    %3207 = vmatprep.subr.bf16.mxu0 %v1135
    %3208 = vmatpush1.bf16.msra.mxu0 %v1134
    %3209 = vmatprep.subr.bf16.mxu0 0
    %3210 = vmatpush2.bf16.msra.mxu0 0
    %3211 = vmatprep.subr.bf16.mxu0 0
    %3212 = vmatpush2.bf16.msra.mxu0 0
    %3213 = vmatprep.subr.bf16.mxu0 0
    %3214 = vmatpush2.bf16.msra.mxu0 0
    %3215 = vmatprep.subr.bf16.mxu0 0
    %3216 = vmatpush2.bf16.msra.mxu0 0
    %3217 = vmatprep.subr.bf16.mxu0 0
    %3218 = vmatpush2.bf16.msra.mxu0 0
    %3219 = vmatprep.subr.bf16.mxu0 0
    %3220 = vmatpush2.bf16.msra.mxu0 0
    %3221 = vmatprep.subr.bf16.mxu0 0
    %3222 = vmatpush2.bf16.msra.mxu0 0
    %3223 = vmatprep.subr.bf16.mxu0 0
    %3224 = vmatpush2.bf16.msra.mxu0 0
    %3225 = vmatprep.mubr.bf16.mxu0 0
    %3226 = vmatmul.mubr.bf16.gmra.mxu0 %v3069
    %v3227 = vpop.f32.mrf.mxu0
    %v3228 = vadd.f32 0.0, %v3227
    %v3229 = vpop.f32.mrf.mxu0
    %v3230 = vadd.f32 0.0, %v3229
    %v3231 = vpop.f32.mrf.mxu0
    %v3232 = vpop.f32.mrf.mxu0
    %3233 = vdwg.mxu0
    %v3234 = vld [vmem:[%s837] sm:$0xff]
    %v3239 = vcombine.low %v3105, %v3107
    %v3240 = vcombine.low %v3146, %v3148
    %v3242 = vunpack.c.l.s4 1983009808
    %v3243 = vunpack.c.0.s8 %v3242
    %v3244 = vlaneseq
    %v3245 = vshrl.u32 %v3244, 7
    %v3246 = vsub.s32 %v3243, %v3245
    %v3247 = vrot.slane %v3239, %v3246
    %v3249 = vunpack.c.l.s4 1983009808
    %v3250 = vunpack.c.0.s8 %v3249
    %v3251 = vlaneseq
    %v3252 = vshrl.u32 %v3251, 7
    %v3253 = vsub.s32 %v3250, %v3252
    %v3254 = vrot.slane %v3240, %v3253
    %v3255 = vcombine.low %v3247, %v3254
    %v3257 = vadd.f32 %v3234, %v3255
    %v3258 = vld [vmem:[%s713] sm:$0xff]
    %v3263 = vcombine.low %v3187, %v3189
    %v3264 = vcombine.low %v3228, %v3230
    %v3266 = vunpack.c.l.s4 1983009808
    %v3267 = vunpack.c.0.s8 %v3266
    %v3268 = vlaneseq
    %v3269 = vshrl.u32 %v3268, 7
    %v3270 = vsub.s32 %v3267, %v3269
    %v3271 = vrot.slane %v3263, %v3270
    %v3273 = vunpack.c.l.s4 1983009808
    %v3274 = vunpack.c.0.s8 %v3273
    %v3275 = vlaneseq
    %v3276 = vshrl.u32 %v3275, 7
    %v3277 = vsub.s32 %v3274, %v3276
    %v3278 = vrot.slane %v3264, %v3277
    %v3279 = vcombine.high %v3271, %v3278
    %v3281 = vadd.f32 %v3258, %v3279
    %v3283 = vcombine.high %v3257, %v3257
    %v3285 = vunpack.c.l.s4 1983009808
    %v3286 = vunpack.c.0.s8 %v3285
    %v3287 = vlaneseq
    %v3288 = vshrl.u32 %v3287, 7
    %v3289 = vsub.s32 %v3286, %v3288
    %v3290 = vrot.slane %v3257, %v3289
    %v3292 = vunpack.c.l.s4 1983009808
    %v3293 = vunpack.c.0.s8 %v3292
    %v3294 = vlaneseq
    %v3295 = vshrl.u32 %v3294, 7
    %v3296 = vsub.s32 %v3293, %v3295
    %v3297 = vrot.slane %v3283, %v3296
    %v3298 = vcombine.high %v3290, %v3290
    %v3299 = vcombine.high %v3297, %v3297
    %v3305 = vcombine.low %v3281, %v3281
    %v3307 = vunpack.c.l.s4 1983009808
    %v3308 = vunpack.c.0.s8 %v3307
    %v3309 = vlaneseq
    %v3310 = vshrl.u32 %v3309, 7
    %v3311 = vsub.s32 %v3308, %v3310
    %v3312 = vrot.slane %v3305, %v3311
    %v3314 = vunpack.c.l.s4 1983009808
    %v3315 = vunpack.c.0.s8 %v3314
    %v3316 = vlaneseq
    %v3317 = vshrl.u32 %v3316, 7
    %v3318 = vsub.s32 %v3315, %v3317
    %v3319 = vrot.slane %v3281, %v3318
    %v3320 = vcombine.high %v3312, %v3312
    %v3321 = vcombine.high %v3319, %v3319
    %v3326 = vsel %vm1512, %v3290, %v3312
    %v3327 = vsel %vm1512, %v3298, %v3320
    %v3328 = vsel %vm1512, %v3297, %v3319
    %v3329 = vsel %vm1512, %v3299, %v3321
    %v3330 = vxor.u32 %v3326, 2147483648
    %v3331 = vmul.f32 %v3330, 1.442695
    %v3332 = vpow.pop %v3331
    %v3333 = vadd.f32 %v3332, 1.0
    %v3334 = vrcp.pop %v3333
    %v3335 = vmul.f32 1.0, %v3334
    %v3336 = vxor.u32 %v3327, 2147483648
    %v3337 = vmul.f32 %v3336, 1.442695
    %v3338 = vpow.pop %v3337
    %v3339 = vadd.f32 %v3338, 1.0
    %v3340 = vrcp.pop %v3339
    %v3341 = vmul.f32 1.0, %v3340
    %v3342 = vtanh.pop %v3328
    %v3343 = vxor.u32 %v3329, 2147483648
    %v3344 = vmul.f32 %v3343, 1.442695
    %v3345 = vpow.pop %v3344
    %v3346 = vadd.f32 %v3345, 1.0
    %v3347 = vrcp.pop %v3346
    %v3348 = vmul.f32 1.0, %v3347
    %v3349 = vmul.f32 %v3341, %v3068
    %v3350 = vmul.f32 %v3335, %v3342
    %v3351 = vadd.f32 %v3349, %v3350
    %v3352 = vtanh.pop %v3351
    %v3353 = vmul.f32 %v3348, %v3352
    %3354 = vst [vmem:[#allocation5] sm:$0xf] %v3351
    %3355 = vst [vmem:[#allocation4] sm:$0xf] %v3353
    %3356 = vst [vmem:[%s1857] sm:$0x3] %v3353
    %v3359 = vunpack.c.l.s4 1983009808
    %v3360 = vunpack.c.0.s8 %v3359
    %v3361 = vlaneseq
    %v3362 = vshrl.u32 %v3361, 7
    %v3363 = vsub.s32 %v3360, %v3362
    %v3364 = vrot.slane %v3353, %v3363
    %v3365 = vcombine.high %v3364, %v3364
    %3367 = vst [vmem:[%s1845 + $0x2] sm:$0x3] %v3365
    %v3368 = vld [vmem:[#allocation4] sm:$0xf]
    %v3369 = vld [vmem:[#allocation5] sm:$0xf]
    %v3370 = vpack.c.bf16 %v3368, %v3368
    %3371 = vmatprep.subr.bf16.mxu0 %v1185
    %3372 = vmatpush1.bf16.msra.mxu0 %v1184
    %3373 = vmatprep.subr.bf16.mxu0 %v1177
    %3374 = vmatpush1.bf16.msra.mxu0 %v1176
    %3375 = vmatprep.subr.bf16.mxu0 %v1169
    %3376 = vmatpush1.bf16.msra.mxu0 %v1168
    %3377 = vmatprep.subr.bf16.mxu0 %v1161
    %3378 = vmatpush1.bf16.msra.mxu0 %v1160
    %3379 = vmatprep.subr.bf16.mxu0 %v1153
    %3380 = vmatpush1.bf16.msra.mxu0 %v1152
    %3381 = vmatprep.subr.bf16.mxu0 %v1145
    %3382 = vmatpush1.bf16.msra.mxu0 %v1144
    %3383 = vmatprep.subr.bf16.mxu0 %v1137
    %3384 = vmatpush1.bf16.msra.mxu0 %v1136
    %3385 = vmatprep.subr.bf16.mxu0 %v1129
    %3386 = vmatpush1.bf16.msra.mxu0 %v1128
    %3387 = vmatprep.subr.bf16.mxu0 0
    %3388 = vmatpush2.bf16.msra.mxu0 0
    %3389 = vmatprep.subr.bf16.mxu0 0
    %3390 = vmatpush2.bf16.msra.mxu0 0
    %3391 = vmatprep.subr.bf16.mxu0 0
    %3392 = vmatpush2.bf16.msra.mxu0 0
    %3393 = vmatprep.subr.bf16.mxu0 0
    %3394 = vmatpush2.bf16.msra.mxu0 0
    %3395 = vmatprep.subr.bf16.mxu0 0
    %3396 = vmatpush2.bf16.msra.mxu0 0
    %3397 = vmatprep.subr.bf16.mxu0 0
    %3398 = vmatpush2.bf16.msra.mxu0 0
    %3399 = vmatprep.subr.bf16.mxu0 0
    %3400 = vmatpush2.bf16.msra.mxu0 0
    %3401 = vmatprep.subr.bf16.mxu0 0
    %3402 = vmatpush2.bf16.msra.mxu0 0
    %3403 = vmatprep.mubr.bf16.mxu0 0
    %3404 = vmatmul.mubr.bf16.gmra.mxu0 %v3370
    %v3405 = vpop.f32.mrf.mxu0
    %v3406 = vadd.f32 0.0, %v3405
    %v3407 = vpop.f32.mrf.mxu0
    %v3408 = vadd.f32 0.0, %v3407
    %v3409 = vpop.f32.mrf.mxu0
    %v3410 = vpop.f32.mrf.mxu0
    %3411 = vdwg.mxu0
    %3412 = vmatprep.subr.bf16.mxu0 %v1187
    %3413 = vmatpush1.bf16.msra.mxu0 %v1186
    %3414 = vmatprep.subr.bf16.mxu0 %v1179
    %3415 = vmatpush1.bf16.msra.mxu0 %v1178
    %3416 = vmatprep.subr.bf16.mxu0 %v1171
    %3417 = vmatpush1.bf16.msra.mxu0 %v1170
    %3418 = vmatprep.subr.bf16.mxu0 %v1163
    %3419 = vmatpush1.bf16.msra.mxu0 %v1162
    %3420 = vmatprep.subr.bf16.mxu0 %v1155
    %3421 = vmatpush1.bf16.msra.mxu0 %v1154
    %3422 = vmatprep.subr.bf16.mxu0 %v1147
    %3423 = vmatpush1.bf16.msra.mxu0 %v1146
    %3424 = vmatprep.subr.bf16.mxu0 %v1139
    %3425 = vmatpush1.bf16.msra.mxu0 %v1138
    %3426 = vmatprep.subr.bf16.mxu0 %v1131
    %3427 = vmatpush1.bf16.msra.mxu0 %v1130
    %3428 = vmatprep.subr.bf16.mxu0 0
    %3429 = vmatpush2.bf16.msra.mxu0 0
    %3430 = vmatprep.subr.bf16.mxu0 0
    %3431 = vmatpush2.bf16.msra.mxu0 0
    %3432 = vmatprep.subr.bf16.mxu0 0
    %3433 = vmatpush2.bf16.msra.mxu0 0
    %3434 = vmatprep.subr.bf16.mxu0 0
    %3435 = vmatpush2.bf16.msra.mxu0 0
    %3436 = vmatprep.subr.bf16.mxu0 0
    %3437 = vmatpush2.bf16.msra.mxu0 0
    %3438 = vmatprep.subr.bf16.mxu0 0
    %3439 = vmatpush2.bf16.msra.mxu0 0
    %3440 = vmatprep.subr.bf16.mxu0 0
    %3441 = vmatpush2.bf16.msra.mxu0 0
    %3442 = vmatprep.subr.bf16.mxu0 0
    %3443 = vmatpush2.bf16.msra.mxu0 0
    %3444 = vmatprep.mubr.bf16.mxu0 0
    %3445 = vmatmul.mubr.bf16.gmra.mxu0 %v3370
    %v3446 = vpop.f32.mrf.mxu0
    %v3447 = vadd.f32 0.0, %v3446
    %v3448 = vpop.f32.mrf.mxu0
    %v3449 = vadd.f32 0.0, %v3448
    %v3450 = vpop.f32.mrf.mxu0
    %v3451 = vpop.f32.mrf.mxu0
    %3452 = vdwg.mxu0
    %3453 = vmatprep.subr.bf16.mxu0 %v1189
    %3454 = vmatpush1.bf16.msra.mxu0 %v1188
    %3455 = vmatprep.subr.bf16.mxu0 %v1181
    %3456 = vmatpush1.bf16.msra.mxu0 %v1180
    %3457 = vmatprep.subr.bf16.mxu0 %v1173
    %3458 = vmatpush1.bf16.msra.mxu0 %v1172
    %3459 = vmatprep.subr.bf16.mxu0 %v1165
    %3460 = vmatpush1.bf16.msra.mxu0 %v1164
    %3461 = vmatprep.subr.bf16.mxu0 %v1157
    %3462 = vmatpush1.bf16.msra.mxu0 %v1156
    %3463 = vmatprep.subr.bf16.mxu0 %v1149
    %3464 = vmatpush1.bf16.msra.mxu0 %v1148
    %3465 = vmatprep.subr.bf16.mxu0 %v1141
    %3466 = vmatpush1.bf16.msra.mxu0 %v1140
    %3467 = vmatprep.subr.bf16.mxu0 %v1133
    %3468 = vmatpush1.bf16.msra.mxu0 %v1132
    %3469 = vmatprep.subr.bf16.mxu0 0
    %3470 = vmatpush2.bf16.msra.mxu0 0
    %3471 = vmatprep.subr.bf16.mxu0 0
    %3472 = vmatpush2.bf16.msra.mxu0 0
    %3473 = vmatprep.subr.bf16.mxu0 0
    %3474 = vmatpush2.bf16.msra.mxu0 0
    %3475 = vmatprep.subr.bf16.mxu0 0
    %3476 = vmatpush2.bf16.msra.mxu0 0
    %3477 = vmatprep.subr.bf16.mxu0 0
    %3478 = vmatpush2.bf16.msra.mxu0 0
    %3479 = vmatprep.subr.bf16.mxu0 0
    %3480 = vmatpush2.bf16.msra.mxu0 0
    %3481 = vmatprep.subr.bf16.mxu0 0
    %3482 = vmatpush2.bf16.msra.mxu0 0
    %3483 = vmatprep.subr.bf16.mxu0 0
    %3484 = vmatpush2.bf16.msra.mxu0 0
    %3485 = vmatprep.mubr.bf16.mxu0 0
    %3486 = vmatmul.mubr.bf16.gmra.mxu0 %v3370
    %v3487 = vpop.f32.mrf.mxu0
    %v3488 = vadd.f32 0.0, %v3487
    %v3489 = vpop.f32.mrf.mxu0
    %v3490 = vadd.f32 0.0, %v3489
    %v3491 = vpop.f32.mrf.mxu0
    %v3492 = vpop.f32.mrf.mxu0
    %3493 = vdwg.mxu0
    %3494 = vmatprep.subr.bf16.mxu0 %v1191
    %3495 = vmatpush1.bf16.msra.mxu0 %v1190
    %3496 = vmatprep.subr.bf16.mxu0 %v1183
    %3497 = vmatpush1.bf16.msra.mxu0 %v1182
    %3498 = vmatprep.subr.bf16.mxu0 %v1175
    %3499 = vmatpush1.bf16.msra.mxu0 %v1174
    %3500 = vmatprep.subr.bf16.mxu0 %v1167
    %3501 = vmatpush1.bf16.msra.mxu0 %v1166
    %3502 = vmatprep.subr.bf16.mxu0 %v1159
    %3503 = vmatpush1.bf16.msra.mxu0 %v1158
    %3504 = vmatprep.subr.bf16.mxu0 %v1151
    %3505 = vmatpush1.bf16.msra.mxu0 %v1150
    %3506 = vmatprep.subr.bf16.mxu0 %v1143
    %3507 = vmatpush1.bf16.msra.mxu0 %v1142
    %3508 = vmatprep.subr.bf16.mxu0 %v1135
    %3509 = vmatpush1.bf16.msra.mxu0 %v1134
    %3510 = vmatprep.subr.bf16.mxu0 0
    %3511 = vmatpush2.bf16.msra.mxu0 0
    %3512 = vmatprep.subr.bf16.mxu0 0
    %3513 = vmatpush2.bf16.msra.mxu0 0
    %3514 = vmatprep.subr.bf16.mxu0 0
    %3515 = vmatpush2.bf16.msra.mxu0 0
    %3516 = vmatprep.subr.bf16.mxu0 0
    %3517 = vmatpush2.bf16.msra.mxu0 0
    %3518 = vmatprep.subr.bf16.mxu0 0
    %3519 = vmatpush2.bf16.msra.mxu0 0
    %3520 = vmatprep.subr.bf16.mxu0 0
    %3521 = vmatpush2.bf16.msra.mxu0 0
    %3522 = vmatprep.subr.bf16.mxu0 0
    %3523 = vmatpush2.bf16.msra.mxu0 0
    %3524 = vmatprep.subr.bf16.mxu0 0
    %3525 = vmatpush2.bf16.msra.mxu0 0
    %3526 = vmatprep.mubr.bf16.mxu0 0
    %3527 = vmatmul.mubr.bf16.gmra.mxu0 %v3370
    %v3528 = vpop.f32.mrf.mxu0
    %v3529 = vadd.f32 0.0, %v3528
    %v3530 = vpop.f32.mrf.mxu0
    %v3531 = vadd.f32 0.0, %v3530
    %v3532 = vpop.f32.mrf.mxu0
    %v3533 = vpop.f32.mrf.mxu0
    %3534 = vdwg.mxu0
    %v3535 = vld [vmem:[%s861] sm:$0xff]
    %v3540 = vcombine.low %v3406, %v3408
    %v3541 = vcombine.low %v3447, %v3449
    %v3543 = vunpack.c.l.s4 1983009808
    %v3544 = vunpack.c.0.s8 %v3543
    %v3545 = vlaneseq
    %v3546 = vshrl.u32 %v3545, 7
    %v3547 = vsub.s32 %v3544, %v3546
    %v3548 = vrot.slane %v3540, %v3547
    %v3550 = vunpack.c.l.s4 1983009808
    %v3551 = vunpack.c.0.s8 %v3550
    %v3552 = vlaneseq
    %v3553 = vshrl.u32 %v3552, 7
    %v3554 = vsub.s32 %v3551, %v3553
    %v3555 = vrot.slane %v3541, %v3554
    %v3556 = vcombine.low %v3548, %v3555
    %v3558 = vadd.f32 %v3535, %v3556
    %v3559 = vld [vmem:[#allocation3] sm:$0xff]
    %v3564 = vcombine.low %v3488, %v3490
    %v3565 = vcombine.low %v3529, %v3531
    %v3567 = vunpack.c.l.s4 1983009808
    %v3568 = vunpack.c.0.s8 %v3567
    %v3569 = vlaneseq
    %v3570 = vshrl.u32 %v3569, 7
    %v3571 = vsub.s32 %v3568, %v3570
    %v3572 = vrot.slane %v3564, %v3571
    %v3574 = vunpack.c.l.s4 1983009808
    %v3575 = vunpack.c.0.s8 %v3574
    %v3576 = vlaneseq
    %v3577 = vshrl.u32 %v3576, 7
    %v3578 = vsub.s32 %v3575, %v3577
    %v3579 = vrot.slane %v3565, %v3578
    %v3580 = vcombine.high %v3572, %v3579
    %v3582 = vadd.f32 %v3559, %v3580
    %v3584 = vcombine.high %v3558, %v3558
    %v3586 = vunpack.c.l.s4 1983009808
    %v3587 = vunpack.c.0.s8 %v3586
    %v3588 = vlaneseq
    %v3589 = vshrl.u32 %v3588, 7
    %v3590 = vsub.s32 %v3587, %v3589
    %v3591 = vrot.slane %v3558, %v3590
    %v3593 = vunpack.c.l.s4 1983009808
    %v3594 = vunpack.c.0.s8 %v3593
    %v3595 = vlaneseq
    %v3596 = vshrl.u32 %v3595, 7
    %v3597 = vsub.s32 %v3594, %v3596
    %v3598 = vrot.slane %v3584, %v3597
    %v3599 = vcombine.high %v3591, %v3591
    %v3600 = vcombine.high %v3598, %v3598
    %v3606 = vcombine.low %v3582, %v3582
    %v3608 = vunpack.c.l.s4 1983009808
    %v3609 = vunpack.c.0.s8 %v3608
    %v3610 = vlaneseq
    %v3611 = vshrl.u32 %v3610, 7
    %v3612 = vsub.s32 %v3609, %v3611
    %v3613 = vrot.slane %v3606, %v3612
    %v3615 = vunpack.c.l.s4 1983009808
    %v3616 = vunpack.c.0.s8 %v3615
    %v3617 = vlaneseq
    %v3618 = vshrl.u32 %v3617, 7
    %v3619 = vsub.s32 %v3616, %v3618
    %v3620 = vrot.slane %v3582, %v3619
    %v3621 = vcombine.high %v3613, %v3613
    %v3622 = vcombine.high %v3620, %v3620
    %v3627 = vsel %vm1512, %v3591, %v3613
    %v3628 = vsel %vm1512, %v3599, %v3621
    %v3629 = vsel %vm1512, %v3598, %v3620
    %v3630 = vsel %vm1512, %v3600, %v3622
    %v3631 = vxor.u32 %v3627, 2147483648
    %v3632 = vmul.f32 %v3631, 1.442695
    %v3633 = vpow.pop %v3632
    %v3634 = vadd.f32 %v3633, 1.0
    %v3635 = vrcp.pop %v3634
    %v3636 = vmul.f32 1.0, %v3635
    %v3637 = vxor.u32 %v3628, 2147483648
    %v3638 = vmul.f32 %v3637, 1.442695
    %v3639 = vpow.pop %v3638
    %v3640 = vadd.f32 %v3639, 1.0
    %v3641 = vrcp.pop %v3640
    %v3642 = vmul.f32 1.0, %v3641
    %v3643 = vtanh.pop %v3629
    %v3644 = vxor.u32 %v3630, 2147483648
    %v3645 = vmul.f32 %v3644, 1.442695
    %v3646 = vpow.pop %v3645
    %v3647 = vadd.f32 %v3646, 1.0
    %v3648 = vrcp.pop %v3647
    %v3649 = vmul.f32 1.0, %v3648
    %v3650 = vmul.f32 %v3642, %v3369
    %v3651 = vmul.f32 %v3636, %v3643
    %v3652 = vadd.f32 %v3650, %v3651
    %v3653 = vtanh.pop %v3652
    %v3654 = vmul.f32 %v3649, %v3653
    %3655 = vst [vmem:[#allocation5] sm:$0xf] %v3652
    %3656 = vst [vmem:[#allocation4] sm:$0xf] %v3654
    %3657 = vst [vmem:[%s1554] sm:$0x3] %v3654
    %v3660 = vunpack.c.l.s4 1983009808
    %v3661 = vunpack.c.0.s8 %v3660
    %v3662 = vlaneseq
    %v3663 = vshrl.u32 %v3662, 7
    %v3664 = vsub.s32 %v3661, %v3663
    %v3665 = vrot.slane %v3654, %v3664
    %v3666 = vcombine.high %v3665, %v3665
    %3668 = vst [vmem:[%s4 + $0x2] sm:$0x3] %v3666
    %v3669 = vld [vmem:[#allocation4] sm:$0xf]
    %v3670 = vld [vmem:[#allocation5] sm:$0xf]
    %v3672 = vrot.slane %v3669, 2
    %v3673 = vcombine.low %v3669, %v3672
    %v3675 = vunpack.c.l.s4 1983009808
    %v3676 = vunpack.c.0.s8 %v3675
    %v3677 = vlaneseq
    %v3678 = vshrl.u32 %v3677, 7
    %v3679 = vsub.s32 %v3676, %v3678
    %v3680 = vrot.slane %v3673, %v3679
    %3682 = vst [vmem:[%s5] sm:$0xf] %v3680
    %v3684 = vrot.slane %v3670, 2
    %v3685 = vcombine.low %v3670, %v3684
    %v3687 = vunpack.c.l.s4 1983009808
    %v3688 = vunpack.c.0.s8 %v3687
    %v3689 = vlaneseq
    %v3690 = vshrl.u32 %v3689, 7
    %v3691 = vsub.s32 %v3688, %v3690
    %v3692 = vrot.slane %v3685, %v3691
    %3694 = vst [vmem:[%s6] sm:$0xf] %v3692
    // Predicated region
    $region30: #{attn_encoder_forward.3} parent=1 // pred_check
      _
    $region31: #{attn_encoder_forward.3} parent=1 // pred_check_branch
      %3696 = sbr.rel (0) target = $region33
    $region32: #{attn_encoder_forward.3} parent=1 // pred_region
      _
    $region33: #{attn_encoder_forward.3} parent=1 // pred_fallthru
      _
    // Predicated region
    $region34: #{attn_encoder_forward.3} parent=1 // pred_check
      _
    $region35: #{attn_encoder_forward.3} parent=1 // pred_check_branch
      %3698 = sbr.rel (0) target = $region37
    $region36: #{attn_encoder_forward.3} parent=1 // pred_region
      _
    $region37: #{attn_encoder_forward.3} parent=1 // pred_fallthru
      _
    // Predicated region
    $region38: #{attn_encoder_forward.3} parent=1 // pred_check
      _
    $region39: #{attn_encoder_forward.3} parent=1 // pred_check_branch
      %3700 = sbr.rel (0) target = $region41
    $region40: #{attn_encoder_forward.3} parent=1 // pred_region
      _
    $region41: #{attn_encoder_forward.3} parent=1 // pred_fallthru
      _
    // Predicated region
    $region42: #{attn_encoder_forward.3} parent=1 // pred_check
      _
    $region43: #{attn_encoder_forward.3} parent=1 // pred_check_branch
      %3702 = sbr.rel (0) target = $region45
    $region44: #{attn_encoder_forward.3} parent=1 // pred_region
      _
    $region45: #{attn_encoder_forward.3} parent=1 // pred_fallthru
      _
    // Predicated region
    $region46: #{attn_encoder_forward.3} parent=1 // pred_check
      _
    $region47: #{attn_encoder_forward.3} parent=1 // pred_check_branch
      %3704 = sbr.rel (0) target = $region49
    $region48: #{attn_encoder_forward.3} parent=1 // pred_region
      _
    $region49: #{attn_encoder_forward.3} parent=1 // pred_fallthru
      _
    // Predicated region
    $region50: #{attn_encoder_forward.3} parent=1 // pred_check
      _
    $region51: #{attn_encoder_forward.3} parent=1 // pred_check_branch
      %3706 = sbr.rel (0) target = $region53
    $region52: #{attn_encoder_forward.3} parent=1 // pred_region
      _
    $region53: #{attn_encoder_forward.3} parent=1 // pred_fallthru
      _
    %3707 = vsyncpa [#allocation7], 1
    %3708 = vsyncpa [#allocation9], 1

// kernel: attn_encoder_forward.4
$region0: #{attn_encoder_forward.4}
  #allocation0 [shape = 'u32[]', space=smem, size = 0x4, offset = 0x4, fixed_abs, tag = 'smem constant byte address 0x4 - core index']
  #allocation1 [shape = 'u32[144,128]{1,0:T(1,128)}', space=vmem, size = 0x12000, scoped, tag = 'internal scratch']
  #allocation2 [shape = 'f32[8,2,512]{2,1,0:T(2,128)}', space=vmem, size = 0x8000, scoped, tag = 'scratch operand']
  #allocation3 [shape = 'f32[8,2,512]{2,1,0:T(2,128)}', space=vmem, size = 0x8000, scoped, tag = 'scratch operand']
  #allocation4 [shape = 'f32[4,128]{1,0:T(4,128)}', space=vmem, size = 0x800, scoped, tag = 'scratch operand']
  #allocation5 [shape = 'f32[4,128]{1,0:T(4,128)}', space=vmem, size = 0x800, scoped, tag = 'scratch operand']
  %s0 = inlined_call_operand.vmem [shape: f32[16,256], index: 0, kind: input, shape index: {}]
  %s1 = inlined_call_operand.vmem [shape: bf16[256,1024], index: 1, kind: input, shape index: {}]
  %s2 = inlined_call_operand.hbm [shape: bf16[128,1024], index: 2, kind: input, shape index: {}]
  %s3 = inlined_call_operand.vmem [shape: f32[1,1024], index: 3, kind: input, shape index: {}]
  %s4 = inlined_call_operand.hbm [shape: f32[8,2,256], index: 4, kind: output, shape index: {0}]
  %s5 = inlined_call_operand.vmem [shape: f32[2,256], index: 5, kind: output, shape index: {1}]
  %s6 = inlined_call_operand.vmem [shape: f32[2,256], index: 6, kind: output, shape index: {2}]
  %7 = xla_tuple %s4, %s5, %s6
  %s8 = sld [smem:[#allocation0]]
  $region46: #{attn_encoder_forward.4} parent=0
    _
  %s10 = ssub.s32 1, %s8
  %s11 = scalar_select 0, %s10, %s8
  $region1: #{attn_encoder_forward.4} parent=0
    #allocation6 [shape = 'u8[262144]{0}', space=vmem, size = 0x40000, scoped, tag = 'input window, operand 2, single buffered']
    #allocation7 [shape = 's32[1]{0}', space=sflag, size = 0x4, scoped, tag = 'scoped memory for attn_encoder_forward.4']
    #allocation8 [shape = 's32[1]{0}', space=sflag, size = 0x4, scoped, tag = 'scoped memory for attn_encoder_forward.4']
    #allocation9 [shape = 'u8[16384]{0}', space=vmem, size = 0x4000, scoped, tag = 'output window, operand 0, single buffered']
    %12 = vsyncpa [#allocation7], 0
    %13 = vsyncpa [#allocation8], 0
    // Predicated region
    $region2: #{attn_encoder_forward.4} parent=1 // pred_check
      _
    $region3: #{attn_encoder_forward.4} parent=1 // pred_check_branch
      %15 = sbr.rel (0) target = $region5
    $region4: #{attn_encoder_forward.4} parent=1 // pred_region
      _
    $region5: #{attn_encoder_forward.4} parent=1 // pred_fallthru
      _
    // Predicated region
    $region6: #{attn_encoder_forward.4} parent=1 // pred_check
      _
    $region7: #{attn_encoder_forward.4} parent=1 // pred_check_branch
      %17 = sbr.rel (0) target = $region9
    $region8: #{attn_encoder_forward.4} parent=1 // pred_region
      _
    $region9: #{attn_encoder_forward.4} parent=1 // pred_fallthru
      _
    // Predicated region
    $region10: #{attn_encoder_forward.4} parent=1 // pred_check
      _
    $region11: #{attn_encoder_forward.4} parent=1 // pred_check_branch
      %19 = sbr.rel (0) target = $region13
    $region12: #{attn_encoder_forward.4} parent=1 // pred_region
      %s21 = ssub.s32 8192, 8192
      %22 = vsyncadd [#allocation7], %s21
      %s23 = sshll.u32 [#allocation6], 4
      %s24 = int_to_ptr.vmem [resolvable:$true] %s23
      %29 = dma.hbm_to_vmem [thread:$0]  %s2, 8192, %s24, [#allocation7], 512, 512, 32
    $region13: #{attn_encoder_forward.4} parent=1 // pred_fallthru
      _
    // Predicated region
    $region14: #{attn_encoder_forward.4} parent=1 // pred_check
      _
    $region15: #{attn_encoder_forward.4} parent=1 // pred_check_branch
      %31 = sbr.rel (0) target = $region17
    $region16: #{attn_encoder_forward.4} parent=1 // pred_region
      _
    $region17: #{attn_encoder_forward.4} parent=1 // pred_fallthru
      _
    // Predicated region
    $region18: #{attn_encoder_forward.4} parent=1 // pred_check
      _
    $region19: #{attn_encoder_forward.4} parent=1 // pred_check_branch
      %33 = sbr.rel (0) target = $region21
    $region20: #{attn_encoder_forward.4} parent=1 // pred_region
      %34 = dma.done [#allocation7], 8192
    $region21: #{attn_encoder_forward.4} parent=1 // pred_fallthru
      _
    %v36 = vld [vmem:[%s0] sm:$0xff]
    %v37 = vld [vmem:[%s0 + $0x8] sm:$0xff]
    %v38 = vld [vmem:[%s0 + $0x10] sm:$0xff]
    %v39 = vld [vmem:[%s0 + $0x18] sm:$0xff]
    %v40 = vpack.c.bf16 %v38, %v36
    %v41 = vpack.c.bf16 %v39, %v37
    %v42 = vld [vmem:[%s1] sm:$0xff]
    %v43 = vld [vmem:[%s1 + $0x8] sm:$0xff]
    %v44 = vld [vmem:[%s1 + $0x10] sm:$0xff]
    %v45 = vld [vmem:[%s1 + $0x18] sm:$0xff]
    %v46 = vld [vmem:[%s1 + $0x20] sm:$0xff]
    %v47 = vld [vmem:[%s1 + $0x28] sm:$0xff]
    %v48 = vld [vmem:[%s1 + $0x30] sm:$0xff]
    %v49 = vld [vmem:[%s1 + $0x38] sm:$0xff]
    %v50 = vld [vmem:[%s1 + $0x40] sm:$0xff]
    %v51 = vld [vmem:[%s1 + $0x48] sm:$0xff]
    %v52 = vld [vmem:[%s1 + $0x50] sm:$0xff]
    %v53 = vld [vmem:[%s1 + $0x58] sm:$0xff]
    %v54 = vld [vmem:[%s1 + $0x60] sm:$0xff]
    %v55 = vld [vmem:[%s1 + $0x68] sm:$0xff]
    %v56 = vld [vmem:[%s1 + $0x70] sm:$0xff]
    %v57 = vld [vmem:[%s1 + $0x78] sm:$0xff]
    %v58 = vld [vmem:[%s1 + $0x80] sm:$0xff]
    %v59 = vld [vmem:[%s1 + $0x88] sm:$0xff]
    %v60 = vld [vmem:[%s1 + $0x90] sm:$0xff]
    %v61 = vld [vmem:[%s1 + $0x98] sm:$0xff]
    %v62 = vld [vmem:[%s1 + $0xa0] sm:$0xff]
    %v63 = vld [vmem:[%s1 + $0xa8] sm:$0xff]
    %v64 = vld [vmem:[%s1 + $0xb0] sm:$0xff]
    %v65 = vld [vmem:[%s1 + $0xb8] sm:$0xff]
    %v66 = vld [vmem:[%s1 + $0xc0] sm:$0xff]
    %v67 = vld [vmem:[%s1 + $0xc8] sm:$0xff]
    %v68 = vld [vmem:[%s1 + $0xd0] sm:$0xff]
    %v69 = vld [vmem:[%s1 + $0xd8] sm:$0xff]
    %v70 = vld [vmem:[%s1 + $0xe0] sm:$0xff]
    %v71 = vld [vmem:[%s1 + $0xe8] sm:$0xff]
    %v72 = vld [vmem:[%s1 + $0xf0] sm:$0xff]
    %v73 = vld [vmem:[%s1 + $0xf8] sm:$0xff]
    %v74 = vld [vmem:[%s1 + $0x100] sm:$0xff]
    %v75 = vld [vmem:[%s1 + $0x108] sm:$0xff]
    %v76 = vld [vmem:[%s1 + $0x110] sm:$0xff]
    %v77 = vld [vmem:[%s1 + $0x118] sm:$0xff]
    %v78 = vld [vmem:[%s1 + $0x120] sm:$0xff]
    %v79 = vld [vmem:[%s1 + $0x128] sm:$0xff]
    %v80 = vld [vmem:[%s1 + $0x130] sm:$0xff]
    %v81 = vld [vmem:[%s1 + $0x138] sm:$0xff]
    %v82 = vld [vmem:[%s1 + $0x140] sm:$0xff]
    %v83 = vld [vmem:[%s1 + $0x148] sm:$0xff]
    %v84 = vld [vmem:[%s1 + $0x150] sm:$0xff]
    %v85 = vld [vmem:[%s1 + $0x158] sm:$0xff]
    %v86 = vld [vmem:[%s1 + $0x160] sm:$0xff]
    %v87 = vld [vmem:[%s1 + $0x168] sm:$0xff]
    %v88 = vld [vmem:[%s1 + $0x170] sm:$0xff]
    %v89 = vld [vmem:[%s1 + $0x178] sm:$0xff]
    %v90 = vld [vmem:[%s1 + $0x180] sm:$0xff]
    %v91 = vld [vmem:[%s1 + $0x188] sm:$0xff]
    %v92 = vld [vmem:[%s1 + $0x190] sm:$0xff]
    %v93 = vld [vmem:[%s1 + $0x198] sm:$0xff]
    %v94 = vld [vmem:[%s1 + $0x1a0] sm:$0xff]
    %v95 = vld [vmem:[%s1 + $0x1a8] sm:$0xff]
    %v96 = vld [vmem:[%s1 + $0x1b0] sm:$0xff]
    %v97 = vld [vmem:[%s1 + $0x1b8] sm:$0xff]
    %v98 = vld [vmem:[%s1 + $0x1c0] sm:$0xff]
    %v99 = vld [vmem:[%s1 + $0x1c8] sm:$0xff]
    %v100 = vld [vmem:[%s1 + $0x1d0] sm:$0xff]
    %v101 = vld [vmem:[%s1 + $0x1d8] sm:$0xff]
    %v102 = vld [vmem:[%s1 + $0x1e0] sm:$0xff]
    %v103 = vld [vmem:[%s1 + $0x1e8] sm:$0xff]
    %v104 = vld [vmem:[%s1 + $0x1f0] sm:$0xff]
    %v105 = vld [vmem:[%s1 + $0x1f8] sm:$0xff]
    %v106 = vld [vmem:[%s1 + $0x200] sm:$0xff]
    %v107 = vld [vmem:[%s1 + $0x208] sm:$0xff]
    %v108 = vld [vmem:[%s1 + $0x210] sm:$0xff]
    %v109 = vld [vmem:[%s1 + $0x218] sm:$0xff]
    %v110 = vld [vmem:[%s1 + $0x220] sm:$0xff]
    %v111 = vld [vmem:[%s1 + $0x228] sm:$0xff]
    %v112 = vld [vmem:[%s1 + $0x230] sm:$0xff]
    %v113 = vld [vmem:[%s1 + $0x238] sm:$0xff]
    %v114 = vld [vmem:[%s1 + $0x240] sm:$0xff]
    %v115 = vld [vmem:[%s1 + $0x248] sm:$0xff]
    %v116 = vld [vmem:[%s1 + $0x250] sm:$0xff]
    %v117 = vld [vmem:[%s1 + $0x258] sm:$0xff]
    %v118 = vld [vmem:[%s1 + $0x260] sm:$0xff]
    %v119 = vld [vmem:[%s1 + $0x268] sm:$0xff]
    %v120 = vld [vmem:[%s1 + $0x270] sm:$0xff]
    %v121 = vld [vmem:[%s1 + $0x278] sm:$0xff]
    %v122 = vld [vmem:[%s1 + $0x280] sm:$0xff]
    %v123 = vld [vmem:[%s1 + $0x288] sm:$0xff]
    %v124 = vld [vmem:[%s1 + $0x290] sm:$0xff]
    %v125 = vld [vmem:[%s1 + $0x298] sm:$0xff]
    %v126 = vld [vmem:[%s1 + $0x2a0] sm:$0xff]
    %v127 = vld [vmem:[%s1 + $0x2a8] sm:$0xff]
    %v128 = vld [vmem:[%s1 + $0x2b0] sm:$0xff]
    %v129 = vld [vmem:[%s1 + $0x2b8] sm:$0xff]
    %v130 = vld [vmem:[%s1 + $0x2c0] sm:$0xff]
    %v131 = vld [vmem:[%s1 + $0x2c8] sm:$0xff]
    %v132 = vld [vmem:[%s1 + $0x2d0] sm:$0xff]
    %v133 = vld [vmem:[%s1 + $0x2d8] sm:$0xff]
    %v134 = vld [vmem:[%s1 + $0x2e0] sm:$0xff]
    %v135 = vld [vmem:[%s1 + $0x2e8] sm:$0xff]
    %v136 = vld [vmem:[%s1 + $0x2f0] sm:$0xff]
    %v137 = vld [vmem:[%s1 + $0x2f8] sm:$0xff]
    %v138 = vld [vmem:[%s1 + $0x300] sm:$0xff]
    %v139 = vld [vmem:[%s1 + $0x308] sm:$0xff]
    %v140 = vld [vmem:[%s1 + $0x310] sm:$0xff]
    %v141 = vld [vmem:[%s1 + $0x318] sm:$0xff]
    %v142 = vld [vmem:[%s1 + $0x320] sm:$0xff]
    %v143 = vld [vmem:[%s1 + $0x328] sm:$0xff]
    %v144 = vld [vmem:[%s1 + $0x330] sm:$0xff]
    %v145 = vld [vmem:[%s1 + $0x338] sm:$0xff]
    %v146 = vld [vmem:[%s1 + $0x340] sm:$0xff]
    %v147 = vld [vmem:[%s1 + $0x348] sm:$0xff]
    %v148 = vld [vmem:[%s1 + $0x350] sm:$0xff]
    %v149 = vld [vmem:[%s1 + $0x358] sm:$0xff]
    %v150 = vld [vmem:[%s1 + $0x360] sm:$0xff]
    %v151 = vld [vmem:[%s1 + $0x368] sm:$0xff]
    %v152 = vld [vmem:[%s1 + $0x370] sm:$0xff]
    %v153 = vld [vmem:[%s1 + $0x378] sm:$0xff]
    %v154 = vld [vmem:[%s1 + $0x380] sm:$0xff]
    %v155 = vld [vmem:[%s1 + $0x388] sm:$0xff]
    %v156 = vld [vmem:[%s1 + $0x390] sm:$0xff]
    %v157 = vld [vmem:[%s1 + $0x398] sm:$0xff]
    %v158 = vld [vmem:[%s1 + $0x3a0] sm:$0xff]
    %v159 = vld [vmem:[%s1 + $0x3a8] sm:$0xff]
    %v160 = vld [vmem:[%s1 + $0x3b0] sm:$0xff]
    %v161 = vld [vmem:[%s1 + $0x3b8] sm:$0xff]
    %v162 = vld [vmem:[%s1 + $0x3c0] sm:$0xff]
    %v163 = vld [vmem:[%s1 + $0x3c8] sm:$0xff]
    %v164 = vld [vmem:[%s1 + $0x3d0] sm:$0xff]
    %v165 = vld [vmem:[%s1 + $0x3d8] sm:$0xff]
    %v166 = vld [vmem:[%s1 + $0x3e0] sm:$0xff]
    %v167 = vld [vmem:[%s1 + $0x3e8] sm:$0xff]
    %v168 = vld [vmem:[%s1 + $0x3f0] sm:$0xff]
    %v169 = vld [vmem:[%s1 + $0x3f8] sm:$0xff]
    %v170 = vld [vmem:[%s3] sm:$0xff]
    %v172 = vlaneseq
    %v173 = vshrl.u32 %v172, 7
    %v174 = vsub.s32 0, %v173
    %v175 = vrot.slane %v170, %v174
    %v176 = vlaneseq
    %v177 = vshrl.u32 %v176, 7
    %v178 = vsub.s32 1, %v177
    %v179 = vrot.slane %v170, %v178
    %v180 = vlaneseq
    %v181 = vshrl.u32 %v180, 7
    %v182 = vsub.s32 2, %v181
    %v183 = vrot.slane %v170, %v182
    %v184 = vlaneseq
    %v185 = vshrl.u32 %v184, 7
    %v186 = vsub.s32 3, %v185
    %v187 = vrot.slane %v170, %v186
    %v188 = vlaneseq
    %v189 = vshrl.u32 %v188, 7
    %v190 = vsub.s32 4, %v189
    %v191 = vrot.slane %v170, %v190
    %v192 = vlaneseq
    %v193 = vshrl.u32 %v192, 7
    %v194 = vsub.s32 5, %v193
    %v195 = vrot.slane %v170, %v194
    %v196 = vlaneseq
    %v197 = vshrl.u32 %v196, 7
    %v198 = vsub.s32 6, %v197
    %v199 = vrot.slane %v170, %v198
    %v200 = vlaneseq
    %v201 = vshrl.u32 %v200, 7
    %v202 = vsub.s32 7, %v201
    %v203 = vrot.slane %v170, %v202
    %v340 = vunpack.c.l.b16 %v42
    %v341 = vunpack.c.h.b16 %v42
    %v342 = vunpack.c.l.b16 %v43
    %v343 = vunpack.c.h.b16 %v43
    %v344 = vunpack.c.l.b16 %v44
    %v345 = vunpack.c.h.b16 %v44
    %v346 = vunpack.c.l.b16 %v45
    %v347 = vunpack.c.h.b16 %v45
    %v348 = vunpack.c.l.b16 %v46
    %v349 = vunpack.c.h.b16 %v46
    %v350 = vunpack.c.l.b16 %v47
    %v351 = vunpack.c.h.b16 %v47
    %v352 = vunpack.c.l.b16 %v48
    %v353 = vunpack.c.h.b16 %v48
    %v354 = vunpack.c.l.b16 %v49
    %v355 = vunpack.c.h.b16 %v49
    %v356 = vunpack.c.l.b16 %v50
    %v357 = vunpack.c.h.b16 %v50
    %v358 = vunpack.c.l.b16 %v51
    %v359 = vunpack.c.h.b16 %v51
    %v360 = vunpack.c.l.b16 %v52
    %v361 = vunpack.c.h.b16 %v52
    %v362 = vunpack.c.l.b16 %v53
    %v363 = vunpack.c.h.b16 %v53
    %v364 = vunpack.c.l.b16 %v54
    %v365 = vunpack.c.h.b16 %v54
    %v366 = vunpack.c.l.b16 %v55
    %v367 = vunpack.c.h.b16 %v55
    %v368 = vunpack.c.l.b16 %v56
    %v369 = vunpack.c.h.b16 %v56
    %v370 = vunpack.c.l.b16 %v57
    %v371 = vunpack.c.h.b16 %v57
    %v372 = vunpack.c.l.b16 %v58
    %v373 = vunpack.c.h.b16 %v58
    %v374 = vunpack.c.l.b16 %v59
    %v375 = vunpack.c.h.b16 %v59
    %v376 = vunpack.c.l.b16 %v60
    %v377 = vunpack.c.h.b16 %v60
    %v378 = vunpack.c.l.b16 %v61
    %v379 = vunpack.c.h.b16 %v61
    %v380 = vunpack.c.l.b16 %v62
    %v381 = vunpack.c.h.b16 %v62
    %v382 = vunpack.c.l.b16 %v63
    %v383 = vunpack.c.h.b16 %v63
    %v384 = vunpack.c.l.b16 %v64
    %v385 = vunpack.c.h.b16 %v64
    %v386 = vunpack.c.l.b16 %v65
    %v387 = vunpack.c.h.b16 %v65
    %v388 = vunpack.c.l.b16 %v66
    %v389 = vunpack.c.h.b16 %v66
    %v390 = vunpack.c.l.b16 %v67
    %v391 = vunpack.c.h.b16 %v67
    %v392 = vunpack.c.l.b16 %v68
    %v393 = vunpack.c.h.b16 %v68
    %v394 = vunpack.c.l.b16 %v69
    %v395 = vunpack.c.h.b16 %v69
    %v396 = vunpack.c.l.b16 %v70
    %v397 = vunpack.c.h.b16 %v70
    %v398 = vunpack.c.l.b16 %v71
    %v399 = vunpack.c.h.b16 %v71
    %v400 = vunpack.c.l.b16 %v72
    %v401 = vunpack.c.h.b16 %v72
    %v402 = vunpack.c.l.b16 %v73
    %v403 = vunpack.c.h.b16 %v73
    %v404 = vunpack.c.l.b16 %v74
    %v405 = vunpack.c.h.b16 %v74
    %v406 = vunpack.c.l.b16 %v75
    %v407 = vunpack.c.h.b16 %v75
    %v408 = vunpack.c.l.b16 %v76
    %v409 = vunpack.c.h.b16 %v76
    %v410 = vunpack.c.l.b16 %v77
    %v411 = vunpack.c.h.b16 %v77
    %v412 = vunpack.c.l.b16 %v78
    %v413 = vunpack.c.h.b16 %v78
    %v414 = vunpack.c.l.b16 %v79
    %v415 = vunpack.c.h.b16 %v79
    %v416 = vunpack.c.l.b16 %v80
    %v417 = vunpack.c.h.b16 %v80
    %v418 = vunpack.c.l.b16 %v81
    %v419 = vunpack.c.h.b16 %v81
    %v420 = vunpack.c.l.b16 %v82
    %v421 = vunpack.c.h.b16 %v82
    %v422 = vunpack.c.l.b16 %v83
    %v423 = vunpack.c.h.b16 %v83
    %v424 = vunpack.c.l.b16 %v84
    %v425 = vunpack.c.h.b16 %v84
    %v426 = vunpack.c.l.b16 %v85
    %v427 = vunpack.c.h.b16 %v85
    %v428 = vunpack.c.l.b16 %v86
    %v429 = vunpack.c.h.b16 %v86
    %v430 = vunpack.c.l.b16 %v87
    %v431 = vunpack.c.h.b16 %v87
    %v432 = vunpack.c.l.b16 %v88
    %v433 = vunpack.c.h.b16 %v88
    %v434 = vunpack.c.l.b16 %v89
    %v435 = vunpack.c.h.b16 %v89
    %v436 = vunpack.c.l.b16 %v90
    %v437 = vunpack.c.h.b16 %v90
    %v438 = vunpack.c.l.b16 %v91
    %v439 = vunpack.c.h.b16 %v91
    %v440 = vunpack.c.l.b16 %v92
    %v441 = vunpack.c.h.b16 %v92
    %v442 = vunpack.c.l.b16 %v93
    %v443 = vunpack.c.h.b16 %v93
    %v444 = vunpack.c.l.b16 %v94
    %v445 = vunpack.c.h.b16 %v94
    %v446 = vunpack.c.l.b16 %v95
    %v447 = vunpack.c.h.b16 %v95
    %v448 = vunpack.c.l.b16 %v96
    %v449 = vunpack.c.h.b16 %v96
    %v450 = vunpack.c.l.b16 %v97
    %v451 = vunpack.c.h.b16 %v97
    %v452 = vunpack.c.l.b16 %v98
    %v453 = vunpack.c.h.b16 %v98
    %v454 = vunpack.c.l.b16 %v99
    %v455 = vunpack.c.h.b16 %v99
    %v456 = vunpack.c.l.b16 %v100
    %v457 = vunpack.c.h.b16 %v100
    %v458 = vunpack.c.l.b16 %v101
    %v459 = vunpack.c.h.b16 %v101
    %v460 = vunpack.c.l.b16 %v102
    %v461 = vunpack.c.h.b16 %v102
    %v462 = vunpack.c.l.b16 %v103
    %v463 = vunpack.c.h.b16 %v103
    %v464 = vunpack.c.l.b16 %v104
    %v465 = vunpack.c.h.b16 %v104
    %v466 = vunpack.c.l.b16 %v105
    %v467 = vunpack.c.h.b16 %v105
    %v468 = vunpack.c.l.b16 %v106
    %v469 = vunpack.c.h.b16 %v106
    %v470 = vunpack.c.l.b16 %v107
    %v471 = vunpack.c.h.b16 %v107
    %v472 = vunpack.c.l.b16 %v108
    %v473 = vunpack.c.h.b16 %v108
    %v474 = vunpack.c.l.b16 %v109
    %v475 = vunpack.c.h.b16 %v109
    %v476 = vunpack.c.l.b16 %v110
    %v477 = vunpack.c.h.b16 %v110
    %v478 = vunpack.c.l.b16 %v111
    %v479 = vunpack.c.h.b16 %v111
    %v480 = vunpack.c.l.b16 %v112
    %v481 = vunpack.c.h.b16 %v112
    %v482 = vunpack.c.l.b16 %v113
    %v483 = vunpack.c.h.b16 %v113
    %v484 = vunpack.c.l.b16 %v114
    %v485 = vunpack.c.h.b16 %v114
    %v486 = vunpack.c.l.b16 %v115
    %v487 = vunpack.c.h.b16 %v115
    %v488 = vunpack.c.l.b16 %v116
    %v489 = vunpack.c.h.b16 %v116
    %v490 = vunpack.c.l.b16 %v117
    %v491 = vunpack.c.h.b16 %v117
    %v492 = vunpack.c.l.b16 %v118
    %v493 = vunpack.c.h.b16 %v118
    %v494 = vunpack.c.l.b16 %v119
    %v495 = vunpack.c.h.b16 %v119
    %v496 = vunpack.c.l.b16 %v120
    %v497 = vunpack.c.h.b16 %v120
    %v498 = vunpack.c.l.b16 %v121
    %v499 = vunpack.c.h.b16 %v121
    %v500 = vunpack.c.l.b16 %v122
    %v501 = vunpack.c.h.b16 %v122
    %v502 = vunpack.c.l.b16 %v123
    %v503 = vunpack.c.h.b16 %v123
    %v504 = vunpack.c.l.b16 %v124
    %v505 = vunpack.c.h.b16 %v124
    %v506 = vunpack.c.l.b16 %v125
    %v507 = vunpack.c.h.b16 %v125
    %v508 = vunpack.c.l.b16 %v126
    %v509 = vunpack.c.h.b16 %v126
    %v510 = vunpack.c.l.b16 %v127
    %v511 = vunpack.c.h.b16 %v127
    %v512 = vunpack.c.l.b16 %v128
    %v513 = vunpack.c.h.b16 %v128
    %v514 = vunpack.c.l.b16 %v129
    %v515 = vunpack.c.h.b16 %v129
    %v516 = vunpack.c.l.b16 %v130
    %v517 = vunpack.c.h.b16 %v130
    %v518 = vunpack.c.l.b16 %v131
    %v519 = vunpack.c.h.b16 %v131
    %v520 = vunpack.c.l.b16 %v132
    %v521 = vunpack.c.h.b16 %v132
    %v522 = vunpack.c.l.b16 %v133
    %v523 = vunpack.c.h.b16 %v133
    %v524 = vunpack.c.l.b16 %v134
    %v525 = vunpack.c.h.b16 %v134
    %v526 = vunpack.c.l.b16 %v135
    %v527 = vunpack.c.h.b16 %v135
    %v528 = vunpack.c.l.b16 %v136
    %v529 = vunpack.c.h.b16 %v136
    %v530 = vunpack.c.l.b16 %v137
    %v531 = vunpack.c.h.b16 %v137
    %v532 = vunpack.c.l.b16 %v138
    %v533 = vunpack.c.h.b16 %v138
    %v534 = vunpack.c.l.b16 %v139
    %v535 = vunpack.c.h.b16 %v139
    %v536 = vunpack.c.l.b16 %v140
    %v537 = vunpack.c.h.b16 %v140
    %v538 = vunpack.c.l.b16 %v141
    %v539 = vunpack.c.h.b16 %v141
    %v540 = vunpack.c.l.b16 %v142
    %v541 = vunpack.c.h.b16 %v142
    %v542 = vunpack.c.l.b16 %v143
    %v543 = vunpack.c.h.b16 %v143
    %v544 = vunpack.c.l.b16 %v144
    %v545 = vunpack.c.h.b16 %v144
    %v546 = vunpack.c.l.b16 %v145
    %v547 = vunpack.c.h.b16 %v145
    %v548 = vunpack.c.l.b16 %v146
    %v549 = vunpack.c.h.b16 %v146
    %v550 = vunpack.c.l.b16 %v147
    %v551 = vunpack.c.h.b16 %v147
    %v552 = vunpack.c.l.b16 %v148
    %v553 = vunpack.c.h.b16 %v148
    %v554 = vunpack.c.l.b16 %v149
    %v555 = vunpack.c.h.b16 %v149
    %v556 = vunpack.c.l.b16 %v150
    %v557 = vunpack.c.h.b16 %v150
    %v558 = vunpack.c.l.b16 %v151
    %v559 = vunpack.c.h.b16 %v151
    %v560 = vunpack.c.l.b16 %v152
    %v561 = vunpack.c.h.b16 %v152
    %v562 = vunpack.c.l.b16 %v153
    %v563 = vunpack.c.h.b16 %v153
    %v564 = vunpack.c.l.b16 %v154
    %v565 = vunpack.c.h.b16 %v154
    %v566 = vunpack.c.l.b16 %v155
    %v567 = vunpack.c.h.b16 %v155
    %v568 = vunpack.c.l.b16 %v156
    %v569 = vunpack.c.h.b16 %v156
    %v570 = vunpack.c.l.b16 %v157
    %v571 = vunpack.c.h.b16 %v157
    %v572 = vunpack.c.l.b16 %v158
    %v573 = vunpack.c.h.b16 %v158
    %v574 = vunpack.c.l.b16 %v159
    %v575 = vunpack.c.h.b16 %v159
    %v576 = vunpack.c.l.b16 %v160
    %v577 = vunpack.c.h.b16 %v160
    %v578 = vunpack.c.l.b16 %v161
    %v579 = vunpack.c.h.b16 %v161
    %v580 = vunpack.c.l.b16 %v162
    %v581 = vunpack.c.h.b16 %v162
    %v582 = vunpack.c.l.b16 %v163
    %v583 = vunpack.c.h.b16 %v163
    %v584 = vunpack.c.l.b16 %v164
    %v585 = vunpack.c.h.b16 %v164
    %v586 = vunpack.c.l.b16 %v165
    %v587 = vunpack.c.h.b16 %v165
    %v588 = vunpack.c.l.b16 %v166
    %v589 = vunpack.c.h.b16 %v166
    %v590 = vunpack.c.l.b16 %v167
    %v591 = vunpack.c.h.b16 %v167
    %v592 = vunpack.c.l.b16 %v168
    %v593 = vunpack.c.h.b16 %v168
    %v594 = vunpack.c.l.b16 %v169
    %v595 = vunpack.c.h.b16 %v169
    %v596 = vpack.c.b16 %v348, %v340
    %v597 = vpack.c.b16 %v349, %v341
    %v598 = vpack.c.b16 %v350, %v342
    %v599 = vpack.c.b16 %v351, %v343
    %v600 = vpack.c.b16 %v352, %v344
    %v601 = vpack.c.b16 %v353, %v345
    %v602 = vpack.c.b16 %v354, %v346
    %v603 = vpack.c.b16 %v355, %v347
    %v604 = vpack.c.b16 %v364, %v356
    %v605 = vpack.c.b16 %v365, %v357
    %v606 = vpack.c.b16 %v366, %v358
    %v607 = vpack.c.b16 %v367, %v359
    %v608 = vpack.c.b16 %v368, %v360
    %v609 = vpack.c.b16 %v369, %v361
    %v610 = vpack.c.b16 %v370, %v362
    %v611 = vpack.c.b16 %v371, %v363
    %v612 = vpack.c.b16 %v380, %v372
    %v613 = vpack.c.b16 %v381, %v373
    %v614 = vpack.c.b16 %v382, %v374
    %v615 = vpack.c.b16 %v383, %v375
    %v616 = vpack.c.b16 %v384, %v376
    %v617 = vpack.c.b16 %v385, %v377
    %v618 = vpack.c.b16 %v386, %v378
    %v619 = vpack.c.b16 %v387, %v379
    %v620 = vpack.c.b16 %v396, %v388
    %v621 = vpack.c.b16 %v397, %v389
    %v622 = vpack.c.b16 %v398, %v390
    %v623 = vpack.c.b16 %v399, %v391
    %v624 = vpack.c.b16 %v400, %v392
    %v625 = vpack.c.b16 %v401, %v393
    %v626 = vpack.c.b16 %v402, %v394
    %v627 = vpack.c.b16 %v403, %v395
    %v628 = vpack.c.b16 %v412, %v404
    %v629 = vpack.c.b16 %v413, %v405
    %v630 = vpack.c.b16 %v414, %v406
    %v631 = vpack.c.b16 %v415, %v407
    %v632 = vpack.c.b16 %v416, %v408
    %v633 = vpack.c.b16 %v417, %v409
    %v634 = vpack.c.b16 %v418, %v410
    %v635 = vpack.c.b16 %v419, %v411
    %v636 = vpack.c.b16 %v428, %v420
    %v637 = vpack.c.b16 %v429, %v421
    %v638 = vpack.c.b16 %v430, %v422
    %v639 = vpack.c.b16 %v431, %v423
    %v640 = vpack.c.b16 %v432, %v424
    %v641 = vpack.c.b16 %v433, %v425
    %v642 = vpack.c.b16 %v434, %v426
    %v643 = vpack.c.b16 %v435, %v427
    %v644 = vpack.c.b16 %v444, %v436
    %v645 = vpack.c.b16 %v445, %v437
    %v646 = vpack.c.b16 %v446, %v438
    %v647 = vpack.c.b16 %v447, %v439
    %v648 = vpack.c.b16 %v448, %v440
    %v649 = vpack.c.b16 %v449, %v441
    %v650 = vpack.c.b16 %v450, %v442
    %v651 = vpack.c.b16 %v451, %v443
    %v652 = vpack.c.b16 %v460, %v452
    %v653 = vpack.c.b16 %v461, %v453
    %v654 = vpack.c.b16 %v462, %v454
    %v655 = vpack.c.b16 %v463, %v455
    %v656 = vpack.c.b16 %v464, %v456
    %v657 = vpack.c.b16 %v465, %v457
    %v658 = vpack.c.b16 %v466, %v458
    %v659 = vpack.c.b16 %v467, %v459
    %v660 = vpack.c.b16 %v476, %v468
    %v661 = vpack.c.b16 %v477, %v469
    %v662 = vpack.c.b16 %v478, %v470
    %v663 = vpack.c.b16 %v479, %v471
    %v664 = vpack.c.b16 %v480, %v472
    %v665 = vpack.c.b16 %v481, %v473
    %v666 = vpack.c.b16 %v482, %v474
    %v667 = vpack.c.b16 %v483, %v475
    %v668 = vpack.c.b16 %v492, %v484
    %v669 = vpack.c.b16 %v493, %v485
    %v670 = vpack.c.b16 %v494, %v486
    %v671 = vpack.c.b16 %v495, %v487
    %v672 = vpack.c.b16 %v496, %v488
    %v673 = vpack.c.b16 %v497, %v489
    %v674 = vpack.c.b16 %v498, %v490
    %v675 = vpack.c.b16 %v499, %v491
    %v676 = vpack.c.b16 %v508, %v500
    %v677 = vpack.c.b16 %v509, %v501
    %v678 = vpack.c.b16 %v510, %v502
    %v679 = vpack.c.b16 %v511, %v503
    %v680 = vpack.c.b16 %v512, %v504
    %v681 = vpack.c.b16 %v513, %v505
    %v682 = vpack.c.b16 %v514, %v506
    %v683 = vpack.c.b16 %v515, %v507
    %v684 = vpack.c.b16 %v524, %v516
    %v685 = vpack.c.b16 %v525, %v517
    %v686 = vpack.c.b16 %v526, %v518
    %v687 = vpack.c.b16 %v527, %v519
    %v688 = vpack.c.b16 %v528, %v520
    %v689 = vpack.c.b16 %v529, %v521
    %v690 = vpack.c.b16 %v530, %v522
    %v691 = vpack.c.b16 %v531, %v523
    %v692 = vpack.c.b16 %v540, %v532
    %v693 = vpack.c.b16 %v541, %v533
    %v694 = vpack.c.b16 %v542, %v534
    %v695 = vpack.c.b16 %v543, %v535
    %v696 = vpack.c.b16 %v544, %v536
    %v697 = vpack.c.b16 %v545, %v537
    %v698 = vpack.c.b16 %v546, %v538
    %v699 = vpack.c.b16 %v547, %v539
    %v700 = vpack.c.b16 %v556, %v548
    %v701 = vpack.c.b16 %v557, %v549
    %v702 = vpack.c.b16 %v558, %v550
    %v703 = vpack.c.b16 %v559, %v551
    %v704 = vpack.c.b16 %v560, %v552
    %v705 = vpack.c.b16 %v561, %v553
    %v706 = vpack.c.b16 %v562, %v554
    %v707 = vpack.c.b16 %v563, %v555
    %v708 = vpack.c.b16 %v572, %v564
    %v709 = vpack.c.b16 %v573, %v565
    %v710 = vpack.c.b16 %v574, %v566
    %v711 = vpack.c.b16 %v575, %v567
    %v712 = vpack.c.b16 %v576, %v568
    %v713 = vpack.c.b16 %v577, %v569
    %v714 = vpack.c.b16 %v578, %v570
    %v715 = vpack.c.b16 %v579, %v571
    %v716 = vpack.c.b16 %v588, %v580
    %v717 = vpack.c.b16 %v589, %v581
    %v718 = vpack.c.b16 %v590, %v582
    %v719 = vpack.c.b16 %v591, %v583
    %v720 = vpack.c.b16 %v592, %v584
    %v721 = vpack.c.b16 %v593, %v585
    %v722 = vpack.c.b16 %v594, %v586
    %v723 = vpack.c.b16 %v595, %v587
    %852 = vmatprep.subr.bf16.mxu0 %v653
    %853 = vmatpush1.bf16.msra.mxu0 %v652
    %854 = vmatprep.subr.bf16.mxu0 %v645
    %855 = vmatpush1.bf16.msra.mxu0 %v644
    %856 = vmatprep.subr.bf16.mxu0 %v637
    %857 = vmatpush1.bf16.msra.mxu0 %v636
    %858 = vmatprep.subr.bf16.mxu0 %v629
    %859 = vmatpush1.bf16.msra.mxu0 %v628
    %860 = vmatprep.subr.bf16.mxu0 %v621
    %861 = vmatpush1.bf16.msra.mxu0 %v620
    %862 = vmatprep.subr.bf16.mxu0 %v613
    %863 = vmatpush1.bf16.msra.mxu0 %v612
    %864 = vmatprep.subr.bf16.mxu0 %v605
    %865 = vmatpush1.bf16.msra.mxu0 %v604
    %866 = vmatprep.subr.bf16.mxu0 %v597
    %867 = vmatpush1.bf16.msra.mxu0 %v596
    %868 = vmatprep.subr.bf16.mxu0 %v717
    %869 = vmatpush2.bf16.msra.mxu0 %v716
    %870 = vmatprep.subr.bf16.mxu0 %v709
    %871 = vmatpush2.bf16.msra.mxu0 %v708
    %872 = vmatprep.subr.bf16.mxu0 %v701
    %873 = vmatpush2.bf16.msra.mxu0 %v700
    %874 = vmatprep.subr.bf16.mxu0 %v693
    %875 = vmatpush2.bf16.msra.mxu0 %v692
    %876 = vmatprep.subr.bf16.mxu0 %v685
    %877 = vmatpush2.bf16.msra.mxu0 %v684
    %878 = vmatprep.subr.bf16.mxu0 %v677
    %879 = vmatpush2.bf16.msra.mxu0 %v676
    %880 = vmatprep.subr.bf16.mxu0 %v669
    %881 = vmatpush2.bf16.msra.mxu0 %v668
    %882 = vmatprep.subr.bf16.mxu0 %v661
    %883 = vmatpush2.bf16.msra.mxu0 %v660
    %884 = vmatprep.mubr.bf16.mxu0 %v41
    %885 = vmatmul.mubr.bf16.gmra.mxu0 %v40
    %v886 = vpop.f32.mrf.mxu0
    %v887 = vadd.f32 %v175, %v886
    %v888 = vpop.f32.mrf.mxu0
    %v889 = vadd.f32 %v179, %v888
    %v890 = vpop.f32.mrf.mxu0
    %v891 = vadd.f32 %v175, %v890
    %v892 = vpop.f32.mrf.mxu0
    %v893 = vadd.f32 %v179, %v892
    %894 = vdwg.mxu0
    %895 = vmatprep.subr.bf16.mxu0 %v655
    %896 = vmatpush1.bf16.msra.mxu0 %v654
    %897 = vmatprep.subr.bf16.mxu0 %v647
    %898 = vmatpush1.bf16.msra.mxu0 %v646
    %899 = vmatprep.subr.bf16.mxu0 %v639
    %900 = vmatpush1.bf16.msra.mxu0 %v638
    %901 = vmatprep.subr.bf16.mxu0 %v631
    %902 = vmatpush1.bf16.msra.mxu0 %v630
    %903 = vmatprep.subr.bf16.mxu0 %v623
    %904 = vmatpush1.bf16.msra.mxu0 %v622
    %905 = vmatprep.subr.bf16.mxu0 %v615
    %906 = vmatpush1.bf16.msra.mxu0 %v614
    %907 = vmatprep.subr.bf16.mxu0 %v607
    %908 = vmatpush1.bf16.msra.mxu0 %v606
    %909 = vmatprep.subr.bf16.mxu0 %v599
    %910 = vmatpush1.bf16.msra.mxu0 %v598
    %911 = vmatprep.subr.bf16.mxu0 %v719
    %912 = vmatpush2.bf16.msra.mxu0 %v718
    %913 = vmatprep.subr.bf16.mxu0 %v711
    %914 = vmatpush2.bf16.msra.mxu0 %v710
    %915 = vmatprep.subr.bf16.mxu0 %v703
    %916 = vmatpush2.bf16.msra.mxu0 %v702
    %917 = vmatprep.subr.bf16.mxu0 %v695
    %918 = vmatpush2.bf16.msra.mxu0 %v694
    %919 = vmatprep.subr.bf16.mxu0 %v687
    %920 = vmatpush2.bf16.msra.mxu0 %v686
    %921 = vmatprep.subr.bf16.mxu0 %v679
    %922 = vmatpush2.bf16.msra.mxu0 %v678
    %923 = vmatprep.subr.bf16.mxu0 %v671
    %924 = vmatpush2.bf16.msra.mxu0 %v670
    %925 = vmatprep.subr.bf16.mxu0 %v663
    %926 = vmatpush2.bf16.msra.mxu0 %v662
    %927 = vmatprep.mubr.bf16.mxu0 %v41
    %928 = vmatmul.mubr.bf16.gmra.mxu0 %v40
    %v929 = vpop.f32.mrf.mxu0
    %v930 = vadd.f32 %v183, %v929
    %v931 = vpop.f32.mrf.mxu0
    %v932 = vadd.f32 %v187, %v931
    %v933 = vpop.f32.mrf.mxu0
    %v934 = vadd.f32 %v183, %v933
    %v935 = vpop.f32.mrf.mxu0
    %v936 = vadd.f32 %v187, %v935
    %937 = vdwg.mxu0
    %938 = vmatprep.subr.bf16.mxu0 %v657
    %939 = vmatpush1.bf16.msra.mxu0 %v656
    %940 = vmatprep.subr.bf16.mxu0 %v649
    %941 = vmatpush1.bf16.msra.mxu0 %v648
    %942 = vmatprep.subr.bf16.mxu0 %v641
    %943 = vmatpush1.bf16.msra.mxu0 %v640
    %944 = vmatprep.subr.bf16.mxu0 %v633
    %945 = vmatpush1.bf16.msra.mxu0 %v632
    %946 = vmatprep.subr.bf16.mxu0 %v625
    %947 = vmatpush1.bf16.msra.mxu0 %v624
    %948 = vmatprep.subr.bf16.mxu0 %v617
    %949 = vmatpush1.bf16.msra.mxu0 %v616
    %950 = vmatprep.subr.bf16.mxu0 %v609
    %951 = vmatpush1.bf16.msra.mxu0 %v608
    %952 = vmatprep.subr.bf16.mxu0 %v601
    %953 = vmatpush1.bf16.msra.mxu0 %v600
    %954 = vmatprep.subr.bf16.mxu0 %v721
    %955 = vmatpush2.bf16.msra.mxu0 %v720
    %956 = vmatprep.subr.bf16.mxu0 %v713
    %957 = vmatpush2.bf16.msra.mxu0 %v712
    %958 = vmatprep.subr.bf16.mxu0 %v705
    %959 = vmatpush2.bf16.msra.mxu0 %v704
    %960 = vmatprep.subr.bf16.mxu0 %v697
    %961 = vmatpush2.bf16.msra.mxu0 %v696
    %962 = vmatprep.subr.bf16.mxu0 %v689
    %963 = vmatpush2.bf16.msra.mxu0 %v688
    %964 = vmatprep.subr.bf16.mxu0 %v681
    %965 = vmatpush2.bf16.msra.mxu0 %v680
    %966 = vmatprep.subr.bf16.mxu0 %v673
    %967 = vmatpush2.bf16.msra.mxu0 %v672
    %968 = vmatprep.subr.bf16.mxu0 %v665
    %969 = vmatpush2.bf16.msra.mxu0 %v664
    %970 = vmatprep.mubr.bf16.mxu0 %v41
    %971 = vmatmul.mubr.bf16.gmra.mxu0 %v40
    %v972 = vpop.f32.mrf.mxu0
    %v973 = vadd.f32 %v191, %v972
    %v974 = vpop.f32.mrf.mxu0
    %v975 = vadd.f32 %v195, %v974
    %v976 = vpop.f32.mrf.mxu0
    %v977 = vadd.f32 %v191, %v976
    %v978 = vpop.f32.mrf.mxu0
    %v979 = vadd.f32 %v195, %v978
    %980 = vdwg.mxu0
    %981 = vmatprep.subr.bf16.mxu0 %v659
    %982 = vmatpush1.bf16.msra.mxu0 %v658
    %983 = vmatprep.subr.bf16.mxu0 %v651
    %984 = vmatpush1.bf16.msra.mxu0 %v650
    %985 = vmatprep.subr.bf16.mxu0 %v643
    %986 = vmatpush1.bf16.msra.mxu0 %v642
    %987 = vmatprep.subr.bf16.mxu0 %v635
    %988 = vmatpush1.bf16.msra.mxu0 %v634
    %989 = vmatprep.subr.bf16.mxu0 %v627
    %990 = vmatpush1.bf16.msra.mxu0 %v626
    %991 = vmatprep.subr.bf16.mxu0 %v619
    %992 = vmatpush1.bf16.msra.mxu0 %v618
    %993 = vmatprep.subr.bf16.mxu0 %v611
    %994 = vmatpush1.bf16.msra.mxu0 %v610
    %995 = vmatprep.subr.bf16.mxu0 %v603
    %996 = vmatpush1.bf16.msra.mxu0 %v602
    %997 = vmatprep.subr.bf16.mxu0 %v723
    %998 = vmatpush2.bf16.msra.mxu0 %v722
    %999 = vmatprep.subr.bf16.mxu0 %v715
    %1000 = vmatpush2.bf16.msra.mxu0 %v714
    %1001 = vmatprep.subr.bf16.mxu0 %v707
    %1002 = vmatpush2.bf16.msra.mxu0 %v706
    %1003 = vmatprep.subr.bf16.mxu0 %v699
    %1004 = vmatpush2.bf16.msra.mxu0 %v698
    %1005 = vmatprep.subr.bf16.mxu0 %v691
    %1006 = vmatpush2.bf16.msra.mxu0 %v690
    %1007 = vmatprep.subr.bf16.mxu0 %v683
    %1008 = vmatpush2.bf16.msra.mxu0 %v682
    %1009 = vmatprep.subr.bf16.mxu0 %v675
    %1010 = vmatpush2.bf16.msra.mxu0 %v674
    %1011 = vmatprep.subr.bf16.mxu0 %v667
    %1012 = vmatpush2.bf16.msra.mxu0 %v666
    %1013 = vmatprep.mubr.bf16.mxu0 %v41
    %1014 = vmatmul.mubr.bf16.gmra.mxu0 %v40
    %v1015 = vpop.f32.mrf.mxu0
    %v1016 = vadd.f32 %v199, %v1015
    %v1017 = vpop.f32.mrf.mxu0
    %v1018 = vadd.f32 %v203, %v1017
    %v1019 = vpop.f32.mrf.mxu0
    %v1020 = vadd.f32 %v199, %v1019
    %v1021 = vpop.f32.mrf.mxu0
    %v1022 = vadd.f32 %v203, %v1021
    %1023 = vdwg.mxu0
    %v1028 = vcombine.low %v887, %v889
    %v1029 = vcombine.low %v930, %v932
    %v1031 = vunpack.c.l.s4 1983009808
    %v1032 = vunpack.c.0.s8 %v1031
    %v1033 = vlaneseq
    %v1034 = vshrl.u32 %v1033, 7
    %v1035 = vsub.s32 %v1032, %v1034
    %v1036 = vrot.slane %v1028, %v1035
    %v1038 = vunpack.c.l.s4 1983009808
    %v1039 = vunpack.c.0.s8 %v1038
    %v1040 = vlaneseq
    %v1041 = vshrl.u32 %v1040, 7
    %v1042 = vsub.s32 %v1039, %v1041
    %v1043 = vrot.slane %v1029, %v1042
    %v1044 = vcombine.low %v1036, %v1043
    %1046 = vst [vmem:[#allocation2] sm:$0xff] %v1044
    %v1051 = vcombine.low %v973, %v975
    %v1052 = vcombine.low %v1016, %v1018
    %v1054 = vunpack.c.l.s4 1983009808
    %v1055 = vunpack.c.0.s8 %v1054
    %v1056 = vlaneseq
    %v1057 = vshrl.u32 %v1056, 7
    %v1058 = vsub.s32 %v1055, %v1057
    %v1059 = vrot.slane %v1051, %v1058
    %v1061 = vunpack.c.l.s4 1983009808
    %v1062 = vunpack.c.0.s8 %v1061
    %v1063 = vlaneseq
    %v1064 = vshrl.u32 %v1063, 7
    %v1065 = vsub.s32 %v1062, %v1064
    %v1066 = vrot.slane %v1052, %v1065
    %v1067 = vcombine.low %v1059, %v1066
    %1069 = vst [vmem:[#allocation3] sm:$0xff] %v1067
    %v1070 = vcombine.high %v1036, %v1043
    %s1072 = scalar_lea.vmem [#allocation2], 8
    %1073 = vst [vmem:[%s1072] sm:$0xff] %v1070
    %v1074 = vcombine.high %v1059, %v1066
    %s1076 = scalar_lea.vmem [#allocation3], 8
    %1077 = vst [vmem:[%s1076] sm:$0xff] %v1074
    %v1078 = vcombine.high %v887, %v889
    %v1079 = vcombine.high %v930, %v932
    %v1081 = vunpack.c.l.s4 1983009808
    %v1082 = vunpack.c.0.s8 %v1081
    %v1083 = vlaneseq
    %v1084 = vshrl.u32 %v1083, 7
    %v1085 = vsub.s32 %v1082, %v1084
    %v1086 = vrot.slane %v1078, %v1085
    %v1088 = vunpack.c.l.s4 1983009808
    %v1089 = vunpack.c.0.s8 %v1088
    %v1090 = vlaneseq
    %v1091 = vshrl.u32 %v1090, 7
    %v1092 = vsub.s32 %v1089, %v1091
    %v1093 = vrot.slane %v1079, %v1092
    %v1094 = vcombine.low %v1086, %v1093
    %s1096 = scalar_lea.vmem [#allocation2], 16
    %1097 = vst [vmem:[%s1096] sm:$0xff] %v1094
    %v1098 = vcombine.high %v973, %v975
    %v1099 = vcombine.high %v1016, %v1018
    %v1101 = vunpack.c.l.s4 1983009808
    %v1102 = vunpack.c.0.s8 %v1101
    %v1103 = vlaneseq
    %v1104 = vshrl.u32 %v1103, 7
    %v1105 = vsub.s32 %v1102, %v1104
    %v1106 = vrot.slane %v1098, %v1105
    %v1108 = vunpack.c.l.s4 1983009808
    %v1109 = vunpack.c.0.s8 %v1108
    %v1110 = vlaneseq
    %v1111 = vshrl.u32 %v1110, 7
    %v1112 = vsub.s32 %v1109, %v1111
    %v1113 = vrot.slane %v1099, %v1112
    %v1114 = vcombine.low %v1106, %v1113
    %s1116 = scalar_lea.vmem [#allocation3], 16
    %1117 = vst [vmem:[%s1116] sm:$0xff] %v1114
    %v1118 = vcombine.high %v1086, %v1093
    %s1120 = scalar_lea.vmem [#allocation2], 24
    %1121 = vst [vmem:[%s1120] sm:$0xff] %v1118
    %v1122 = vcombine.high %v1106, %v1113
    %s1124 = scalar_lea.vmem [#allocation3], 24
    %1125 = vst [vmem:[%s1124] sm:$0xff] %v1122
    %v1130 = vcombine.low %v891, %v893
    %v1131 = vcombine.low %v934, %v936
    %v1133 = vunpack.c.l.s4 1983009808
    %v1134 = vunpack.c.0.s8 %v1133
    %v1135 = vlaneseq
    %v1136 = vshrl.u32 %v1135, 7
    %v1137 = vsub.s32 %v1134, %v1136
    %v1138 = vrot.slane %v1130, %v1137
    %v1140 = vunpack.c.l.s4 1983009808
    %v1141 = vunpack.c.0.s8 %v1140
    %v1142 = vlaneseq
    %v1143 = vshrl.u32 %v1142, 7
    %v1144 = vsub.s32 %v1141, %v1143
    %v1145 = vrot.slane %v1131, %v1144
    %v1146 = vcombine.low %v1138, %v1145
    %s1148 = scalar_lea.vmem [#allocation2], 32
    %1149 = vst [vmem:[%s1148] sm:$0xff] %v1146
    %v1154 = vcombine.low %v977, %v979
    %v1155 = vcombine.low %v1020, %v1022
    %v1157 = vunpack.c.l.s4 1983009808
    %v1158 = vunpack.c.0.s8 %v1157
    %v1159 = vlaneseq
    %v1160 = vshrl.u32 %v1159, 7
    %v1161 = vsub.s32 %v1158, %v1160
    %v1162 = vrot.slane %v1154, %v1161
    %v1164 = vunpack.c.l.s4 1983009808
    %v1165 = vunpack.c.0.s8 %v1164
    %v1166 = vlaneseq
    %v1167 = vshrl.u32 %v1166, 7
    %v1168 = vsub.s32 %v1165, %v1167
    %v1169 = vrot.slane %v1155, %v1168
    %v1170 = vcombine.low %v1162, %v1169
    %s1172 = scalar_lea.vmem [#allocation3], 32
    %1173 = vst [vmem:[%s1172] sm:$0xff] %v1170
    %v1174 = vcombine.high %v1138, %v1145
    %s1176 = scalar_lea.vmem [#allocation2], 40
    %1177 = vst [vmem:[%s1176] sm:$0xff] %v1174
    %v1178 = vcombine.high %v1162, %v1169
    %s1180 = scalar_lea.vmem [#allocation3], 40
    %1181 = vst [vmem:[%s1180] sm:$0xff] %v1178
    %v1182 = vcombine.high %v891, %v893
    %v1183 = vcombine.high %v934, %v936
    %v1185 = vunpack.c.l.s4 1983009808
    %v1186 = vunpack.c.0.s8 %v1185
    %v1187 = vlaneseq
    %v1188 = vshrl.u32 %v1187, 7
    %v1189 = vsub.s32 %v1186, %v1188
    %v1190 = vrot.slane %v1182, %v1189
    %v1192 = vunpack.c.l.s4 1983009808
    %v1193 = vunpack.c.0.s8 %v1192
    %v1194 = vlaneseq
    %v1195 = vshrl.u32 %v1194, 7
    %v1196 = vsub.s32 %v1193, %v1195
    %v1197 = vrot.slane %v1183, %v1196
    %v1198 = vcombine.low %v1190, %v1197
    %s1200 = scalar_lea.vmem [#allocation2], 48
    %1201 = vst [vmem:[%s1200] sm:$0xff] %v1198
    %v1202 = vcombine.high %v977, %v979
    %v1203 = vcombine.high %v1020, %v1022
    %v1205 = vunpack.c.l.s4 1983009808
    %v1206 = vunpack.c.0.s8 %v1205
    %v1207 = vlaneseq
    %v1208 = vshrl.u32 %v1207, 7
    %v1209 = vsub.s32 %v1206, %v1208
    %v1210 = vrot.slane %v1202, %v1209
    %v1212 = vunpack.c.l.s4 1983009808
    %v1213 = vunpack.c.0.s8 %v1212
    %v1214 = vlaneseq
    %v1215 = vshrl.u32 %v1214, 7
    %v1216 = vsub.s32 %v1213, %v1215
    %v1217 = vrot.slane %v1203, %v1216
    %v1218 = vcombine.low %v1210, %v1217
    %s1220 = scalar_lea.vmem [#allocation3], 48
    %1221 = vst [vmem:[%s1220] sm:$0xff] %v1218
    %v1222 = vcombine.high %v1190, %v1197
    %s1224 = scalar_lea.vmem [#allocation2], 56
    %1225 = vst [vmem:[%s1224] sm:$0xff] %v1222
    %v1226 = vcombine.high %v1210, %v1217
    %s1228 = scalar_lea.vmem [#allocation3], 56
    %1229 = vst [vmem:[%s1228] sm:$0xff] %v1226
    %1230 = vst [vmem:[#allocation4] sm:$0xf] 0.0
    %1231 = vst [vmem:[#allocation5] sm:$0xf] 0.0
    %v1232 = vld [vmem:[#allocation6] sm:$0xff]
    %v1233 = vld [vmem:[#allocation6 + $0x8] sm:$0xff]
    %v1234 = vld [vmem:[#allocation6 + $0x10] sm:$0xff]
    %v1235 = vld [vmem:[#allocation6 + $0x18] sm:$0xff]
    %v1236 = vld [vmem:[#allocation6 + $0x20] sm:$0xff]
    %v1237 = vld [vmem:[#allocation6 + $0x28] sm:$0xff]
    %v1238 = vld [vmem:[#allocation6 + $0x30] sm:$0xff]
    %v1239 = vld [vmem:[#allocation6 + $0x38] sm:$0xff]
    %v1240 = vld [vmem:[#allocation6 + $0x40] sm:$0xff]
    %v1241 = vld [vmem:[#allocation6 + $0x48] sm:$0xff]
    %v1242 = vld [vmem:[#allocation6 + $0x50] sm:$0xff]
    %v1243 = vld [vmem:[#allocation6 + $0x58] sm:$0xff]
    %v1244 = vld [vmem:[#allocation6 + $0x60] sm:$0xff]
    %v1245 = vld [vmem:[#allocation6 + $0x68] sm:$0xff]
    %v1246 = vld [vmem:[#allocation6 + $0x70] sm:$0xff]
    %v1247 = vld [vmem:[#allocation6 + $0x78] sm:$0xff]
    %v1248 = vld [vmem:[#allocation6 + $0x80] sm:$0xff]
    %v1249 = vld [vmem:[#allocation6 + $0x88] sm:$0xff]
    %v1250 = vld [vmem:[#allocation6 + $0x90] sm:$0xff]
    %v1251 = vld [vmem:[#allocation6 + $0x98] sm:$0xff]
    %v1252 = vld [vmem:[#allocation6 + $0xa0] sm:$0xff]
    %v1253 = vld [vmem:[#allocation6 + $0xa8] sm:$0xff]
    %v1254 = vld [vmem:[#allocation6 + $0xb0] sm:$0xff]
    %v1255 = vld [vmem:[#allocation6 + $0xb8] sm:$0xff]
    %v1256 = vld [vmem:[#allocation6 + $0xc0] sm:$0xff]
    %v1257 = vld [vmem:[#allocation6 + $0xc8] sm:$0xff]
    %v1258 = vld [vmem:[#allocation6 + $0xd0] sm:$0xff]
    %v1259 = vld [vmem:[#allocation6 + $0xd8] sm:$0xff]
    %v1260 = vld [vmem:[#allocation6 + $0xe0] sm:$0xff]
    %v1261 = vld [vmem:[#allocation6 + $0xe8] sm:$0xff]
    %v1262 = vld [vmem:[#allocation6 + $0xf0] sm:$0xff]
    %v1263 = vld [vmem:[#allocation6 + $0xf8] sm:$0xff]
    %v1264 = vld [vmem:[#allocation6 + $0x100] sm:$0xff]
    %v1265 = vld [vmem:[#allocation6 + $0x108] sm:$0xff]
    %v1266 = vld [vmem:[#allocation6 + $0x110] sm:$0xff]
    %v1267 = vld [vmem:[#allocation6 + $0x118] sm:$0xff]
    %v1268 = vld [vmem:[#allocation6 + $0x120] sm:$0xff]
    %v1269 = vld [vmem:[#allocation6 + $0x128] sm:$0xff]
    %v1270 = vld [vmem:[#allocation6 + $0x130] sm:$0xff]
    %v1271 = vld [vmem:[#allocation6 + $0x138] sm:$0xff]
    %v1272 = vld [vmem:[#allocation6 + $0x140] sm:$0xff]
    %v1273 = vld [vmem:[#allocation6 + $0x148] sm:$0xff]
    %v1274 = vld [vmem:[#allocation6 + $0x150] sm:$0xff]
    %v1275 = vld [vmem:[#allocation6 + $0x158] sm:$0xff]
    %v1276 = vld [vmem:[#allocation6 + $0x160] sm:$0xff]
    %v1277 = vld [vmem:[#allocation6 + $0x168] sm:$0xff]
    %v1278 = vld [vmem:[#allocation6 + $0x170] sm:$0xff]
    %v1279 = vld [vmem:[#allocation6 + $0x178] sm:$0xff]
    %v1280 = vld [vmem:[#allocation6 + $0x180] sm:$0xff]
    %v1281 = vld [vmem:[#allocation6 + $0x188] sm:$0xff]
    %v1282 = vld [vmem:[#allocation6 + $0x190] sm:$0xff]
    %v1283 = vld [vmem:[#allocation6 + $0x198] sm:$0xff]
    %v1284 = vld [vmem:[#allocation6 + $0x1a0] sm:$0xff]
    %v1285 = vld [vmem:[#allocation6 + $0x1a8] sm:$0xff]
    %v1286 = vld [vmem:[#allocation6 + $0x1b0] sm:$0xff]
    %v1287 = vld [vmem:[#allocation6 + $0x1b8] sm:$0xff]
    %v1288 = vld [vmem:[#allocation6 + $0x1c0] sm:$0xff]
    %v1289 = vld [vmem:[#allocation6 + $0x1c8] sm:$0xff]
    %v1290 = vld [vmem:[#allocation6 + $0x1d0] sm:$0xff]
    %v1291 = vld [vmem:[#allocation6 + $0x1d8] sm:$0xff]
    %v1292 = vld [vmem:[#allocation6 + $0x1e0] sm:$0xff]
    %v1293 = vld [vmem:[#allocation6 + $0x1e8] sm:$0xff]
    %v1294 = vld [vmem:[#allocation6 + $0x1f0] sm:$0xff]
    %v1295 = vld [vmem:[#allocation6 + $0x1f8] sm:$0xff]
    %v1296 = vld [vmem:[#allocation4] sm:$0xf]
    %v1297 = vld [vmem:[#allocation5] sm:$0xf]
    %v1298 = vpack.c.bf16 %v1296, %v1296
    %v1363 = vunpack.c.l.b16 %v1232
    %v1364 = vunpack.c.h.b16 %v1232
    %v1365 = vunpack.c.l.b16 %v1233
    %v1366 = vunpack.c.h.b16 %v1233
    %v1367 = vunpack.c.l.b16 %v1234
    %v1368 = vunpack.c.h.b16 %v1234
    %v1369 = vunpack.c.l.b16 %v1235
    %v1370 = vunpack.c.h.b16 %v1235
    %v1371 = vunpack.c.l.b16 %v1236
    %v1372 = vunpack.c.h.b16 %v1236
    %v1373 = vunpack.c.l.b16 %v1237
    %v1374 = vunpack.c.h.b16 %v1237
    %v1375 = vunpack.c.l.b16 %v1238
    %v1376 = vunpack.c.h.b16 %v1238
    %v1377 = vunpack.c.l.b16 %v1239
    %v1378 = vunpack.c.h.b16 %v1239
    %v1379 = vunpack.c.l.b16 %v1240
    %v1380 = vunpack.c.h.b16 %v1240
    %v1381 = vunpack.c.l.b16 %v1241
    %v1382 = vunpack.c.h.b16 %v1241
    %v1383 = vunpack.c.l.b16 %v1242
    %v1384 = vunpack.c.h.b16 %v1242
    %v1385 = vunpack.c.l.b16 %v1243
    %v1386 = vunpack.c.h.b16 %v1243
    %v1387 = vunpack.c.l.b16 %v1244
    %v1388 = vunpack.c.h.b16 %v1244
    %v1389 = vunpack.c.l.b16 %v1245
    %v1390 = vunpack.c.h.b16 %v1245
    %v1391 = vunpack.c.l.b16 %v1246
    %v1392 = vunpack.c.h.b16 %v1246
    %v1393 = vunpack.c.l.b16 %v1247
    %v1394 = vunpack.c.h.b16 %v1247
    %v1395 = vunpack.c.l.b16 %v1248
    %v1396 = vunpack.c.h.b16 %v1248
    %v1397 = vunpack.c.l.b16 %v1249
    %v1398 = vunpack.c.h.b16 %v1249
    %v1399 = vunpack.c.l.b16 %v1250
    %v1400 = vunpack.c.h.b16 %v1250
    %v1401 = vunpack.c.l.b16 %v1251
    %v1402 = vunpack.c.h.b16 %v1251
    %v1403 = vunpack.c.l.b16 %v1252
    %v1404 = vunpack.c.h.b16 %v1252
    %v1405 = vunpack.c.l.b16 %v1253
    %v1406 = vunpack.c.h.b16 %v1253
    %v1407 = vunpack.c.l.b16 %v1254
    %v1408 = vunpack.c.h.b16 %v1254
    %v1409 = vunpack.c.l.b16 %v1255
    %v1410 = vunpack.c.h.b16 %v1255
    %v1411 = vunpack.c.l.b16 %v1256
    %v1412 = vunpack.c.h.b16 %v1256
    %v1413 = vunpack.c.l.b16 %v1257
    %v1414 = vunpack.c.h.b16 %v1257
    %v1415 = vunpack.c.l.b16 %v1258
    %v1416 = vunpack.c.h.b16 %v1258
    %v1417 = vunpack.c.l.b16 %v1259
    %v1418 = vunpack.c.h.b16 %v1259
    %v1419 = vunpack.c.l.b16 %v1260
    %v1420 = vunpack.c.h.b16 %v1260
    %v1421 = vunpack.c.l.b16 %v1261
    %v1422 = vunpack.c.h.b16 %v1261
    %v1423 = vunpack.c.l.b16 %v1262
    %v1424 = vunpack.c.h.b16 %v1262
    %v1425 = vunpack.c.l.b16 %v1263
    %v1426 = vunpack.c.h.b16 %v1263
    %v1427 = vunpack.c.l.b16 %v1264
    %v1428 = vunpack.c.h.b16 %v1264
    %v1429 = vunpack.c.l.b16 %v1265
    %v1430 = vunpack.c.h.b16 %v1265
    %v1431 = vunpack.c.l.b16 %v1266
    %v1432 = vunpack.c.h.b16 %v1266
    %v1433 = vunpack.c.l.b16 %v1267
    %v1434 = vunpack.c.h.b16 %v1267
    %v1435 = vunpack.c.l.b16 %v1268
    %v1436 = vunpack.c.h.b16 %v1268
    %v1437 = vunpack.c.l.b16 %v1269
    %v1438 = vunpack.c.h.b16 %v1269
    %v1439 = vunpack.c.l.b16 %v1270
    %v1440 = vunpack.c.h.b16 %v1270
    %v1441 = vunpack.c.l.b16 %v1271
    %v1442 = vunpack.c.h.b16 %v1271
    %v1443 = vunpack.c.l.b16 %v1272
    %v1444 = vunpack.c.h.b16 %v1272
    %v1445 = vunpack.c.l.b16 %v1273
    %v1446 = vunpack.c.h.b16 %v1273
    %v1447 = vunpack.c.l.b16 %v1274
    %v1448 = vunpack.c.h.b16 %v1274
    %v1449 = vunpack.c.l.b16 %v1275
    %v1450 = vunpack.c.h.b16 %v1275
    %v1451 = vunpack.c.l.b16 %v1276
    %v1452 = vunpack.c.h.b16 %v1276
    %v1453 = vunpack.c.l.b16 %v1277
    %v1454 = vunpack.c.h.b16 %v1277
    %v1455 = vunpack.c.l.b16 %v1278
    %v1456 = vunpack.c.h.b16 %v1278
    %v1457 = vunpack.c.l.b16 %v1279
    %v1458 = vunpack.c.h.b16 %v1279
    %v1459 = vunpack.c.l.b16 %v1280
    %v1460 = vunpack.c.h.b16 %v1280
    %v1461 = vunpack.c.l.b16 %v1281
    %v1462 = vunpack.c.h.b16 %v1281
    %v1463 = vunpack.c.l.b16 %v1282
    %v1464 = vunpack.c.h.b16 %v1282
    %v1465 = vunpack.c.l.b16 %v1283
    %v1466 = vunpack.c.h.b16 %v1283
    %v1467 = vunpack.c.l.b16 %v1284
    %v1468 = vunpack.c.h.b16 %v1284
    %v1469 = vunpack.c.l.b16 %v1285
    %v1470 = vunpack.c.h.b16 %v1285
    %v1471 = vunpack.c.l.b16 %v1286
    %v1472 = vunpack.c.h.b16 %v1286
    %v1473 = vunpack.c.l.b16 %v1287
    %v1474 = vunpack.c.h.b16 %v1287
    %v1475 = vunpack.c.l.b16 %v1288
    %v1476 = vunpack.c.h.b16 %v1288
    %v1477 = vunpack.c.l.b16 %v1289
    %v1478 = vunpack.c.h.b16 %v1289
    %v1479 = vunpack.c.l.b16 %v1290
    %v1480 = vunpack.c.h.b16 %v1290
    %v1481 = vunpack.c.l.b16 %v1291
    %v1482 = vunpack.c.h.b16 %v1291
    %v1483 = vunpack.c.l.b16 %v1292
    %v1484 = vunpack.c.h.b16 %v1292
    %v1485 = vunpack.c.l.b16 %v1293
    %v1486 = vunpack.c.h.b16 %v1293
    %v1487 = vunpack.c.l.b16 %v1294
    %v1488 = vunpack.c.h.b16 %v1294
    %v1489 = vunpack.c.l.b16 %v1295
    %v1490 = vunpack.c.h.b16 %v1295
    %v1491 = vpack.c.b16 %v1371, %v1363
    %v1492 = vpack.c.b16 %v1372, %v1364
    %v1493 = vpack.c.b16 %v1373, %v1365
    %v1494 = vpack.c.b16 %v1374, %v1366
    %v1495 = vpack.c.b16 %v1375, %v1367
    %v1496 = vpack.c.b16 %v1376, %v1368
    %v1497 = vpack.c.b16 %v1377, %v1369
    %v1498 = vpack.c.b16 %v1378, %v1370
    %v1499 = vpack.c.b16 %v1387, %v1379
    %v1500 = vpack.c.b16 %v1388, %v1380
    %v1501 = vpack.c.b16 %v1389, %v1381
    %v1502 = vpack.c.b16 %v1390, %v1382
    %v1503 = vpack.c.b16 %v1391, %v1383
    %v1504 = vpack.c.b16 %v1392, %v1384
    %v1505 = vpack.c.b16 %v1393, %v1385
    %v1506 = vpack.c.b16 %v1394, %v1386
    %v1507 = vpack.c.b16 %v1403, %v1395
    %v1508 = vpack.c.b16 %v1404, %v1396
    %v1509 = vpack.c.b16 %v1405, %v1397
    %v1510 = vpack.c.b16 %v1406, %v1398
    %v1511 = vpack.c.b16 %v1407, %v1399
    %v1512 = vpack.c.b16 %v1408, %v1400
    %v1513 = vpack.c.b16 %v1409, %v1401
    %v1514 = vpack.c.b16 %v1410, %v1402
    %v1515 = vpack.c.b16 %v1419, %v1411
    %v1516 = vpack.c.b16 %v1420, %v1412
    %v1517 = vpack.c.b16 %v1421, %v1413
    %v1518 = vpack.c.b16 %v1422, %v1414
    %v1519 = vpack.c.b16 %v1423, %v1415
    %v1520 = vpack.c.b16 %v1424, %v1416
    %v1521 = vpack.c.b16 %v1425, %v1417
    %v1522 = vpack.c.b16 %v1426, %v1418
    %v1523 = vpack.c.b16 %v1435, %v1427
    %v1524 = vpack.c.b16 %v1436, %v1428
    %v1525 = vpack.c.b16 %v1437, %v1429
    %v1526 = vpack.c.b16 %v1438, %v1430
    %v1527 = vpack.c.b16 %v1439, %v1431
    %v1528 = vpack.c.b16 %v1440, %v1432
    %v1529 = vpack.c.b16 %v1441, %v1433
    %v1530 = vpack.c.b16 %v1442, %v1434
    %v1531 = vpack.c.b16 %v1451, %v1443
    %v1532 = vpack.c.b16 %v1452, %v1444
    %v1533 = vpack.c.b16 %v1453, %v1445
    %v1534 = vpack.c.b16 %v1454, %v1446
    %v1535 = vpack.c.b16 %v1455, %v1447
    %v1536 = vpack.c.b16 %v1456, %v1448
    %v1537 = vpack.c.b16 %v1457, %v1449
    %v1538 = vpack.c.b16 %v1458, %v1450
    %v1539 = vpack.c.b16 %v1467, %v1459
    %v1540 = vpack.c.b16 %v1468, %v1460
    %v1541 = vpack.c.b16 %v1469, %v1461
    %v1542 = vpack.c.b16 %v1470, %v1462
    %v1543 = vpack.c.b16 %v1471, %v1463
    %v1544 = vpack.c.b16 %v1472, %v1464
    %v1545 = vpack.c.b16 %v1473, %v1465
    %v1546 = vpack.c.b16 %v1474, %v1466
    %v1547 = vpack.c.b16 %v1483, %v1475
    %v1548 = vpack.c.b16 %v1484, %v1476
    %v1549 = vpack.c.b16 %v1485, %v1477
    %v1550 = vpack.c.b16 %v1486, %v1478
    %v1551 = vpack.c.b16 %v1487, %v1479
    %v1552 = vpack.c.b16 %v1488, %v1480
    %v1553 = vpack.c.b16 %v1489, %v1481
    %v1554 = vpack.c.b16 %v1490, %v1482
    %1619 = vmatprep.subr.bf16.mxu0 %v1548
    %1620 = vmatpush1.bf16.msra.mxu0 %v1547
    %1621 = vmatprep.subr.bf16.mxu0 %v1540
    %1622 = vmatpush1.bf16.msra.mxu0 %v1539
    %1623 = vmatprep.subr.bf16.mxu0 %v1532
    %1624 = vmatpush1.bf16.msra.mxu0 %v1531
    %1625 = vmatprep.subr.bf16.mxu0 %v1524
    %1626 = vmatpush1.bf16.msra.mxu0 %v1523
    %1627 = vmatprep.subr.bf16.mxu0 %v1516
    %1628 = vmatpush1.bf16.msra.mxu0 %v1515
    %1629 = vmatprep.subr.bf16.mxu0 %v1508
    %1630 = vmatpush1.bf16.msra.mxu0 %v1507
    %1631 = vmatprep.subr.bf16.mxu0 %v1500
    %1632 = vmatpush1.bf16.msra.mxu0 %v1499
    %1633 = vmatprep.subr.bf16.mxu0 %v1492
    %1634 = vmatpush1.bf16.msra.mxu0 %v1491
    %1635 = vmatprep.subr.bf16.mxu0 0
    %1636 = vmatpush2.bf16.msra.mxu0 0
    %1637 = vmatprep.subr.bf16.mxu0 0
    %1638 = vmatpush2.bf16.msra.mxu0 0
    %1639 = vmatprep.subr.bf16.mxu0 0
    %1640 = vmatpush2.bf16.msra.mxu0 0
    %1641 = vmatprep.subr.bf16.mxu0 0
    %1642 = vmatpush2.bf16.msra.mxu0 0
    %1643 = vmatprep.subr.bf16.mxu0 0
    %1644 = vmatpush2.bf16.msra.mxu0 0
    %1645 = vmatprep.subr.bf16.mxu0 0
    %1646 = vmatpush2.bf16.msra.mxu0 0
    %1647 = vmatprep.subr.bf16.mxu0 0
    %1648 = vmatpush2.bf16.msra.mxu0 0
    %1649 = vmatprep.subr.bf16.mxu0 0
    %1650 = vmatpush2.bf16.msra.mxu0 0
    %1651 = vmatprep.mubr.bf16.mxu0 0
    %1652 = vmatmul.mubr.bf16.gmra.mxu0 %v1298
    %v1653 = vpop.f32.mrf.mxu0
    %v1654 = vadd.f32 0.0, %v1653
    %v1655 = vpop.f32.mrf.mxu0
    %v1656 = vadd.f32 0.0, %v1655
    %v1657 = vpop.f32.mrf.mxu0
    %v1658 = vpop.f32.mrf.mxu0
    %1659 = vdwg.mxu0
    %1660 = vmatprep.subr.bf16.mxu0 %v1550
    %1661 = vmatpush1.bf16.msra.mxu0 %v1549
    %1662 = vmatprep.subr.bf16.mxu0 %v1542
    %1663 = vmatpush1.bf16.msra.mxu0 %v1541
    %1664 = vmatprep.subr.bf16.mxu0 %v1534
    %1665 = vmatpush1.bf16.msra.mxu0 %v1533
    %1666 = vmatprep.subr.bf16.mxu0 %v1526
    %1667 = vmatpush1.bf16.msra.mxu0 %v1525
    %1668 = vmatprep.subr.bf16.mxu0 %v1518
    %1669 = vmatpush1.bf16.msra.mxu0 %v1517
    %1670 = vmatprep.subr.bf16.mxu0 %v1510
    %1671 = vmatpush1.bf16.msra.mxu0 %v1509
    %1672 = vmatprep.subr.bf16.mxu0 %v1502
    %1673 = vmatpush1.bf16.msra.mxu0 %v1501
    %1674 = vmatprep.subr.bf16.mxu0 %v1494
    %1675 = vmatpush1.bf16.msra.mxu0 %v1493
    %1676 = vmatprep.subr.bf16.mxu0 0
    %1677 = vmatpush2.bf16.msra.mxu0 0
    %1678 = vmatprep.subr.bf16.mxu0 0
    %1679 = vmatpush2.bf16.msra.mxu0 0
    %1680 = vmatprep.subr.bf16.mxu0 0
    %1681 = vmatpush2.bf16.msra.mxu0 0
    %1682 = vmatprep.subr.bf16.mxu0 0
    %1683 = vmatpush2.bf16.msra.mxu0 0
    %1684 = vmatprep.subr.bf16.mxu0 0
    %1685 = vmatpush2.bf16.msra.mxu0 0
    %1686 = vmatprep.subr.bf16.mxu0 0
    %1687 = vmatpush2.bf16.msra.mxu0 0
    %1688 = vmatprep.subr.bf16.mxu0 0
    %1689 = vmatpush2.bf16.msra.mxu0 0
    %1690 = vmatprep.subr.bf16.mxu0 0
    %1691 = vmatpush2.bf16.msra.mxu0 0
    %1692 = vmatprep.mubr.bf16.mxu0 0
    %1693 = vmatmul.mubr.bf16.gmra.mxu0 %v1298
    %v1694 = vpop.f32.mrf.mxu0
    %v1695 = vadd.f32 0.0, %v1694
    %v1696 = vpop.f32.mrf.mxu0
    %v1697 = vadd.f32 0.0, %v1696
    %v1698 = vpop.f32.mrf.mxu0
    %v1699 = vpop.f32.mrf.mxu0
    %1700 = vdwg.mxu0
    %1701 = vmatprep.subr.bf16.mxu0 %v1552
    %1702 = vmatpush1.bf16.msra.mxu0 %v1551
    %1703 = vmatprep.subr.bf16.mxu0 %v1544
    %1704 = vmatpush1.bf16.msra.mxu0 %v1543
    %1705 = vmatprep.subr.bf16.mxu0 %v1536
    %1706 = vmatpush1.bf16.msra.mxu0 %v1535
    %1707 = vmatprep.subr.bf16.mxu0 %v1528
    %1708 = vmatpush1.bf16.msra.mxu0 %v1527
    %1709 = vmatprep.subr.bf16.mxu0 %v1520
    %1710 = vmatpush1.bf16.msra.mxu0 %v1519
    %1711 = vmatprep.subr.bf16.mxu0 %v1512
    %1712 = vmatpush1.bf16.msra.mxu0 %v1511
    %1713 = vmatprep.subr.bf16.mxu0 %v1504
    %1714 = vmatpush1.bf16.msra.mxu0 %v1503
    %1715 = vmatprep.subr.bf16.mxu0 %v1496
    %1716 = vmatpush1.bf16.msra.mxu0 %v1495
    %1717 = vmatprep.subr.bf16.mxu0 0
    %1718 = vmatpush2.bf16.msra.mxu0 0
    %1719 = vmatprep.subr.bf16.mxu0 0
    %1720 = vmatpush2.bf16.msra.mxu0 0
    %1721 = vmatprep.subr.bf16.mxu0 0
    %1722 = vmatpush2.bf16.msra.mxu0 0
    %1723 = vmatprep.subr.bf16.mxu0 0
    %1724 = vmatpush2.bf16.msra.mxu0 0
    %1725 = vmatprep.subr.bf16.mxu0 0
    %1726 = vmatpush2.bf16.msra.mxu0 0
    %1727 = vmatprep.subr.bf16.mxu0 0
    %1728 = vmatpush2.bf16.msra.mxu0 0
    %1729 = vmatprep.subr.bf16.mxu0 0
    %1730 = vmatpush2.bf16.msra.mxu0 0
    %1731 = vmatprep.subr.bf16.mxu0 0
    %1732 = vmatpush2.bf16.msra.mxu0 0
    %1733 = vmatprep.mubr.bf16.mxu0 0
    %1734 = vmatmul.mubr.bf16.gmra.mxu0 %v1298
    %v1735 = vpop.f32.mrf.mxu0
    %v1736 = vadd.f32 0.0, %v1735
    %v1737 = vpop.f32.mrf.mxu0
    %v1738 = vadd.f32 0.0, %v1737
    %v1739 = vpop.f32.mrf.mxu0
    %v1740 = vpop.f32.mrf.mxu0
    %1741 = vdwg.mxu0
    %1742 = vmatprep.subr.bf16.mxu0 %v1554
    %1743 = vmatpush1.bf16.msra.mxu0 %v1553
    %1744 = vmatprep.subr.bf16.mxu0 %v1546
    %1745 = vmatpush1.bf16.msra.mxu0 %v1545
    %1746 = vmatprep.subr.bf16.mxu0 %v1538
    %1747 = vmatpush1.bf16.msra.mxu0 %v1537
    %1748 = vmatprep.subr.bf16.mxu0 %v1530
    %1749 = vmatpush1.bf16.msra.mxu0 %v1529
    %1750 = vmatprep.subr.bf16.mxu0 %v1522
    %1751 = vmatpush1.bf16.msra.mxu0 %v1521
    %1752 = vmatprep.subr.bf16.mxu0 %v1514
    %1753 = vmatpush1.bf16.msra.mxu0 %v1513
    %1754 = vmatprep.subr.bf16.mxu0 %v1506
    %1755 = vmatpush1.bf16.msra.mxu0 %v1505
    %1756 = vmatprep.subr.bf16.mxu0 %v1498
    %1757 = vmatpush1.bf16.msra.mxu0 %v1497
    %1758 = vmatprep.subr.bf16.mxu0 0
    %1759 = vmatpush2.bf16.msra.mxu0 0
    %1760 = vmatprep.subr.bf16.mxu0 0
    %1761 = vmatpush2.bf16.msra.mxu0 0
    %1762 = vmatprep.subr.bf16.mxu0 0
    %1763 = vmatpush2.bf16.msra.mxu0 0
    %1764 = vmatprep.subr.bf16.mxu0 0
    %1765 = vmatpush2.bf16.msra.mxu0 0
    %1766 = vmatprep.subr.bf16.mxu0 0
    %1767 = vmatpush2.bf16.msra.mxu0 0
    %1768 = vmatprep.subr.bf16.mxu0 0
    %1769 = vmatpush2.bf16.msra.mxu0 0
    %1770 = vmatprep.subr.bf16.mxu0 0
    %1771 = vmatpush2.bf16.msra.mxu0 0
    %1772 = vmatprep.subr.bf16.mxu0 0
    %1773 = vmatpush2.bf16.msra.mxu0 0
    %1774 = vmatprep.mubr.bf16.mxu0 0
    %1775 = vmatmul.mubr.bf16.gmra.mxu0 %v1298
    %v1776 = vpop.f32.mrf.mxu0
    %v1777 = vadd.f32 0.0, %v1776
    %v1778 = vpop.f32.mrf.mxu0
    %v1779 = vadd.f32 0.0, %v1778
    %v1780 = vpop.f32.mrf.mxu0
    %v1781 = vpop.f32.mrf.mxu0
    %1782 = vdwg.mxu0
    %v1783 = vld [vmem:[#allocation2] sm:$0xff]
    %v1788 = vcombine.low %v1654, %v1656
    %v1789 = vcombine.low %v1695, %v1697
    %v1791 = vunpack.c.l.s4 1983009808
    %v1792 = vunpack.c.0.s8 %v1791
    %v1793 = vlaneseq
    %v1794 = vshrl.u32 %v1793, 7
    %v1795 = vsub.s32 %v1792, %v1794
    %v1796 = vrot.slane %v1788, %v1795
    %v1798 = vunpack.c.l.s4 1983009808
    %v1799 = vunpack.c.0.s8 %v1798
    %v1800 = vlaneseq
    %v1801 = vshrl.u32 %v1800, 7
    %v1802 = vsub.s32 %v1799, %v1801
    %v1803 = vrot.slane %v1789, %v1802
    %v1804 = vcombine.low %v1796, %v1803
    %v1806 = vadd.f32 %v1783, %v1804
    %v1807 = vld [vmem:[%s1228] sm:$0xff]
    %v1812 = vcombine.low %v1736, %v1738
    %v1813 = vcombine.low %v1777, %v1779
    %v1815 = vunpack.c.l.s4 1983009808
    %v1816 = vunpack.c.0.s8 %v1815
    %v1817 = vlaneseq
    %v1818 = vshrl.u32 %v1817, 7
    %v1819 = vsub.s32 %v1816, %v1818
    %v1820 = vrot.slane %v1812, %v1819
    %v1822 = vunpack.c.l.s4 1983009808
    %v1823 = vunpack.c.0.s8 %v1822
    %v1824 = vlaneseq
    %v1825 = vshrl.u32 %v1824, 7
    %v1826 = vsub.s32 %v1823, %v1825
    %v1827 = vrot.slane %v1813, %v1826
    %v1828 = vcombine.high %v1820, %v1827
    %v1830 = vadd.f32 %v1807, %v1828
    %v1832 = vcombine.high %v1806, %v1806
    %v1834 = vunpack.c.l.s4 1983009808
    %v1835 = vunpack.c.0.s8 %v1834
    %v1836 = vlaneseq
    %v1837 = vshrl.u32 %v1836, 7
    %v1838 = vsub.s32 %v1835, %v1837
    %v1839 = vrot.slane %v1806, %v1838
    %v1841 = vunpack.c.l.s4 1983009808
    %v1842 = vunpack.c.0.s8 %v1841
    %v1843 = vlaneseq
    %v1844 = vshrl.u32 %v1843, 7
    %v1845 = vsub.s32 %v1842, %v1844
    %v1846 = vrot.slane %v1832, %v1845
    %v1847 = vcombine.high %v1839, %v1839
    %v1848 = vcombine.high %v1846, %v1846
    %v1854 = vcombine.low %v1830, %v1830
    %v1856 = vunpack.c.l.s4 1983009808
    %v1857 = vunpack.c.0.s8 %v1856
    %v1858 = vlaneseq
    %v1859 = vshrl.u32 %v1858, 7
    %v1860 = vsub.s32 %v1857, %v1859
    %v1861 = vrot.slane %v1854, %v1860
    %v1863 = vunpack.c.l.s4 1983009808
    %v1864 = vunpack.c.0.s8 %v1863
    %v1865 = vlaneseq
    %v1866 = vshrl.u32 %v1865, 7
    %v1867 = vsub.s32 %v1864, %v1866
    %v1868 = vrot.slane %v1830, %v1867
    %v1869 = vcombine.high %v1861, %v1861
    %v1870 = vcombine.high %v1868, %v1868
    %vm1875 = vcmask 1041408
    %v1876 = vsel %vm1875, %v1839, %v1861
    %v1877 = vsel %vm1875, %v1847, %v1869
    %v1878 = vsel %vm1875, %v1846, %v1868
    %v1879 = vsel %vm1875, %v1848, %v1870
    %v1880 = vxor.u32 %v1876, 2147483648
    %v1881 = vmul.f32 %v1880, 1.442695
    %v1882 = vpow.pop %v1881
    %v1883 = vadd.f32 %v1882, 1.0
    %v1884 = vrcp.pop %v1883
    %v1885 = vmul.f32 1.0, %v1884
    %v1886 = vxor.u32 %v1877, 2147483648
    %v1887 = vmul.f32 %v1886, 1.442695
    %v1888 = vpow.pop %v1887
    %v1889 = vadd.f32 %v1888, 1.0
    %v1890 = vrcp.pop %v1889
    %v1891 = vmul.f32 1.0, %v1890
    %v1892 = vtanh.pop %v1878
    %v1893 = vxor.u32 %v1879, 2147483648
    %v1894 = vmul.f32 %v1893, 1.442695
    %v1895 = vpow.pop %v1894
    %v1896 = vadd.f32 %v1895, 1.0
    %v1897 = vrcp.pop %v1896
    %v1898 = vmul.f32 1.0, %v1897
    %v1899 = vmul.f32 %v1891, %v1297
    %v1900 = vmul.f32 %v1885, %v1892
    %v1901 = vadd.f32 %v1899, %v1900
    %v1902 = vtanh.pop %v1901
    %v1903 = vmul.f32 %v1898, %v1902
    %1904 = vst [vmem:[#allocation5] sm:$0xf] %v1901
    %1905 = vst [vmem:[#allocation4] sm:$0xf] %v1903
    %1906 = vst [vmem:[#allocation9] sm:$0x3] %v1903
    %v1909 = vunpack.c.l.s4 1983009808
    %v1910 = vunpack.c.0.s8 %v1909
    %v1911 = vlaneseq
    %v1912 = vshrl.u32 %v1911, 7
    %v1913 = vsub.s32 %v1910, %v1912
    %v1914 = vrot.slane %v1903, %v1913
    %v1915 = vcombine.high %v1914, %v1914
    %s1917 = scalar_lea.vmem [#allocation9], 28
    %1918 = vst [vmem:[%s1917 + $0x2] sm:$0x3] %v1915
    %v1919 = vld [vmem:[#allocation4] sm:$0xf]
    %v1920 = vld [vmem:[#allocation5] sm:$0xf]
    %v1921 = vpack.c.bf16 %v1919, %v1919
    %1922 = vmatprep.subr.bf16.mxu0 %v1548
    %1923 = vmatpush1.bf16.msra.mxu0 %v1547
    %1924 = vmatprep.subr.bf16.mxu0 %v1540
    %1925 = vmatpush1.bf16.msra.mxu0 %v1539
    %1926 = vmatprep.subr.bf16.mxu0 %v1532
    %1927 = vmatpush1.bf16.msra.mxu0 %v1531
    %1928 = vmatprep.subr.bf16.mxu0 %v1524
    %1929 = vmatpush1.bf16.msra.mxu0 %v1523
    %1930 = vmatprep.subr.bf16.mxu0 %v1516
    %1931 = vmatpush1.bf16.msra.mxu0 %v1515
    %1932 = vmatprep.subr.bf16.mxu0 %v1508
    %1933 = vmatpush1.bf16.msra.mxu0 %v1507
    %1934 = vmatprep.subr.bf16.mxu0 %v1500
    %1935 = vmatpush1.bf16.msra.mxu0 %v1499
    %1936 = vmatprep.subr.bf16.mxu0 %v1492
    %1937 = vmatpush1.bf16.msra.mxu0 %v1491
    %1938 = vmatprep.subr.bf16.mxu0 0
    %1939 = vmatpush2.bf16.msra.mxu0 0
    %1940 = vmatprep.subr.bf16.mxu0 0
    %1941 = vmatpush2.bf16.msra.mxu0 0
    %1942 = vmatprep.subr.bf16.mxu0 0
    %1943 = vmatpush2.bf16.msra.mxu0 0
    %1944 = vmatprep.subr.bf16.mxu0 0
    %1945 = vmatpush2.bf16.msra.mxu0 0
    %1946 = vmatprep.subr.bf16.mxu0 0
    %1947 = vmatpush2.bf16.msra.mxu0 0
    %1948 = vmatprep.subr.bf16.mxu0 0
    %1949 = vmatpush2.bf16.msra.mxu0 0
    %1950 = vmatprep.subr.bf16.mxu0 0
    %1951 = vmatpush2.bf16.msra.mxu0 0
    %1952 = vmatprep.subr.bf16.mxu0 0
    %1953 = vmatpush2.bf16.msra.mxu0 0
    %1954 = vmatprep.mubr.bf16.mxu0 0
    %1955 = vmatmul.mubr.bf16.gmra.mxu0 %v1921
    %v1956 = vpop.f32.mrf.mxu0
    %v1957 = vadd.f32 0.0, %v1956
    %v1958 = vpop.f32.mrf.mxu0
    %v1959 = vadd.f32 0.0, %v1958
    %v1960 = vpop.f32.mrf.mxu0
    %v1961 = vpop.f32.mrf.mxu0
    %1962 = vdwg.mxu0
    %1963 = vmatprep.subr.bf16.mxu0 %v1550
    %1964 = vmatpush1.bf16.msra.mxu0 %v1549
    %1965 = vmatprep.subr.bf16.mxu0 %v1542
    %1966 = vmatpush1.bf16.msra.mxu0 %v1541
    %1967 = vmatprep.subr.bf16.mxu0 %v1534
    %1968 = vmatpush1.bf16.msra.mxu0 %v1533
    %1969 = vmatprep.subr.bf16.mxu0 %v1526
    %1970 = vmatpush1.bf16.msra.mxu0 %v1525
    %1971 = vmatprep.subr.bf16.mxu0 %v1518
    %1972 = vmatpush1.bf16.msra.mxu0 %v1517
    %1973 = vmatprep.subr.bf16.mxu0 %v1510
    %1974 = vmatpush1.bf16.msra.mxu0 %v1509
    %1975 = vmatprep.subr.bf16.mxu0 %v1502
    %1976 = vmatpush1.bf16.msra.mxu0 %v1501
    %1977 = vmatprep.subr.bf16.mxu0 %v1494
    %1978 = vmatpush1.bf16.msra.mxu0 %v1493
    %1979 = vmatprep.subr.bf16.mxu0 0
    %1980 = vmatpush2.bf16.msra.mxu0 0
    %1981 = vmatprep.subr.bf16.mxu0 0
    %1982 = vmatpush2.bf16.msra.mxu0 0
    %1983 = vmatprep.subr.bf16.mxu0 0
    %1984 = vmatpush2.bf16.msra.mxu0 0
    %1985 = vmatprep.subr.bf16.mxu0 0
    %1986 = vmatpush2.bf16.msra.mxu0 0
    %1987 = vmatprep.subr.bf16.mxu0 0
    %1988 = vmatpush2.bf16.msra.mxu0 0
    %1989 = vmatprep.subr.bf16.mxu0 0
    %1990 = vmatpush2.bf16.msra.mxu0 0
    %1991 = vmatprep.subr.bf16.mxu0 0
    %1992 = vmatpush2.bf16.msra.mxu0 0
    %1993 = vmatprep.subr.bf16.mxu0 0
    %1994 = vmatpush2.bf16.msra.mxu0 0
    %1995 = vmatprep.mubr.bf16.mxu0 0
    %1996 = vmatmul.mubr.bf16.gmra.mxu0 %v1921
    %v1997 = vpop.f32.mrf.mxu0
    %v1998 = vadd.f32 0.0, %v1997
    %v1999 = vpop.f32.mrf.mxu0
    %v2000 = vadd.f32 0.0, %v1999
    %v2001 = vpop.f32.mrf.mxu0
    %v2002 = vpop.f32.mrf.mxu0
    %2003 = vdwg.mxu0
    %2004 = vmatprep.subr.bf16.mxu0 %v1552
    %2005 = vmatpush1.bf16.msra.mxu0 %v1551
    %2006 = vmatprep.subr.bf16.mxu0 %v1544
    %2007 = vmatpush1.bf16.msra.mxu0 %v1543
    %2008 = vmatprep.subr.bf16.mxu0 %v1536
    %2009 = vmatpush1.bf16.msra.mxu0 %v1535
    %2010 = vmatprep.subr.bf16.mxu0 %v1528
    %2011 = vmatpush1.bf16.msra.mxu0 %v1527
    %2012 = vmatprep.subr.bf16.mxu0 %v1520
    %2013 = vmatpush1.bf16.msra.mxu0 %v1519
    %2014 = vmatprep.subr.bf16.mxu0 %v1512
    %2015 = vmatpush1.bf16.msra.mxu0 %v1511
    %2016 = vmatprep.subr.bf16.mxu0 %v1504
    %2017 = vmatpush1.bf16.msra.mxu0 %v1503
    %2018 = vmatprep.subr.bf16.mxu0 %v1496
    %2019 = vmatpush1.bf16.msra.mxu0 %v1495
    %2020 = vmatprep.subr.bf16.mxu0 0
    %2021 = vmatpush2.bf16.msra.mxu0 0
    %2022 = vmatprep.subr.bf16.mxu0 0
    %2023 = vmatpush2.bf16.msra.mxu0 0
    %2024 = vmatprep.subr.bf16.mxu0 0
    %2025 = vmatpush2.bf16.msra.mxu0 0
    %2026 = vmatprep.subr.bf16.mxu0 0
    %2027 = vmatpush2.bf16.msra.mxu0 0
    %2028 = vmatprep.subr.bf16.mxu0 0
    %2029 = vmatpush2.bf16.msra.mxu0 0
    %2030 = vmatprep.subr.bf16.mxu0 0
    %2031 = vmatpush2.bf16.msra.mxu0 0
    %2032 = vmatprep.subr.bf16.mxu0 0
    %2033 = vmatpush2.bf16.msra.mxu0 0
    %2034 = vmatprep.subr.bf16.mxu0 0
    %2035 = vmatpush2.bf16.msra.mxu0 0
    %2036 = vmatprep.mubr.bf16.mxu0 0
    %2037 = vmatmul.mubr.bf16.gmra.mxu0 %v1921
    %v2038 = vpop.f32.mrf.mxu0
    %v2039 = vadd.f32 0.0, %v2038
    %v2040 = vpop.f32.mrf.mxu0
    %v2041 = vadd.f32 0.0, %v2040
    %v2042 = vpop.f32.mrf.mxu0
    %v2043 = vpop.f32.mrf.mxu0
    %2044 = vdwg.mxu0
    %2045 = vmatprep.subr.bf16.mxu0 %v1554
    %2046 = vmatpush1.bf16.msra.mxu0 %v1553
    %2047 = vmatprep.subr.bf16.mxu0 %v1546
    %2048 = vmatpush1.bf16.msra.mxu0 %v1545
    %2049 = vmatprep.subr.bf16.mxu0 %v1538
    %2050 = vmatpush1.bf16.msra.mxu0 %v1537
    %2051 = vmatprep.subr.bf16.mxu0 %v1530
    %2052 = vmatpush1.bf16.msra.mxu0 %v1529
    %2053 = vmatprep.subr.bf16.mxu0 %v1522
    %2054 = vmatpush1.bf16.msra.mxu0 %v1521
    %2055 = vmatprep.subr.bf16.mxu0 %v1514
    %2056 = vmatpush1.bf16.msra.mxu0 %v1513
    %2057 = vmatprep.subr.bf16.mxu0 %v1506
    %2058 = vmatpush1.bf16.msra.mxu0 %v1505
    %2059 = vmatprep.subr.bf16.mxu0 %v1498
    %2060 = vmatpush1.bf16.msra.mxu0 %v1497
    %2061 = vmatprep.subr.bf16.mxu0 0
    %2062 = vmatpush2.bf16.msra.mxu0 0
    %2063 = vmatprep.subr.bf16.mxu0 0
    %2064 = vmatpush2.bf16.msra.mxu0 0
    %2065 = vmatprep.subr.bf16.mxu0 0
    %2066 = vmatpush2.bf16.msra.mxu0 0
    %2067 = vmatprep.subr.bf16.mxu0 0
    %2068 = vmatpush2.bf16.msra.mxu0 0
    %2069 = vmatprep.subr.bf16.mxu0 0
    %2070 = vmatpush2.bf16.msra.mxu0 0
    %2071 = vmatprep.subr.bf16.mxu0 0
    %2072 = vmatpush2.bf16.msra.mxu0 0
    %2073 = vmatprep.subr.bf16.mxu0 0
    %2074 = vmatpush2.bf16.msra.mxu0 0
    %2075 = vmatprep.subr.bf16.mxu0 0
    %2076 = vmatpush2.bf16.msra.mxu0 0
    %2077 = vmatprep.mubr.bf16.mxu0 0
    %2078 = vmatmul.mubr.bf16.gmra.mxu0 %v1921
    %v2079 = vpop.f32.mrf.mxu0
    %v2080 = vadd.f32 0.0, %v2079
    %v2081 = vpop.f32.mrf.mxu0
    %v2082 = vadd.f32 0.0, %v2081
    %v2083 = vpop.f32.mrf.mxu0
    %v2084 = vpop.f32.mrf.mxu0
    %2085 = vdwg.mxu0
    %v2086 = vld [vmem:[%s1072] sm:$0xff]
    %v2091 = vcombine.low %v1957, %v1959
    %v2092 = vcombine.low %v1998, %v2000
    %v2094 = vunpack.c.l.s4 1983009808
    %v2095 = vunpack.c.0.s8 %v2094
    %v2096 = vlaneseq
    %v2097 = vshrl.u32 %v2096, 7
    %v2098 = vsub.s32 %v2095, %v2097
    %v2099 = vrot.slane %v2091, %v2098
    %v2101 = vunpack.c.l.s4 1983009808
    %v2102 = vunpack.c.0.s8 %v2101
    %v2103 = vlaneseq
    %v2104 = vshrl.u32 %v2103, 7
    %v2105 = vsub.s32 %v2102, %v2104
    %v2106 = vrot.slane %v2092, %v2105
    %v2107 = vcombine.low %v2099, %v2106
    %v2109 = vadd.f32 %v2086, %v2107
    %v2110 = vld [vmem:[%s1220] sm:$0xff]
    %v2115 = vcombine.low %v2039, %v2041
    %v2116 = vcombine.low %v2080, %v2082
    %v2118 = vunpack.c.l.s4 1983009808
    %v2119 = vunpack.c.0.s8 %v2118
    %v2120 = vlaneseq
    %v2121 = vshrl.u32 %v2120, 7
    %v2122 = vsub.s32 %v2119, %v2121
    %v2123 = vrot.slane %v2115, %v2122
    %v2125 = vunpack.c.l.s4 1983009808
    %v2126 = vunpack.c.0.s8 %v2125
    %v2127 = vlaneseq
    %v2128 = vshrl.u32 %v2127, 7
    %v2129 = vsub.s32 %v2126, %v2128
    %v2130 = vrot.slane %v2116, %v2129
    %v2131 = vcombine.high %v2123, %v2130
    %v2133 = vadd.f32 %v2110, %v2131
    %v2135 = vcombine.high %v2109, %v2109
    %v2137 = vunpack.c.l.s4 1983009808
    %v2138 = vunpack.c.0.s8 %v2137
    %v2139 = vlaneseq
    %v2140 = vshrl.u32 %v2139, 7
    %v2141 = vsub.s32 %v2138, %v2140
    %v2142 = vrot.slane %v2109, %v2141
    %v2144 = vunpack.c.l.s4 1983009808
    %v2145 = vunpack.c.0.s8 %v2144
    %v2146 = vlaneseq
    %v2147 = vshrl.u32 %v2146, 7
    %v2148 = vsub.s32 %v2145, %v2147
    %v2149 = vrot.slane %v2135, %v2148
    %v2150 = vcombine.high %v2142, %v2142
    %v2151 = vcombine.high %v2149, %v2149
    %v2157 = vcombine.low %v2133, %v2133
    %v2159 = vunpack.c.l.s4 1983009808
    %v2160 = vunpack.c.0.s8 %v2159
    %v2161 = vlaneseq
    %v2162 = vshrl.u32 %v2161, 7
    %v2163 = vsub.s32 %v2160, %v2162
    %v2164 = vrot.slane %v2157, %v2163
    %v2166 = vunpack.c.l.s4 1983009808
    %v2167 = vunpack.c.0.s8 %v2166
    %v2168 = vlaneseq
    %v2169 = vshrl.u32 %v2168, 7
    %v2170 = vsub.s32 %v2167, %v2169
    %v2171 = vrot.slane %v2133, %v2170
    %v2172 = vcombine.high %v2164, %v2164
    %v2173 = vcombine.high %v2171, %v2171
    %v2178 = vsel %vm1875, %v2142, %v2164
    %v2179 = vsel %vm1875, %v2150, %v2172
    %v2180 = vsel %vm1875, %v2149, %v2171
    %v2181 = vsel %vm1875, %v2151, %v2173
    %v2182 = vxor.u32 %v2178, 2147483648
    %v2183 = vmul.f32 %v2182, 1.442695
    %v2184 = vpow.pop %v2183
    %v2185 = vadd.f32 %v2184, 1.0
    %v2186 = vrcp.pop %v2185
    %v2187 = vmul.f32 1.0, %v2186
    %v2188 = vxor.u32 %v2179, 2147483648
    %v2189 = vmul.f32 %v2188, 1.442695
    %v2190 = vpow.pop %v2189
    %v2191 = vadd.f32 %v2190, 1.0
    %v2192 = vrcp.pop %v2191
    %v2193 = vmul.f32 1.0, %v2192
    %v2194 = vtanh.pop %v2180
    %v2195 = vxor.u32 %v2181, 2147483648
    %v2196 = vmul.f32 %v2195, 1.442695
    %v2197 = vpow.pop %v2196
    %v2198 = vadd.f32 %v2197, 1.0
    %v2199 = vrcp.pop %v2198
    %v2200 = vmul.f32 1.0, %v2199
    %v2201 = vmul.f32 %v2193, %v1920
    %v2202 = vmul.f32 %v2187, %v2194
    %v2203 = vadd.f32 %v2201, %v2202
    %v2204 = vtanh.pop %v2203
    %v2205 = vmul.f32 %v2200, %v2204
    %2206 = vst [vmem:[#allocation5] sm:$0xf] %v2203
    %2207 = vst [vmem:[#allocation4] sm:$0xf] %v2205
    %s2208 = scalar_lea.vmem [#allocation9], 4
    %2209 = vst [vmem:[%s2208] sm:$0x3] %v2205
    %v2212 = vunpack.c.l.s4 1983009808
    %v2213 = vunpack.c.0.s8 %v2212
    %v2214 = vlaneseq
    %v2215 = vshrl.u32 %v2214, 7
    %v2216 = vsub.s32 %v2213, %v2215
    %v2217 = vrot.slane %v2205, %v2216
    %v2218 = vcombine.high %v2217, %v2217
    %s2220 = scalar_lea.vmem [#allocation9], 24
    %2221 = vst [vmem:[%s2220 + $0x2] sm:$0x3] %v2218
    %v2222 = vld [vmem:[#allocation4] sm:$0xf]
    %v2223 = vld [vmem:[#allocation5] sm:$0xf]
    %v2224 = vpack.c.bf16 %v2222, %v2222
    %2225 = vmatprep.subr.bf16.mxu0 %v1548
    %2226 = vmatpush1.bf16.msra.mxu0 %v1547
    %2227 = vmatprep.subr.bf16.mxu0 %v1540
    %2228 = vmatpush1.bf16.msra.mxu0 %v1539
    %2229 = vmatprep.subr.bf16.mxu0 %v1532
    %2230 = vmatpush1.bf16.msra.mxu0 %v1531
    %2231 = vmatprep.subr.bf16.mxu0 %v1524
    %2232 = vmatpush1.bf16.msra.mxu0 %v1523
    %2233 = vmatprep.subr.bf16.mxu0 %v1516
    %2234 = vmatpush1.bf16.msra.mxu0 %v1515
    %2235 = vmatprep.subr.bf16.mxu0 %v1508
    %2236 = vmatpush1.bf16.msra.mxu0 %v1507
    %2237 = vmatprep.subr.bf16.mxu0 %v1500
    %2238 = vmatpush1.bf16.msra.mxu0 %v1499
    %2239 = vmatprep.subr.bf16.mxu0 %v1492
    %2240 = vmatpush1.bf16.msra.mxu0 %v1491
    %2241 = vmatprep.subr.bf16.mxu0 0
    %2242 = vmatpush2.bf16.msra.mxu0 0
    %2243 = vmatprep.subr.bf16.mxu0 0
    %2244 = vmatpush2.bf16.msra.mxu0 0
    %2245 = vmatprep.subr.bf16.mxu0 0
    %2246 = vmatpush2.bf16.msra.mxu0 0
    %2247 = vmatprep.subr.bf16.mxu0 0
    %2248 = vmatpush2.bf16.msra.mxu0 0
    %2249 = vmatprep.subr.bf16.mxu0 0
    %2250 = vmatpush2.bf16.msra.mxu0 0
    %2251 = vmatprep.subr.bf16.mxu0 0
    %2252 = vmatpush2.bf16.msra.mxu0 0
    %2253 = vmatprep.subr.bf16.mxu0 0
    %2254 = vmatpush2.bf16.msra.mxu0 0
    %2255 = vmatprep.subr.bf16.mxu0 0
    %2256 = vmatpush2.bf16.msra.mxu0 0
    %2257 = vmatprep.mubr.bf16.mxu0 0
    %2258 = vmatmul.mubr.bf16.gmra.mxu0 %v2224
    %v2259 = vpop.f32.mrf.mxu0
    %v2260 = vadd.f32 0.0, %v2259
    %v2261 = vpop.f32.mrf.mxu0
    %v2262 = vadd.f32 0.0, %v2261
    %v2263 = vpop.f32.mrf.mxu0
    %v2264 = vpop.f32.mrf.mxu0
    %2265 = vdwg.mxu0
    %2266 = vmatprep.subr.bf16.mxu0 %v1550
    %2267 = vmatpush1.bf16.msra.mxu0 %v1549
    %2268 = vmatprep.subr.bf16.mxu0 %v1542
    %2269 = vmatpush1.bf16.msra.mxu0 %v1541
    %2270 = vmatprep.subr.bf16.mxu0 %v1534
    %2271 = vmatpush1.bf16.msra.mxu0 %v1533
    %2272 = vmatprep.subr.bf16.mxu0 %v1526
    %2273 = vmatpush1.bf16.msra.mxu0 %v1525
    %2274 = vmatprep.subr.bf16.mxu0 %v1518
    %2275 = vmatpush1.bf16.msra.mxu0 %v1517
    %2276 = vmatprep.subr.bf16.mxu0 %v1510
    %2277 = vmatpush1.bf16.msra.mxu0 %v1509
    %2278 = vmatprep.subr.bf16.mxu0 %v1502
    %2279 = vmatpush1.bf16.msra.mxu0 %v1501
    %2280 = vmatprep.subr.bf16.mxu0 %v1494
    %2281 = vmatpush1.bf16.msra.mxu0 %v1493
    %2282 = vmatprep.subr.bf16.mxu0 0
    %2283 = vmatpush2.bf16.msra.mxu0 0
    %2284 = vmatprep.subr.bf16.mxu0 0
    %2285 = vmatpush2.bf16.msra.mxu0 0
    %2286 = vmatprep.subr.bf16.mxu0 0
    %2287 = vmatpush2.bf16.msra.mxu0 0
    %2288 = vmatprep.subr.bf16.mxu0 0
    %2289 = vmatpush2.bf16.msra.mxu0 0
    %2290 = vmatprep.subr.bf16.mxu0 0
    %2291 = vmatpush2.bf16.msra.mxu0 0
    %2292 = vmatprep.subr.bf16.mxu0 0
    %2293 = vmatpush2.bf16.msra.mxu0 0
    %2294 = vmatprep.subr.bf16.mxu0 0
    %2295 = vmatpush2.bf16.msra.mxu0 0
    %2296 = vmatprep.subr.bf16.mxu0 0
    %2297 = vmatpush2.bf16.msra.mxu0 0
    %2298 = vmatprep.mubr.bf16.mxu0 0
    %2299 = vmatmul.mubr.bf16.gmra.mxu0 %v2224
    %v2300 = vpop.f32.mrf.mxu0
    %v2301 = vadd.f32 0.0, %v2300
    %v2302 = vpop.f32.mrf.mxu0
    %v2303 = vadd.f32 0.0, %v2302
    %v2304 = vpop.f32.mrf.mxu0
    %v2305 = vpop.f32.mrf.mxu0
    %2306 = vdwg.mxu0
    %2307 = vmatprep.subr.bf16.mxu0 %v1552
    %2308 = vmatpush1.bf16.msra.mxu0 %v1551
    %2309 = vmatprep.subr.bf16.mxu0 %v1544
    %2310 = vmatpush1.bf16.msra.mxu0 %v1543
    %2311 = vmatprep.subr.bf16.mxu0 %v1536
    %2312 = vmatpush1.bf16.msra.mxu0 %v1535
    %2313 = vmatprep.subr.bf16.mxu0 %v1528
    %2314 = vmatpush1.bf16.msra.mxu0 %v1527
    %2315 = vmatprep.subr.bf16.mxu0 %v1520
    %2316 = vmatpush1.bf16.msra.mxu0 %v1519
    %2317 = vmatprep.subr.bf16.mxu0 %v1512
    %2318 = vmatpush1.bf16.msra.mxu0 %v1511
    %2319 = vmatprep.subr.bf16.mxu0 %v1504
    %2320 = vmatpush1.bf16.msra.mxu0 %v1503
    %2321 = vmatprep.subr.bf16.mxu0 %v1496
    %2322 = vmatpush1.bf16.msra.mxu0 %v1495
    %2323 = vmatprep.subr.bf16.mxu0 0
    %2324 = vmatpush2.bf16.msra.mxu0 0
    %2325 = vmatprep.subr.bf16.mxu0 0
    %2326 = vmatpush2.bf16.msra.mxu0 0
    %2327 = vmatprep.subr.bf16.mxu0 0
    %2328 = vmatpush2.bf16.msra.mxu0 0
    %2329 = vmatprep.subr.bf16.mxu0 0
    %2330 = vmatpush2.bf16.msra.mxu0 0
    %2331 = vmatprep.subr.bf16.mxu0 0
    %2332 = vmatpush2.bf16.msra.mxu0 0
    %2333 = vmatprep.subr.bf16.mxu0 0
    %2334 = vmatpush2.bf16.msra.mxu0 0
    %2335 = vmatprep.subr.bf16.mxu0 0
    %2336 = vmatpush2.bf16.msra.mxu0 0
    %2337 = vmatprep.subr.bf16.mxu0 0
    %2338 = vmatpush2.bf16.msra.mxu0 0
    %2339 = vmatprep.mubr.bf16.mxu0 0
    %2340 = vmatmul.mubr.bf16.gmra.mxu0 %v2224
    %v2341 = vpop.f32.mrf.mxu0
    %v2342 = vadd.f32 0.0, %v2341
    %v2343 = vpop.f32.mrf.mxu0
    %v2344 = vadd.f32 0.0, %v2343
    %v2345 = vpop.f32.mrf.mxu0
    %v2346 = vpop.f32.mrf.mxu0
    %2347 = vdwg.mxu0
    %2348 = vmatprep.subr.bf16.mxu0 %v1554
    %2349 = vmatpush1.bf16.msra.mxu0 %v1553
    %2350 = vmatprep.subr.bf16.mxu0 %v1546
    %2351 = vmatpush1.bf16.msra.mxu0 %v1545
    %2352 = vmatprep.subr.bf16.mxu0 %v1538
    %2353 = vmatpush1.bf16.msra.mxu0 %v1537
    %2354 = vmatprep.subr.bf16.mxu0 %v1530
    %2355 = vmatpush1.bf16.msra.mxu0 %v1529
    %2356 = vmatprep.subr.bf16.mxu0 %v1522
    %2357 = vmatpush1.bf16.msra.mxu0 %v1521
    %2358 = vmatprep.subr.bf16.mxu0 %v1514
    %2359 = vmatpush1.bf16.msra.mxu0 %v1513
    %2360 = vmatprep.subr.bf16.mxu0 %v1506
    %2361 = vmatpush1.bf16.msra.mxu0 %v1505
    %2362 = vmatprep.subr.bf16.mxu0 %v1498
    %2363 = vmatpush1.bf16.msra.mxu0 %v1497
    %2364 = vmatprep.subr.bf16.mxu0 0
    %2365 = vmatpush2.bf16.msra.mxu0 0
    %2366 = vmatprep.subr.bf16.mxu0 0
    %2367 = vmatpush2.bf16.msra.mxu0 0
    %2368 = vmatprep.subr.bf16.mxu0 0
    %2369 = vmatpush2.bf16.msra.mxu0 0
    %2370 = vmatprep.subr.bf16.mxu0 0
    %2371 = vmatpush2.bf16.msra.mxu0 0
    %2372 = vmatprep.subr.bf16.mxu0 0
    %2373 = vmatpush2.bf16.msra.mxu0 0
    %2374 = vmatprep.subr.bf16.mxu0 0
    %2375 = vmatpush2.bf16.msra.mxu0 0
    %2376 = vmatprep.subr.bf16.mxu0 0
    %2377 = vmatpush2.bf16.msra.mxu0 0
    %2378 = vmatprep.subr.bf16.mxu0 0
    %2379 = vmatpush2.bf16.msra.mxu0 0
    %2380 = vmatprep.mubr.bf16.mxu0 0
    %2381 = vmatmul.mubr.bf16.gmra.mxu0 %v2224
    %v2382 = vpop.f32.mrf.mxu0
    %v2383 = vadd.f32 0.0, %v2382
    %v2384 = vpop.f32.mrf.mxu0
    %v2385 = vadd.f32 0.0, %v2384
    %v2386 = vpop.f32.mrf.mxu0
    %v2387 = vpop.f32.mrf.mxu0
    %2388 = vdwg.mxu0
    %v2389 = vld [vmem:[%s1096] sm:$0xff]
    %v2394 = vcombine.low %v2260, %v2262
    %v2395 = vcombine.low %v2301, %v2303
    %v2397 = vunpack.c.l.s4 1983009808
    %v2398 = vunpack.c.0.s8 %v2397
    %v2399 = vlaneseq
    %v2400 = vshrl.u32 %v2399, 7
    %v2401 = vsub.s32 %v2398, %v2400
    %v2402 = vrot.slane %v2394, %v2401
    %v2404 = vunpack.c.l.s4 1983009808
    %v2405 = vunpack.c.0.s8 %v2404
    %v2406 = vlaneseq
    %v2407 = vshrl.u32 %v2406, 7
    %v2408 = vsub.s32 %v2405, %v2407
    %v2409 = vrot.slane %v2395, %v2408
    %v2410 = vcombine.low %v2402, %v2409
    %v2412 = vadd.f32 %v2389, %v2410
    %v2413 = vld [vmem:[%s1180] sm:$0xff]
    %v2418 = vcombine.low %v2342, %v2344
    %v2419 = vcombine.low %v2383, %v2385
    %v2421 = vunpack.c.l.s4 1983009808
    %v2422 = vunpack.c.0.s8 %v2421
    %v2423 = vlaneseq
    %v2424 = vshrl.u32 %v2423, 7
    %v2425 = vsub.s32 %v2422, %v2424
    %v2426 = vrot.slane %v2418, %v2425
    %v2428 = vunpack.c.l.s4 1983009808
    %v2429 = vunpack.c.0.s8 %v2428
    %v2430 = vlaneseq
    %v2431 = vshrl.u32 %v2430, 7
    %v2432 = vsub.s32 %v2429, %v2431
    %v2433 = vrot.slane %v2419, %v2432
    %v2434 = vcombine.high %v2426, %v2433
    %v2436 = vadd.f32 %v2413, %v2434
    %v2438 = vcombine.high %v2412, %v2412
    %v2440 = vunpack.c.l.s4 1983009808
    %v2441 = vunpack.c.0.s8 %v2440
    %v2442 = vlaneseq
    %v2443 = vshrl.u32 %v2442, 7
    %v2444 = vsub.s32 %v2441, %v2443
    %v2445 = vrot.slane %v2412, %v2444
    %v2447 = vunpack.c.l.s4 1983009808
    %v2448 = vunpack.c.0.s8 %v2447
    %v2449 = vlaneseq
    %v2450 = vshrl.u32 %v2449, 7
    %v2451 = vsub.s32 %v2448, %v2450
    %v2452 = vrot.slane %v2438, %v2451
    %v2453 = vcombine.high %v2445, %v2445
    %v2454 = vcombine.high %v2452, %v2452
    %v2460 = vcombine.low %v2436, %v2436
    %v2462 = vunpack.c.l.s4 1983009808
    %v2463 = vunpack.c.0.s8 %v2462
    %v2464 = vlaneseq
    %v2465 = vshrl.u32 %v2464, 7
    %v2466 = vsub.s32 %v2463, %v2465
    %v2467 = vrot.slane %v2460, %v2466
    %v2469 = vunpack.c.l.s4 1983009808
    %v2470 = vunpack.c.0.s8 %v2469
    %v2471 = vlaneseq
    %v2472 = vshrl.u32 %v2471, 7
    %v2473 = vsub.s32 %v2470, %v2472
    %v2474 = vrot.slane %v2436, %v2473
    %v2475 = vcombine.high %v2467, %v2467
    %v2476 = vcombine.high %v2474, %v2474
    %v2481 = vsel %vm1875, %v2445, %v2467
    %v2482 = vsel %vm1875, %v2453, %v2475
    %v2483 = vsel %vm1875, %v2452, %v2474
    %v2484 = vsel %vm1875, %v2454, %v2476
    %v2485 = vxor.u32 %v2481, 2147483648
    %v2486 = vmul.f32 %v2485, 1.442695
    %v2487 = vpow.pop %v2486
    %v2488 = vadd.f32 %v2487, 1.0
    %v2489 = vrcp.pop %v2488
    %v2490 = vmul.f32 1.0, %v2489
    %v2491 = vxor.u32 %v2482, 2147483648
    %v2492 = vmul.f32 %v2491, 1.442695
    %v2493 = vpow.pop %v2492
    %v2494 = vadd.f32 %v2493, 1.0
    %v2495 = vrcp.pop %v2494
    %v2496 = vmul.f32 1.0, %v2495
    %v2497 = vtanh.pop %v2483
    %v2498 = vxor.u32 %v2484, 2147483648
    %v2499 = vmul.f32 %v2498, 1.442695
    %v2500 = vpow.pop %v2499
    %v2501 = vadd.f32 %v2500, 1.0
    %v2502 = vrcp.pop %v2501
    %v2503 = vmul.f32 1.0, %v2502
    %v2504 = vmul.f32 %v2496, %v2223
    %v2505 = vmul.f32 %v2490, %v2497
    %v2506 = vadd.f32 %v2504, %v2505
    %v2507 = vtanh.pop %v2506
    %v2508 = vmul.f32 %v2503, %v2507
    %2509 = vst [vmem:[#allocation5] sm:$0xf] %v2506
    %2510 = vst [vmem:[#allocation4] sm:$0xf] %v2508
    %s2511 = scalar_lea.vmem [#allocation9], 8
    %2512 = vst [vmem:[%s2511] sm:$0x3] %v2508
    %v2515 = vunpack.c.l.s4 1983009808
    %v2516 = vunpack.c.0.s8 %v2515
    %v2517 = vlaneseq
    %v2518 = vshrl.u32 %v2517, 7
    %v2519 = vsub.s32 %v2516, %v2518
    %v2520 = vrot.slane %v2508, %v2519
    %v2521 = vcombine.high %v2520, %v2520
    %s2523 = scalar_lea.vmem [#allocation9], 20
    %2524 = vst [vmem:[%s2523 + $0x2] sm:$0x3] %v2521
    %v2525 = vld [vmem:[#allocation4] sm:$0xf]
    %v2526 = vld [vmem:[#allocation5] sm:$0xf]
    %v2527 = vpack.c.bf16 %v2525, %v2525
    %2528 = vmatprep.subr.bf16.mxu0 %v1548
    %2529 = vmatpush1.bf16.msra.mxu0 %v1547
    %2530 = vmatprep.subr.bf16.mxu0 %v1540
    %2531 = vmatpush1.bf16.msra.mxu0 %v1539
    %2532 = vmatprep.subr.bf16.mxu0 %v1532
    %2533 = vmatpush1.bf16.msra.mxu0 %v1531
    %2534 = vmatprep.subr.bf16.mxu0 %v1524
    %2535 = vmatpush1.bf16.msra.mxu0 %v1523
    %2536 = vmatprep.subr.bf16.mxu0 %v1516
    %2537 = vmatpush1.bf16.msra.mxu0 %v1515
    %2538 = vmatprep.subr.bf16.mxu0 %v1508
    %2539 = vmatpush1.bf16.msra.mxu0 %v1507
    %2540 = vmatprep.subr.bf16.mxu0 %v1500
    %2541 = vmatpush1.bf16.msra.mxu0 %v1499
    %2542 = vmatprep.subr.bf16.mxu0 %v1492
    %2543 = vmatpush1.bf16.msra.mxu0 %v1491
    %2544 = vmatprep.subr.bf16.mxu0 0
    %2545 = vmatpush2.bf16.msra.mxu0 0
    %2546 = vmatprep.subr.bf16.mxu0 0
    %2547 = vmatpush2.bf16.msra.mxu0 0
    %2548 = vmatprep.subr.bf16.mxu0 0
    %2549 = vmatpush2.bf16.msra.mxu0 0
    %2550 = vmatprep.subr.bf16.mxu0 0
    %2551 = vmatpush2.bf16.msra.mxu0 0
    %2552 = vmatprep.subr.bf16.mxu0 0
    %2553 = vmatpush2.bf16.msra.mxu0 0
    %2554 = vmatprep.subr.bf16.mxu0 0
    %2555 = vmatpush2.bf16.msra.mxu0 0
    %2556 = vmatprep.subr.bf16.mxu0 0
    %2557 = vmatpush2.bf16.msra.mxu0 0
    %2558 = vmatprep.subr.bf16.mxu0 0
    %2559 = vmatpush2.bf16.msra.mxu0 0
    %2560 = vmatprep.mubr.bf16.mxu0 0
    %2561 = vmatmul.mubr.bf16.gmra.mxu0 %v2527
    %v2562 = vpop.f32.mrf.mxu0
    %v2563 = vadd.f32 0.0, %v2562
    %v2564 = vpop.f32.mrf.mxu0
    %v2565 = vadd.f32 0.0, %v2564
    %v2566 = vpop.f32.mrf.mxu0
    %v2567 = vpop.f32.mrf.mxu0
    %2568 = vdwg.mxu0
    %2569 = vmatprep.subr.bf16.mxu0 %v1550
    %2570 = vmatpush1.bf16.msra.mxu0 %v1549
    %2571 = vmatprep.subr.bf16.mxu0 %v1542
    %2572 = vmatpush1.bf16.msra.mxu0 %v1541
    %2573 = vmatprep.subr.bf16.mxu0 %v1534
    %2574 = vmatpush1.bf16.msra.mxu0 %v1533
    %2575 = vmatprep.subr.bf16.mxu0 %v1526
    %2576 = vmatpush1.bf16.msra.mxu0 %v1525
    %2577 = vmatprep.subr.bf16.mxu0 %v1518
    %2578 = vmatpush1.bf16.msra.mxu0 %v1517
    %2579 = vmatprep.subr.bf16.mxu0 %v1510
    %2580 = vmatpush1.bf16.msra.mxu0 %v1509
    %2581 = vmatprep.subr.bf16.mxu0 %v1502
    %2582 = vmatpush1.bf16.msra.mxu0 %v1501
    %2583 = vmatprep.subr.bf16.mxu0 %v1494
    %2584 = vmatpush1.bf16.msra.mxu0 %v1493
    %2585 = vmatprep.subr.bf16.mxu0 0
    %2586 = vmatpush2.bf16.msra.mxu0 0
    %2587 = vmatprep.subr.bf16.mxu0 0
    %2588 = vmatpush2.bf16.msra.mxu0 0
    %2589 = vmatprep.subr.bf16.mxu0 0
    %2590 = vmatpush2.bf16.msra.mxu0 0
    %2591 = vmatprep.subr.bf16.mxu0 0
    %2592 = vmatpush2.bf16.msra.mxu0 0
    %2593 = vmatprep.subr.bf16.mxu0 0
    %2594 = vmatpush2.bf16.msra.mxu0 0
    %2595 = vmatprep.subr.bf16.mxu0 0
    %2596 = vmatpush2.bf16.msra.mxu0 0
    %2597 = vmatprep.subr.bf16.mxu0 0
    %2598 = vmatpush2.bf16.msra.mxu0 0
    %2599 = vmatprep.subr.bf16.mxu0 0
    %2600 = vmatpush2.bf16.msra.mxu0 0
    %2601 = vmatprep.mubr.bf16.mxu0 0
    %2602 = vmatmul.mubr.bf16.gmra.mxu0 %v2527
    %v2603 = vpop.f32.mrf.mxu0
    %v2604 = vadd.f32 0.0, %v2603
    %v2605 = vpop.f32.mrf.mxu0
    %v2606 = vadd.f32 0.0, %v2605
    %v2607 = vpop.f32.mrf.mxu0
    %v2608 = vpop.f32.mrf.mxu0
    %2609 = vdwg.mxu0
    %2610 = vmatprep.subr.bf16.mxu0 %v1552
    %2611 = vmatpush1.bf16.msra.mxu0 %v1551
    %2612 = vmatprep.subr.bf16.mxu0 %v1544
    %2613 = vmatpush1.bf16.msra.mxu0 %v1543
    %2614 = vmatprep.subr.bf16.mxu0 %v1536
    %2615 = vmatpush1.bf16.msra.mxu0 %v1535
    %2616 = vmatprep.subr.bf16.mxu0 %v1528
    %2617 = vmatpush1.bf16.msra.mxu0 %v1527
    %2618 = vmatprep.subr.bf16.mxu0 %v1520
    %2619 = vmatpush1.bf16.msra.mxu0 %v1519
    %2620 = vmatprep.subr.bf16.mxu0 %v1512
    %2621 = vmatpush1.bf16.msra.mxu0 %v1511
    %2622 = vmatprep.subr.bf16.mxu0 %v1504
    %2623 = vmatpush1.bf16.msra.mxu0 %v1503
    %2624 = vmatprep.subr.bf16.mxu0 %v1496
    %2625 = vmatpush1.bf16.msra.mxu0 %v1495
    %2626 = vmatprep.subr.bf16.mxu0 0
    %2627 = vmatpush2.bf16.msra.mxu0 0
    %2628 = vmatprep.subr.bf16.mxu0 0
    %2629 = vmatpush2.bf16.msra.mxu0 0
    %2630 = vmatprep.subr.bf16.mxu0 0
    %2631 = vmatpush2.bf16.msra.mxu0 0
    %2632 = vmatprep.subr.bf16.mxu0 0
    %2633 = vmatpush2.bf16.msra.mxu0 0
    %2634 = vmatprep.subr.bf16.mxu0 0
    %2635 = vmatpush2.bf16.msra.mxu0 0
    %2636 = vmatprep.subr.bf16.mxu0 0
    %2637 = vmatpush2.bf16.msra.mxu0 0
    %2638 = vmatprep.subr.bf16.mxu0 0
    %2639 = vmatpush2.bf16.msra.mxu0 0
    %2640 = vmatprep.subr.bf16.mxu0 0
    %2641 = vmatpush2.bf16.msra.mxu0 0
    %2642 = vmatprep.mubr.bf16.mxu0 0
    %2643 = vmatmul.mubr.bf16.gmra.mxu0 %v2527
    %v2644 = vpop.f32.mrf.mxu0
    %v2645 = vadd.f32 0.0, %v2644
    %v2646 = vpop.f32.mrf.mxu0
    %v2647 = vadd.f32 0.0, %v2646
    %v2648 = vpop.f32.mrf.mxu0
    %v2649 = vpop.f32.mrf.mxu0
    %2650 = vdwg.mxu0
    %2651 = vmatprep.subr.bf16.mxu0 %v1554
    %2652 = vmatpush1.bf16.msra.mxu0 %v1553
    %2653 = vmatprep.subr.bf16.mxu0 %v1546
    %2654 = vmatpush1.bf16.msra.mxu0 %v1545
    %2655 = vmatprep.subr.bf16.mxu0 %v1538
    %2656 = vmatpush1.bf16.msra.mxu0 %v1537
    %2657 = vmatprep.subr.bf16.mxu0 %v1530
    %2658 = vmatpush1.bf16.msra.mxu0 %v1529
    %2659 = vmatprep.subr.bf16.mxu0 %v1522
    %2660 = vmatpush1.bf16.msra.mxu0 %v1521
    %2661 = vmatprep.subr.bf16.mxu0 %v1514
    %2662 = vmatpush1.bf16.msra.mxu0 %v1513
    %2663 = vmatprep.subr.bf16.mxu0 %v1506
    %2664 = vmatpush1.bf16.msra.mxu0 %v1505
    %2665 = vmatprep.subr.bf16.mxu0 %v1498
    %2666 = vmatpush1.bf16.msra.mxu0 %v1497
    %2667 = vmatprep.subr.bf16.mxu0 0
    %2668 = vmatpush2.bf16.msra.mxu0 0
    %2669 = vmatprep.subr.bf16.mxu0 0
    %2670 = vmatpush2.bf16.msra.mxu0 0
    %2671 = vmatprep.subr.bf16.mxu0 0
    %2672 = vmatpush2.bf16.msra.mxu0 0
    %2673 = vmatprep.subr.bf16.mxu0 0
    %2674 = vmatpush2.bf16.msra.mxu0 0
    %2675 = vmatprep.subr.bf16.mxu0 0
    %2676 = vmatpush2.bf16.msra.mxu0 0
    %2677 = vmatprep.subr.bf16.mxu0 0
    %2678 = vmatpush2.bf16.msra.mxu0 0
    %2679 = vmatprep.subr.bf16.mxu0 0
    %2680 = vmatpush2.bf16.msra.mxu0 0
    %2681 = vmatprep.subr.bf16.mxu0 0
    %2682 = vmatpush2.bf16.msra.mxu0 0
    %2683 = vmatprep.mubr.bf16.mxu0 0
    %2684 = vmatmul.mubr.bf16.gmra.mxu0 %v2527
    %v2685 = vpop.f32.mrf.mxu0
    %v2686 = vadd.f32 0.0, %v2685
    %v2687 = vpop.f32.mrf.mxu0
    %v2688 = vadd.f32 0.0, %v2687
    %v2689 = vpop.f32.mrf.mxu0
    %v2690 = vpop.f32.mrf.mxu0
    %2691 = vdwg.mxu0
    %v2692 = vld [vmem:[%s1120] sm:$0xff]
    %v2697 = vcombine.low %v2563, %v2565
    %v2698 = vcombine.low %v2604, %v2606
    %v2700 = vunpack.c.l.s4 1983009808
    %v2701 = vunpack.c.0.s8 %v2700
    %v2702 = vlaneseq
    %v2703 = vshrl.u32 %v2702, 7
    %v2704 = vsub.s32 %v2701, %v2703
    %v2705 = vrot.slane %v2697, %v2704
    %v2707 = vunpack.c.l.s4 1983009808
    %v2708 = vunpack.c.0.s8 %v2707
    %v2709 = vlaneseq
    %v2710 = vshrl.u32 %v2709, 7
    %v2711 = vsub.s32 %v2708, %v2710
    %v2712 = vrot.slane %v2698, %v2711
    %v2713 = vcombine.low %v2705, %v2712
    %v2715 = vadd.f32 %v2692, %v2713
    %v2716 = vld [vmem:[%s1172] sm:$0xff]
    %v2721 = vcombine.low %v2645, %v2647
    %v2722 = vcombine.low %v2686, %v2688
    %v2724 = vunpack.c.l.s4 1983009808
    %v2725 = vunpack.c.0.s8 %v2724
    %v2726 = vlaneseq
    %v2727 = vshrl.u32 %v2726, 7
    %v2728 = vsub.s32 %v2725, %v2727
    %v2729 = vrot.slane %v2721, %v2728
    %v2731 = vunpack.c.l.s4 1983009808
    %v2732 = vunpack.c.0.s8 %v2731
    %v2733 = vlaneseq
    %v2734 = vshrl.u32 %v2733, 7
    %v2735 = vsub.s32 %v2732, %v2734
    %v2736 = vrot.slane %v2722, %v2735
    %v2737 = vcombine.high %v2729, %v2736
    %v2739 = vadd.f32 %v2716, %v2737
    %v2741 = vcombine.high %v2715, %v2715
    %v2743 = vunpack.c.l.s4 1983009808
    %v2744 = vunpack.c.0.s8 %v2743
    %v2745 = vlaneseq
    %v2746 = vshrl.u32 %v2745, 7
    %v2747 = vsub.s32 %v2744, %v2746
    %v2748 = vrot.slane %v2715, %v2747
    %v2750 = vunpack.c.l.s4 1983009808
    %v2751 = vunpack.c.0.s8 %v2750
    %v2752 = vlaneseq
    %v2753 = vshrl.u32 %v2752, 7
    %v2754 = vsub.s32 %v2751, %v2753
    %v2755 = vrot.slane %v2741, %v2754
    %v2756 = vcombine.high %v2748, %v2748
    %v2757 = vcombine.high %v2755, %v2755
    %v2763 = vcombine.low %v2739, %v2739
    %v2765 = vunpack.c.l.s4 1983009808
    %v2766 = vunpack.c.0.s8 %v2765
    %v2767 = vlaneseq
    %v2768 = vshrl.u32 %v2767, 7
    %v2769 = vsub.s32 %v2766, %v2768
    %v2770 = vrot.slane %v2763, %v2769
    %v2772 = vunpack.c.l.s4 1983009808
    %v2773 = vunpack.c.0.s8 %v2772
    %v2774 = vlaneseq
    %v2775 = vshrl.u32 %v2774, 7
    %v2776 = vsub.s32 %v2773, %v2775
    %v2777 = vrot.slane %v2739, %v2776
    %v2778 = vcombine.high %v2770, %v2770
    %v2779 = vcombine.high %v2777, %v2777
    %v2784 = vsel %vm1875, %v2748, %v2770
    %v2785 = vsel %vm1875, %v2756, %v2778
    %v2786 = vsel %vm1875, %v2755, %v2777
    %v2787 = vsel %vm1875, %v2757, %v2779
    %v2788 = vxor.u32 %v2784, 2147483648
    %v2789 = vmul.f32 %v2788, 1.442695
    %v2790 = vpow.pop %v2789
    %v2791 = vadd.f32 %v2790, 1.0
    %v2792 = vrcp.pop %v2791
    %v2793 = vmul.f32 1.0, %v2792
    %v2794 = vxor.u32 %v2785, 2147483648
    %v2795 = vmul.f32 %v2794, 1.442695
    %v2796 = vpow.pop %v2795
    %v2797 = vadd.f32 %v2796, 1.0
    %v2798 = vrcp.pop %v2797
    %v2799 = vmul.f32 1.0, %v2798
    %v2800 = vtanh.pop %v2786
    %v2801 = vxor.u32 %v2787, 2147483648
    %v2802 = vmul.f32 %v2801, 1.442695
    %v2803 = vpow.pop %v2802
    %v2804 = vadd.f32 %v2803, 1.0
    %v2805 = vrcp.pop %v2804
    %v2806 = vmul.f32 1.0, %v2805
    %v2807 = vmul.f32 %v2799, %v2526
    %v2808 = vmul.f32 %v2793, %v2800
    %v2809 = vadd.f32 %v2807, %v2808
    %v2810 = vtanh.pop %v2809
    %v2811 = vmul.f32 %v2806, %v2810
    %2812 = vst [vmem:[#allocation5] sm:$0xf] %v2809
    %2813 = vst [vmem:[#allocation4] sm:$0xf] %v2811
    %s2814 = scalar_lea.vmem [#allocation9], 12
    %2815 = vst [vmem:[%s2814] sm:$0x3] %v2811
    %v2818 = vunpack.c.l.s4 1983009808
    %v2819 = vunpack.c.0.s8 %v2818
    %v2820 = vlaneseq
    %v2821 = vshrl.u32 %v2820, 7
    %v2822 = vsub.s32 %v2819, %v2821
    %v2823 = vrot.slane %v2811, %v2822
    %v2824 = vcombine.high %v2823, %v2823
    %s2826 = scalar_lea.vmem [#allocation9], 16
    %2827 = vst [vmem:[%s2826 + $0x2] sm:$0x3] %v2824
    %v2828 = vld [vmem:[#allocation4] sm:$0xf]
    %v2829 = vld [vmem:[#allocation5] sm:$0xf]
    %v2830 = vpack.c.bf16 %v2828, %v2828
    %2831 = vmatprep.subr.bf16.mxu0 %v1548
    %2832 = vmatpush1.bf16.msra.mxu0 %v1547
    %2833 = vmatprep.subr.bf16.mxu0 %v1540
    %2834 = vmatpush1.bf16.msra.mxu0 %v1539
    %2835 = vmatprep.subr.bf16.mxu0 %v1532
    %2836 = vmatpush1.bf16.msra.mxu0 %v1531
    %2837 = vmatprep.subr.bf16.mxu0 %v1524
    %2838 = vmatpush1.bf16.msra.mxu0 %v1523
    %2839 = vmatprep.subr.bf16.mxu0 %v1516
    %2840 = vmatpush1.bf16.msra.mxu0 %v1515
    %2841 = vmatprep.subr.bf16.mxu0 %v1508
    %2842 = vmatpush1.bf16.msra.mxu0 %v1507
    %2843 = vmatprep.subr.bf16.mxu0 %v1500
    %2844 = vmatpush1.bf16.msra.mxu0 %v1499
    %2845 = vmatprep.subr.bf16.mxu0 %v1492
    %2846 = vmatpush1.bf16.msra.mxu0 %v1491
    %2847 = vmatprep.subr.bf16.mxu0 0
    %2848 = vmatpush2.bf16.msra.mxu0 0
    %2849 = vmatprep.subr.bf16.mxu0 0
    %2850 = vmatpush2.bf16.msra.mxu0 0
    %2851 = vmatprep.subr.bf16.mxu0 0
    %2852 = vmatpush2.bf16.msra.mxu0 0
    %2853 = vmatprep.subr.bf16.mxu0 0
    %2854 = vmatpush2.bf16.msra.mxu0 0
    %2855 = vmatprep.subr.bf16.mxu0 0
    %2856 = vmatpush2.bf16.msra.mxu0 0
    %2857 = vmatprep.subr.bf16.mxu0 0
    %2858 = vmatpush2.bf16.msra.mxu0 0
    %2859 = vmatprep.subr.bf16.mxu0 0
    %2860 = vmatpush2.bf16.msra.mxu0 0
    %2861 = vmatprep.subr.bf16.mxu0 0
    %2862 = vmatpush2.bf16.msra.mxu0 0
    %2863 = vmatprep.mubr.bf16.mxu0 0
    %2864 = vmatmul.mubr.bf16.gmra.mxu0 %v2830
    %v2865 = vpop.f32.mrf.mxu0
    %v2866 = vadd.f32 0.0, %v2865
    %v2867 = vpop.f32.mrf.mxu0
    %v2868 = vadd.f32 0.0, %v2867
    %v2869 = vpop.f32.mrf.mxu0
    %v2870 = vpop.f32.mrf.mxu0
    %2871 = vdwg.mxu0
    %2872 = vmatprep.subr.bf16.mxu0 %v1550
    %2873 = vmatpush1.bf16.msra.mxu0 %v1549
    %2874 = vmatprep.subr.bf16.mxu0 %v1542
    %2875 = vmatpush1.bf16.msra.mxu0 %v1541
    %2876 = vmatprep.subr.bf16.mxu0 %v1534
    %2877 = vmatpush1.bf16.msra.mxu0 %v1533
    %2878 = vmatprep.subr.bf16.mxu0 %v1526
    %2879 = vmatpush1.bf16.msra.mxu0 %v1525
    %2880 = vmatprep.subr.bf16.mxu0 %v1518
    %2881 = vmatpush1.bf16.msra.mxu0 %v1517
    %2882 = vmatprep.subr.bf16.mxu0 %v1510
    %2883 = vmatpush1.bf16.msra.mxu0 %v1509
    %2884 = vmatprep.subr.bf16.mxu0 %v1502
    %2885 = vmatpush1.bf16.msra.mxu0 %v1501
    %2886 = vmatprep.subr.bf16.mxu0 %v1494
    %2887 = vmatpush1.bf16.msra.mxu0 %v1493
    %2888 = vmatprep.subr.bf16.mxu0 0
    %2889 = vmatpush2.bf16.msra.mxu0 0
    %2890 = vmatprep.subr.bf16.mxu0 0
    %2891 = vmatpush2.bf16.msra.mxu0 0
    %2892 = vmatprep.subr.bf16.mxu0 0
    %2893 = vmatpush2.bf16.msra.mxu0 0
    %2894 = vmatprep.subr.bf16.mxu0 0
    %2895 = vmatpush2.bf16.msra.mxu0 0
    %2896 = vmatprep.subr.bf16.mxu0 0
    %2897 = vmatpush2.bf16.msra.mxu0 0
    %2898 = vmatprep.subr.bf16.mxu0 0
    %2899 = vmatpush2.bf16.msra.mxu0 0
    %2900 = vmatprep.subr.bf16.mxu0 0
    %2901 = vmatpush2.bf16.msra.mxu0 0
    %2902 = vmatprep.subr.bf16.mxu0 0
    %2903 = vmatpush2.bf16.msra.mxu0 0
    %2904 = vmatprep.mubr.bf16.mxu0 0
    %2905 = vmatmul.mubr.bf16.gmra.mxu0 %v2830
    %v2906 = vpop.f32.mrf.mxu0
    %v2907 = vadd.f32 0.0, %v2906
    %v2908 = vpop.f32.mrf.mxu0
    %v2909 = vadd.f32 0.0, %v2908
    %v2910 = vpop.f32.mrf.mxu0
    %v2911 = vpop.f32.mrf.mxu0
    %2912 = vdwg.mxu0
    %2913 = vmatprep.subr.bf16.mxu0 %v1552
    %2914 = vmatpush1.bf16.msra.mxu0 %v1551
    %2915 = vmatprep.subr.bf16.mxu0 %v1544
    %2916 = vmatpush1.bf16.msra.mxu0 %v1543
    %2917 = vmatprep.subr.bf16.mxu0 %v1536
    %2918 = vmatpush1.bf16.msra.mxu0 %v1535
    %2919 = vmatprep.subr.bf16.mxu0 %v1528
    %2920 = vmatpush1.bf16.msra.mxu0 %v1527
    %2921 = vmatprep.subr.bf16.mxu0 %v1520
    %2922 = vmatpush1.bf16.msra.mxu0 %v1519
    %2923 = vmatprep.subr.bf16.mxu0 %v1512
    %2924 = vmatpush1.bf16.msra.mxu0 %v1511
    %2925 = vmatprep.subr.bf16.mxu0 %v1504
    %2926 = vmatpush1.bf16.msra.mxu0 %v1503
    %2927 = vmatprep.subr.bf16.mxu0 %v1496
    %2928 = vmatpush1.bf16.msra.mxu0 %v1495
    %2929 = vmatprep.subr.bf16.mxu0 0
    %2930 = vmatpush2.bf16.msra.mxu0 0
    %2931 = vmatprep.subr.bf16.mxu0 0
    %2932 = vmatpush2.bf16.msra.mxu0 0
    %2933 = vmatprep.subr.bf16.mxu0 0
    %2934 = vmatpush2.bf16.msra.mxu0 0
    %2935 = vmatprep.subr.bf16.mxu0 0
    %2936 = vmatpush2.bf16.msra.mxu0 0
    %2937 = vmatprep.subr.bf16.mxu0 0
    %2938 = vmatpush2.bf16.msra.mxu0 0
    %2939 = vmatprep.subr.bf16.mxu0 0
    %2940 = vmatpush2.bf16.msra.mxu0 0
    %2941 = vmatprep.subr.bf16.mxu0 0
    %2942 = vmatpush2.bf16.msra.mxu0 0
    %2943 = vmatprep.subr.bf16.mxu0 0
    %2944 = vmatpush2.bf16.msra.mxu0 0
    %2945 = vmatprep.mubr.bf16.mxu0 0
    %2946 = vmatmul.mubr.bf16.gmra.mxu0 %v2830
    %v2947 = vpop.f32.mrf.mxu0
    %v2948 = vadd.f32 0.0, %v2947
    %v2949 = vpop.f32.mrf.mxu0
    %v2950 = vadd.f32 0.0, %v2949
    %v2951 = vpop.f32.mrf.mxu0
    %v2952 = vpop.f32.mrf.mxu0
    %2953 = vdwg.mxu0
    %2954 = vmatprep.subr.bf16.mxu0 %v1554
    %2955 = vmatpush1.bf16.msra.mxu0 %v1553
    %2956 = vmatprep.subr.bf16.mxu0 %v1546
    %2957 = vmatpush1.bf16.msra.mxu0 %v1545
    %2958 = vmatprep.subr.bf16.mxu0 %v1538
    %2959 = vmatpush1.bf16.msra.mxu0 %v1537
    %2960 = vmatprep.subr.bf16.mxu0 %v1530
    %2961 = vmatpush1.bf16.msra.mxu0 %v1529
    %2962 = vmatprep.subr.bf16.mxu0 %v1522
    %2963 = vmatpush1.bf16.msra.mxu0 %v1521
    %2964 = vmatprep.subr.bf16.mxu0 %v1514
    %2965 = vmatpush1.bf16.msra.mxu0 %v1513
    %2966 = vmatprep.subr.bf16.mxu0 %v1506
    %2967 = vmatpush1.bf16.msra.mxu0 %v1505
    %2968 = vmatprep.subr.bf16.mxu0 %v1498
    %2969 = vmatpush1.bf16.msra.mxu0 %v1497
    %2970 = vmatprep.subr.bf16.mxu0 0
    %2971 = vmatpush2.bf16.msra.mxu0 0
    %2972 = vmatprep.subr.bf16.mxu0 0
    %2973 = vmatpush2.bf16.msra.mxu0 0
    %2974 = vmatprep.subr.bf16.mxu0 0
    %2975 = vmatpush2.bf16.msra.mxu0 0
    %2976 = vmatprep.subr.bf16.mxu0 0
    %2977 = vmatpush2.bf16.msra.mxu0 0
    %2978 = vmatprep.subr.bf16.mxu0 0
    %2979 = vmatpush2.bf16.msra.mxu0 0
    %2980 = vmatprep.subr.bf16.mxu0 0
    %2981 = vmatpush2.bf16.msra.mxu0 0
    %2982 = vmatprep.subr.bf16.mxu0 0
    %2983 = vmatpush2.bf16.msra.mxu0 0
    %2984 = vmatprep.subr.bf16.mxu0 0
    %2985 = vmatpush2.bf16.msra.mxu0 0
    %2986 = vmatprep.mubr.bf16.mxu0 0
    %2987 = vmatmul.mubr.bf16.gmra.mxu0 %v2830
    %v2988 = vpop.f32.mrf.mxu0
    %v2989 = vadd.f32 0.0, %v2988
    %v2990 = vpop.f32.mrf.mxu0
    %v2991 = vadd.f32 0.0, %v2990
    %v2992 = vpop.f32.mrf.mxu0
    %v2993 = vpop.f32.mrf.mxu0
    %2994 = vdwg.mxu0
    %v2995 = vld [vmem:[%s1148] sm:$0xff]
    %v3000 = vcombine.low %v2866, %v2868
    %v3001 = vcombine.low %v2907, %v2909
    %v3003 = vunpack.c.l.s4 1983009808
    %v3004 = vunpack.c.0.s8 %v3003
    %v3005 = vlaneseq
    %v3006 = vshrl.u32 %v3005, 7
    %v3007 = vsub.s32 %v3004, %v3006
    %v3008 = vrot.slane %v3000, %v3007
    %v3010 = vunpack.c.l.s4 1983009808
    %v3011 = vunpack.c.0.s8 %v3010
    %v3012 = vlaneseq
    %v3013 = vshrl.u32 %v3012, 7
    %v3014 = vsub.s32 %v3011, %v3013
    %v3015 = vrot.slane %v3001, %v3014
    %v3016 = vcombine.low %v3008, %v3015
    %v3018 = vadd.f32 %v2995, %v3016
    %v3019 = vld [vmem:[%s1124] sm:$0xff]
    %v3024 = vcombine.low %v2948, %v2950
    %v3025 = vcombine.low %v2989, %v2991
    %v3027 = vunpack.c.l.s4 1983009808
    %v3028 = vunpack.c.0.s8 %v3027
    %v3029 = vlaneseq
    %v3030 = vshrl.u32 %v3029, 7
    %v3031 = vsub.s32 %v3028, %v3030
    %v3032 = vrot.slane %v3024, %v3031
    %v3034 = vunpack.c.l.s4 1983009808
    %v3035 = vunpack.c.0.s8 %v3034
    %v3036 = vlaneseq
    %v3037 = vshrl.u32 %v3036, 7
    %v3038 = vsub.s32 %v3035, %v3037
    %v3039 = vrot.slane %v3025, %v3038
    %v3040 = vcombine.high %v3032, %v3039
    %v3042 = vadd.f32 %v3019, %v3040
    %v3044 = vcombine.high %v3018, %v3018
    %v3046 = vunpack.c.l.s4 1983009808
    %v3047 = vunpack.c.0.s8 %v3046
    %v3048 = vlaneseq
    %v3049 = vshrl.u32 %v3048, 7
    %v3050 = vsub.s32 %v3047, %v3049
    %v3051 = vrot.slane %v3018, %v3050
    %v3053 = vunpack.c.l.s4 1983009808
    %v3054 = vunpack.c.0.s8 %v3053
    %v3055 = vlaneseq
    %v3056 = vshrl.u32 %v3055, 7
    %v3057 = vsub.s32 %v3054, %v3056
    %v3058 = vrot.slane %v3044, %v3057
    %v3059 = vcombine.high %v3051, %v3051
    %v3060 = vcombine.high %v3058, %v3058
    %v3066 = vcombine.low %v3042, %v3042
    %v3068 = vunpack.c.l.s4 1983009808
    %v3069 = vunpack.c.0.s8 %v3068
    %v3070 = vlaneseq
    %v3071 = vshrl.u32 %v3070, 7
    %v3072 = vsub.s32 %v3069, %v3071
    %v3073 = vrot.slane %v3066, %v3072
    %v3075 = vunpack.c.l.s4 1983009808
    %v3076 = vunpack.c.0.s8 %v3075
    %v3077 = vlaneseq
    %v3078 = vshrl.u32 %v3077, 7
    %v3079 = vsub.s32 %v3076, %v3078
    %v3080 = vrot.slane %v3042, %v3079
    %v3081 = vcombine.high %v3073, %v3073
    %v3082 = vcombine.high %v3080, %v3080
    %v3087 = vsel %vm1875, %v3051, %v3073
    %v3088 = vsel %vm1875, %v3059, %v3081
    %v3089 = vsel %vm1875, %v3058, %v3080
    %v3090 = vsel %vm1875, %v3060, %v3082
    %v3091 = vxor.u32 %v3087, 2147483648
    %v3092 = vmul.f32 %v3091, 1.442695
    %v3093 = vpow.pop %v3092
    %v3094 = vadd.f32 %v3093, 1.0
    %v3095 = vrcp.pop %v3094
    %v3096 = vmul.f32 1.0, %v3095
    %v3097 = vxor.u32 %v3088, 2147483648
    %v3098 = vmul.f32 %v3097, 1.442695
    %v3099 = vpow.pop %v3098
    %v3100 = vadd.f32 %v3099, 1.0
    %v3101 = vrcp.pop %v3100
    %v3102 = vmul.f32 1.0, %v3101
    %v3103 = vtanh.pop %v3089
    %v3104 = vxor.u32 %v3090, 2147483648
    %v3105 = vmul.f32 %v3104, 1.442695
    %v3106 = vpow.pop %v3105
    %v3107 = vadd.f32 %v3106, 1.0
    %v3108 = vrcp.pop %v3107
    %v3109 = vmul.f32 1.0, %v3108
    %v3110 = vmul.f32 %v3102, %v2829
    %v3111 = vmul.f32 %v3096, %v3103
    %v3112 = vadd.f32 %v3110, %v3111
    %v3113 = vtanh.pop %v3112
    %v3114 = vmul.f32 %v3109, %v3113
    %3115 = vst [vmem:[#allocation5] sm:$0xf] %v3112
    %3116 = vst [vmem:[#allocation4] sm:$0xf] %v3114
    %3117 = vst [vmem:[%s2826] sm:$0x3] %v3114
    %v3120 = vunpack.c.l.s4 1983009808
    %v3121 = vunpack.c.0.s8 %v3120
    %v3122 = vlaneseq
    %v3123 = vshrl.u32 %v3122, 7
    %v3124 = vsub.s32 %v3121, %v3123
    %v3125 = vrot.slane %v3114, %v3124
    %v3126 = vcombine.high %v3125, %v3125
    %3128 = vst [vmem:[%s2814 + $0x2] sm:$0x3] %v3126
    %v3129 = vld [vmem:[#allocation4] sm:$0xf]
    %v3130 = vld [vmem:[#allocation5] sm:$0xf]
    %v3131 = vpack.c.bf16 %v3129, %v3129
    %3132 = vmatprep.subr.bf16.mxu0 %v1548
    %3133 = vmatpush1.bf16.msra.mxu0 %v1547
    %3134 = vmatprep.subr.bf16.mxu0 %v1540
    %3135 = vmatpush1.bf16.msra.mxu0 %v1539
    %3136 = vmatprep.subr.bf16.mxu0 %v1532
    %3137 = vmatpush1.bf16.msra.mxu0 %v1531
    %3138 = vmatprep.subr.bf16.mxu0 %v1524
    %3139 = vmatpush1.bf16.msra.mxu0 %v1523
    %3140 = vmatprep.subr.bf16.mxu0 %v1516
    %3141 = vmatpush1.bf16.msra.mxu0 %v1515
    %3142 = vmatprep.subr.bf16.mxu0 %v1508
    %3143 = vmatpush1.bf16.msra.mxu0 %v1507
    %3144 = vmatprep.subr.bf16.mxu0 %v1500
    %3145 = vmatpush1.bf16.msra.mxu0 %v1499
    %3146 = vmatprep.subr.bf16.mxu0 %v1492
    %3147 = vmatpush1.bf16.msra.mxu0 %v1491
    %3148 = vmatprep.subr.bf16.mxu0 0
    %3149 = vmatpush2.bf16.msra.mxu0 0
    %3150 = vmatprep.subr.bf16.mxu0 0
    %3151 = vmatpush2.bf16.msra.mxu0 0
    %3152 = vmatprep.subr.bf16.mxu0 0
    %3153 = vmatpush2.bf16.msra.mxu0 0
    %3154 = vmatprep.subr.bf16.mxu0 0
    %3155 = vmatpush2.bf16.msra.mxu0 0
    %3156 = vmatprep.subr.bf16.mxu0 0
    %3157 = vmatpush2.bf16.msra.mxu0 0
    %3158 = vmatprep.subr.bf16.mxu0 0
    %3159 = vmatpush2.bf16.msra.mxu0 0
    %3160 = vmatprep.subr.bf16.mxu0 0
    %3161 = vmatpush2.bf16.msra.mxu0 0
    %3162 = vmatprep.subr.bf16.mxu0 0
    %3163 = vmatpush2.bf16.msra.mxu0 0
    %3164 = vmatprep.mubr.bf16.mxu0 0
    %3165 = vmatmul.mubr.bf16.gmra.mxu0 %v3131
    %v3166 = vpop.f32.mrf.mxu0
    %v3167 = vadd.f32 0.0, %v3166
    %v3168 = vpop.f32.mrf.mxu0
    %v3169 = vadd.f32 0.0, %v3168
    %v3170 = vpop.f32.mrf.mxu0
    %v3171 = vpop.f32.mrf.mxu0
    %3172 = vdwg.mxu0
    %3173 = vmatprep.subr.bf16.mxu0 %v1550
    %3174 = vmatpush1.bf16.msra.mxu0 %v1549
    %3175 = vmatprep.subr.bf16.mxu0 %v1542
    %3176 = vmatpush1.bf16.msra.mxu0 %v1541
    %3177 = vmatprep.subr.bf16.mxu0 %v1534
    %3178 = vmatpush1.bf16.msra.mxu0 %v1533
    %3179 = vmatprep.subr.bf16.mxu0 %v1526
    %3180 = vmatpush1.bf16.msra.mxu0 %v1525
    %3181 = vmatprep.subr.bf16.mxu0 %v1518
    %3182 = vmatpush1.bf16.msra.mxu0 %v1517
    %3183 = vmatprep.subr.bf16.mxu0 %v1510
    %3184 = vmatpush1.bf16.msra.mxu0 %v1509
    %3185 = vmatprep.subr.bf16.mxu0 %v1502
    %3186 = vmatpush1.bf16.msra.mxu0 %v1501
    %3187 = vmatprep.subr.bf16.mxu0 %v1494
    %3188 = vmatpush1.bf16.msra.mxu0 %v1493
    %3189 = vmatprep.subr.bf16.mxu0 0
    %3190 = vmatpush2.bf16.msra.mxu0 0
    %3191 = vmatprep.subr.bf16.mxu0 0
    %3192 = vmatpush2.bf16.msra.mxu0 0
    %3193 = vmatprep.subr.bf16.mxu0 0
    %3194 = vmatpush2.bf16.msra.mxu0 0
    %3195 = vmatprep.subr.bf16.mxu0 0
    %3196 = vmatpush2.bf16.msra.mxu0 0
    %3197 = vmatprep.subr.bf16.mxu0 0
    %3198 = vmatpush2.bf16.msra.mxu0 0
    %3199 = vmatprep.subr.bf16.mxu0 0
    %3200 = vmatpush2.bf16.msra.mxu0 0
    %3201 = vmatprep.subr.bf16.mxu0 0
    %3202 = vmatpush2.bf16.msra.mxu0 0
    %3203 = vmatprep.subr.bf16.mxu0 0
    %3204 = vmatpush2.bf16.msra.mxu0 0
    %3205 = vmatprep.mubr.bf16.mxu0 0
    %3206 = vmatmul.mubr.bf16.gmra.mxu0 %v3131
    %v3207 = vpop.f32.mrf.mxu0
    %v3208 = vadd.f32 0.0, %v3207
    %v3209 = vpop.f32.mrf.mxu0
    %v3210 = vadd.f32 0.0, %v3209
    %v3211 = vpop.f32.mrf.mxu0
    %v3212 = vpop.f32.mrf.mxu0
    %3213 = vdwg.mxu0
    %3214 = vmatprep.subr.bf16.mxu0 %v1552
    %3215 = vmatpush1.bf16.msra.mxu0 %v1551
    %3216 = vmatprep.subr.bf16.mxu0 %v1544
    %3217 = vmatpush1.bf16.msra.mxu0 %v1543
    %3218 = vmatprep.subr.bf16.mxu0 %v1536
    %3219 = vmatpush1.bf16.msra.mxu0 %v1535
    %3220 = vmatprep.subr.bf16.mxu0 %v1528
    %3221 = vmatpush1.bf16.msra.mxu0 %v1527
    %3222 = vmatprep.subr.bf16.mxu0 %v1520
    %3223 = vmatpush1.bf16.msra.mxu0 %v1519
    %3224 = vmatprep.subr.bf16.mxu0 %v1512
    %3225 = vmatpush1.bf16.msra.mxu0 %v1511
    %3226 = vmatprep.subr.bf16.mxu0 %v1504
    %3227 = vmatpush1.bf16.msra.mxu0 %v1503
    %3228 = vmatprep.subr.bf16.mxu0 %v1496
    %3229 = vmatpush1.bf16.msra.mxu0 %v1495
    %3230 = vmatprep.subr.bf16.mxu0 0
    %3231 = vmatpush2.bf16.msra.mxu0 0
    %3232 = vmatprep.subr.bf16.mxu0 0
    %3233 = vmatpush2.bf16.msra.mxu0 0
    %3234 = vmatprep.subr.bf16.mxu0 0
    %3235 = vmatpush2.bf16.msra.mxu0 0
    %3236 = vmatprep.subr.bf16.mxu0 0
    %3237 = vmatpush2.bf16.msra.mxu0 0
    %3238 = vmatprep.subr.bf16.mxu0 0
    %3239 = vmatpush2.bf16.msra.mxu0 0
    %3240 = vmatprep.subr.bf16.mxu0 0
    %3241 = vmatpush2.bf16.msra.mxu0 0
    %3242 = vmatprep.subr.bf16.mxu0 0
    %3243 = vmatpush2.bf16.msra.mxu0 0
    %3244 = vmatprep.subr.bf16.mxu0 0
    %3245 = vmatpush2.bf16.msra.mxu0 0
    %3246 = vmatprep.mubr.bf16.mxu0 0
    %3247 = vmatmul.mubr.bf16.gmra.mxu0 %v3131
    %v3248 = vpop.f32.mrf.mxu0
    %v3249 = vadd.f32 0.0, %v3248
    %v3250 = vpop.f32.mrf.mxu0
    %v3251 = vadd.f32 0.0, %v3250
    %v3252 = vpop.f32.mrf.mxu0
    %v3253 = vpop.f32.mrf.mxu0
    %3254 = vdwg.mxu0
    %3255 = vmatprep.subr.bf16.mxu0 %v1554
    %3256 = vmatpush1.bf16.msra.mxu0 %v1553
    %3257 = vmatprep.subr.bf16.mxu0 %v1546
    %3258 = vmatpush1.bf16.msra.mxu0 %v1545
    %3259 = vmatprep.subr.bf16.mxu0 %v1538
    %3260 = vmatpush1.bf16.msra.mxu0 %v1537
    %3261 = vmatprep.subr.bf16.mxu0 %v1530
    %3262 = vmatpush1.bf16.msra.mxu0 %v1529
    %3263 = vmatprep.subr.bf16.mxu0 %v1522
    %3264 = vmatpush1.bf16.msra.mxu0 %v1521
    %3265 = vmatprep.subr.bf16.mxu0 %v1514
    %3266 = vmatpush1.bf16.msra.mxu0 %v1513
    %3267 = vmatprep.subr.bf16.mxu0 %v1506
    %3268 = vmatpush1.bf16.msra.mxu0 %v1505
    %3269 = vmatprep.subr.bf16.mxu0 %v1498
    %3270 = vmatpush1.bf16.msra.mxu0 %v1497
    %3271 = vmatprep.subr.bf16.mxu0 0
    %3272 = vmatpush2.bf16.msra.mxu0 0
    %3273 = vmatprep.subr.bf16.mxu0 0
    %3274 = vmatpush2.bf16.msra.mxu0 0
    %3275 = vmatprep.subr.bf16.mxu0 0
    %3276 = vmatpush2.bf16.msra.mxu0 0
    %3277 = vmatprep.subr.bf16.mxu0 0
    %3278 = vmatpush2.bf16.msra.mxu0 0
    %3279 = vmatprep.subr.bf16.mxu0 0
    %3280 = vmatpush2.bf16.msra.mxu0 0
    %3281 = vmatprep.subr.bf16.mxu0 0
    %3282 = vmatpush2.bf16.msra.mxu0 0
    %3283 = vmatprep.subr.bf16.mxu0 0
    %3284 = vmatpush2.bf16.msra.mxu0 0
    %3285 = vmatprep.subr.bf16.mxu0 0
    %3286 = vmatpush2.bf16.msra.mxu0 0
    %3287 = vmatprep.mubr.bf16.mxu0 0
    %3288 = vmatmul.mubr.bf16.gmra.mxu0 %v3131
    %v3289 = vpop.f32.mrf.mxu0
    %v3290 = vadd.f32 0.0, %v3289
    %v3291 = vpop.f32.mrf.mxu0
    %v3292 = vadd.f32 0.0, %v3291
    %v3293 = vpop.f32.mrf.mxu0
    %v3294 = vpop.f32.mrf.mxu0
    %3295 = vdwg.mxu0
    %v3296 = vld [vmem:[%s1176] sm:$0xff]
    %v3301 = vcombine.low %v3167, %v3169
    %v3302 = vcombine.low %v3208, %v3210
    %v3304 = vunpack.c.l.s4 1983009808
    %v3305 = vunpack.c.0.s8 %v3304
    %v3306 = vlaneseq
    %v3307 = vshrl.u32 %v3306, 7
    %v3308 = vsub.s32 %v3305, %v3307
    %v3309 = vrot.slane %v3301, %v3308
    %v3311 = vunpack.c.l.s4 1983009808
    %v3312 = vunpack.c.0.s8 %v3311
    %v3313 = vlaneseq
    %v3314 = vshrl.u32 %v3313, 7
    %v3315 = vsub.s32 %v3312, %v3314
    %v3316 = vrot.slane %v3302, %v3315
    %v3317 = vcombine.low %v3309, %v3316
    %v3319 = vadd.f32 %v3296, %v3317
    %v3320 = vld [vmem:[%s1116] sm:$0xff]
    %v3325 = vcombine.low %v3249, %v3251
    %v3326 = vcombine.low %v3290, %v3292
    %v3328 = vunpack.c.l.s4 1983009808
    %v3329 = vunpack.c.0.s8 %v3328
    %v3330 = vlaneseq
    %v3331 = vshrl.u32 %v3330, 7
    %v3332 = vsub.s32 %v3329, %v3331
    %v3333 = vrot.slane %v3325, %v3332
    %v3335 = vunpack.c.l.s4 1983009808
    %v3336 = vunpack.c.0.s8 %v3335
    %v3337 = vlaneseq
    %v3338 = vshrl.u32 %v3337, 7
    %v3339 = vsub.s32 %v3336, %v3338
    %v3340 = vrot.slane %v3326, %v3339
    %v3341 = vcombine.high %v3333, %v3340
    %v3343 = vadd.f32 %v3320, %v3341
    %v3345 = vcombine.high %v3319, %v3319
    %v3347 = vunpack.c.l.s4 1983009808
    %v3348 = vunpack.c.0.s8 %v3347
    %v3349 = vlaneseq
    %v3350 = vshrl.u32 %v3349, 7
    %v3351 = vsub.s32 %v3348, %v3350
    %v3352 = vrot.slane %v3319, %v3351
    %v3354 = vunpack.c.l.s4 1983009808
    %v3355 = vunpack.c.0.s8 %v3354
    %v3356 = vlaneseq
    %v3357 = vshrl.u32 %v3356, 7
    %v3358 = vsub.s32 %v3355, %v3357
    %v3359 = vrot.slane %v3345, %v3358
    %v3360 = vcombine.high %v3352, %v3352
    %v3361 = vcombine.high %v3359, %v3359
    %v3367 = vcombine.low %v3343, %v3343
    %v3369 = vunpack.c.l.s4 1983009808
    %v3370 = vunpack.c.0.s8 %v3369
    %v3371 = vlaneseq
    %v3372 = vshrl.u32 %v3371, 7
    %v3373 = vsub.s32 %v3370, %v3372
    %v3374 = vrot.slane %v3367, %v3373
    %v3376 = vunpack.c.l.s4 1983009808
    %v3377 = vunpack.c.0.s8 %v3376
    %v3378 = vlaneseq
    %v3379 = vshrl.u32 %v3378, 7
    %v3380 = vsub.s32 %v3377, %v3379
    %v3381 = vrot.slane %v3343, %v3380
    %v3382 = vcombine.high %v3374, %v3374
    %v3383 = vcombine.high %v3381, %v3381
    %v3388 = vsel %vm1875, %v3352, %v3374
    %v3389 = vsel %vm1875, %v3360, %v3382
    %v3390 = vsel %vm1875, %v3359, %v3381
    %v3391 = vsel %vm1875, %v3361, %v3383
    %v3392 = vxor.u32 %v3388, 2147483648
    %v3393 = vmul.f32 %v3392, 1.442695
    %v3394 = vpow.pop %v3393
    %v3395 = vadd.f32 %v3394, 1.0
    %v3396 = vrcp.pop %v3395
    %v3397 = vmul.f32 1.0, %v3396
    %v3398 = vxor.u32 %v3389, 2147483648
    %v3399 = vmul.f32 %v3398, 1.442695
    %v3400 = vpow.pop %v3399
    %v3401 = vadd.f32 %v3400, 1.0
    %v3402 = vrcp.pop %v3401
    %v3403 = vmul.f32 1.0, %v3402
    %v3404 = vtanh.pop %v3390
    %v3405 = vxor.u32 %v3391, 2147483648
    %v3406 = vmul.f32 %v3405, 1.442695
    %v3407 = vpow.pop %v3406
    %v3408 = vadd.f32 %v3407, 1.0
    %v3409 = vrcp.pop %v3408
    %v3410 = vmul.f32 1.0, %v3409
    %v3411 = vmul.f32 %v3403, %v3130
    %v3412 = vmul.f32 %v3397, %v3404
    %v3413 = vadd.f32 %v3411, %v3412
    %v3414 = vtanh.pop %v3413
    %v3415 = vmul.f32 %v3410, %v3414
    %3416 = vst [vmem:[#allocation5] sm:$0xf] %v3413
    %3417 = vst [vmem:[#allocation4] sm:$0xf] %v3415
    %3418 = vst [vmem:[%s2523] sm:$0x3] %v3415
    %v3421 = vunpack.c.l.s4 1983009808
    %v3422 = vunpack.c.0.s8 %v3421
    %v3423 = vlaneseq
    %v3424 = vshrl.u32 %v3423, 7
    %v3425 = vsub.s32 %v3422, %v3424
    %v3426 = vrot.slane %v3415, %v3425
    %v3427 = vcombine.high %v3426, %v3426
    %3429 = vst [vmem:[%s2511 + $0x2] sm:$0x3] %v3427
    %v3430 = vld [vmem:[#allocation4] sm:$0xf]
    %v3431 = vld [vmem:[#allocation5] sm:$0xf]
    %v3432 = vpack.c.bf16 %v3430, %v3430
    %3433 = vmatprep.subr.bf16.mxu0 %v1548
    %3434 = vmatpush1.bf16.msra.mxu0 %v1547
    %3435 = vmatprep.subr.bf16.mxu0 %v1540
    %3436 = vmatpush1.bf16.msra.mxu0 %v1539
    %3437 = vmatprep.subr.bf16.mxu0 %v1532
    %3438 = vmatpush1.bf16.msra.mxu0 %v1531
    %3439 = vmatprep.subr.bf16.mxu0 %v1524
    %3440 = vmatpush1.bf16.msra.mxu0 %v1523
    %3441 = vmatprep.subr.bf16.mxu0 %v1516
    %3442 = vmatpush1.bf16.msra.mxu0 %v1515
    %3443 = vmatprep.subr.bf16.mxu0 %v1508
    %3444 = vmatpush1.bf16.msra.mxu0 %v1507
    %3445 = vmatprep.subr.bf16.mxu0 %v1500
    %3446 = vmatpush1.bf16.msra.mxu0 %v1499
    %3447 = vmatprep.subr.bf16.mxu0 %v1492
    %3448 = vmatpush1.bf16.msra.mxu0 %v1491
    %3449 = vmatprep.subr.bf16.mxu0 0
    %3450 = vmatpush2.bf16.msra.mxu0 0
    %3451 = vmatprep.subr.bf16.mxu0 0
    %3452 = vmatpush2.bf16.msra.mxu0 0
    %3453 = vmatprep.subr.bf16.mxu0 0
    %3454 = vmatpush2.bf16.msra.mxu0 0
    %3455 = vmatprep.subr.bf16.mxu0 0
    %3456 = vmatpush2.bf16.msra.mxu0 0
    %3457 = vmatprep.subr.bf16.mxu0 0
    %3458 = vmatpush2.bf16.msra.mxu0 0
    %3459 = vmatprep.subr.bf16.mxu0 0
    %3460 = vmatpush2.bf16.msra.mxu0 0
    %3461 = vmatprep.subr.bf16.mxu0 0
    %3462 = vmatpush2.bf16.msra.mxu0 0
    %3463 = vmatprep.subr.bf16.mxu0 0
    %3464 = vmatpush2.bf16.msra.mxu0 0
    %3465 = vmatprep.mubr.bf16.mxu0 0
    %3466 = vmatmul.mubr.bf16.gmra.mxu0 %v3432
    %v3467 = vpop.f32.mrf.mxu0
    %v3468 = vadd.f32 0.0, %v3467
    %v3469 = vpop.f32.mrf.mxu0
    %v3470 = vadd.f32 0.0, %v3469
    %v3471 = vpop.f32.mrf.mxu0
    %v3472 = vpop.f32.mrf.mxu0
    %3473 = vdwg.mxu0
    %3474 = vmatprep.subr.bf16.mxu0 %v1550
    %3475 = vmatpush1.bf16.msra.mxu0 %v1549
    %3476 = vmatprep.subr.bf16.mxu0 %v1542
    %3477 = vmatpush1.bf16.msra.mxu0 %v1541
    %3478 = vmatprep.subr.bf16.mxu0 %v1534
    %3479 = vmatpush1.bf16.msra.mxu0 %v1533
    %3480 = vmatprep.subr.bf16.mxu0 %v1526
    %3481 = vmatpush1.bf16.msra.mxu0 %v1525
    %3482 = vmatprep.subr.bf16.mxu0 %v1518
    %3483 = vmatpush1.bf16.msra.mxu0 %v1517
    %3484 = vmatprep.subr.bf16.mxu0 %v1510
    %3485 = vmatpush1.bf16.msra.mxu0 %v1509
    %3486 = vmatprep.subr.bf16.mxu0 %v1502
    %3487 = vmatpush1.bf16.msra.mxu0 %v1501
    %3488 = vmatprep.subr.bf16.mxu0 %v1494
    %3489 = vmatpush1.bf16.msra.mxu0 %v1493
    %3490 = vmatprep.subr.bf16.mxu0 0
    %3491 = vmatpush2.bf16.msra.mxu0 0
    %3492 = vmatprep.subr.bf16.mxu0 0
    %3493 = vmatpush2.bf16.msra.mxu0 0
    %3494 = vmatprep.subr.bf16.mxu0 0
    %3495 = vmatpush2.bf16.msra.mxu0 0
    %3496 = vmatprep.subr.bf16.mxu0 0
    %3497 = vmatpush2.bf16.msra.mxu0 0
    %3498 = vmatprep.subr.bf16.mxu0 0
    %3499 = vmatpush2.bf16.msra.mxu0 0
    %3500 = vmatprep.subr.bf16.mxu0 0
    %3501 = vmatpush2.bf16.msra.mxu0 0
    %3502 = vmatprep.subr.bf16.mxu0 0
    %3503 = vmatpush2.bf16.msra.mxu0 0
    %3504 = vmatprep.subr.bf16.mxu0 0
    %3505 = vmatpush2.bf16.msra.mxu0 0
    %3506 = vmatprep.mubr.bf16.mxu0 0
    %3507 = vmatmul.mubr.bf16.gmra.mxu0 %v3432
    %v3508 = vpop.f32.mrf.mxu0
    %v3509 = vadd.f32 0.0, %v3508
    %v3510 = vpop.f32.mrf.mxu0
    %v3511 = vadd.f32 0.0, %v3510
    %v3512 = vpop.f32.mrf.mxu0
    %v3513 = vpop.f32.mrf.mxu0
    %3514 = vdwg.mxu0
    %3515 = vmatprep.subr.bf16.mxu0 %v1552
    %3516 = vmatpush1.bf16.msra.mxu0 %v1551
    %3517 = vmatprep.subr.bf16.mxu0 %v1544
    %3518 = vmatpush1.bf16.msra.mxu0 %v1543
    %3519 = vmatprep.subr.bf16.mxu0 %v1536
    %3520 = vmatpush1.bf16.msra.mxu0 %v1535
    %3521 = vmatprep.subr.bf16.mxu0 %v1528
    %3522 = vmatpush1.bf16.msra.mxu0 %v1527
    %3523 = vmatprep.subr.bf16.mxu0 %v1520
    %3524 = vmatpush1.bf16.msra.mxu0 %v1519
    %3525 = vmatprep.subr.bf16.mxu0 %v1512
    %3526 = vmatpush1.bf16.msra.mxu0 %v1511
    %3527 = vmatprep.subr.bf16.mxu0 %v1504
    %3528 = vmatpush1.bf16.msra.mxu0 %v1503
    %3529 = vmatprep.subr.bf16.mxu0 %v1496
    %3530 = vmatpush1.bf16.msra.mxu0 %v1495
    %3531 = vmatprep.subr.bf16.mxu0 0
    %3532 = vmatpush2.bf16.msra.mxu0 0
    %3533 = vmatprep.subr.bf16.mxu0 0
    %3534 = vmatpush2.bf16.msra.mxu0 0
    %3535 = vmatprep.subr.bf16.mxu0 0
    %3536 = vmatpush2.bf16.msra.mxu0 0
    %3537 = vmatprep.subr.bf16.mxu0 0
    %3538 = vmatpush2.bf16.msra.mxu0 0
    %3539 = vmatprep.subr.bf16.mxu0 0
    %3540 = vmatpush2.bf16.msra.mxu0 0
    %3541 = vmatprep.subr.bf16.mxu0 0
    %3542 = vmatpush2.bf16.msra.mxu0 0
    %3543 = vmatprep.subr.bf16.mxu0 0
    %3544 = vmatpush2.bf16.msra.mxu0 0
    %3545 = vmatprep.subr.bf16.mxu0 0
    %3546 = vmatpush2.bf16.msra.mxu0 0
    %3547 = vmatprep.mubr.bf16.mxu0 0
    %3548 = vmatmul.mubr.bf16.gmra.mxu0 %v3432
    %v3549 = vpop.f32.mrf.mxu0
    %v3550 = vadd.f32 0.0, %v3549
    %v3551 = vpop.f32.mrf.mxu0
    %v3552 = vadd.f32 0.0, %v3551
    %v3553 = vpop.f32.mrf.mxu0
    %v3554 = vpop.f32.mrf.mxu0
    %3555 = vdwg.mxu0
    %3556 = vmatprep.subr.bf16.mxu0 %v1554
    %3557 = vmatpush1.bf16.msra.mxu0 %v1553
    %3558 = vmatprep.subr.bf16.mxu0 %v1546
    %3559 = vmatpush1.bf16.msra.mxu0 %v1545
    %3560 = vmatprep.subr.bf16.mxu0 %v1538
    %3561 = vmatpush1.bf16.msra.mxu0 %v1537
    %3562 = vmatprep.subr.bf16.mxu0 %v1530
    %3563 = vmatpush1.bf16.msra.mxu0 %v1529
    %3564 = vmatprep.subr.bf16.mxu0 %v1522
    %3565 = vmatpush1.bf16.msra.mxu0 %v1521
    %3566 = vmatprep.subr.bf16.mxu0 %v1514
    %3567 = vmatpush1.bf16.msra.mxu0 %v1513
    %3568 = vmatprep.subr.bf16.mxu0 %v1506
    %3569 = vmatpush1.bf16.msra.mxu0 %v1505
    %3570 = vmatprep.subr.bf16.mxu0 %v1498
    %3571 = vmatpush1.bf16.msra.mxu0 %v1497
    %3572 = vmatprep.subr.bf16.mxu0 0
    %3573 = vmatpush2.bf16.msra.mxu0 0
    %3574 = vmatprep.subr.bf16.mxu0 0
    %3575 = vmatpush2.bf16.msra.mxu0 0
    %3576 = vmatprep.subr.bf16.mxu0 0
    %3577 = vmatpush2.bf16.msra.mxu0 0
    %3578 = vmatprep.subr.bf16.mxu0 0
    %3579 = vmatpush2.bf16.msra.mxu0 0
    %3580 = vmatprep.subr.bf16.mxu0 0
    %3581 = vmatpush2.bf16.msra.mxu0 0
    %3582 = vmatprep.subr.bf16.mxu0 0
    %3583 = vmatpush2.bf16.msra.mxu0 0
    %3584 = vmatprep.subr.bf16.mxu0 0
    %3585 = vmatpush2.bf16.msra.mxu0 0
    %3586 = vmatprep.subr.bf16.mxu0 0
    %3587 = vmatpush2.bf16.msra.mxu0 0
    %3588 = vmatprep.mubr.bf16.mxu0 0
    %3589 = vmatmul.mubr.bf16.gmra.mxu0 %v3432
    %v3590 = vpop.f32.mrf.mxu0
    %v3591 = vadd.f32 0.0, %v3590
    %v3592 = vpop.f32.mrf.mxu0
    %v3593 = vadd.f32 0.0, %v3592
    %v3594 = vpop.f32.mrf.mxu0
    %v3595 = vpop.f32.mrf.mxu0
    %3596 = vdwg.mxu0
    %v3597 = vld [vmem:[%s1200] sm:$0xff]
    %v3602 = vcombine.low %v3468, %v3470
    %v3603 = vcombine.low %v3509, %v3511
    %v3605 = vunpack.c.l.s4 1983009808
    %v3606 = vunpack.c.0.s8 %v3605
    %v3607 = vlaneseq
    %v3608 = vshrl.u32 %v3607, 7
    %v3609 = vsub.s32 %v3606, %v3608
    %v3610 = vrot.slane %v3602, %v3609
    %v3612 = vunpack.c.l.s4 1983009808
    %v3613 = vunpack.c.0.s8 %v3612
    %v3614 = vlaneseq
    %v3615 = vshrl.u32 %v3614, 7
    %v3616 = vsub.s32 %v3613, %v3615
    %v3617 = vrot.slane %v3603, %v3616
    %v3618 = vcombine.low %v3610, %v3617
    %v3620 = vadd.f32 %v3597, %v3618
    %v3621 = vld [vmem:[%s1076] sm:$0xff]
    %v3626 = vcombine.low %v3550, %v3552
    %v3627 = vcombine.low %v3591, %v3593
    %v3629 = vunpack.c.l.s4 1983009808
    %v3630 = vunpack.c.0.s8 %v3629
    %v3631 = vlaneseq
    %v3632 = vshrl.u32 %v3631, 7
    %v3633 = vsub.s32 %v3630, %v3632
    %v3634 = vrot.slane %v3626, %v3633
    %v3636 = vunpack.c.l.s4 1983009808
    %v3637 = vunpack.c.0.s8 %v3636
    %v3638 = vlaneseq
    %v3639 = vshrl.u32 %v3638, 7
    %v3640 = vsub.s32 %v3637, %v3639
    %v3641 = vrot.slane %v3627, %v3640
    %v3642 = vcombine.high %v3634, %v3641
    %v3644 = vadd.f32 %v3621, %v3642
    %v3646 = vcombine.high %v3620, %v3620
    %v3648 = vunpack.c.l.s4 1983009808
    %v3649 = vunpack.c.0.s8 %v3648
    %v3650 = vlaneseq
    %v3651 = vshrl.u32 %v3650, 7
    %v3652 = vsub.s32 %v3649, %v3651
    %v3653 = vrot.slane %v3620, %v3652
    %v3655 = vunpack.c.l.s4 1983009808
    %v3656 = vunpack.c.0.s8 %v3655
    %v3657 = vlaneseq
    %v3658 = vshrl.u32 %v3657, 7
    %v3659 = vsub.s32 %v3656, %v3658
    %v3660 = vrot.slane %v3646, %v3659
    %v3661 = vcombine.high %v3653, %v3653
    %v3662 = vcombine.high %v3660, %v3660
    %v3668 = vcombine.low %v3644, %v3644
    %v3670 = vunpack.c.l.s4 1983009808
    %v3671 = vunpack.c.0.s8 %v3670
    %v3672 = vlaneseq
    %v3673 = vshrl.u32 %v3672, 7
    %v3674 = vsub.s32 %v3671, %v3673
    %v3675 = vrot.slane %v3668, %v3674
    %v3677 = vunpack.c.l.s4 1983009808
    %v3678 = vunpack.c.0.s8 %v3677
    %v3679 = vlaneseq
    %v3680 = vshrl.u32 %v3679, 7
    %v3681 = vsub.s32 %v3678, %v3680
    %v3682 = vrot.slane %v3644, %v3681
    %v3683 = vcombine.high %v3675, %v3675
    %v3684 = vcombine.high %v3682, %v3682
    %v3689 = vsel %vm1875, %v3653, %v3675
    %v3690 = vsel %vm1875, %v3661, %v3683
    %v3691 = vsel %vm1875, %v3660, %v3682
    %v3692 = vsel %vm1875, %v3662, %v3684
    %v3693 = vxor.u32 %v3689, 2147483648
    %v3694 = vmul.f32 %v3693, 1.442695
    %v3695 = vpow.pop %v3694
    %v3696 = vadd.f32 %v3695, 1.0
    %v3697 = vrcp.pop %v3696
    %v3698 = vmul.f32 1.0, %v3697
    %v3699 = vxor.u32 %v3690, 2147483648
    %v3700 = vmul.f32 %v3699, 1.442695
    %v3701 = vpow.pop %v3700
    %v3702 = vadd.f32 %v3701, 1.0
    %v3703 = vrcp.pop %v3702
    %v3704 = vmul.f32 1.0, %v3703
    %v3705 = vtanh.pop %v3691
    %v3706 = vxor.u32 %v3692, 2147483648
    %v3707 = vmul.f32 %v3706, 1.442695
    %v3708 = vpow.pop %v3707
    %v3709 = vadd.f32 %v3708, 1.0
    %v3710 = vrcp.pop %v3709
    %v3711 = vmul.f32 1.0, %v3710
    %v3712 = vmul.f32 %v3704, %v3431
    %v3713 = vmul.f32 %v3698, %v3705
    %v3714 = vadd.f32 %v3712, %v3713
    %v3715 = vtanh.pop %v3714
    %v3716 = vmul.f32 %v3711, %v3715
    %3717 = vst [vmem:[#allocation5] sm:$0xf] %v3714
    %3718 = vst [vmem:[#allocation4] sm:$0xf] %v3716
    %3719 = vst [vmem:[%s2220] sm:$0x3] %v3716
    %v3722 = vunpack.c.l.s4 1983009808
    %v3723 = vunpack.c.0.s8 %v3722
    %v3724 = vlaneseq
    %v3725 = vshrl.u32 %v3724, 7
    %v3726 = vsub.s32 %v3723, %v3725
    %v3727 = vrot.slane %v3716, %v3726
    %v3728 = vcombine.high %v3727, %v3727
    %3730 = vst [vmem:[%s2208 + $0x2] sm:$0x3] %v3728
    %v3731 = vld [vmem:[#allocation4] sm:$0xf]
    %v3732 = vld [vmem:[#allocation5] sm:$0xf]
    %v3733 = vpack.c.bf16 %v3731, %v3731
    %3734 = vmatprep.subr.bf16.mxu0 %v1548
    %3735 = vmatpush1.bf16.msra.mxu0 %v1547
    %3736 = vmatprep.subr.bf16.mxu0 %v1540
    %3737 = vmatpush1.bf16.msra.mxu0 %v1539
    %3738 = vmatprep.subr.bf16.mxu0 %v1532
    %3739 = vmatpush1.bf16.msra.mxu0 %v1531
    %3740 = vmatprep.subr.bf16.mxu0 %v1524
    %3741 = vmatpush1.bf16.msra.mxu0 %v1523
    %3742 = vmatprep.subr.bf16.mxu0 %v1516
    %3743 = vmatpush1.bf16.msra.mxu0 %v1515
    %3744 = vmatprep.subr.bf16.mxu0 %v1508
    %3745 = vmatpush1.bf16.msra.mxu0 %v1507
    %3746 = vmatprep.subr.bf16.mxu0 %v1500
    %3747 = vmatpush1.bf16.msra.mxu0 %v1499
    %3748 = vmatprep.subr.bf16.mxu0 %v1492
    %3749 = vmatpush1.bf16.msra.mxu0 %v1491
    %3750 = vmatprep.subr.bf16.mxu0 0
    %3751 = vmatpush2.bf16.msra.mxu0 0
    %3752 = vmatprep.subr.bf16.mxu0 0
    %3753 = vmatpush2.bf16.msra.mxu0 0
    %3754 = vmatprep.subr.bf16.mxu0 0
    %3755 = vmatpush2.bf16.msra.mxu0 0
    %3756 = vmatprep.subr.bf16.mxu0 0
    %3757 = vmatpush2.bf16.msra.mxu0 0
    %3758 = vmatprep.subr.bf16.mxu0 0
    %3759 = vmatpush2.bf16.msra.mxu0 0
    %3760 = vmatprep.subr.bf16.mxu0 0
    %3761 = vmatpush2.bf16.msra.mxu0 0
    %3762 = vmatprep.subr.bf16.mxu0 0
    %3763 = vmatpush2.bf16.msra.mxu0 0
    %3764 = vmatprep.subr.bf16.mxu0 0
    %3765 = vmatpush2.bf16.msra.mxu0 0
    %3766 = vmatprep.mubr.bf16.mxu0 0
    %3767 = vmatmul.mubr.bf16.gmra.mxu0 %v3733
    %v3768 = vpop.f32.mrf.mxu0
    %v3769 = vadd.f32 0.0, %v3768
    %v3770 = vpop.f32.mrf.mxu0
    %v3771 = vadd.f32 0.0, %v3770
    %v3772 = vpop.f32.mrf.mxu0
    %v3773 = vpop.f32.mrf.mxu0
    %3774 = vdwg.mxu0
    %3775 = vmatprep.subr.bf16.mxu0 %v1550
    %3776 = vmatpush1.bf16.msra.mxu0 %v1549
    %3777 = vmatprep.subr.bf16.mxu0 %v1542
    %3778 = vmatpush1.bf16.msra.mxu0 %v1541
    %3779 = vmatprep.subr.bf16.mxu0 %v1534
    %3780 = vmatpush1.bf16.msra.mxu0 %v1533
    %3781 = vmatprep.subr.bf16.mxu0 %v1526
    %3782 = vmatpush1.bf16.msra.mxu0 %v1525
    %3783 = vmatprep.subr.bf16.mxu0 %v1518
    %3784 = vmatpush1.bf16.msra.mxu0 %v1517
    %3785 = vmatprep.subr.bf16.mxu0 %v1510
    %3786 = vmatpush1.bf16.msra.mxu0 %v1509
    %3787 = vmatprep.subr.bf16.mxu0 %v1502
    %3788 = vmatpush1.bf16.msra.mxu0 %v1501
    %3789 = vmatprep.subr.bf16.mxu0 %v1494
    %3790 = vmatpush1.bf16.msra.mxu0 %v1493
    %3791 = vmatprep.subr.bf16.mxu0 0
    %3792 = vmatpush2.bf16.msra.mxu0 0
    %3793 = vmatprep.subr.bf16.mxu0 0
    %3794 = vmatpush2.bf16.msra.mxu0 0
    %3795 = vmatprep.subr.bf16.mxu0 0
    %3796 = vmatpush2.bf16.msra.mxu0 0
    %3797 = vmatprep.subr.bf16.mxu0 0
    %3798 = vmatpush2.bf16.msra.mxu0 0
    %3799 = vmatprep.subr.bf16.mxu0 0
    %3800 = vmatpush2.bf16.msra.mxu0 0
    %3801 = vmatprep.subr.bf16.mxu0 0
    %3802 = vmatpush2.bf16.msra.mxu0 0
    %3803 = vmatprep.subr.bf16.mxu0 0
    %3804 = vmatpush2.bf16.msra.mxu0 0
    %3805 = vmatprep.subr.bf16.mxu0 0
    %3806 = vmatpush2.bf16.msra.mxu0 0
    %3807 = vmatprep.mubr.bf16.mxu0 0
    %3808 = vmatmul.mubr.bf16.gmra.mxu0 %v3733
    %v3809 = vpop.f32.mrf.mxu0
    %v3810 = vadd.f32 0.0, %v3809
    %v3811 = vpop.f32.mrf.mxu0
    %v3812 = vadd.f32 0.0, %v3811
    %v3813 = vpop.f32.mrf.mxu0
    %v3814 = vpop.f32.mrf.mxu0
    %3815 = vdwg.mxu0
    %3816 = vmatprep.subr.bf16.mxu0 %v1552
    %3817 = vmatpush1.bf16.msra.mxu0 %v1551
    %3818 = vmatprep.subr.bf16.mxu0 %v1544
    %3819 = vmatpush1.bf16.msra.mxu0 %v1543
    %3820 = vmatprep.subr.bf16.mxu0 %v1536
    %3821 = vmatpush1.bf16.msra.mxu0 %v1535
    %3822 = vmatprep.subr.bf16.mxu0 %v1528
    %3823 = vmatpush1.bf16.msra.mxu0 %v1527
    %3824 = vmatprep.subr.bf16.mxu0 %v1520
    %3825 = vmatpush1.bf16.msra.mxu0 %v1519
    %3826 = vmatprep.subr.bf16.mxu0 %v1512
    %3827 = vmatpush1.bf16.msra.mxu0 %v1511
    %3828 = vmatprep.subr.bf16.mxu0 %v1504
    %3829 = vmatpush1.bf16.msra.mxu0 %v1503
    %3830 = vmatprep.subr.bf16.mxu0 %v1496
    %3831 = vmatpush1.bf16.msra.mxu0 %v1495
    %3832 = vmatprep.subr.bf16.mxu0 0
    %3833 = vmatpush2.bf16.msra.mxu0 0
    %3834 = vmatprep.subr.bf16.mxu0 0
    %3835 = vmatpush2.bf16.msra.mxu0 0
    %3836 = vmatprep.subr.bf16.mxu0 0
    %3837 = vmatpush2.bf16.msra.mxu0 0
    %3838 = vmatprep.subr.bf16.mxu0 0
    %3839 = vmatpush2.bf16.msra.mxu0 0
    %3840 = vmatprep.subr.bf16.mxu0 0
    %3841 = vmatpush2.bf16.msra.mxu0 0
    %3842 = vmatprep.subr.bf16.mxu0 0
    %3843 = vmatpush2.bf16.msra.mxu0 0
    %3844 = vmatprep.subr.bf16.mxu0 0
    %3845 = vmatpush2.bf16.msra.mxu0 0
    %3846 = vmatprep.subr.bf16.mxu0 0
    %3847 = vmatpush2.bf16.msra.mxu0 0
    %3848 = vmatprep.mubr.bf16.mxu0 0
    %3849 = vmatmul.mubr.bf16.gmra.mxu0 %v3733
    %v3850 = vpop.f32.mrf.mxu0
    %v3851 = vadd.f32 0.0, %v3850
    %v3852 = vpop.f32.mrf.mxu0
    %v3853 = vadd.f32 0.0, %v3852
    %v3854 = vpop.f32.mrf.mxu0
    %v3855 = vpop.f32.mrf.mxu0
    %3856 = vdwg.mxu0
    %3857 = vmatprep.subr.bf16.mxu0 %v1554
    %3858 = vmatpush1.bf16.msra.mxu0 %v1553
    %3859 = vmatprep.subr.bf16.mxu0 %v1546
    %3860 = vmatpush1.bf16.msra.mxu0 %v1545
    %3861 = vmatprep.subr.bf16.mxu0 %v1538
    %3862 = vmatpush1.bf16.msra.mxu0 %v1537
    %3863 = vmatprep.subr.bf16.mxu0 %v1530
    %3864 = vmatpush1.bf16.msra.mxu0 %v1529
    %3865 = vmatprep.subr.bf16.mxu0 %v1522
    %3866 = vmatpush1.bf16.msra.mxu0 %v1521
    %3867 = vmatprep.subr.bf16.mxu0 %v1514
    %3868 = vmatpush1.bf16.msra.mxu0 %v1513
    %3869 = vmatprep.subr.bf16.mxu0 %v1506
    %3870 = vmatpush1.bf16.msra.mxu0 %v1505
    %3871 = vmatprep.subr.bf16.mxu0 %v1498
    %3872 = vmatpush1.bf16.msra.mxu0 %v1497
    %3873 = vmatprep.subr.bf16.mxu0 0
    %3874 = vmatpush2.bf16.msra.mxu0 0
    %3875 = vmatprep.subr.bf16.mxu0 0
    %3876 = vmatpush2.bf16.msra.mxu0 0
    %3877 = vmatprep.subr.bf16.mxu0 0
    %3878 = vmatpush2.bf16.msra.mxu0 0
    %3879 = vmatprep.subr.bf16.mxu0 0
    %3880 = vmatpush2.bf16.msra.mxu0 0
    %3881 = vmatprep.subr.bf16.mxu0 0
    %3882 = vmatpush2.bf16.msra.mxu0 0
    %3883 = vmatprep.subr.bf16.mxu0 0
    %3884 = vmatpush2.bf16.msra.mxu0 0
    %3885 = vmatprep.subr.bf16.mxu0 0
    %3886 = vmatpush2.bf16.msra.mxu0 0
    %3887 = vmatprep.subr.bf16.mxu0 0
    %3888 = vmatpush2.bf16.msra.mxu0 0
    %3889 = vmatprep.mubr.bf16.mxu0 0
    %3890 = vmatmul.mubr.bf16.gmra.mxu0 %v3733
    %v3891 = vpop.f32.mrf.mxu0
    %v3892 = vadd.f32 0.0, %v3891
    %v3893 = vpop.f32.mrf.mxu0
    %v3894 = vadd.f32 0.0, %v3893
    %v3895 = vpop.f32.mrf.mxu0
    %v3896 = vpop.f32.mrf.mxu0
    %3897 = vdwg.mxu0
    %v3898 = vld [vmem:[%s1224] sm:$0xff]
    %v3903 = vcombine.low %v3769, %v3771
    %v3904 = vcombine.low %v3810, %v3812
    %v3906 = vunpack.c.l.s4 1983009808
    %v3907 = vunpack.c.0.s8 %v3906
    %v3908 = vlaneseq
    %v3909 = vshrl.u32 %v3908, 7
    %v3910 = vsub.s32 %v3907, %v3909
    %v3911 = vrot.slane %v3903, %v3910
    %v3913 = vunpack.c.l.s4 1983009808
    %v3914 = vunpack.c.0.s8 %v3913
    %v3915 = vlaneseq
    %v3916 = vshrl.u32 %v3915, 7
    %v3917 = vsub.s32 %v3914, %v3916
    %v3918 = vrot.slane %v3904, %v3917
    %v3919 = vcombine.low %v3911, %v3918
    %v3921 = vadd.f32 %v3898, %v3919
    %v3922 = vld [vmem:[#allocation3] sm:$0xff]
    %v3927 = vcombine.low %v3851, %v3853
    %v3928 = vcombine.low %v3892, %v3894
    %v3930 = vunpack.c.l.s4 1983009808
    %v3931 = vunpack.c.0.s8 %v3930
    %v3932 = vlaneseq
    %v3933 = vshrl.u32 %v3932, 7
    %v3934 = vsub.s32 %v3931, %v3933
    %v3935 = vrot.slane %v3927, %v3934
    %v3937 = vunpack.c.l.s4 1983009808
    %v3938 = vunpack.c.0.s8 %v3937
    %v3939 = vlaneseq
    %v3940 = vshrl.u32 %v3939, 7
    %v3941 = vsub.s32 %v3938, %v3940
    %v3942 = vrot.slane %v3928, %v3941
    %v3943 = vcombine.high %v3935, %v3942
    %v3945 = vadd.f32 %v3922, %v3943
    %v3947 = vcombine.high %v3921, %v3921
    %v3949 = vunpack.c.l.s4 1983009808
    %v3950 = vunpack.c.0.s8 %v3949
    %v3951 = vlaneseq
    %v3952 = vshrl.u32 %v3951, 7
    %v3953 = vsub.s32 %v3950, %v3952
    %v3954 = vrot.slane %v3921, %v3953
    %v3956 = vunpack.c.l.s4 1983009808
    %v3957 = vunpack.c.0.s8 %v3956
    %v3958 = vlaneseq
    %v3959 = vshrl.u32 %v3958, 7
    %v3960 = vsub.s32 %v3957, %v3959
    %v3961 = vrot.slane %v3947, %v3960
    %v3962 = vcombine.high %v3954, %v3954
    %v3963 = vcombine.high %v3961, %v3961
    %v3969 = vcombine.low %v3945, %v3945
    %v3971 = vunpack.c.l.s4 1983009808
    %v3972 = vunpack.c.0.s8 %v3971
    %v3973 = vlaneseq
    %v3974 = vshrl.u32 %v3973, 7
    %v3975 = vsub.s32 %v3972, %v3974
    %v3976 = vrot.slane %v3969, %v3975
    %v3978 = vunpack.c.l.s4 1983009808
    %v3979 = vunpack.c.0.s8 %v3978
    %v3980 = vlaneseq
    %v3981 = vshrl.u32 %v3980, 7
    %v3982 = vsub.s32 %v3979, %v3981
    %v3983 = vrot.slane %v3945, %v3982
    %v3984 = vcombine.high %v3976, %v3976
    %v3985 = vcombine.high %v3983, %v3983
    %v3990 = vsel %vm1875, %v3954, %v3976
    %v3991 = vsel %vm1875, %v3962, %v3984
    %v3992 = vsel %vm1875, %v3961, %v3983
    %v3993 = vsel %vm1875, %v3963, %v3985
    %v3994 = vxor.u32 %v3990, 2147483648
    %v3995 = vmul.f32 %v3994, 1.442695
    %v3996 = vpow.pop %v3995
    %v3997 = vadd.f32 %v3996, 1.0
    %v3998 = vrcp.pop %v3997
    %v3999 = vmul.f32 1.0, %v3998
    %v4000 = vxor.u32 %v3991, 2147483648
    %v4001 = vmul.f32 %v4000, 1.442695
    %v4002 = vpow.pop %v4001
    %v4003 = vadd.f32 %v4002, 1.0
    %v4004 = vrcp.pop %v4003
    %v4005 = vmul.f32 1.0, %v4004
    %v4006 = vtanh.pop %v3992
    %v4007 = vxor.u32 %v3993, 2147483648
    %v4008 = vmul.f32 %v4007, 1.442695
    %v4009 = vpow.pop %v4008
    %v4010 = vadd.f32 %v4009, 1.0
    %v4011 = vrcp.pop %v4010
    %v4012 = vmul.f32 1.0, %v4011
    %v4013 = vmul.f32 %v4005, %v3732
    %v4014 = vmul.f32 %v3999, %v4006
    %v4015 = vadd.f32 %v4013, %v4014
    %v4016 = vtanh.pop %v4015
    %v4017 = vmul.f32 %v4012, %v4016
    %4018 = vst [vmem:[#allocation5] sm:$0xf] %v4015
    %4019 = vst [vmem:[#allocation4] sm:$0xf] %v4017
    %4020 = vst [vmem:[%s1917] sm:$0x3] %v4017
    %v4023 = vunpack.c.l.s4 1983009808
    %v4024 = vunpack.c.0.s8 %v4023
    %v4025 = vlaneseq
    %v4026 = vshrl.u32 %v4025, 7
    %v4027 = vsub.s32 %v4024, %v4026
    %v4028 = vrot.slane %v4017, %v4027
    %v4029 = vcombine.high %v4028, %v4028
    %4031 = vst [vmem:[#allocation9 + $0x2] sm:$0x3] %v4029
    %v4032 = vld [vmem:[#allocation4] sm:$0xf]
    %v4033 = vld [vmem:[#allocation5] sm:$0xf]
    %v4035 = vrot.slane %v4032, 2
    %v4036 = vcombine.low %v4032, %v4035
    %v4038 = vunpack.c.l.s4 1983009808
    %v4039 = vunpack.c.0.s8 %v4038
    %v4040 = vlaneseq
    %v4041 = vshrl.u32 %v4040, 7
    %v4042 = vsub.s32 %v4039, %v4041
    %v4043 = vrot.slane %v4036, %v4042
    %4045 = vst [vmem:[%s5] sm:$0xf] %v4043
    %v4047 = vrot.slane %v4033, 2
    %v4048 = vcombine.low %v4033, %v4047
    %v4050 = vunpack.c.l.s4 1983009808
    %v4051 = vunpack.c.0.s8 %v4050
    %v4052 = vlaneseq
    %v4053 = vshrl.u32 %v4052, 7
    %v4054 = vsub.s32 %v4051, %v4053
    %v4055 = vrot.slane %v4048, %v4054
    %4057 = vst [vmem:[%s6] sm:$0xf] %v4055
    // Predicated region
    $region22: #{attn_encoder_forward.4} parent=1 // pred_check
      _
    $region23: #{attn_encoder_forward.4} parent=1 // pred_check_branch
      %4059 = sbr.rel (0) target = $region25
    $region24: #{attn_encoder_forward.4} parent=1 // pred_region
      %s4061 = ssub.s32 512, 512
      %4062 = vsyncadd [#allocation8], %s4061
      %s4063 = sshll.u32 [#allocation9], 4
      %s4064 = int_to_ptr.vmem [resolvable:$true] %s4063
      %4069 = dma.vmem_to_hbm [thread:$0]  %s4064, 512, %s4, [#allocation8], 64, 64, 4
    $region25: #{attn_encoder_forward.4} parent=1 // pred_fallthru
      _
    // Predicated region
    $region26: #{attn_encoder_forward.4} parent=1 // pred_check
      _
    $region27: #{attn_encoder_forward.4} parent=1 // pred_check_branch
      %4071 = sbr.rel (0) target = $region29
    $region28: #{attn_encoder_forward.4} parent=1 // pred_region
      _
    $region29: #{attn_encoder_forward.4} parent=1 // pred_fallthru
      _
    // Predicated region
    $region30: #{attn_encoder_forward.4} parent=1 // pred_check
      _
    $region31: #{attn_encoder_forward.4} parent=1 // pred_check_branch
      %4073 = sbr.rel (0) target = $region33
    $region32: #{attn_encoder_forward.4} parent=1 // pred_region
      _
    $region33: #{attn_encoder_forward.4} parent=1 // pred_fallthru
      _
    // Predicated region
    $region34: #{attn_encoder_forward.4} parent=1 // pred_check
      _
    $region35: #{attn_encoder_forward.4} parent=1 // pred_check_branch
      %4075 = sbr.rel (0) target = $region37
    $region36: #{attn_encoder_forward.4} parent=1 // pred_region
      %4076 = dma.done [#allocation8], 512
    $region37: #{attn_encoder_forward.4} parent=1 // pred_fallthru
      _
    // Predicated region
    $region38: #{attn_encoder_forward.4} parent=1 // pred_check
      _
    $region39: #{attn_encoder_forward.4} parent=1 // pred_check_branch
      %4078 = sbr.rel (0) target = $region41
    $region40: #{attn_encoder_forward.4} parent=1 // pred_region
      _
    $region41: #{attn_encoder_forward.4} parent=1 // pred_fallthru
      _
    // Predicated region
    $region42: #{attn_encoder_forward.4} parent=1 // pred_check
      _
    $region43: #{attn_encoder_forward.4} parent=1 // pred_check_branch
      %4080 = sbr.rel (0) target = $region45
    $region44: #{attn_encoder_forward.4} parent=1 // pred_region
      _
    $region45: #{attn_encoder_forward.4} parent=1 // pred_fallthru
      _
    %4081 = vsyncpa [#allocation7], 1
    %4082 = vsyncpa [#allocation8], 1

</llo_original>
